<compile_context>
chip_gen: v7x
topology: tpu7x:2x2x1
jax: 0.10.0
libtpu: 0.0.40
codegen_flags: <defaults>
</compile_context>

<pallas_src>
import jax
import jax.numpy as jnp
from jax import lax
from jax.experimental import pallas as pl
from jax.experimental.pallas import tpu as pltpu

LATENT_DIM = 128      # latent_dim=128 in the module
PAD_LEN = 20          # forward() pads the permuted time axis by 20
M_N = 0.00025         # KLD weight from the module's forward()


def _resident_spec(shape):
    """Constant-index (resident) weight/bias spec; single-buffered if supported."""
    try:
        return pl.BlockSpec(shape, lambda i: (0, 0), pipeline_mode=pl.Buffered(1))
    except (TypeError, AttributeError):
        return pl.BlockSpec(shape, lambda i: (0, 0))


def _pick_tb(b, tb_max=512):
    """Batch-tile rows: multiple of 16 (bf16 sublane pack), <= tb_max, and split
    into >= 2 tiles when the batch allows so the 'parallel' axis uses both TCs."""
    tb = min(tb_max, max(16, ((b + 15) // 16) * 16))
    if b > 16 and pl.cdiv(b, tb) < 2:
        tb = max(16, ((pl.cdiv(b, 2) + 15) // 16) * 16)
    return tb


def _make_vae_kernel(b_real, tb, lc):
    """lc = len_sw * n_channels (the real, non-padded input columns, (t,c) order)."""

    def kernel(x_ref, eps_ref,
               we1, be1, we2, be2, wml, bml,          # encoder + fused mu/logvar head
               wd1, bd1, wd2, bd2, wd3, bd3,          # decoder
               out_ref, sse_ref, kld_ref):
        x16 = x_ref[...]                              # (TB, lc) bf16

        def lin(h, w_ref, b_ref):
            # bf16 matmul operands, f32 accumulation on the MXU.
            return jnp.dot(h.astype(jnp.bfloat16), w_ref[...],
                           preferred_element_type=jnp.float32) + b_ref[...]

        # Encoder (MLP stand-in for the conv stack).
        h = jnp.maximum(lin(x16, we1, be1), 0.0)
        h = jnp.maximum(lin(h, we2, be2), 0.0)

        # Fused mu/logvar head: one 256-wide matmul, sliced on a 128-lane boundary.
        ml = lin(h, wml, bml)                         # (TB, 2*LATENT_DIM)
        mu = ml[:, :LATENT_DIM]
        logvar = ml[:, LATENT_DIM:]

        # Reparameterize (epsilon supplied from the host for determinism).
        z = mu + jnp.exp(0.5 * logvar) * eps_ref[...]

        # Decoder; VanillaVAE's final layer ends in Tanh.  wd3's columns were
        # pre-permuted so y is already flattened in (time, channel) order with
        # the 20 padded time steps in the last columns.
        h = jnp.maximum(lin(z, wd1, bd1), 0.0)
        h = jnp.maximum(lin(h, wd2, bd2), 0.0)
        y = jnp.tanh(lin(h, wd3, bd3))                # (TB, C*(L+PAD_LEN)) f32

        # forward() only returns the first len_sw time steps.
        out_ref[...] = y[:, :lc].astype(out_ref.dtype)

        # Per-tile partial losses (f32); mask out padded batch rows.
        row = pl.program_id(0) * tb + lax.broadcasted_iota(jnp.int32, (tb, 1), 0)
        mask = (row < b_real).astype(jnp.float32)     # (TB, 1)

        diff = (y[:, :lc] - x16.astype(jnp.float32)) * mask
        # Padded time steps of the input are zero, so their squared error is y^2.
        sse = jnp.sum(diff * diff) + jnp.sum((y[:, lc:] * mask) ** 2)
        kld_rows = -0.5 * jnp.sum(1.0 + logvar - mu * mu - jnp.exp(logvar),
                                  axis=1, keepdims=True)   # (TB, 1)
        kld = jnp.sum(kld_rows * mask)

        sse_ref[0, 0] = sse
        kld_ref[0, 0] = kld

    return kernel


def vae_forward(x, kparams, eps, *, tb_max=512):
    """x: (B, len_sw, C) f32; kparams: kernel-layout params from fold_params();
    eps: (B, LATENT_DIM) f32.  Returns (loss, recon[:, :len_sw, :]) matching the
    PyTorch VAE.forward() (reconstruction is returned in bf16)."""
    B, L, C = x.shape
    LP = L + PAD_LEN
    LC = L * C
    D_full = C * LP                                   # MSE denominator uses padded size

    # Permutation/padding folded into the weights: the kernel consumes x
    # flattened directly in (t, c) order -> free reshape, no transpose/pad pass.
    x_flat = x.reshape(B, LC).astype(jnp.bfloat16)

    TB = _pick_tb(B, tb_max)
    n_tiles = pl.cdiv(B, TB)
    B_pad = n_tiles * TB
    if B_pad != B:
        x_flat = jnp.pad(x_flat, ((0, B_pad - B), (0, 0)))
        eps = jnp.pad(eps, ((0, B_pad - B), (0, 0)))

    args = [x_flat, eps]
    in_specs = [
        pl.BlockSpec((TB, LC), lambda i: (i, 0)),
        pl.BlockSpec((TB, LATENT_DIM), lambda i: (i, 0)),
    ]
    for (w, b) in kparams:
        args += [w, b]
        in_specs += [_resident_spec(w.shape), _resident_spec(b.shape)]

    recon_flat, sse_part, kld_part = pl.pallas_call(
        _make_vae_kernel(B, TB, LC),
        grid=(n_tiles,),
        out_shape=(
            jax.ShapeDtypeStruct((B_pad, LC), jnp.bfloat16),
            jax.ShapeDtypeStruct((n_tiles, 1), jnp.float32),
            jax.ShapeDtypeStruct((n_tiles, 1), jnp.float32),
        ),
        in_specs=in_specs,
        out_specs=(
            pl.BlockSpec((TB, LC), lambda i: (i, 0)),
            pl.BlockSpec((1, 1), lambda i: (i, 0),
                         memory_space=pltpu.MemorySpace.SMEM),
            pl.BlockSpec((1, 1), lambda i: (i, 0),
                         memory_space=pltpu.MemorySpace.SMEM),
        ),
        compiler_params=pltpu.CompilerParams(
            dimension_semantics=("parallel",),
            vmem_limit_bytes=48 * 1024 * 1024,
        ),
    )(*args)

    # Finish the reductions in JAX (per-tile partials -> means), exactly like
    # F.mse_loss(recon, padded_input) + M_N * mean_batch(KLD).
    recons_loss = jnp.sum(sse_part) / jnp.float32(B * D_full)
    kld_loss = jnp.sum(kld_part) / jnp.float32(B)
    loss = recons_loss + jnp.float32(M_N) * kld_loss

    recon = recon_flat[:B].reshape(B, L, C)           # already in (t, c) order
    return loss, recon


def init_linear(key, fan_in, fan_out):
    """torch.nn.Linear-style init (uniform +-1/sqrt(fan_in)), f32 master weights."""
    kw, kb = jax.random.split(key)
    bound = 1.0 / jnp.sqrt(jnp.float32(fan_in))
    w = jax.random.uniform(kw, (fan_in, fan_out), jnp.float32, -bound, bound)
    b = jax.random.uniform(kb, (1, fan_out), jnp.float32, -bound, bound)
    return w, b


def make_params(key, d_in):
    """Original-layout (permute+pad order, d_in = C*(L+PAD_LEN)) parameters."""
    dims = [
        (d_in, 512), (512, 256),                  # encoder
        (256, LATENT_DIM), (256, LATENT_DIM),     # fc_mu, fc_logvar
        (LATENT_DIM, 256), (256, 512),            # decoder
        (512, d_in),                              # final layer (tanh)
    ]
    keys = jax.random.split(key, len(dims))
    return [init_linear(k, fi, fo) for k, (fi, fo) in zip(keys, dims)]


def fold_params(params, n_channels, len_sw):
    """Build kernel-layout params: (t,c)-order permutation folded into the first
    and last layers, mu/logvar heads fused into one matmul, weights cast bf16."""
    LP = len_sw + PAD_LEN
    (we1, be1), (we2, be2), (wmu, bmu), (wlv, blv), \
        (wd1, bd1), (wd2, bd2), (wd3, bd3) = params

    # Kernel index j = t*C + c  <->  original padded index  c*LP + t.
    j_in = jnp.arange(len_sw * n_channels)
    perm_in = (j_in % n_channels) * LP + (j_in // n_channels)
    j_out = jnp.arange(LP * n_channels)
    perm_out = (j_out % n_channels) * LP + (j_out // n_channels)

    we1_k = we1[perm_in, :]                       # padded-time rows feed zeros -> dropped
    wd3_k = wd3[:, perm_out]
    bd3_k = bd3[:, perm_out]
    wml = jnp.concatenate([wmu, wlv], axis=1)     # fused mu/logvar head (256, 256)
    bml = jnp.concatenate([bmu, blv], axis=1)

    kparams = [(we1_k, be1), (we2, be2), (wml, bml),
               (wd1, bd1), (wd2, bd2), (wd3_k, bd3_k)]
    return [(w.astype(jnp.bfloat16), b.astype(jnp.float32)) for (w, b) in kparams]


def ref_forward(x, params, eps):
    """Pure-JAX reference of the same math on the original (un-folded) weights."""
    B, L, C = x.shape
    LP = L + PAD_LEN
    xp = jnp.pad(jnp.transpose(x, (0, 2, 1)), ((0, 0), (0, 0), (0, PAD_LEN)))
    xf = xp.reshape(B, -1)
    xq = xf.astype(jnp.bfloat16).astype(jnp.float32)   # kernel stores x as bf16

    def lin(h, w, b):
        return jnp.dot(h.astype(jnp.bfloat16), w.astype(jnp.bfloat16),
                       preferred_element_type=jnp.float32) + b

    (we1, be1), (we2, be2), (wmu, bmu), (wlv, blv), \
        (wd1, bd1), (wd2, bd2), (wd3, bd3) = params
    h = jnp.maximum(lin(xq, we1, be1), 0.0)
    h = jnp.maximum(lin(h, we2, be2), 0.0)
    mu = lin(h, wmu, bmu)
    lv = lin(h, wlv, blv)
    z = mu + jnp.exp(0.5 * lv) * eps
    h = jnp.maximum(lin(z, wd1, bd1), 0.0)
    h = jnp.maximum(lin(h, wd2, bd2), 0.0)
    y = jnp.tanh(lin(h, wd3, bd3))

    recons_loss = jnp.mean((y - xq) ** 2)
    kld_loss = jnp.mean(-0.5 * jnp.sum(1.0 + lv - mu * mu - jnp.exp(lv), axis=1))
    loss = recons_loss + M_N * kld_loss
    out = jnp.transpose(y.reshape(B, C, LP), (0, 2, 1))[:, :L, :]
    return loss, out


if __name__ == "__main__":
    # Small shapes consistent with the module: len_sw=300, n_channels=6.
    B, L, C = 2, 300, 6
    key = jax.random.PRNGKey(0)
    kx, kp, ke = jax.random.split(key, 3)

    x = jax.random.normal(kx, (B, L, C), jnp.float32)
    params = make_params(kp, C * (L + PAD_LEN))       # original-layout master weights
    kparams = fold_params(params, C, L)               # kernel-layout (folded, fused, bf16)
    eps = jax.random.normal(ke, (B, LATENT_DIM), jnp.float32)

    loss, recon = jax.jit(vae_forward)(x, kparams, eps)
    jax.block_until_ready((loss, recon))

    ref_loss, ref_recon = ref_forward(x, params, eps)
    assert recon.shape == (B, L, C)
    recon_f32 = recon.astype(jnp.float32)
    assert jnp.allclose(recon_f32, ref_recon, atol=5e-3, rtol=5e-3), \
        float(jnp.max(jnp.abs(recon_f32 - ref_recon)))
    assert jnp.allclose(loss, ref_loss, atol=5e-4, rtol=5e-3), \
        (float(loss), float(ref_loss))

    print("KERNEL_OK")
</pallas_src>

<mosaic_0001>
module attributes {stable_mosaic.version = 11 : i64} {
  func.func @kernel(%arg0: i32, %arg1: memref<16x1800xbf16, #tpu.memory_space<vmem>>, %arg2: memref<16x128xf32, #tpu.memory_space<vmem>>, %arg3: memref<1800x512xbf16, #tpu.memory_space<vmem>>, %arg4: memref<1x512xf32, #tpu.memory_space<vmem>>, %arg5: memref<512x256xbf16, #tpu.memory_space<vmem>>, %arg6: memref<1x256xf32, #tpu.memory_space<vmem>>, %arg7: memref<256x256xbf16, #tpu.memory_space<vmem>>, %arg8: memref<1x256xf32, #tpu.memory_space<vmem>>, %arg9: memref<128x256xbf16, #tpu.memory_space<vmem>>, %arg10: memref<1x256xf32, #tpu.memory_space<vmem>>, %arg11: memref<256x512xbf16, #tpu.memory_space<vmem>>, %arg12: memref<1x512xf32, #tpu.memory_space<vmem>>, %arg13: memref<512x1920xbf16, #tpu.memory_space<vmem>>, %arg14: memref<1x1920xf32, #tpu.memory_space<vmem>>, %arg15: memref<16x1800xbf16, #tpu.memory_space<vmem>>, %arg16: memref<1x1xf32, #tpu.memory_space<smem>>, %arg17: memref<1x1xf32, #tpu.memory_space<smem>>) attributes {dimension_semantics = [#tpu.dimension_semantics<parallel>], iteration_bounds = array<i64: 1>, scalar_prefetch = 0 : i64, scratch_operands = 0 : i64, tpu.core_type = #tpu.core_type<tc>, window_params = [{transform_indices = @transform_0, window_bounds = array<i64: 16, 1800>}, {transform_indices = @transform_1, window_bounds = array<i64: 16, 128>}, {pipeline_mode = #tpu.pipeline_mode<synchronous>, transform_indices = @transform_2, window_bounds = array<i64: 1800, 512>}, {pipeline_mode = #tpu.pipeline_mode<synchronous>, transform_indices = @transform_3, window_bounds = array<i64: 1, 512>}, {pipeline_mode = #tpu.pipeline_mode<synchronous>, transform_indices = @transform_4, window_bounds = array<i64: 512, 256>}, {pipeline_mode = #tpu.pipeline_mode<synchronous>, transform_indices = @transform_5, window_bounds = array<i64: 1, 256>}, {pipeline_mode = #tpu.pipeline_mode<synchronous>, transform_indices = @transform_6, window_bounds = array<i64: 256, 256>}, {pipeline_mode = #tpu.pipeline_mode<synchronous>, transform_indices = @transform_7, window_bounds = array<i64: 1, 256>}, {pipeline_mode = #tpu.pipeline_mode<synchronous>, transform_indices = @transform_8, window_bounds = array<i64: 128, 256>}, {pipeline_mode = #tpu.pipeline_mode<synchronous>, transform_indices = @transform_9, window_bounds = array<i64: 1, 256>}, {pipeline_mode = #tpu.pipeline_mode<synchronous>, transform_indices = @transform_10, window_bounds = array<i64: 256, 512>}, {pipeline_mode = #tpu.pipeline_mode<synchronous>, transform_indices = @transform_11, window_bounds = array<i64: 1, 512>}, {pipeline_mode = #tpu.pipeline_mode<synchronous>, transform_indices = @transform_12, window_bounds = array<i64: 512, 1920>}, {pipeline_mode = #tpu.pipeline_mode<synchronous>, transform_indices = @transform_13, window_bounds = array<i64: 1, 1920>}, {transform_indices = @transform_14, window_bounds = array<i64: 16, 1800>}, {transform_indices = @transform_15, window_bounds = array<i64: 1, 1>}, {transform_indices = @transform_16, window_bounds = array<i64: 1, 1>}]} {
    %c0 = arith.constant 0 : index
    %c0_0 = arith.constant 0 : index
    %0 = vector.load %arg1[%c0, %c0_0] : memref<16x1800xbf16, #tpu.memory_space<vmem>>, vector<16x1800xbf16>
    %c0_1 = arith.constant 0 : index
    %c0_2 = arith.constant 0 : index
    %1 = vector.load %arg3[%c0_1, %c0_2] : memref<1800x512xbf16, #tpu.memory_space<vmem>>, vector<1800x512xbf16>
    %cst = arith.constant dense<0.000000e+00> : vector<16x512xf32>
    %2 = tpu.matmul %0, %1, %cst {dimension_numbers = #tpu.dot_dimension_numbers<[1], [0], [0], [1], [0, 0, 1, 1], [], []>} : vector<16x1800xbf16>, vector<1800x512xbf16>, vector<16x512xf32> -> vector<16x512xf32>
    %c0_3 = arith.constant 0 : index
    %c0_4 = arith.constant 0 : index
    %3 = vector.load %arg4[%c0_3, %c0_4] : memref<1x512xf32, #tpu.memory_space<vmem>>, vector<1x512xf32>
    %4 = vector.broadcast %3 : vector<1x512xf32> to vector<16x512xf32>
    %5 = arith.addf %2, %4 : vector<16x512xf32>
    %cst_5 = arith.constant 0.000000e+00 : f32
    %6 = vector.broadcast %cst_5 : f32 to vector<16x512xf32>
    %7 = arith.maximumf %5, %6 : vector<16x512xf32>
    %8 = arith.truncf %7 : vector<16x512xf32> to vector<16x512xbf16>
    %c0_6 = arith.constant 0 : index
    %c0_7 = arith.constant 0 : index
    %9 = vector.load %arg5[%c0_6, %c0_7] : memref<512x256xbf16, #tpu.memory_space<vmem>>, vector<512x256xbf16>
    %cst_8 = arith.constant dense<0.000000e+00> : vector<16x256xf32>
    %10 = tpu.matmul %8, %9, %cst_8 {dimension_numbers = #tpu.dot_dimension_numbers<[1], [0], [0], [1], [0, 0, 1, 1], [], []>} : vector<16x512xbf16>, vector<512x256xbf16>, vector<16x256xf32> -> vector<16x256xf32>
    %c0_9 = arith.constant 0 : index
    %c0_10 = arith.constant 0 : index
    %11 = vector.load %arg6[%c0_9, %c0_10] : memref<1x256xf32, #tpu.memory_space<vmem>>, vector<1x256xf32>
    %12 = vector.broadcast %11 : vector<1x256xf32> to vector<16x256xf32>
    %13 = arith.addf %10, %12 : vector<16x256xf32>
    %cst_11 = arith.constant 0.000000e+00 : f32
    %14 = vector.broadcast %cst_11 : f32 to vector<16x256xf32>
    %15 = arith.maximumf %13, %14 : vector<16x256xf32>
    %16 = arith.truncf %15 : vector<16x256xf32> to vector<16x256xbf16>
    %c0_12 = arith.constant 0 : index
    %c0_13 = arith.constant 0 : index
    %17 = vector.load %arg7[%c0_12, %c0_13] : memref<256x256xbf16, #tpu.memory_space<vmem>>, vector<256x256xbf16>
    %cst_14 = arith.constant dense<0.000000e+00> : vector<16x256xf32>
    %18 = tpu.matmul %16, %17, %cst_14 {dimension_numbers = #tpu.dot_dimension_numbers<[1], [0], [0], [1], [0, 0, 1, 1], [], []>} : vector<16x256xbf16>, vector<256x256xbf16>, vector<16x256xf32> -> vector<16x256xf32>
    %c0_15 = arith.constant 0 : index
    %c0_16 = arith.constant 0 : index
    %19 = vector.load %arg8[%c0_15, %c0_16] : memref<1x256xf32, #tpu.memory_space<vmem>>, vector<1x256xf32>
    %20 = vector.broadcast %19 : vector<1x256xf32> to vector<16x256xf32>
    %21 = arith.addf %18, %20 : vector<16x256xf32>
    %22 = vector.extract_strided_slice %21 {offsets = [0, 0], sizes = [16, 128], strides = [1, 1]} : vector<16x256xf32> to vector<16x128xf32>
    %23 = vector.extract_strided_slice %21 {offsets = [0, 128], sizes = [16, 128], strides = [1, 1]} : vector<16x256xf32> to vector<16x128xf32>
    %cst_17 = arith.constant 5.000000e-01 : f32
    %24 = vector.broadcast %cst_17 : f32 to vector<16x128xf32>
    %25 = arith.mulf %24, %23 : vector<16x128xf32>
    %26 = math.exp %25 : vector<16x128xf32>
    %c0_18 = arith.constant 0 : index
    %c0_19 = arith.constant 0 : index
    %27 = vector.load %arg2[%c0_18, %c0_19] : memref<16x128xf32, #tpu.memory_space<vmem>>, vector<16x128xf32>
    %28 = arith.mulf %26, %27 : vector<16x128xf32>
    %29 = arith.addf %22, %28 : vector<16x128xf32>
    %30 = arith.truncf %29 : vector<16x128xf32> to vector<16x128xbf16>
    %c0_20 = arith.constant 0 : index
    %c0_21 = arith.constant 0 : index
    %31 = vector.load %arg9[%c0_20, %c0_21] : memref<128x256xbf16, #tpu.memory_space<vmem>>, vector<128x256xbf16>
    %cst_22 = arith.constant dense<0.000000e+00> : vector<16x256xf32>
    %32 = tpu.matmul %30, %31, %cst_22 {dimension_numbers = #tpu.dot_dimension_numbers<[1], [0], [0], [1], [0, 0, 1, 1], [], []>} : vector<16x128xbf16>, vector<128x256xbf16>, vector<16x256xf32> -> vector<16x256xf32>
    %c0_23 = arith.constant 0 : index
    %c0_24 = arith.constant 0 : index
    %33 = vector.load %arg10[%c0_23, %c0_24] : memref<1x256xf32, #tpu.memory_space<vmem>>, vector<1x256xf32>
    %34 = vector.broadcast %33 : vector<1x256xf32> to vector<16x256xf32>
    %35 = arith.addf %32, %34 : vector<16x256xf32>
    %cst_25 = arith.constant 0.000000e+00 : f32
    %36 = vector.broadcast %cst_25 : f32 to vector<16x256xf32>
    %37 = arith.maximumf %35, %36 : vector<16x256xf32>
    %38 = arith.truncf %37 : vector<16x256xf32> to vector<16x256xbf16>
    %c0_26 = arith.constant 0 : index
    %c0_27 = arith.constant 0 : index
    %39 = vector.load %arg11[%c0_26, %c0_27] : memref<256x512xbf16, #tpu.memory_space<vmem>>, vector<256x512xbf16>
    %cst_28 = arith.constant dense<0.000000e+00> : vector<16x512xf32>
    %40 = tpu.matmul %38, %39, %cst_28 {dimension_numbers = #tpu.dot_dimension_numbers<[1], [0], [0], [1], [0, 0, 1, 1], [], []>} : vector<16x256xbf16>, vector<256x512xbf16>, vector<16x512xf32> -> vector<16x512xf32>
    %c0_29 = arith.constant 0 : index
    %c0_30 = arith.constant 0 : index
    %41 = vector.load %arg12[%c0_29, %c0_30] : memref<1x512xf32, #tpu.memory_space<vmem>>, vector<1x512xf32>
    %42 = vector.broadcast %41 : vector<1x512xf32> to vector<16x512xf32>
    %43 = arith.addf %40, %42 : vector<16x512xf32>
    %cst_31 = arith.constant 0.000000e+00 : f32
    %44 = vector.broadcast %cst_31 : f32 to vector<16x512xf32>
    %45 = arith.maximumf %43, %44 : vector<16x512xf32>
    %46 = arith.truncf %45 : vector<16x512xf32> to vector<16x512xbf16>
    %c0_32 = arith.constant 0 : index
    %c0_33 = arith.constant 0 : index
    %47 = vector.load %arg13[%c0_32, %c0_33] : memref<512x1920xbf16, #tpu.memory_space<vmem>>, vector<512x1920xbf16>
    %cst_34 = arith.constant dense<0.000000e+00> : vector<16x1920xf32>
    %48 = tpu.matmul %46, %47, %cst_34 {dimension_numbers = #tpu.dot_dimension_numbers<[1], [0], [0], [1], [0, 0, 1, 1], [], []>} : vector<16x512xbf16>, vector<512x1920xbf16>, vector<16x1920xf32> -> vector<16x1920xf32>
    %c0_35 = arith.constant 0 : index
    %c0_36 = arith.constant 0 : index
    %49 = vector.load %arg14[%c0_35, %c0_36] : memref<1x1920xf32, #tpu.memory_space<vmem>>, vector<1x1920xf32>
    %50 = vector.broadcast %49 : vector<1x1920xf32> to vector<16x1920xf32>
    %51 = arith.addf %48, %50 : vector<16x1920xf32>
    %52 = math.tanh %51 : vector<16x1920xf32>
    %53 = vector.extract_strided_slice %52 {offsets = [0, 0], sizes = [16, 1800], strides = [1, 1]} : vector<16x1920xf32> to vector<16x1800xf32>
    %54 = arith.truncf %53 : vector<16x1800xf32> to vector<16x1800xbf16>
    %c0_37 = arith.constant 0 : index
    %c0_38 = arith.constant 0 : index
    %55 = vector.load %arg15[%c0_37, %c0_38] : memref<16x1800xbf16, #tpu.memory_space<vmem>>, vector<16x1800xbf16>
    tpu.vector_store %arg15[%c0_37, %c0_38], %54 {strides = array<i32>} : memref<16x1800xbf16, #tpu.memory_space<vmem>>, vector<16x1800xbf16>,
    %c16_i32 = arith.constant 16 : i32
    %56 = arith.muli %arg0, %c16_i32 : i32
    %57 = tpu.iota {dimensions = array<i32: 0>} : vector<16x1xi32>
    %58 = vector.broadcast %56 : i32 to vector<16x1xi32>
    %59 = arith.addi %58, %57 : vector<16x1xi32>
    %c2_i32 = arith.constant 2 : i32
    %60 = vector.broadcast %c2_i32 : i32 to vector<16x1xi32>
    %61 = arith.cmpi slt, %59, %60 : vector<16x1xi32>
    %62 = arith.extui %61 : vector<16x1xi1> to vector<16x1xi32>
    %63 = arith.sitofp %62 : vector<16x1xi32> to vector<16x1xf32>
    %64 = vector.extract_strided_slice %52 {offsets = [0, 0], sizes = [16, 1800], strides = [1, 1]} : vector<16x1920xf32> to vector<16x1800xf32>
    %65 = arith.extf %0 : vector<16x1800xbf16> to vector<16x1800xf32>
    %66 = arith.subf %64, %65 : vector<16x1800xf32>
    %67 = vector.broadcast %63 : vector<16x1xf32> to vector<16x1800xf32>
    %68 = arith.mulf %66, %67 : vector<16x1800xf32>
    %69 = arith.mulf %68, %68 : vector<16x1800xf32>
    %70 = vector.shape_cast %69 : vector<16x1800xf32> to vector<1x16x1800xf32>
    %cst_39 = arith.constant dense<0.000000e+00> : vector<1xf32>
    %71 = vector.multi_reduction <add>, %70, %cst_39 [1, 2] : vector<1x16x1800xf32> to vector<1xf32>
    %72 = vector.shape_cast %71 : vector<1xf32> to vector<1x1x1xf32>
    %73 = vector.extract %72[0, 0, 0] : f32 from vector<1x1x1xf32>
    %74 = vector.extract_strided_slice %52 {offsets = [0, 1800], sizes = [16, 120], strides = [1, 1]} : vector<16x1920xf32> to vector<16x120xf32>
    %75 = vector.broadcast %63 : vector<16x1xf32> to vector<16x120xf32>
    %76 = arith.mulf %74, %75 : vector<16x120xf32>
    %77 = arith.mulf %76, %76 : vector<16x120xf32>
    %78 = vector.shape_cast %77 : vector<16x120xf32> to vector<1x16x120xf32>
    %cst_40 = arith.constant dense<0.000000e+00> : vector<1xf32>
    %79 = vector.multi_reduction <add>, %78, %cst_40 [1, 2] : vector<1x16x120xf32> to vector<1xf32>
    %80 = vector.shape_cast %79 : vector<1xf32> to vector<1x1x1xf32>
    %81 = vector.extract %80[0, 0, 0] : f32 from vector<1x1x1xf32>
    %82 = arith.addf %73, %81 : f32
    %cst_41 = arith.constant 1.000000e+00 : f32
    %83 = vector.broadcast %cst_41 : f32 to vector<16x128xf32>
    %84 = arith.addf %83, %23 : vector<16x128xf32>
    %85 = arith.mulf %22, %22 : vector<16x128xf32>
    %86 = arith.subf %84, %85 : vector<16x128xf32>
    %87 = math.exp %23 : vector<16x128xf32>
    %88 = arith.subf %86, %87 : vector<16x128xf32>
    %cst_42 = arith.constant dense<0.000000e+00> : vector<16xf32>
    %89 = vector.multi_reduction <add>, %88, %cst_42 [1] : vector<16x128xf32> to vector<16xf32>
    %90 = vector.shape_cast %89 : vector<16xf32> to vector<16x1xf32>
    %cst_43 = arith.constant -5.000000e-01 : f32
    %91 = vector.broadcast %cst_43 : f32 to vector<16x1xf32>
    %92 = arith.mulf %91, %90 : vector<16x1xf32>
    %93 = arith.mulf %92, %63 : vector<16x1xf32>
    %94 = vector.shape_cast %93 : vector<16x1xf32> to vector<1x16x1xf32>
    %cst_44 = arith.constant dense<0.000000e+00> : vector<1xf32>
    %95 = vector.multi_reduction <add>, %94, %cst_44 [1, 2] : vector<1x16x1xf32> to vector<1xf32>
    %96 = vector.shape_cast %95 : vector<1xf32> to vector<1x1x1xf32>
    %97 = vector.extract %96[0, 0, 0] : f32 from vector<1x1x1xf32>
    %c0_45 = arith.constant 0 : index
    %c0_46 = arith.constant 0 : index
    %98 = memref.load %arg16[%c0_45, %c0_46] : memref<1x1xf32, #tpu.memory_space<smem>>
    memref.store %82, %arg16[%c0_45, %c0_46] : memref<1x1xf32, #tpu.memory_space<smem>>
    %c0_47 = arith.constant 0 : index
    %c0_48 = arith.constant 0 : index
    %99 = memref.load %arg17[%c0_47, %c0_48] : memref<1x1xf32, #tpu.memory_space<smem>>
    memref.store %97, %arg17[%c0_47, %c0_48] : memref<1x1xf32, #tpu.memory_space<smem>>
    return
  }
  func.func @transform_0(%arg0: i32) -> (i32, i32) {
    %c0_i32 = arith.constant 0 : i32
    %c0_i32_0 = arith.constant 0 : i32
    return %arg0, %c0_i32 : i32, i32
  }
  func.func @transform_1(%arg0: i32) -> (i32, i32) {
    %c0_i32 = arith.constant 0 : i32
    %c0_i32_0 = arith.constant 0 : i32
    return %arg0, %c0_i32 : i32, i32
  }
  func.func @transform_2(%arg0: i32) -> (i32, i32) {
    %c0_i32 = arith.constant 0 : i32
    %c0_i32_0 = arith.constant 0 : i32
    %c0_i32_1 = arith.constant 0 : i32
    return %c0_i32, %c0_i32_0 : i32, i32
  }
  func.func @transform_3(%arg0: i32) -> (i32, i32) {
    %c0_i32 = arith.constant 0 : i32
    %c0_i32_0 = arith.constant 0 : i32
    %c0_i32_1 = arith.constant 0 : i32
    return %c0_i32, %c0_i32_0 : i32, i32
  }
  func.func @transform_4(%arg0: i32) -> (i32, i32) {
    %c0_i32 = arith.constant 0 : i32
    %c0_i32_0 = arith.constant 0 : i32
    %c0_i32_1 = arith.constant 0 : i32
    return %c0_i32, %c0_i32_0 : i32, i32
  }
  func.func @transform_5(%arg0: i32) -> (i32, i32) {
    %c0_i32 = arith.constant 0 : i32
    %c0_i32_0 = arith.constant 0 : i32
    %c0_i32_1 = arith.constant 0 : i32
    return %c0_i32, %c0_i32_0 : i32, i32
  }
  func.func @transform_6(%arg0: i32) -> (i32, i32) {
    %c0_i32 = arith.constant 0 : i32
    %c0_i32_0 = arith.constant 0 : i32
    %c0_i32_1 = arith.constant 0 : i32
    return %c0_i32, %c0_i32_0 : i32, i32
  }
  func.func @transform_7(%arg0: i32) -> (i32, i32) {
    %c0_i32 = arith.constant 0 : i32
    %c0_i32_0 = arith.constant 0 : i32
    %c0_i32_1 = arith.constant 0 : i32
    return %c0_i32, %c0_i32_0 : i32, i32
  }
  func.func @transform_8(%arg0: i32) -> (i32, i32) {
    %c0_i32 = arith.constant 0 : i32
    %c0_i32_0 = arith.constant 0 : i32
    %c0_i32_1 = arith.constant 0 : i32
    return %c0_i32, %c0_i32_0 : i32, i32
  }
  func.func @transform_9(%arg0: i32) -> (i32, i32) {
    %c0_i32 = arith.constant 0 : i32
    %c0_i32_0 = arith.constant 0 : i32
    %c0_i32_1 = arith.constant 0 : i32
    return %c0_i32, %c0_i32_0 : i32, i32
  }
  func.func @transform_10(%arg0: i32) -> (i32, i32) {
    %c0_i32 = arith.constant 0 : i32
    %c0_i32_0 = arith.constant 0 : i32
    %c0_i32_1 = arith.constant 0 : i32
    return %c0_i32, %c0_i32_0 : i32, i32
  }
  func.func @transform_11(%arg0: i32) -> (i32, i32) {
    %c0_i32 = arith.constant 0 : i32
    %c0_i32_0 = arith.constant 0 : i32
    %c0_i32_1 = arith.constant 0 : i32
    return %c0_i32, %c0_i32_0 : i32, i32
  }
  func.func @transform_12(%arg0: i32) -> (i32, i32) {
    %c0_i32 = arith.constant 0 : i32
    %c0_i32_0 = arith.constant 0 : i32
    %c0_i32_1 = arith.constant 0 : i32
    return %c0_i32, %c0_i32_0 : i32, i32
  }
  func.func @transform_13(%arg0: i32) -> (i32, i32) {
    %c0_i32 = arith.constant 0 : i32
    %c0_i32_0 = arith.constant 0 : i32
    %c0_i32_1 = arith.constant 0 : i32
    return %c0_i32, %c0_i32_0 : i32, i32
  }
  func.func @transform_14(%arg0: i32) -> (i32, i32) {
    %c0_i32 = arith.constant 0 : i32
    %c0_i32_0 = arith.constant 0 : i32
    return %arg0, %c0_i32 : i32, i32
  }
  func.func @transform_15(%arg0: i32) -> (i32, i32) {
    %c0_i32 = arith.constant 0 : i32
    %c0_i32_0 = arith.constant 0 : i32
    return %arg0, %c0_i32 : i32, i32
  }
  func.func @transform_16(%arg0: i32) -> (i32, i32) {
    %c0_i32 = arith.constant 0 : i32
    %c0_i32_0 = arith.constant 0 : i32
    return %arg0, %c0_i32 : i32, i32
  }
}

</mosaic_0001>

<llo_original>
// kernel: vae_forward.1
$region0: #{vae_forward.1}
  #allocation0 [shape = 'u32[]', space=smem, size = 0x4, offset = 0x4, fixed_abs, tag = 'smem constant byte address 0x4 - core index']
  #allocation1 [shape = 'u32[144,128]{1,0:T(1,128)}', space=vmem, size = 0x12000, scoped, tag = 'internal scratch']
  %s0 = inlined_call_operand.vmem [shape: bf16[16,1800], index: 0, kind: input, shape index: {}]
  %s1 = inlined_call_operand.vmem [shape: f32[16,128], index: 1, kind: input, shape index: {}]
  %s2 = inlined_call_operand.hbm [shape: bf16[1800,512], index: 2, kind: input, shape index: {}]
  %s3 = inlined_call_operand.hbm [shape: f32[1,512], index: 3, kind: input, shape index: {}]
  %s4 = inlined_call_operand.hbm [shape: bf16[512,256], index: 4, kind: input, shape index: {}]
  %s5 = inlined_call_operand.hbm [shape: f32[1,256], index: 5, kind: input, shape index: {}]
  %s6 = inlined_call_operand.hbm [shape: bf16[256,256], index: 6, kind: input, shape index: {}]
  %s7 = inlined_call_operand.hbm [shape: f32[1,256], index: 7, kind: input, shape index: {}]
  %s8 = inlined_call_operand.hbm [shape: bf16[128,256], index: 8, kind: input, shape index: {}]
  %s9 = inlined_call_operand.hbm [shape: f32[1,256], index: 9, kind: input, shape index: {}]
  %s10 = inlined_call_operand.hbm [shape: bf16[256,512], index: 10, kind: input, shape index: {}]
  %s11 = inlined_call_operand.hbm [shape: f32[1,512], index: 11, kind: input, shape index: {}]
  %s12 = inlined_call_operand.hbm [shape: bf16[512,1920], index: 12, kind: input, shape index: {}]
  %s13 = inlined_call_operand.hbm [shape: f32[1,1920], index: 13, kind: input, shape index: {}]
  %s14 = inlined_call_operand.vmem [shape: bf16[16,1800], index: 14, kind: output, shape index: {0}]
  %s15 = inlined_call_operand.hbm [shape: f32[1,1], index: 15, kind: output, shape index: {1}]
  %s16 = inlined_call_operand.hbm [shape: f32[1,1], index: 16, kind: output, shape index: {2}]
  %17 = xla_tuple %s14, %s15, %s16
  %s18 = sld [smem:[#allocation0]]
  $region130: #{vae_forward.1} parent=0
    _
  %s20 = ssub.s32 1, %s18
  %s21 = scalar_select 0, %s20, %s18
  $region1: #{vae_forward.1} parent=0
    #allocation2 [shape = 'u8[1843200]{0}', space=vmem, size = 0x1c2000, scoped, tag = 'input window, operand 2, single buffered']
    #allocation3 [shape = 's32[1]{0}', space=sflag, size = 0x4, scoped, tag = 'scoped memory for vae_forward.1']
    #allocation4 [shape = 's32[1]{0}', space=sflag, size = 0x4, scoped, tag = 'scoped memory for vae_forward.1']
    #allocation5 [shape = 'u8[2048]{0}', space=vmem, size = 0x800, scoped, tag = 'input window, operand 3, single buffered']
    #allocation6 [shape = 's32[1]{0}', space=sflag, size = 0x4, scoped, tag = 'scoped memory for vae_forward.1']
    #allocation7 [shape = 'u8[262144]{0}', space=vmem, size = 0x40000, scoped, tag = 'input window, operand 4, single buffered']
    #allocation8 [shape = 'u8[1024]{0}', space=vmem, size = 0x400, scoped, tag = 'input window, operand 5, single buffered']
    #allocation9 [shape = 's32[1]{0}', space=sflag, size = 0x4, scoped, tag = 'scoped memory for vae_forward.1']
    #allocation10 [shape = 'u8[131072]{0}', space=vmem, size = 0x20000, scoped, tag = 'input window, operand 6, single buffered']
    #allocation11 [shape = 'u8[1024]{0}', space=vmem, size = 0x400, scoped, tag = 'input window, operand 7, single buffered']
    #allocation12 [shape = 's32[1]{0}', space=sflag, size = 0x4, scoped, tag = 'scoped memory for vae_forward.1']
    #allocation13 [shape = 'u8[65536]{0}', space=vmem, size = 0x10000, scoped, tag = 'input window, operand 8, single buffered']
    #allocation14 [shape = 'u8[1024]{0}', space=vmem, size = 0x400, scoped, tag = 'input window, operand 9, single buffered']
    #allocation15 [shape = 's32[1]{0}', space=sflag, size = 0x4, scoped, tag = 'scoped memory for vae_forward.1']
    #allocation16 [shape = 'u8[262144]{0}', space=vmem, size = 0x40000, scoped, tag = 'input window, operand 10, single buffered']
    #allocation17 [shape = 'u8[2048]{0}', space=vmem, size = 0x800, scoped, tag = 'input window, operand 11, single buffered']
    #allocation18 [shape = 's32[1]{0}', space=sflag, size = 0x4, scoped, tag = 'scoped memory for vae_forward.1']
    #allocation19 [shape = 'u8[1966080]{0}', space=vmem, size = 0x1e0000, scoped, tag = 'input window, operand 12, single buffered']
    #allocation20 [shape = 'u8[7680]{0}', space=vmem, size = 0x2000, scoped, tag = 'input window, operand 13, single buffered']
    #allocation21 [shape = 's32[1]{0}', space=sflag, size = 0x4, scoped, tag = 'scoped memory for vae_forward.1']
    #allocation22 [shape = 'u8[512]{0}', space=smem, size = 0x200, scoped, tag = 'output window, operand 1, single buffered']
    #allocation23 [shape = 'u8[512]{0}', space=smem, size = 0x200, scoped, tag = 'output window, operand 2, single buffered']
    #allocation24 [shape = 's32[1]{0}', space=sflag, size = 0x4, scoped, tag = 'scoped memory for vae_forward.1']
    %22 = vsyncpa [#allocation3], 0
    %23 = vsyncpa [#allocation6], 0
    %24 = vsyncpa [#allocation9], 0
    %25 = vsyncpa [#allocation12], 0
    %26 = vsyncpa [#allocation15], 0
    %27 = vsyncpa [#allocation18], 0
    %28 = vsyncpa [#allocation21], 0
    %29 = vsyncpa [#allocation4], 0
    %30 = vsyncpa [#allocation24], 0
    // Predicated region
    $region2: #{vae_forward.1} parent=1 // pred_check
      _
    $region3: #{vae_forward.1} parent=1 // pred_check_branch
      %32 = sbr.rel (0) target = $region5
    $region4: #{vae_forward.1} parent=1 // pred_region
      _
    $region5: #{vae_forward.1} parent=1 // pred_fallthru
      _
    // Predicated region
    $region6: #{vae_forward.1} parent=1 // pred_check
      _
    $region7: #{vae_forward.1} parent=1 // pred_check_branch
      %34 = sbr.rel (0) target = $region9
    $region8: #{vae_forward.1} parent=1 // pred_region
      _
    $region9: #{vae_forward.1} parent=1 // pred_fallthru
      _
    // Predicated region
    $region10: #{vae_forward.1} parent=1 // pred_check
      _
    $region11: #{vae_forward.1} parent=1 // pred_check_branch
      %36 = sbr.rel (0) target = $region13
    $region12: #{vae_forward.1} parent=1 // pred_region
      %s38 = ssub.s32 57600, 57600
      %39 = vsyncadd [#allocation3], %s38
      %s40 = sshll.u32 [#allocation2], 4
      %s41 = int_to_ptr.vmem [resolvable:$true] %s40
      %46 = dma.hbm_to_vmem [thread:$0]  %s2, 57600, %s41, [#allocation3], 256, 256, 16
    $region13: #{vae_forward.1} parent=1 // pred_fallthru
      _
    // Predicated region
    $region14: #{vae_forward.1} parent=1 // pred_check
      _
    $region15: #{vae_forward.1} parent=1 // pred_check_branch
      %48 = sbr.rel (0) target = $region17
    $region16: #{vae_forward.1} parent=1 // pred_region
      %s50 = ssub.s32 64, 64
      %51 = vsyncadd [#allocation6], %s50
      %s53 = sshll.u32 [#allocation5], 4
      %s54 = int_to_ptr.vmem [resolvable:$true] %s53
      %56 = dma.hbm_to_vmem [thread:$0]  %s3, 64, %s54, [#allocation6]
    $region17: #{vae_forward.1} parent=1 // pred_fallthru
      _
    // Predicated region
    $region18: #{vae_forward.1} parent=1 // pred_check
      _
    $region19: #{vae_forward.1} parent=1 // pred_check_branch
      %58 = sbr.rel (0) target = $region21
    $region20: #{vae_forward.1} parent=1 // pred_region
      %s60 = ssub.s32 8192, 8192
      %61 = vsyncadd [#allocation6], %s60
      %s62 = sshll.u32 [#allocation7], 4
      %s63 = int_to_ptr.vmem [resolvable:$true] %s62
      %68 = dma.hbm_to_vmem [thread:$0]  %s4, 8192, %s63, [#allocation6], 128, 128, 8
    $region21: #{vae_forward.1} parent=1 // pred_fallthru
      _
    // Predicated region
    $region22: #{vae_forward.1} parent=1 // pred_check
      _
    $region23: #{vae_forward.1} parent=1 // pred_check_branch
      %70 = sbr.rel (0) target = $region25
    $region24: #{vae_forward.1} parent=1 // pred_region
      %s72 = ssub.s32 32, 32
      %73 = vsyncadd [#allocation9], %s72
      %s75 = sshll.u32 [#allocation8], 4
      %s76 = int_to_ptr.vmem [resolvable:$true] %s75
      %78 = dma.hbm_to_vmem [thread:$0]  %s5, 32, %s76, [#allocation9]
    $region25: #{vae_forward.1} parent=1 // pred_fallthru
      _
    // Predicated region
    $region26: #{vae_forward.1} parent=1 // pred_check
      _
    $region27: #{vae_forward.1} parent=1 // pred_check_branch
      %80 = sbr.rel (0) target = $region29
    $region28: #{vae_forward.1} parent=1 // pred_region
      %s82 = ssub.s32 4096, 4096
      %83 = vsyncadd [#allocation9], %s82
      %s84 = sshll.u32 [#allocation10], 4
      %s85 = int_to_ptr.vmem [resolvable:$true] %s84
      %90 = dma.hbm_to_vmem [thread:$0]  %s6, 4096, %s85, [#allocation9], 128, 128, 8
    $region29: #{vae_forward.1} parent=1 // pred_fallthru
      _
    // Predicated region
    $region30: #{vae_forward.1} parent=1 // pred_check
      _
    $region31: #{vae_forward.1} parent=1 // pred_check_branch
      %92 = sbr.rel (0) target = $region33
    $region32: #{vae_forward.1} parent=1 // pred_region
      %s94 = ssub.s32 32, 32
      %95 = vsyncadd [#allocation12], %s94
      %s97 = sshll.u32 [#allocation11], 4
      %s98 = int_to_ptr.vmem [resolvable:$true] %s97
      %100 = dma.hbm_to_vmem [thread:$0]  %s7, 32, %s98, [#allocation12]
    $region33: #{vae_forward.1} parent=1 // pred_fallthru
      _
    // Predicated region
    $region34: #{vae_forward.1} parent=1 // pred_check
      _
    $region35: #{vae_forward.1} parent=1 // pred_check_branch
      %102 = sbr.rel (0) target = $region37
    $region36: #{vae_forward.1} parent=1 // pred_region
      %s104 = ssub.s32 2048, 2048
      %105 = vsyncadd [#allocation12], %s104
      %s106 = sshll.u32 [#allocation13], 4
      %s107 = int_to_ptr.vmem [resolvable:$true] %s106
      %112 = dma.hbm_to_vmem [thread:$0]  %s8, 2048, %s107, [#allocation12], 128, 128, 8
    $region37: #{vae_forward.1} parent=1 // pred_fallthru
      _
    // Predicated region
    $region38: #{vae_forward.1} parent=1 // pred_check
      _
    $region39: #{vae_forward.1} parent=1 // pred_check_branch
      %114 = sbr.rel (0) target = $region41
    $region40: #{vae_forward.1} parent=1 // pred_region
      %s116 = ssub.s32 32, 32
      %117 = vsyncadd [#allocation15], %s116
      %s119 = sshll.u32 [#allocation14], 4
      %s120 = int_to_ptr.vmem [resolvable:$true] %s119
      %122 = dma.hbm_to_vmem [thread:$0]  %s9, 32, %s120, [#allocation15]
    $region41: #{vae_forward.1} parent=1 // pred_fallthru
      _
    // Predicated region
    $region42: #{vae_forward.1} parent=1 // pred_check
      _
    $region43: #{vae_forward.1} parent=1 // pred_check_branch
      %124 = sbr.rel (0) target = $region45
    $region44: #{vae_forward.1} parent=1 // pred_region
      %s126 = ssub.s32 8192, 8192
      %127 = vsyncadd [#allocation15], %s126
      %s128 = sshll.u32 [#allocation16], 4
      %s129 = int_to_ptr.vmem [resolvable:$true] %s128
      %134 = dma.hbm_to_vmem [thread:$0]  %s10, 8192, %s129, [#allocation15], 256, 256, 16
    $region45: #{vae_forward.1} parent=1 // pred_fallthru
      _
    // Predicated region
    $region46: #{vae_forward.1} parent=1 // pred_check
      _
    $region47: #{vae_forward.1} parent=1 // pred_check_branch
      %136 = sbr.rel (0) target = $region49
    $region48: #{vae_forward.1} parent=1 // pred_region
      %s138 = ssub.s32 64, 64
      %139 = vsyncadd [#allocation18], %s138
      %s141 = sshll.u32 [#allocation17], 4
      %s142 = int_to_ptr.vmem [resolvable:$true] %s141
      %144 = dma.hbm_to_vmem [thread:$0]  %s11, 64, %s142, [#allocation18]
    $region49: #{vae_forward.1} parent=1 // pred_fallthru
      _
    // Predicated region
    $region50: #{vae_forward.1} parent=1 // pred_check
      _
    $region51: #{vae_forward.1} parent=1 // pred_check_branch
      %146 = sbr.rel (0) target = $region53
    $region52: #{vae_forward.1} parent=1 // pred_region
      %s148 = ssub.s32 61440, 61440
      %149 = vsyncadd [#allocation18], %s148
      %s150 = sshll.u32 [#allocation19], 4
      %s151 = int_to_ptr.vmem [resolvable:$true] %s150
      %156 = dma.hbm_to_vmem [thread:$0]  %s12, 61440, %s151, [#allocation18], 960, 960, 60
    $region53: #{vae_forward.1} parent=1 // pred_fallthru
      _
    // Predicated region
    $region54: #{vae_forward.1} parent=1 // pred_check
      _
    $region55: #{vae_forward.1} parent=1 // pred_check_branch
      %158 = sbr.rel (0) target = $region57
    $region56: #{vae_forward.1} parent=1 // pred_region
      %s160 = ssub.s32 240, 240
      %161 = vsyncadd [#allocation21], %s160
      %s163 = sshll.u32 [#allocation20], 4
      %s164 = int_to_ptr.vmem [resolvable:$true] %s163
      %166 = dma.hbm_to_vmem [thread:$0]  %s13, 240, %s164, [#allocation21]
    $region57: #{vae_forward.1} parent=1 // pred_fallthru
      _
    // Predicated region
    $region58: #{vae_forward.1} parent=1 // pred_check
      _
    $region59: #{vae_forward.1} parent=1 // pred_check_branch
      %168 = sbr.rel (0) target = $region61
    $region60: #{vae_forward.1} parent=1 // pred_region
      %169 = dma.done [#allocation3], 57600
    $region61: #{vae_forward.1} parent=1 // pred_fallthru
      _
    // Predicated region
    $region62: #{vae_forward.1} parent=1 // pred_check
      _
    $region63: #{vae_forward.1} parent=1 // pred_check_branch
      %171 = sbr.rel (0) target = $region65
    $region64: #{vae_forward.1} parent=1 // pred_region
      %172 = dma.done [#allocation6], 64
    $region65: #{vae_forward.1} parent=1 // pred_fallthru
      _
    // Predicated region
    $region66: #{vae_forward.1} parent=1 // pred_check
      _
    $region67: #{vae_forward.1} parent=1 // pred_check_branch
      %174 = sbr.rel (0) target = $region69
    $region68: #{vae_forward.1} parent=1 // pred_region
      %175 = dma.done [#allocation6], 8192
    $region69: #{vae_forward.1} parent=1 // pred_fallthru
      _
    // Predicated region
    $region70: #{vae_forward.1} parent=1 // pred_check
      _
    $region71: #{vae_forward.1} parent=1 // pred_check_branch
      %177 = sbr.rel (0) target = $region73
    $region72: #{vae_forward.1} parent=1 // pred_region
      %178 = dma.done [#allocation9], 32
    $region73: #{vae_forward.1} parent=1 // pred_fallthru
      _
    // Predicated region
    $region74: #{vae_forward.1} parent=1 // pred_check
      _
    $region75: #{vae_forward.1} parent=1 // pred_check_branch
      %180 = sbr.rel (0) target = $region77
    $region76: #{vae_forward.1} parent=1 // pred_region
      %181 = dma.done [#allocation9], 4096
    $region77: #{vae_forward.1} parent=1 // pred_fallthru
      _
    // Predicated region
    $region78: #{vae_forward.1} parent=1 // pred_check
      _
    $region79: #{vae_forward.1} parent=1 // pred_check_branch
      %183 = sbr.rel (0) target = $region81
    $region80: #{vae_forward.1} parent=1 // pred_region
      %184 = dma.done [#allocation12], 32
    $region81: #{vae_forward.1} parent=1 // pred_fallthru
      _
    // Predicated region
    $region82: #{vae_forward.1} parent=1 // pred_check
      _
    $region83: #{vae_forward.1} parent=1 // pred_check_branch
      %186 = sbr.rel (0) target = $region85
    $region84: #{vae_forward.1} parent=1 // pred_region
      %187 = dma.done [#allocation12], 2048
    $region85: #{vae_forward.1} parent=1 // pred_fallthru
      _
    // Predicated region
    $region86: #{vae_forward.1} parent=1 // pred_check
      _
    $region87: #{vae_forward.1} parent=1 // pred_check_branch
      %189 = sbr.rel (0) target = $region89
    $region88: #{vae_forward.1} parent=1 // pred_region
      %190 = dma.done [#allocation15], 32
    $region89: #{vae_forward.1} parent=1 // pred_fallthru
      _
    // Predicated region
    $region90: #{vae_forward.1} parent=1 // pred_check
      _
    $region91: #{vae_forward.1} parent=1 // pred_check_branch
      %192 = sbr.rel (0) target = $region93
    $region92: #{vae_forward.1} parent=1 // pred_region
      %193 = dma.done [#allocation15], 8192
    $region93: #{vae_forward.1} parent=1 // pred_fallthru
      _
    // Predicated region
    $region94: #{vae_forward.1} parent=1 // pred_check
      _
    $region95: #{vae_forward.1} parent=1 // pred_check_branch
      %195 = sbr.rel (0) target = $region97
    $region96: #{vae_forward.1} parent=1 // pred_region
      %196 = dma.done [#allocation18], 64
    $region97: #{vae_forward.1} parent=1 // pred_fallthru
      _
    // Predicated region
    $region98: #{vae_forward.1} parent=1 // pred_check
      _
    $region99: #{vae_forward.1} parent=1 // pred_check_branch
      %198 = sbr.rel (0) target = $region101
    $region100: #{vae_forward.1} parent=1 // pred_region
      %199 = dma.done [#allocation18], 61440
    $region101: #{vae_forward.1} parent=1 // pred_fallthru
      _
    // Predicated region
    $region102: #{vae_forward.1} parent=1 // pred_check
      _
    $region103: #{vae_forward.1} parent=1 // pred_check_branch
      %201 = sbr.rel (0) target = $region105
    $region104: #{vae_forward.1} parent=1 // pred_region
      %202 = dma.done [#allocation21], 240
    $region105: #{vae_forward.1} parent=1 // pred_fallthru
      _
    %v204 = vld [vmem:[%s0] sm:$0xff]
    %v205 = vld [vmem:[%s0 + $0x8] sm:$0xff]
    %v206 = vld [vmem:[%s0 + $0x10] sm:$0xff]
    %v207 = vld [vmem:[%s0 + $0x18] sm:$0xff]
    %v208 = vld [vmem:[%s0 + $0x20] sm:$0xff]
    %v209 = vld [vmem:[%s0 + $0x28] sm:$0xff]
    %v210 = vld [vmem:[%s0 + $0x30] sm:$0xff]
    %v211 = vld [vmem:[%s0 + $0x38] sm:$0xf]
    %v212 = vld [vmem:[%s0 + $0x3c] sm:$0xff]
    %v213 = vld [vmem:[%s0 + $0x44] sm:$0xff]
    %v214 = vld [vmem:[%s0 + $0x4c] sm:$0xff]
    %v215 = vld [vmem:[%s0 + $0x54] sm:$0xff]
    %v216 = vld [vmem:[%s0 + $0x5c] sm:$0xff]
    %v217 = vld [vmem:[%s0 + $0x64] sm:$0xff]
    %v218 = vld [vmem:[%s0 + $0x6c] sm:$0xff]
    %v219 = vld [vmem:[%s0 + $0x74] sm:$0xf]
    %v220 = vld [vmem:[#allocation2] sm:$0xff]
    %v221 = vld [vmem:[#allocation2 + $0x8] sm:$0xff]
    %v222 = vld [vmem:[#allocation2 + $0x10] sm:$0xff]
    %v223 = vld [vmem:[#allocation2 + $0x18] sm:$0xff]
    %v224 = vld [vmem:[#allocation2 + $0x20] sm:$0xff]
    %v225 = vld [vmem:[#allocation2 + $0x28] sm:$0xff]
    %v226 = vld [vmem:[#allocation2 + $0x30] sm:$0xff]
    %v227 = vld [vmem:[#allocation2 + $0x38] sm:$0xff]
    %v228 = vld [vmem:[#allocation2 + $0x40] sm:$0xff]
    %v229 = vld [vmem:[#allocation2 + $0x48] sm:$0xff]
    %v230 = vld [vmem:[#allocation2 + $0x50] sm:$0xff]
    %v231 = vld [vmem:[#allocation2 + $0x58] sm:$0xff]
    %v232 = vld [vmem:[#allocation2 + $0x60] sm:$0xff]
    %v233 = vld [vmem:[#allocation2 + $0x68] sm:$0xff]
    %v234 = vld [vmem:[#allocation2 + $0x70] sm:$0xff]
    %v235 = vld [vmem:[#allocation2 + $0x78] sm:$0xff]
    %v236 = vld [vmem:[#allocation2 + $0x80] sm:$0xff]
    %v237 = vld [vmem:[#allocation2 + $0x88] sm:$0xff]
    %v238 = vld [vmem:[#allocation2 + $0x90] sm:$0xff]
    %v239 = vld [vmem:[#allocation2 + $0x98] sm:$0xff]
    %v240 = vld [vmem:[#allocation2 + $0xa0] sm:$0xff]
    %v241 = vld [vmem:[#allocation2 + $0xa8] sm:$0xff]
    %v242 = vld [vmem:[#allocation2 + $0xb0] sm:$0xff]
    %v243 = vld [vmem:[#allocation2 + $0xb8] sm:$0xff]
    %v244 = vld [vmem:[#allocation2 + $0xc0] sm:$0xff]
    %v245 = vld [vmem:[#allocation2 + $0xc8] sm:$0xff]
    %v246 = vld [vmem:[#allocation2 + $0xd0] sm:$0xff]
    %v247 = vld [vmem:[#allocation2 + $0xd8] sm:$0xff]
    %v248 = vld [vmem:[#allocation2 + $0xe0] sm:$0xff]
    %v249 = vld [vmem:[#allocation2 + $0xe8] sm:$0xff]
    %v250 = vld [vmem:[#allocation2 + $0xf0] sm:$0xff]
    %v251 = vld [vmem:[#allocation2 + $0xf8] sm:$0xff]
    %v252 = vld [vmem:[#allocation2 + $0x100] sm:$0xff]
    %v253 = vld [vmem:[#allocation2 + $0x108] sm:$0xff]
    %v254 = vld [vmem:[#allocation2 + $0x110] sm:$0xff]
    %v255 = vld [vmem:[#allocation2 + $0x118] sm:$0xff]
    %v256 = vld [vmem:[#allocation2 + $0x120] sm:$0xff]
    %v257 = vld [vmem:[#allocation2 + $0x128] sm:$0xff]
    %v258 = vld [vmem:[#allocation2 + $0x130] sm:$0xff]
    %v259 = vld [vmem:[#allocation2 + $0x138] sm:$0xff]
    %v260 = vld [vmem:[#allocation2 + $0x140] sm:$0xff]
    %v261 = vld [vmem:[#allocation2 + $0x148] sm:$0xff]
    %v262 = vld [vmem:[#allocation2 + $0x150] sm:$0xff]
    %v263 = vld [vmem:[#allocation2 + $0x158] sm:$0xff]
    %v264 = vld [vmem:[#allocation2 + $0x160] sm:$0xff]
    %v265 = vld [vmem:[#allocation2 + $0x168] sm:$0xff]
    %v266 = vld [vmem:[#allocation2 + $0x170] sm:$0xff]
    %v267 = vld [vmem:[#allocation2 + $0x178] sm:$0xff]
    %v268 = vld [vmem:[#allocation2 + $0x180] sm:$0xff]
    %v269 = vld [vmem:[#allocation2 + $0x188] sm:$0xff]
    %v270 = vld [vmem:[#allocation2 + $0x190] sm:$0xff]
    %v271 = vld [vmem:[#allocation2 + $0x198] sm:$0xff]
    %v272 = vld [vmem:[#allocation2 + $0x1a0] sm:$0xff]
    %v273 = vld [vmem:[#allocation2 + $0x1a8] sm:$0xff]
    %v274 = vld [vmem:[#allocation2 + $0x1b0] sm:$0xff]
    %v275 = vld [vmem:[#allocation2 + $0x1b8] sm:$0xff]
    %v276 = vld [vmem:[#allocation2 + $0x1c0] sm:$0xff]
    %v277 = vld [vmem:[#allocation2 + $0x1c8] sm:$0xff]
    %v278 = vld [vmem:[#allocation2 + $0x1d0] sm:$0xff]
    %v279 = vld [vmem:[#allocation2 + $0x1d8] sm:$0xff]
    %v280 = vld [vmem:[#allocation2 + $0x1e0] sm:$0xff]
    %v281 = vld [vmem:[#allocation2 + $0x1e8] sm:$0xff]
    %v282 = vld [vmem:[#allocation2 + $0x1f0] sm:$0xff]
    %v283 = vld [vmem:[#allocation2 + $0x1f8] sm:$0xff]
    %v284 = vld [vmem:[#allocation2 + $0x200] sm:$0xff]
    %v285 = vld [vmem:[#allocation2 + $0x208] sm:$0xff]
    %v286 = vld [vmem:[#allocation2 + $0x210] sm:$0xff]
    %v287 = vld [vmem:[#allocation2 + $0x218] sm:$0xff]
    %v288 = vld [vmem:[#allocation2 + $0x220] sm:$0xff]
    %v289 = vld [vmem:[#allocation2 + $0x228] sm:$0xff]
    %v290 = vld [vmem:[#allocation2 + $0x230] sm:$0xff]
    %v291 = vld [vmem:[#allocation2 + $0x238] sm:$0xff]
    %v292 = vld [vmem:[#allocation2 + $0x240] sm:$0xff]
    %v293 = vld [vmem:[#allocation2 + $0x248] sm:$0xff]
    %v294 = vld [vmem:[#allocation2 + $0x250] sm:$0xff]
    %v295 = vld [vmem:[#allocation2 + $0x258] sm:$0xff]
    %v296 = vld [vmem:[#allocation2 + $0x260] sm:$0xff]
    %v297 = vld [vmem:[#allocation2 + $0x268] sm:$0xff]
    %v298 = vld [vmem:[#allocation2 + $0x270] sm:$0xff]
    %v299 = vld [vmem:[#allocation2 + $0x278] sm:$0xff]
    %v300 = vld [vmem:[#allocation2 + $0x280] sm:$0xff]
    %v301 = vld [vmem:[#allocation2 + $0x288] sm:$0xff]
    %v302 = vld [vmem:[#allocation2 + $0x290] sm:$0xff]
    %v303 = vld [vmem:[#allocation2 + $0x298] sm:$0xff]
    %v304 = vld [vmem:[#allocation2 + $0x2a0] sm:$0xff]
    %v305 = vld [vmem:[#allocation2 + $0x2a8] sm:$0xff]
    %v306 = vld [vmem:[#allocation2 + $0x2b0] sm:$0xff]
    %v307 = vld [vmem:[#allocation2 + $0x2b8] sm:$0xff]
    %v308 = vld [vmem:[#allocation2 + $0x2c0] sm:$0xff]
    %v309 = vld [vmem:[#allocation2 + $0x2c8] sm:$0xff]
    %v310 = vld [vmem:[#allocation2 + $0x2d0] sm:$0xff]
    %v311 = vld [vmem:[#allocation2 + $0x2d8] sm:$0xff]
    %v312 = vld [vmem:[#allocation2 + $0x2e0] sm:$0xff]
    %v313 = vld [vmem:[#allocation2 + $0x2e8] sm:$0xff]
    %v314 = vld [vmem:[#allocation2 + $0x2f0] sm:$0xff]
    %v315 = vld [vmem:[#allocation2 + $0x2f8] sm:$0xff]
    %v316 = vld [vmem:[#allocation2 + $0x300] sm:$0xff]
    %v317 = vld [vmem:[#allocation2 + $0x308] sm:$0xff]
    %v318 = vld [vmem:[#allocation2 + $0x310] sm:$0xff]
    %v319 = vld [vmem:[#allocation2 + $0x318] sm:$0xff]
    %v320 = vld [vmem:[#allocation2 + $0x320] sm:$0xff]
    %v321 = vld [vmem:[#allocation2 + $0x328] sm:$0xff]
    %v322 = vld [vmem:[#allocation2 + $0x330] sm:$0xff]
    %v323 = vld [vmem:[#allocation2 + $0x338] sm:$0xff]
    %v324 = vld [vmem:[#allocation2 + $0x340] sm:$0xff]
    %v325 = vld [vmem:[#allocation2 + $0x348] sm:$0xff]
    %v326 = vld [vmem:[#allocation2 + $0x350] sm:$0xff]
    %v327 = vld [vmem:[#allocation2 + $0x358] sm:$0xff]
    %v328 = vld [vmem:[#allocation2 + $0x360] sm:$0xff]
    %v329 = vld [vmem:[#allocation2 + $0x368] sm:$0xff]
    %v330 = vld [vmem:[#allocation2 + $0x370] sm:$0xff]
    %v331 = vld [vmem:[#allocation2 + $0x378] sm:$0xff]
    %v332 = vld [vmem:[#allocation2 + $0x380] sm:$0xff]
    %v333 = vld [vmem:[#allocation2 + $0x388] sm:$0xff]
    %v334 = vld [vmem:[#allocation2 + $0x390] sm:$0xff]
    %v335 = vld [vmem:[#allocation2 + $0x398] sm:$0xff]
    %v336 = vld [vmem:[#allocation2 + $0x3a0] sm:$0xff]
    %v337 = vld [vmem:[#allocation2 + $0x3a8] sm:$0xff]
    %v338 = vld [vmem:[#allocation2 + $0x3b0] sm:$0xff]
    %v339 = vld [vmem:[#allocation2 + $0x3b8] sm:$0xff]
    %v340 = vld [vmem:[#allocation2 + $0x3c0] sm:$0xff]
    %v341 = vld [vmem:[#allocation2 + $0x3c8] sm:$0xff]
    %v342 = vld [vmem:[#allocation2 + $0x3d0] sm:$0xff]
    %v343 = vld [vmem:[#allocation2 + $0x3d8] sm:$0xff]
    %v344 = vld [vmem:[#allocation2 + $0x3e0] sm:$0xff]
    %v345 = vld [vmem:[#allocation2 + $0x3e8] sm:$0xff]
    %v346 = vld [vmem:[#allocation2 + $0x3f0] sm:$0xff]
    %v347 = vld [vmem:[#allocation2 + $0x3f8] sm:$0xff]
    %v348 = vld [vmem:[#allocation2 + $0x400] sm:$0xff]
    %v349 = vld [vmem:[#allocation2 + $0x408] sm:$0xff]
    %v350 = vld [vmem:[#allocation2 + $0x410] sm:$0xff]
    %v351 = vld [vmem:[#allocation2 + $0x418] sm:$0xff]
    %v352 = vld [vmem:[#allocation2 + $0x420] sm:$0xff]
    %v353 = vld [vmem:[#allocation2 + $0x428] sm:$0xff]
    %v354 = vld [vmem:[#allocation2 + $0x430] sm:$0xff]
    %v355 = vld [vmem:[#allocation2 + $0x438] sm:$0xff]
    %v356 = vld [vmem:[#allocation2 + $0x440] sm:$0xff]
    %v357 = vld [vmem:[#allocation2 + $0x448] sm:$0xff]
    %v358 = vld [vmem:[#allocation2 + $0x450] sm:$0xff]
    %v359 = vld [vmem:[#allocation2 + $0x458] sm:$0xff]
    %v360 = vld [vmem:[#allocation2 + $0x460] sm:$0xff]
    %v361 = vld [vmem:[#allocation2 + $0x468] sm:$0xff]
    %v362 = vld [vmem:[#allocation2 + $0x470] sm:$0xff]
    %v363 = vld [vmem:[#allocation2 + $0x478] sm:$0xff]
    %v364 = vld [vmem:[#allocation2 + $0x480] sm:$0xff]
    %v365 = vld [vmem:[#allocation2 + $0x488] sm:$0xff]
    %v366 = vld [vmem:[#allocation2 + $0x490] sm:$0xff]
    %v367 = vld [vmem:[#allocation2 + $0x498] sm:$0xff]
    %v368 = vld [vmem:[#allocation2 + $0x4a0] sm:$0xff]
    %v369 = vld [vmem:[#allocation2 + $0x4a8] sm:$0xff]
    %v370 = vld [vmem:[#allocation2 + $0x4b0] sm:$0xff]
    %v371 = vld [vmem:[#allocation2 + $0x4b8] sm:$0xff]
    %v372 = vld [vmem:[#allocation2 + $0x4c0] sm:$0xff]
    %v373 = vld [vmem:[#allocation2 + $0x4c8] sm:$0xff]
    %v374 = vld [vmem:[#allocation2 + $0x4d0] sm:$0xff]
    %v375 = vld [vmem:[#allocation2 + $0x4d8] sm:$0xff]
    %v376 = vld [vmem:[#allocation2 + $0x4e0] sm:$0xff]
    %v377 = vld [vmem:[#allocation2 + $0x4e8] sm:$0xff]
    %v378 = vld [vmem:[#allocation2 + $0x4f0] sm:$0xff]
    %v379 = vld [vmem:[#allocation2 + $0x4f8] sm:$0xff]
    %v380 = vld [vmem:[#allocation2 + $0x500] sm:$0xff]
    %v381 = vld [vmem:[#allocation2 + $0x508] sm:$0xff]
    %v382 = vld [vmem:[#allocation2 + $0x510] sm:$0xff]
    %v383 = vld [vmem:[#allocation2 + $0x518] sm:$0xff]
    %v384 = vld [vmem:[#allocation2 + $0x520] sm:$0xff]
    %v385 = vld [vmem:[#allocation2 + $0x528] sm:$0xff]
    %v386 = vld [vmem:[#allocation2 + $0x530] sm:$0xff]
    %v387 = vld [vmem:[#allocation2 + $0x538] sm:$0xff]
    %v388 = vld [vmem:[#allocation2 + $0x540] sm:$0xff]
    %v389 = vld [vmem:[#allocation2 + $0x548] sm:$0xff]
    %v390 = vld [vmem:[#allocation2 + $0x550] sm:$0xff]
    %v391 = vld [vmem:[#allocation2 + $0x558] sm:$0xff]
    %v392 = vld [vmem:[#allocation2 + $0x560] sm:$0xff]
    %v393 = vld [vmem:[#allocation2 + $0x568] sm:$0xff]
    %v394 = vld [vmem:[#allocation2 + $0x570] sm:$0xff]
    %v395 = vld [vmem:[#allocation2 + $0x578] sm:$0xff]
    %v396 = vld [vmem:[#allocation2 + $0x580] sm:$0xff]
    %v397 = vld [vmem:[#allocation2 + $0x588] sm:$0xff]
    %v398 = vld [vmem:[#allocation2 + $0x590] sm:$0xff]
    %v399 = vld [vmem:[#allocation2 + $0x598] sm:$0xff]
    %v400 = vld [vmem:[#allocation2 + $0x5a0] sm:$0xff]
    %v401 = vld [vmem:[#allocation2 + $0x5a8] sm:$0xff]
    %v402 = vld [vmem:[#allocation2 + $0x5b0] sm:$0xff]
    %v403 = vld [vmem:[#allocation2 + $0x5b8] sm:$0xff]
    %v404 = vld [vmem:[#allocation2 + $0x5c0] sm:$0xff]
    %v405 = vld [vmem:[#allocation2 + $0x5c8] sm:$0xff]
    %v406 = vld [vmem:[#allocation2 + $0x5d0] sm:$0xff]
    %v407 = vld [vmem:[#allocation2 + $0x5d8] sm:$0xff]
    %v408 = vld [vmem:[#allocation2 + $0x5e0] sm:$0xff]
    %v409 = vld [vmem:[#allocation2 + $0x5e8] sm:$0xff]
    %v410 = vld [vmem:[#allocation2 + $0x5f0] sm:$0xff]
    %v411 = vld [vmem:[#allocation2 + $0x5f8] sm:$0xff]
    %v412 = vld [vmem:[#allocation2 + $0x600] sm:$0xff]
    %v413 = vld [vmem:[#allocation2 + $0x608] sm:$0xff]
    %v414 = vld [vmem:[#allocation2 + $0x610] sm:$0xff]
    %v415 = vld [vmem:[#allocation2 + $0x618] sm:$0xff]
    %v416 = vld [vmem:[#allocation2 + $0x620] sm:$0xff]
    %v417 = vld [vmem:[#allocation2 + $0x628] sm:$0xff]
    %v418 = vld [vmem:[#allocation2 + $0x630] sm:$0xff]
    %v419 = vld [vmem:[#allocation2 + $0x638] sm:$0xff]
    %v420 = vld [vmem:[#allocation2 + $0x640] sm:$0xff]
    %v421 = vld [vmem:[#allocation2 + $0x648] sm:$0xff]
    %v422 = vld [vmem:[#allocation2 + $0x650] sm:$0xff]
    %v423 = vld [vmem:[#allocation2 + $0x658] sm:$0xff]
    %v424 = vld [vmem:[#allocation2 + $0x660] sm:$0xff]
    %v425 = vld [vmem:[#allocation2 + $0x668] sm:$0xff]
    %v426 = vld [vmem:[#allocation2 + $0x670] sm:$0xff]
    %v427 = vld [vmem:[#allocation2 + $0x678] sm:$0xff]
    %v428 = vld [vmem:[#allocation2 + $0x680] sm:$0xff]
    %v429 = vld [vmem:[#allocation2 + $0x688] sm:$0xff]
    %v430 = vld [vmem:[#allocation2 + $0x690] sm:$0xff]
    %v431 = vld [vmem:[#allocation2 + $0x698] sm:$0xff]
    %v432 = vld [vmem:[#allocation2 + $0x6a0] sm:$0xff]
    %v433 = vld [vmem:[#allocation2 + $0x6a8] sm:$0xff]
    %v434 = vld [vmem:[#allocation2 + $0x6b0] sm:$0xff]
    %v435 = vld [vmem:[#allocation2 + $0x6b8] sm:$0xff]
    %v436 = vld [vmem:[#allocation2 + $0x6c0] sm:$0xff]
    %v437 = vld [vmem:[#allocation2 + $0x6c8] sm:$0xff]
    %v438 = vld [vmem:[#allocation2 + $0x6d0] sm:$0xff]
    %v439 = vld [vmem:[#allocation2 + $0x6d8] sm:$0xff]
    %v440 = vld [vmem:[#allocation2 + $0x6e0] sm:$0xff]
    %v441 = vld [vmem:[#allocation2 + $0x6e8] sm:$0xff]
    %v442 = vld [vmem:[#allocation2 + $0x6f0] sm:$0xff]
    %v443 = vld [vmem:[#allocation2 + $0x6f8] sm:$0xff]
    %v444 = vld [vmem:[#allocation2 + $0x700] sm:$0xff]
    %v445 = vld [vmem:[#allocation2 + $0x708] sm:$0xff]
    %v446 = vld [vmem:[#allocation2 + $0x710] sm:$0xff]
    %v447 = vld [vmem:[#allocation2 + $0x718] sm:$0xff]
    %v448 = vld [vmem:[#allocation2 + $0x720] sm:$0xff]
    %v449 = vld [vmem:[#allocation2 + $0x728] sm:$0xff]
    %v450 = vld [vmem:[#allocation2 + $0x730] sm:$0xff]
    %v451 = vld [vmem:[#allocation2 + $0x738] sm:$0xff]
    %v452 = vld [vmem:[#allocation2 + $0x740] sm:$0xff]
    %v453 = vld [vmem:[#allocation2 + $0x748] sm:$0xff]
    %v454 = vld [vmem:[#allocation2 + $0x750] sm:$0xff]
    %v455 = vld [vmem:[#allocation2 + $0x758] sm:$0xff]
    %v456 = vld [vmem:[#allocation2 + $0x760] sm:$0xff]
    %v457 = vld [vmem:[#allocation2 + $0x768] sm:$0xff]
    %v458 = vld [vmem:[#allocation2 + $0x770] sm:$0xff]
    %v459 = vld [vmem:[#allocation2 + $0x778] sm:$0xff]
    %v460 = vld [vmem:[#allocation2 + $0x780] sm:$0xff]
    %v461 = vld [vmem:[#allocation2 + $0x788] sm:$0xff]
    %v462 = vld [vmem:[#allocation2 + $0x790] sm:$0xff]
    %v463 = vld [vmem:[#allocation2 + $0x798] sm:$0xff]
    %v464 = vld [vmem:[#allocation2 + $0x7a0] sm:$0xff]
    %v465 = vld [vmem:[#allocation2 + $0x7a8] sm:$0xff]
    %v466 = vld [vmem:[#allocation2 + $0x7b0] sm:$0xff]
    %v467 = vld [vmem:[#allocation2 + $0x7b8] sm:$0xff]
    %v468 = vld [vmem:[#allocation2 + $0x7c0] sm:$0xff]
    %v469 = vld [vmem:[#allocation2 + $0x7c8] sm:$0xff]
    %v470 = vld [vmem:[#allocation2 + $0x7d0] sm:$0xff]
    %v471 = vld [vmem:[#allocation2 + $0x7d8] sm:$0xff]
    %v472 = vld [vmem:[#allocation2 + $0x7e0] sm:$0xff]
    %v473 = vld [vmem:[#allocation2 + $0x7e8] sm:$0xff]
    %v474 = vld [vmem:[#allocation2 + $0x7f0] sm:$0xff]
    %v475 = vld [vmem:[#allocation2 + $0x7f8] sm:$0xff]
    %v476 = vld [vmem:[#allocation2 + $0x800] sm:$0xff]
    %v477 = vld [vmem:[#allocation2 + $0x808] sm:$0xff]
    %v478 = vld [vmem:[#allocation2 + $0x810] sm:$0xff]
    %v479 = vld [vmem:[#allocation2 + $0x818] sm:$0xff]
    %v480 = vld [vmem:[#allocation2 + $0x820] sm:$0xff]
    %v481 = vld [vmem:[#allocation2 + $0x828] sm:$0xff]
    %v482 = vld [vmem:[#allocation2 + $0x830] sm:$0xff]
    %v483 = vld [vmem:[#allocation2 + $0x838] sm:$0xff]
    %v484 = vld [vmem:[#allocation2 + $0x840] sm:$0xff]
    %v485 = vld [vmem:[#allocation2 + $0x848] sm:$0xff]
    %v486 = vld [vmem:[#allocation2 + $0x850] sm:$0xff]
    %v487 = vld [vmem:[#allocation2 + $0x858] sm:$0xff]
    %v488 = vld [vmem:[#allocation2 + $0x860] sm:$0xff]
    %v489 = vld [vmem:[#allocation2 + $0x868] sm:$0xff]
    %v490 = vld [vmem:[#allocation2 + $0x870] sm:$0xff]
    %v491 = vld [vmem:[#allocation2 + $0x878] sm:$0xff]
    %v492 = vld [vmem:[#allocation2 + $0x880] sm:$0xff]
    %v493 = vld [vmem:[#allocation2 + $0x888] sm:$0xff]
    %v494 = vld [vmem:[#allocation2 + $0x890] sm:$0xff]
    %v495 = vld [vmem:[#allocation2 + $0x898] sm:$0xff]
    %v496 = vld [vmem:[#allocation2 + $0x8a0] sm:$0xff]
    %v497 = vld [vmem:[#allocation2 + $0x8a8] sm:$0xff]
    %v498 = vld [vmem:[#allocation2 + $0x8b0] sm:$0xff]
    %v499 = vld [vmem:[#allocation2 + $0x8b8] sm:$0xff]
    %v500 = vld [vmem:[#allocation2 + $0x8c0] sm:$0xff]
    %v501 = vld [vmem:[#allocation2 + $0x8c8] sm:$0xff]
    %v502 = vld [vmem:[#allocation2 + $0x8d0] sm:$0xff]
    %v503 = vld [vmem:[#allocation2 + $0x8d8] sm:$0xff]
    %v504 = vld [vmem:[#allocation2 + $0x8e0] sm:$0xff]
    %v505 = vld [vmem:[#allocation2 + $0x8e8] sm:$0xff]
    %v506 = vld [vmem:[#allocation2 + $0x8f0] sm:$0xff]
    %v507 = vld [vmem:[#allocation2 + $0x8f8] sm:$0xff]
    %v508 = vld [vmem:[#allocation2 + $0x900] sm:$0xff]
    %v509 = vld [vmem:[#allocation2 + $0x908] sm:$0xff]
    %v510 = vld [vmem:[#allocation2 + $0x910] sm:$0xff]
    %v511 = vld [vmem:[#allocation2 + $0x918] sm:$0xff]
    %v512 = vld [vmem:[#allocation2 + $0x920] sm:$0xff]
    %v513 = vld [vmem:[#allocation2 + $0x928] sm:$0xff]
    %v514 = vld [vmem:[#allocation2 + $0x930] sm:$0xff]
    %v515 = vld [vmem:[#allocation2 + $0x938] sm:$0xff]
    %v516 = vld [vmem:[#allocation2 + $0x940] sm:$0xff]
    %v517 = vld [vmem:[#allocation2 + $0x948] sm:$0xff]
    %v518 = vld [vmem:[#allocation2 + $0x950] sm:$0xff]
    %v519 = vld [vmem:[#allocation2 + $0x958] sm:$0xff]
    %v520 = vld [vmem:[#allocation2 + $0x960] sm:$0xff]
    %v521 = vld [vmem:[#allocation2 + $0x968] sm:$0xff]
    %v522 = vld [vmem:[#allocation2 + $0x970] sm:$0xff]
    %v523 = vld [vmem:[#allocation2 + $0x978] sm:$0xff]
    %v524 = vld [vmem:[#allocation2 + $0x980] sm:$0xff]
    %v525 = vld [vmem:[#allocation2 + $0x988] sm:$0xff]
    %v526 = vld [vmem:[#allocation2 + $0x990] sm:$0xff]
    %v527 = vld [vmem:[#allocation2 + $0x998] sm:$0xff]
    %v528 = vld [vmem:[#allocation2 + $0x9a0] sm:$0xff]
    %v529 = vld [vmem:[#allocation2 + $0x9a8] sm:$0xff]
    %v530 = vld [vmem:[#allocation2 + $0x9b0] sm:$0xff]
    %v531 = vld [vmem:[#allocation2 + $0x9b8] sm:$0xff]
    %v532 = vld [vmem:[#allocation2 + $0x9c0] sm:$0xff]
    %v533 = vld [vmem:[#allocation2 + $0x9c8] sm:$0xff]
    %v534 = vld [vmem:[#allocation2 + $0x9d0] sm:$0xff]
    %v535 = vld [vmem:[#allocation2 + $0x9d8] sm:$0xff]
    %v536 = vld [vmem:[#allocation2 + $0x9e0] sm:$0xff]
    %v537 = vld [vmem:[#allocation2 + $0x9e8] sm:$0xff]
    %v538 = vld [vmem:[#allocation2 + $0x9f0] sm:$0xff]
    %v539 = vld [vmem:[#allocation2 + $0x9f8] sm:$0xff]
    %v540 = vld [vmem:[#allocation2 + $0xa00] sm:$0xff]
    %v541 = vld [vmem:[#allocation2 + $0xa08] sm:$0xff]
    %v542 = vld [vmem:[#allocation2 + $0xa10] sm:$0xff]
    %v543 = vld [vmem:[#allocation2 + $0xa18] sm:$0xff]
    %v544 = vld [vmem:[#allocation2 + $0xa20] sm:$0xff]
    %v545 = vld [vmem:[#allocation2 + $0xa28] sm:$0xff]
    %v546 = vld [vmem:[#allocation2 + $0xa30] sm:$0xff]
    %v547 = vld [vmem:[#allocation2 + $0xa38] sm:$0xff]
    %v548 = vld [vmem:[#allocation2 + $0xa40] sm:$0xff]
    %v549 = vld [vmem:[#allocation2 + $0xa48] sm:$0xff]
    %v550 = vld [vmem:[#allocation2 + $0xa50] sm:$0xff]
    %v551 = vld [vmem:[#allocation2 + $0xa58] sm:$0xff]
    %v552 = vld [vmem:[#allocation2 + $0xa60] sm:$0xff]
    %v553 = vld [vmem:[#allocation2 + $0xa68] sm:$0xff]
    %v554 = vld [vmem:[#allocation2 + $0xa70] sm:$0xff]
    %v555 = vld [vmem:[#allocation2 + $0xa78] sm:$0xff]
    %v556 = vld [vmem:[#allocation2 + $0xa80] sm:$0xff]
    %v557 = vld [vmem:[#allocation2 + $0xa88] sm:$0xff]
    %v558 = vld [vmem:[#allocation2 + $0xa90] sm:$0xff]
    %v559 = vld [vmem:[#allocation2 + $0xa98] sm:$0xff]
    %v560 = vld [vmem:[#allocation2 + $0xaa0] sm:$0xff]
    %v561 = vld [vmem:[#allocation2 + $0xaa8] sm:$0xff]
    %v562 = vld [vmem:[#allocation2 + $0xab0] sm:$0xff]
    %v563 = vld [vmem:[#allocation2 + $0xab8] sm:$0xff]
    %v564 = vld [vmem:[#allocation2 + $0xac0] sm:$0xff]
    %v565 = vld [vmem:[#allocation2 + $0xac8] sm:$0xff]
    %v566 = vld [vmem:[#allocation2 + $0xad0] sm:$0xff]
    %v567 = vld [vmem:[#allocation2 + $0xad8] sm:$0xff]
    %v568 = vld [vmem:[#allocation2 + $0xae0] sm:$0xff]
    %v569 = vld [vmem:[#allocation2 + $0xae8] sm:$0xff]
    %v570 = vld [vmem:[#allocation2 + $0xaf0] sm:$0xff]
    %v571 = vld [vmem:[#allocation2 + $0xaf8] sm:$0xff]
    %v572 = vld [vmem:[#allocation2 + $0xb00] sm:$0xff]
    %v573 = vld [vmem:[#allocation2 + $0xb08] sm:$0xff]
    %v574 = vld [vmem:[#allocation2 + $0xb10] sm:$0xff]
    %v575 = vld [vmem:[#allocation2 + $0xb18] sm:$0xff]
    %v576 = vld [vmem:[#allocation2 + $0xb20] sm:$0xff]
    %v577 = vld [vmem:[#allocation2 + $0xb28] sm:$0xff]
    %v578 = vld [vmem:[#allocation2 + $0xb30] sm:$0xff]
    %v579 = vld [vmem:[#allocation2 + $0xb38] sm:$0xff]
    %v580 = vld [vmem:[#allocation2 + $0xb40] sm:$0xff]
    %v581 = vld [vmem:[#allocation2 + $0xb48] sm:$0xff]
    %v582 = vld [vmem:[#allocation2 + $0xb50] sm:$0xff]
    %v583 = vld [vmem:[#allocation2 + $0xb58] sm:$0xff]
    %v584 = vld [vmem:[#allocation2 + $0xb60] sm:$0xff]
    %v585 = vld [vmem:[#allocation2 + $0xb68] sm:$0xff]
    %v586 = vld [vmem:[#allocation2 + $0xb70] sm:$0xff]
    %v587 = vld [vmem:[#allocation2 + $0xb78] sm:$0xff]
    %v588 = vld [vmem:[#allocation2 + $0xb80] sm:$0xff]
    %v589 = vld [vmem:[#allocation2 + $0xb88] sm:$0xff]
    %v590 = vld [vmem:[#allocation2 + $0xb90] sm:$0xff]
    %v591 = vld [vmem:[#allocation2 + $0xb98] sm:$0xff]
    %v592 = vld [vmem:[#allocation2 + $0xba0] sm:$0xff]
    %v593 = vld [vmem:[#allocation2 + $0xba8] sm:$0xff]
    %v594 = vld [vmem:[#allocation2 + $0xbb0] sm:$0xff]
    %v595 = vld [vmem:[#allocation2 + $0xbb8] sm:$0xff]
    %v596 = vld [vmem:[#allocation2 + $0xbc0] sm:$0xff]
    %v597 = vld [vmem:[#allocation2 + $0xbc8] sm:$0xff]
    %v598 = vld [vmem:[#allocation2 + $0xbd0] sm:$0xff]
    %v599 = vld [vmem:[#allocation2 + $0xbd8] sm:$0xff]
    %v600 = vld [vmem:[#allocation2 + $0xbe0] sm:$0xff]
    %v601 = vld [vmem:[#allocation2 + $0xbe8] sm:$0xff]
    %v602 = vld [vmem:[#allocation2 + $0xbf0] sm:$0xff]
    %v603 = vld [vmem:[#allocation2 + $0xbf8] sm:$0xff]
    %v604 = vld [vmem:[#allocation2 + $0xc00] sm:$0xff]
    %v605 = vld [vmem:[#allocation2 + $0xc08] sm:$0xff]
    %v606 = vld [vmem:[#allocation2 + $0xc10] sm:$0xff]
    %v607 = vld [vmem:[#allocation2 + $0xc18] sm:$0xff]
    %v608 = vld [vmem:[#allocation2 + $0xc20] sm:$0xff]
    %v609 = vld [vmem:[#allocation2 + $0xc28] sm:$0xff]
    %v610 = vld [vmem:[#allocation2 + $0xc30] sm:$0xff]
    %v611 = vld [vmem:[#allocation2 + $0xc38] sm:$0xff]
    %v612 = vld [vmem:[#allocation2 + $0xc40] sm:$0xff]
    %v613 = vld [vmem:[#allocation2 + $0xc48] sm:$0xff]
    %v614 = vld [vmem:[#allocation2 + $0xc50] sm:$0xff]
    %v615 = vld [vmem:[#allocation2 + $0xc58] sm:$0xff]
    %v616 = vld [vmem:[#allocation2 + $0xc60] sm:$0xff]
    %v617 = vld [vmem:[#allocation2 + $0xc68] sm:$0xff]
    %v618 = vld [vmem:[#allocation2 + $0xc70] sm:$0xff]
    %v619 = vld [vmem:[#allocation2 + $0xc78] sm:$0xff]
    %v620 = vld [vmem:[#allocation2 + $0xc80] sm:$0xff]
    %v621 = vld [vmem:[#allocation2 + $0xc88] sm:$0xff]
    %v622 = vld [vmem:[#allocation2 + $0xc90] sm:$0xff]
    %v623 = vld [vmem:[#allocation2 + $0xc98] sm:$0xff]
    %v624 = vld [vmem:[#allocation2 + $0xca0] sm:$0xff]
    %v625 = vld [vmem:[#allocation2 + $0xca8] sm:$0xff]
    %v626 = vld [vmem:[#allocation2 + $0xcb0] sm:$0xff]
    %v627 = vld [vmem:[#allocation2 + $0xcb8] sm:$0xff]
    %v628 = vld [vmem:[#allocation2 + $0xcc0] sm:$0xff]
    %v629 = vld [vmem:[#allocation2 + $0xcc8] sm:$0xff]
    %v630 = vld [vmem:[#allocation2 + $0xcd0] sm:$0xff]
    %v631 = vld [vmem:[#allocation2 + $0xcd8] sm:$0xff]
    %v632 = vld [vmem:[#allocation2 + $0xce0] sm:$0xff]
    %v633 = vld [vmem:[#allocation2 + $0xce8] sm:$0xff]
    %v634 = vld [vmem:[#allocation2 + $0xcf0] sm:$0xff]
    %v635 = vld [vmem:[#allocation2 + $0xcf8] sm:$0xff]
    %v636 = vld [vmem:[#allocation2 + $0xd00] sm:$0xff]
    %v637 = vld [vmem:[#allocation2 + $0xd08] sm:$0xff]
    %v638 = vld [vmem:[#allocation2 + $0xd10] sm:$0xff]
    %v639 = vld [vmem:[#allocation2 + $0xd18] sm:$0xff]
    %v640 = vld [vmem:[#allocation2 + $0xd20] sm:$0xff]
    %v641 = vld [vmem:[#allocation2 + $0xd28] sm:$0xff]
    %v642 = vld [vmem:[#allocation2 + $0xd30] sm:$0xff]
    %v643 = vld [vmem:[#allocation2 + $0xd38] sm:$0xff]
    %v644 = vld [vmem:[#allocation2 + $0xd40] sm:$0xff]
    %v645 = vld [vmem:[#allocation2 + $0xd48] sm:$0xff]
    %v646 = vld [vmem:[#allocation2 + $0xd50] sm:$0xff]
    %v647 = vld [vmem:[#allocation2 + $0xd58] sm:$0xff]
    %v648 = vld [vmem:[#allocation2 + $0xd60] sm:$0xff]
    %v649 = vld [vmem:[#allocation2 + $0xd68] sm:$0xff]
    %v650 = vld [vmem:[#allocation2 + $0xd70] sm:$0xff]
    %v651 = vld [vmem:[#allocation2 + $0xd78] sm:$0xff]
    %v652 = vld [vmem:[#allocation2 + $0xd80] sm:$0xff]
    %v653 = vld [vmem:[#allocation2 + $0xd88] sm:$0xff]
    %v654 = vld [vmem:[#allocation2 + $0xd90] sm:$0xff]
    %v655 = vld [vmem:[#allocation2 + $0xd98] sm:$0xff]
    %v656 = vld [vmem:[#allocation2 + $0xda0] sm:$0xff]
    %v657 = vld [vmem:[#allocation2 + $0xda8] sm:$0xff]
    %v658 = vld [vmem:[#allocation2 + $0xdb0] sm:$0xff]
    %v659 = vld [vmem:[#allocation2 + $0xdb8] sm:$0xff]
    %v660 = vld [vmem:[#allocation2 + $0xdc0] sm:$0xff]
    %v661 = vld [vmem:[#allocation2 + $0xdc8] sm:$0xff]
    %v662 = vld [vmem:[#allocation2 + $0xdd0] sm:$0xff]
    %v663 = vld [vmem:[#allocation2 + $0xdd8] sm:$0xff]
    %v664 = vld [vmem:[#allocation2 + $0xde0] sm:$0xff]
    %v665 = vld [vmem:[#allocation2 + $0xde8] sm:$0xff]
    %v666 = vld [vmem:[#allocation2 + $0xdf0] sm:$0xff]
    %v667 = vld [vmem:[#allocation2 + $0xdf8] sm:$0xff]
    %v668 = vld [vmem:[#allocation2 + $0xe00] sm:$0xff]
    %v669 = vld [vmem:[#allocation2 + $0xe08] sm:$0xff]
    %v670 = vld [vmem:[#allocation5] sm:$0xf]
    %v672 = vlaneseq
    %v673 = vshrl.u32 %v672, 7
    %v674 = vsub.s32 0, %v673
    %v675 = vrot.slane %v670, %v674
    %v676 = vlaneseq
    %v677 = vshrl.u32 %v676, 7
    %v678 = vsub.s32 1, %v677
    %v679 = vrot.slane %v670, %v678
    %v680 = vlaneseq
    %v681 = vshrl.u32 %v680, 7
    %v682 = vsub.s32 2, %v681
    %v683 = vrot.slane %v670, %v682
    %v684 = vlaneseq
    %v685 = vshrl.u32 %v684, 7
    %v686 = vsub.s32 3, %v685
    %v687 = vrot.slane %v670, %v686
    %v708 = vunpack.c.l.b16 %v204
    %v709 = vunpack.c.h.b16 %v204
    %v710 = vunpack.c.l.b16 %v205
    %v711 = vunpack.c.h.b16 %v205
    %v712 = vunpack.c.l.b16 %v206
    %v713 = vunpack.c.h.b16 %v206
    %v714 = vunpack.c.l.b16 %v207
    %v715 = vunpack.c.h.b16 %v207
    %v716 = vunpack.c.l.b16 %v208
    %v717 = vunpack.c.h.b16 %v208
    %v718 = vunpack.c.l.b16 %v209
    %v719 = vunpack.c.h.b16 %v209
    %v720 = vunpack.c.l.b16 %v210
    %v721 = vunpack.c.h.b16 %v210
    %v722 = vunpack.c.l.b16 %v211
    %v723 = vunpack.c.l.b16 %v212
    %v724 = vunpack.c.h.b16 %v212
    %v725 = vunpack.c.l.b16 %v213
    %v726 = vunpack.c.h.b16 %v213
    %v727 = vunpack.c.l.b16 %v214
    %v728 = vunpack.c.h.b16 %v214
    %v729 = vunpack.c.l.b16 %v215
    %v730 = vunpack.c.h.b16 %v215
    %v731 = vunpack.c.l.b16 %v216
    %v732 = vunpack.c.h.b16 %v216
    %v733 = vunpack.c.l.b16 %v217
    %v734 = vunpack.c.h.b16 %v217
    %v735 = vunpack.c.l.b16 %v218
    %v736 = vunpack.c.h.b16 %v218
    %v737 = vunpack.c.l.b16 %v219
    %v738 = vpack.c.b16 %v723, %v708
    %v739 = vpack.c.b16 %v724, %v709
    %v740 = vpack.c.b16 %v725, %v710
    %v741 = vpack.c.b16 %v726, %v711
    %v742 = vpack.c.b16 %v727, %v712
    %v743 = vpack.c.b16 %v728, %v713
    %v744 = vpack.c.b16 %v729, %v714
    %v745 = vpack.c.b16 %v730, %v715
    %v746 = vpack.c.b16 %v731, %v716
    %v747 = vpack.c.b16 %v732, %v717
    %v748 = vpack.c.b16 %v733, %v718
    %v749 = vpack.c.b16 %v734, %v719
    %v750 = vpack.c.b16 %v735, %v720
    %v751 = vpack.c.b16 %v736, %v721
    %v752 = vpack.c.b16 %v737, %v722
    %v1217 = vunpack.c.l.b16 %v220
    %v1218 = vunpack.c.h.b16 %v220
    %v1219 = vunpack.c.l.b16 %v221
    %v1220 = vunpack.c.h.b16 %v221
    %v1221 = vunpack.c.l.b16 %v222
    %v1222 = vunpack.c.h.b16 %v222
    %v1223 = vunpack.c.l.b16 %v223
    %v1224 = vunpack.c.h.b16 %v223
    %v1225 = vunpack.c.l.b16 %v224
    %v1226 = vunpack.c.h.b16 %v224
    %v1227 = vunpack.c.l.b16 %v225
    %v1228 = vunpack.c.h.b16 %v225
    %v1229 = vunpack.c.l.b16 %v226
    %v1230 = vunpack.c.h.b16 %v226
    %v1231 = vunpack.c.l.b16 %v227
    %v1232 = vunpack.c.h.b16 %v227
    %v1233 = vunpack.c.l.b16 %v228
    %v1234 = vunpack.c.h.b16 %v228
    %v1235 = vunpack.c.l.b16 %v229
    %v1236 = vunpack.c.h.b16 %v229
    %v1237 = vunpack.c.l.b16 %v230
    %v1238 = vunpack.c.h.b16 %v230
    %v1239 = vunpack.c.l.b16 %v231
    %v1240 = vunpack.c.h.b16 %v231
    %v1241 = vunpack.c.l.b16 %v232
    %v1242 = vunpack.c.h.b16 %v232
    %v1243 = vunpack.c.l.b16 %v233
    %v1244 = vunpack.c.h.b16 %v233
    %v1245 = vunpack.c.l.b16 %v234
    %v1246 = vunpack.c.h.b16 %v234
    %v1247 = vunpack.c.l.b16 %v235
    %v1248 = vunpack.c.h.b16 %v235
    %v1249 = vunpack.c.l.b16 %v236
    %v1250 = vunpack.c.h.b16 %v236
    %v1251 = vunpack.c.l.b16 %v237
    %v1252 = vunpack.c.h.b16 %v237
    %v1253 = vunpack.c.l.b16 %v238
    %v1254 = vunpack.c.h.b16 %v238
    %v1255 = vunpack.c.l.b16 %v239
    %v1256 = vunpack.c.h.b16 %v239
    %v1257 = vunpack.c.l.b16 %v240
    %v1258 = vunpack.c.h.b16 %v240
    %v1259 = vunpack.c.l.b16 %v241
    %v1260 = vunpack.c.h.b16 %v241
    %v1261 = vunpack.c.l.b16 %v242
    %v1262 = vunpack.c.h.b16 %v242
    %v1263 = vunpack.c.l.b16 %v243
    %v1264 = vunpack.c.h.b16 %v243
    %v1265 = vunpack.c.l.b16 %v244
    %v1266 = vunpack.c.h.b16 %v244
    %v1267 = vunpack.c.l.b16 %v245
    %v1268 = vunpack.c.h.b16 %v245
    %v1269 = vunpack.c.l.b16 %v246
    %v1270 = vunpack.c.h.b16 %v246
    %v1271 = vunpack.c.l.b16 %v247
    %v1272 = vunpack.c.h.b16 %v247
    %v1273 = vunpack.c.l.b16 %v248
    %v1274 = vunpack.c.h.b16 %v248
    %v1275 = vunpack.c.l.b16 %v249
    %v1276 = vunpack.c.h.b16 %v249
    %v1277 = vunpack.c.l.b16 %v250
    %v1278 = vunpack.c.h.b16 %v250
    %v1279 = vunpack.c.l.b16 %v251
    %v1280 = vunpack.c.h.b16 %v251
    %v1281 = vunpack.c.l.b16 %v252
    %v1282 = vunpack.c.h.b16 %v252
    %v1283 = vunpack.c.l.b16 %v253
    %v1284 = vunpack.c.h.b16 %v253
    %v1285 = vunpack.c.l.b16 %v254
    %v1286 = vunpack.c.h.b16 %v254
    %v1287 = vunpack.c.l.b16 %v255
    %v1288 = vunpack.c.h.b16 %v255
    %v1289 = vunpack.c.l.b16 %v256
    %v1290 = vunpack.c.h.b16 %v256
    %v1291 = vunpack.c.l.b16 %v257
    %v1292 = vunpack.c.h.b16 %v257
    %v1293 = vunpack.c.l.b16 %v258
    %v1294 = vunpack.c.h.b16 %v258
    %v1295 = vunpack.c.l.b16 %v259
    %v1296 = vunpack.c.h.b16 %v259
    %v1297 = vunpack.c.l.b16 %v260
    %v1298 = vunpack.c.h.b16 %v260
    %v1299 = vunpack.c.l.b16 %v261
    %v1300 = vunpack.c.h.b16 %v261
    %v1301 = vunpack.c.l.b16 %v262
    %v1302 = vunpack.c.h.b16 %v262
    %v1303 = vunpack.c.l.b16 %v263
    %v1304 = vunpack.c.h.b16 %v263
    %v1305 = vunpack.c.l.b16 %v264
    %v1306 = vunpack.c.h.b16 %v264
    %v1307 = vunpack.c.l.b16 %v265
    %v1308 = vunpack.c.h.b16 %v265
    %v1309 = vunpack.c.l.b16 %v266
    %v1310 = vunpack.c.h.b16 %v266
    %v1311 = vunpack.c.l.b16 %v267
    %v1312 = vunpack.c.h.b16 %v267
    %v1313 = vunpack.c.l.b16 %v268
    %v1314 = vunpack.c.h.b16 %v268
    %v1315 = vunpack.c.l.b16 %v269
    %v1316 = vunpack.c.h.b16 %v269
    %v1317 = vunpack.c.l.b16 %v270
    %v1318 = vunpack.c.h.b16 %v270
    %v1319 = vunpack.c.l.b16 %v271
    %v1320 = vunpack.c.h.b16 %v271
    %v1321 = vunpack.c.l.b16 %v272
    %v1322 = vunpack.c.h.b16 %v272
    %v1323 = vunpack.c.l.b16 %v273
    %v1324 = vunpack.c.h.b16 %v273
    %v1325 = vunpack.c.l.b16 %v274
    %v1326 = vunpack.c.h.b16 %v274
    %v1327 = vunpack.c.l.b16 %v275
    %v1328 = vunpack.c.h.b16 %v275
    %v1329 = vunpack.c.l.b16 %v276
    %v1330 = vunpack.c.h.b16 %v276
    %v1331 = vunpack.c.l.b16 %v277
    %v1332 = vunpack.c.h.b16 %v277
    %v1333 = vunpack.c.l.b16 %v278
    %v1334 = vunpack.c.h.b16 %v278
    %v1335 = vunpack.c.l.b16 %v279
    %v1336 = vunpack.c.h.b16 %v279
    %v1337 = vunpack.c.l.b16 %v280
    %v1338 = vunpack.c.h.b16 %v280
    %v1339 = vunpack.c.l.b16 %v281
    %v1340 = vunpack.c.h.b16 %v281
    %v1341 = vunpack.c.l.b16 %v282
    %v1342 = vunpack.c.h.b16 %v282
    %v1343 = vunpack.c.l.b16 %v283
    %v1344 = vunpack.c.h.b16 %v283
    %v1345 = vunpack.c.l.b16 %v284
    %v1346 = vunpack.c.h.b16 %v284
    %v1347 = vunpack.c.l.b16 %v285
    %v1348 = vunpack.c.h.b16 %v285
    %v1349 = vunpack.c.l.b16 %v286
    %v1350 = vunpack.c.h.b16 %v286
    %v1351 = vunpack.c.l.b16 %v287
    %v1352 = vunpack.c.h.b16 %v287
    %v1353 = vunpack.c.l.b16 %v288
    %v1354 = vunpack.c.h.b16 %v288
    %v1355 = vunpack.c.l.b16 %v289
    %v1356 = vunpack.c.h.b16 %v289
    %v1357 = vunpack.c.l.b16 %v290
    %v1358 = vunpack.c.h.b16 %v290
    %v1359 = vunpack.c.l.b16 %v291
    %v1360 = vunpack.c.h.b16 %v291
    %v1361 = vunpack.c.l.b16 %v292
    %v1362 = vunpack.c.h.b16 %v292
    %v1363 = vunpack.c.l.b16 %v293
    %v1364 = vunpack.c.h.b16 %v293
    %v1365 = vunpack.c.l.b16 %v294
    %v1366 = vunpack.c.h.b16 %v294
    %v1367 = vunpack.c.l.b16 %v295
    %v1368 = vunpack.c.h.b16 %v295
    %v1369 = vunpack.c.l.b16 %v296
    %v1370 = vunpack.c.h.b16 %v296
    %v1371 = vunpack.c.l.b16 %v297
    %v1372 = vunpack.c.h.b16 %v297
    %v1373 = vunpack.c.l.b16 %v298
    %v1374 = vunpack.c.h.b16 %v298
    %v1375 = vunpack.c.l.b16 %v299
    %v1376 = vunpack.c.h.b16 %v299
    %v1377 = vunpack.c.l.b16 %v300
    %v1378 = vunpack.c.h.b16 %v300
    %v1379 = vunpack.c.l.b16 %v301
    %v1380 = vunpack.c.h.b16 %v301
    %v1381 = vunpack.c.l.b16 %v302
    %v1382 = vunpack.c.h.b16 %v302
    %v1383 = vunpack.c.l.b16 %v303
    %v1384 = vunpack.c.h.b16 %v303
    %v1385 = vunpack.c.l.b16 %v304
    %v1386 = vunpack.c.h.b16 %v304
    %v1387 = vunpack.c.l.b16 %v305
    %v1388 = vunpack.c.h.b16 %v305
    %v1389 = vunpack.c.l.b16 %v306
    %v1390 = vunpack.c.h.b16 %v306
    %v1391 = vunpack.c.l.b16 %v307
    %v1392 = vunpack.c.h.b16 %v307
    %v1393 = vunpack.c.l.b16 %v308
    %v1394 = vunpack.c.h.b16 %v308
    %v1395 = vunpack.c.l.b16 %v309
    %v1396 = vunpack.c.h.b16 %v309
    %v1397 = vunpack.c.l.b16 %v310
    %v1398 = vunpack.c.h.b16 %v310
    %v1399 = vunpack.c.l.b16 %v311
    %v1400 = vunpack.c.h.b16 %v311
    %v1401 = vunpack.c.l.b16 %v312
    %v1402 = vunpack.c.h.b16 %v312
    %v1403 = vunpack.c.l.b16 %v313
    %v1404 = vunpack.c.h.b16 %v313
    %v1405 = vunpack.c.l.b16 %v314
    %v1406 = vunpack.c.h.b16 %v314
    %v1407 = vunpack.c.l.b16 %v315
    %v1408 = vunpack.c.h.b16 %v315
    %v1409 = vunpack.c.l.b16 %v316
    %v1410 = vunpack.c.h.b16 %v316
    %v1411 = vunpack.c.l.b16 %v317
    %v1412 = vunpack.c.h.b16 %v317
    %v1413 = vunpack.c.l.b16 %v318
    %v1414 = vunpack.c.h.b16 %v318
    %v1415 = vunpack.c.l.b16 %v319
    %v1416 = vunpack.c.h.b16 %v319
    %v1417 = vunpack.c.l.b16 %v320
    %v1418 = vunpack.c.h.b16 %v320
    %v1419 = vunpack.c.l.b16 %v321
    %v1420 = vunpack.c.h.b16 %v321
    %v1421 = vunpack.c.l.b16 %v322
    %v1422 = vunpack.c.h.b16 %v322
    %v1423 = vunpack.c.l.b16 %v323
    %v1424 = vunpack.c.h.b16 %v323
    %v1425 = vunpack.c.l.b16 %v324
    %v1426 = vunpack.c.h.b16 %v324
    %v1427 = vunpack.c.l.b16 %v325
    %v1428 = vunpack.c.h.b16 %v325
    %v1429 = vunpack.c.l.b16 %v326
    %v1430 = vunpack.c.h.b16 %v326
    %v1431 = vunpack.c.l.b16 %v327
    %v1432 = vunpack.c.h.b16 %v327
    %v1433 = vunpack.c.l.b16 %v328
    %v1434 = vunpack.c.h.b16 %v328
    %v1435 = vunpack.c.l.b16 %v329
    %v1436 = vunpack.c.h.b16 %v329
    %v1437 = vunpack.c.l.b16 %v330
    %v1438 = vunpack.c.h.b16 %v330
    %v1439 = vunpack.c.l.b16 %v331
    %v1440 = vunpack.c.h.b16 %v331
    %v1441 = vunpack.c.l.b16 %v332
    %v1442 = vunpack.c.h.b16 %v332
    %v1443 = vunpack.c.l.b16 %v333
    %v1444 = vunpack.c.h.b16 %v333
    %v1445 = vunpack.c.l.b16 %v334
    %v1446 = vunpack.c.h.b16 %v334
    %v1447 = vunpack.c.l.b16 %v335
    %v1448 = vunpack.c.h.b16 %v335
    %v1449 = vunpack.c.l.b16 %v336
    %v1450 = vunpack.c.h.b16 %v336
    %v1451 = vunpack.c.l.b16 %v337
    %v1452 = vunpack.c.h.b16 %v337
    %v1453 = vunpack.c.l.b16 %v338
    %v1454 = vunpack.c.h.b16 %v338
    %v1455 = vunpack.c.l.b16 %v339
    %v1456 = vunpack.c.h.b16 %v339
    %v1457 = vunpack.c.l.b16 %v340
    %v1458 = vunpack.c.h.b16 %v340
    %v1459 = vunpack.c.l.b16 %v341
    %v1460 = vunpack.c.h.b16 %v341
    %v1461 = vunpack.c.l.b16 %v342
    %v1462 = vunpack.c.h.b16 %v342
    %v1463 = vunpack.c.l.b16 %v343
    %v1464 = vunpack.c.h.b16 %v343
    %v1465 = vunpack.c.l.b16 %v344
    %v1466 = vunpack.c.h.b16 %v344
    %v1467 = vunpack.c.l.b16 %v345
    %v1468 = vunpack.c.h.b16 %v345
    %v1469 = vunpack.c.l.b16 %v346
    %v1470 = vunpack.c.h.b16 %v346
    %v1471 = vunpack.c.l.b16 %v347
    %v1472 = vunpack.c.h.b16 %v347
    %v1473 = vunpack.c.l.b16 %v348
    %v1474 = vunpack.c.h.b16 %v348
    %v1475 = vunpack.c.l.b16 %v349
    %v1476 = vunpack.c.h.b16 %v349
    %v1477 = vunpack.c.l.b16 %v350
    %v1478 = vunpack.c.h.b16 %v350
    %v1479 = vunpack.c.l.b16 %v351
    %v1480 = vunpack.c.h.b16 %v351
    %v1481 = vunpack.c.l.b16 %v352
    %v1482 = vunpack.c.h.b16 %v352
    %v1483 = vunpack.c.l.b16 %v353
    %v1484 = vunpack.c.h.b16 %v353
    %v1485 = vunpack.c.l.b16 %v354
    %v1486 = vunpack.c.h.b16 %v354
    %v1487 = vunpack.c.l.b16 %v355
    %v1488 = vunpack.c.h.b16 %v355
    %v1489 = vunpack.c.l.b16 %v356
    %v1490 = vunpack.c.h.b16 %v356
    %v1491 = vunpack.c.l.b16 %v357
    %v1492 = vunpack.c.h.b16 %v357
    %v1493 = vunpack.c.l.b16 %v358
    %v1494 = vunpack.c.h.b16 %v358
    %v1495 = vunpack.c.l.b16 %v359
    %v1496 = vunpack.c.h.b16 %v359
    %v1497 = vunpack.c.l.b16 %v360
    %v1498 = vunpack.c.h.b16 %v360
    %v1499 = vunpack.c.l.b16 %v361
    %v1500 = vunpack.c.h.b16 %v361
    %v1501 = vunpack.c.l.b16 %v362
    %v1502 = vunpack.c.h.b16 %v362
    %v1503 = vunpack.c.l.b16 %v363
    %v1504 = vunpack.c.h.b16 %v363
    %v1505 = vunpack.c.l.b16 %v364
    %v1506 = vunpack.c.h.b16 %v364
    %v1507 = vunpack.c.l.b16 %v365
    %v1508 = vunpack.c.h.b16 %v365
    %v1509 = vunpack.c.l.b16 %v366
    %v1510 = vunpack.c.h.b16 %v366
    %v1511 = vunpack.c.l.b16 %v367
    %v1512 = vunpack.c.h.b16 %v367
    %v1513 = vunpack.c.l.b16 %v368
    %v1514 = vunpack.c.h.b16 %v368
    %v1515 = vunpack.c.l.b16 %v369
    %v1516 = vunpack.c.h.b16 %v369
    %v1517 = vunpack.c.l.b16 %v370
    %v1518 = vunpack.c.h.b16 %v370
    %v1519 = vunpack.c.l.b16 %v371
    %v1520 = vunpack.c.h.b16 %v371
    %v1521 = vunpack.c.l.b16 %v372
    %v1522 = vunpack.c.h.b16 %v372
    %v1523 = vunpack.c.l.b16 %v373
    %v1524 = vunpack.c.h.b16 %v373
    %v1525 = vunpack.c.l.b16 %v374
    %v1526 = vunpack.c.h.b16 %v374
    %v1527 = vunpack.c.l.b16 %v375
    %v1528 = vunpack.c.h.b16 %v375
    %v1529 = vunpack.c.l.b16 %v376
    %v1530 = vunpack.c.h.b16 %v376
    %v1531 = vunpack.c.l.b16 %v377
    %v1532 = vunpack.c.h.b16 %v377
    %v1533 = vunpack.c.l.b16 %v378
    %v1534 = vunpack.c.h.b16 %v378
    %v1535 = vunpack.c.l.b16 %v379
    %v1536 = vunpack.c.h.b16 %v379
    %v1537 = vunpack.c.l.b16 %v380
    %v1538 = vunpack.c.h.b16 %v380
    %v1539 = vunpack.c.l.b16 %v381
    %v1540 = vunpack.c.h.b16 %v381
    %v1541 = vunpack.c.l.b16 %v382
    %v1542 = vunpack.c.h.b16 %v382
    %v1543 = vunpack.c.l.b16 %v383
    %v1544 = vunpack.c.h.b16 %v383
    %v1545 = vunpack.c.l.b16 %v384
    %v1546 = vunpack.c.h.b16 %v384
    %v1547 = vunpack.c.l.b16 %v385
    %v1548 = vunpack.c.h.b16 %v385
    %v1549 = vunpack.c.l.b16 %v386
    %v1550 = vunpack.c.h.b16 %v386
    %v1551 = vunpack.c.l.b16 %v387
    %v1552 = vunpack.c.h.b16 %v387
    %v1553 = vunpack.c.l.b16 %v388
    %v1554 = vunpack.c.h.b16 %v388
    %v1555 = vunpack.c.l.b16 %v389
    %v1556 = vunpack.c.h.b16 %v389
    %v1557 = vunpack.c.l.b16 %v390
    %v1558 = vunpack.c.h.b16 %v390
    %v1559 = vunpack.c.l.b16 %v391
    %v1560 = vunpack.c.h.b16 %v391
    %v1561 = vunpack.c.l.b16 %v392
    %v1562 = vunpack.c.h.b16 %v392
    %v1563 = vunpack.c.l.b16 %v393
    %v1564 = vunpack.c.h.b16 %v393
    %v1565 = vunpack.c.l.b16 %v394
    %v1566 = vunpack.c.h.b16 %v394
    %v1567 = vunpack.c.l.b16 %v395
    %v1568 = vunpack.c.h.b16 %v395
    %v1569 = vunpack.c.l.b16 %v396
    %v1570 = vunpack.c.h.b16 %v396
    %v1571 = vunpack.c.l.b16 %v397
    %v1572 = vunpack.c.h.b16 %v397
    %v1573 = vunpack.c.l.b16 %v398
    %v1574 = vunpack.c.h.b16 %v398
    %v1575 = vunpack.c.l.b16 %v399
    %v1576 = vunpack.c.h.b16 %v399
    %v1577 = vunpack.c.l.b16 %v400
    %v1578 = vunpack.c.h.b16 %v400
    %v1579 = vunpack.c.l.b16 %v401
    %v1580 = vunpack.c.h.b16 %v401
    %v1581 = vunpack.c.l.b16 %v402
    %v1582 = vunpack.c.h.b16 %v402
    %v1583 = vunpack.c.l.b16 %v403
    %v1584 = vunpack.c.h.b16 %v403
    %v1585 = vunpack.c.l.b16 %v404
    %v1586 = vunpack.c.h.b16 %v404
    %v1587 = vunpack.c.l.b16 %v405
    %v1588 = vunpack.c.h.b16 %v405
    %v1589 = vunpack.c.l.b16 %v406
    %v1590 = vunpack.c.h.b16 %v406
    %v1591 = vunpack.c.l.b16 %v407
    %v1592 = vunpack.c.h.b16 %v407
    %v1593 = vunpack.c.l.b16 %v408
    %v1594 = vunpack.c.h.b16 %v408
    %v1595 = vunpack.c.l.b16 %v409
    %v1596 = vunpack.c.h.b16 %v409
    %v1597 = vunpack.c.l.b16 %v410
    %v1598 = vunpack.c.h.b16 %v410
    %v1599 = vunpack.c.l.b16 %v411
    %v1600 = vunpack.c.h.b16 %v411
    %v1601 = vunpack.c.l.b16 %v412
    %v1602 = vunpack.c.h.b16 %v412
    %v1603 = vunpack.c.l.b16 %v413
    %v1604 = vunpack.c.h.b16 %v413
    %v1605 = vunpack.c.l.b16 %v414
    %v1606 = vunpack.c.h.b16 %v414
    %v1607 = vunpack.c.l.b16 %v415
    %v1608 = vunpack.c.h.b16 %v415
    %v1609 = vunpack.c.l.b16 %v416
    %v1610 = vunpack.c.h.b16 %v416
    %v1611 = vunpack.c.l.b16 %v417
    %v1612 = vunpack.c.h.b16 %v417
    %v1613 = vunpack.c.l.b16 %v418
    %v1614 = vunpack.c.h.b16 %v418
    %v1615 = vunpack.c.l.b16 %v419
    %v1616 = vunpack.c.h.b16 %v419
    %v1617 = vunpack.c.l.b16 %v420
    %v1618 = vunpack.c.h.b16 %v420
    %v1619 = vunpack.c.l.b16 %v421
    %v1620 = vunpack.c.h.b16 %v421
    %v1621 = vunpack.c.l.b16 %v422
    %v1622 = vunpack.c.h.b16 %v422
    %v1623 = vunpack.c.l.b16 %v423
    %v1624 = vunpack.c.h.b16 %v423
    %v1625 = vunpack.c.l.b16 %v424
    %v1626 = vunpack.c.h.b16 %v424
    %v1627 = vunpack.c.l.b16 %v425
    %v1628 = vunpack.c.h.b16 %v425
    %v1629 = vunpack.c.l.b16 %v426
    %v1630 = vunpack.c.h.b16 %v426
    %v1631 = vunpack.c.l.b16 %v427
    %v1632 = vunpack.c.h.b16 %v427
    %v1633 = vunpack.c.l.b16 %v428
    %v1634 = vunpack.c.h.b16 %v428
    %v1635 = vunpack.c.l.b16 %v429
    %v1636 = vunpack.c.h.b16 %v429
    %v1637 = vunpack.c.l.b16 %v430
    %v1638 = vunpack.c.h.b16 %v430
    %v1639 = vunpack.c.l.b16 %v431
    %v1640 = vunpack.c.h.b16 %v431
    %v1641 = vunpack.c.l.b16 %v432
    %v1642 = vunpack.c.h.b16 %v432
    %v1643 = vunpack.c.l.b16 %v433
    %v1644 = vunpack.c.h.b16 %v433
    %v1645 = vunpack.c.l.b16 %v434
    %v1646 = vunpack.c.h.b16 %v434
    %v1647 = vunpack.c.l.b16 %v435
    %v1648 = vunpack.c.h.b16 %v435
    %v1649 = vunpack.c.l.b16 %v436
    %v1650 = vunpack.c.h.b16 %v436
    %v1651 = vunpack.c.l.b16 %v437
    %v1652 = vunpack.c.h.b16 %v437
    %v1653 = vunpack.c.l.b16 %v438
    %v1654 = vunpack.c.h.b16 %v438
    %v1655 = vunpack.c.l.b16 %v439
    %v1656 = vunpack.c.h.b16 %v439
    %v1657 = vunpack.c.l.b16 %v440
    %v1658 = vunpack.c.h.b16 %v440
    %v1659 = vunpack.c.l.b16 %v441
    %v1660 = vunpack.c.h.b16 %v441
    %v1661 = vunpack.c.l.b16 %v442
    %v1662 = vunpack.c.h.b16 %v442
    %v1663 = vunpack.c.l.b16 %v443
    %v1664 = vunpack.c.h.b16 %v443
    %v1665 = vunpack.c.l.b16 %v444
    %v1666 = vunpack.c.h.b16 %v444
    %v1667 = vunpack.c.l.b16 %v445
    %v1668 = vunpack.c.h.b16 %v445
    %v1669 = vunpack.c.l.b16 %v446
    %v1670 = vunpack.c.h.b16 %v446
    %v1671 = vunpack.c.l.b16 %v447
    %v1672 = vunpack.c.h.b16 %v447
    %v1673 = vunpack.c.l.b16 %v448
    %v1674 = vunpack.c.h.b16 %v448
    %v1675 = vunpack.c.l.b16 %v449
    %v1676 = vunpack.c.h.b16 %v449
    %v1677 = vunpack.c.l.b16 %v450
    %v1678 = vunpack.c.h.b16 %v450
    %v1679 = vunpack.c.l.b16 %v451
    %v1680 = vunpack.c.h.b16 %v451
    %v1681 = vunpack.c.l.b16 %v452
    %v1682 = vunpack.c.h.b16 %v452
    %v1683 = vunpack.c.l.b16 %v453
    %v1684 = vunpack.c.h.b16 %v453
    %v1685 = vunpack.c.l.b16 %v454
    %v1686 = vunpack.c.h.b16 %v454
    %v1687 = vunpack.c.l.b16 %v455
    %v1688 = vunpack.c.h.b16 %v455
    %v1689 = vunpack.c.l.b16 %v456
    %v1690 = vunpack.c.h.b16 %v456
    %v1691 = vunpack.c.l.b16 %v457
    %v1692 = vunpack.c.h.b16 %v457
    %v1693 = vunpack.c.l.b16 %v458
    %v1694 = vunpack.c.h.b16 %v458
    %v1695 = vunpack.c.l.b16 %v459
    %v1696 = vunpack.c.h.b16 %v459
    %v1697 = vunpack.c.l.b16 %v460
    %v1698 = vunpack.c.h.b16 %v460
    %v1699 = vunpack.c.l.b16 %v461
    %v1700 = vunpack.c.h.b16 %v461
    %v1701 = vunpack.c.l.b16 %v462
    %v1702 = vunpack.c.h.b16 %v462
    %v1703 = vunpack.c.l.b16 %v463
    %v1704 = vunpack.c.h.b16 %v463
    %v1705 = vunpack.c.l.b16 %v464
    %v1706 = vunpack.c.h.b16 %v464
    %v1707 = vunpack.c.l.b16 %v465
    %v1708 = vunpack.c.h.b16 %v465
    %v1709 = vunpack.c.l.b16 %v466
    %v1710 = vunpack.c.h.b16 %v466
    %v1711 = vunpack.c.l.b16 %v467
    %v1712 = vunpack.c.h.b16 %v467
    %v1713 = vunpack.c.l.b16 %v468
    %v1714 = vunpack.c.h.b16 %v468
    %v1715 = vunpack.c.l.b16 %v469
    %v1716 = vunpack.c.h.b16 %v469
    %v1717 = vunpack.c.l.b16 %v470
    %v1718 = vunpack.c.h.b16 %v470
    %v1719 = vunpack.c.l.b16 %v471
    %v1720 = vunpack.c.h.b16 %v471
    %v1721 = vunpack.c.l.b16 %v472
    %v1722 = vunpack.c.h.b16 %v472
    %v1723 = vunpack.c.l.b16 %v473
    %v1724 = vunpack.c.h.b16 %v473
    %v1725 = vunpack.c.l.b16 %v474
    %v1726 = vunpack.c.h.b16 %v474
    %v1727 = vunpack.c.l.b16 %v475
    %v1728 = vunpack.c.h.b16 %v475
    %v1729 = vunpack.c.l.b16 %v476
    %v1730 = vunpack.c.h.b16 %v476
    %v1731 = vunpack.c.l.b16 %v477
    %v1732 = vunpack.c.h.b16 %v477
    %v1733 = vunpack.c.l.b16 %v478
    %v1734 = vunpack.c.h.b16 %v478
    %v1735 = vunpack.c.l.b16 %v479
    %v1736 = vunpack.c.h.b16 %v479
    %v1737 = vunpack.c.l.b16 %v480
    %v1738 = vunpack.c.h.b16 %v480
    %v1739 = vunpack.c.l.b16 %v481
    %v1740 = vunpack.c.h.b16 %v481
    %v1741 = vunpack.c.l.b16 %v482
    %v1742 = vunpack.c.h.b16 %v482
    %v1743 = vunpack.c.l.b16 %v483
    %v1744 = vunpack.c.h.b16 %v483
    %v1745 = vunpack.c.l.b16 %v484
    %v1746 = vunpack.c.h.b16 %v484
    %v1747 = vunpack.c.l.b16 %v485
    %v1748 = vunpack.c.h.b16 %v485
    %v1749 = vunpack.c.l.b16 %v486
    %v1750 = vunpack.c.h.b16 %v486
    %v1751 = vunpack.c.l.b16 %v487
    %v1752 = vunpack.c.h.b16 %v487
    %v1753 = vunpack.c.l.b16 %v488
    %v1754 = vunpack.c.h.b16 %v488
    %v1755 = vunpack.c.l.b16 %v489
    %v1756 = vunpack.c.h.b16 %v489
    %v1757 = vunpack.c.l.b16 %v490
    %v1758 = vunpack.c.h.b16 %v490
    %v1759 = vunpack.c.l.b16 %v491
    %v1760 = vunpack.c.h.b16 %v491
    %v1761 = vunpack.c.l.b16 %v492
    %v1762 = vunpack.c.h.b16 %v492
    %v1763 = vunpack.c.l.b16 %v493
    %v1764 = vunpack.c.h.b16 %v493
    %v1765 = vunpack.c.l.b16 %v494
    %v1766 = vunpack.c.h.b16 %v494
    %v1767 = vunpack.c.l.b16 %v495
    %v1768 = vunpack.c.h.b16 %v495
    %v1769 = vunpack.c.l.b16 %v496
    %v1770 = vunpack.c.h.b16 %v496
    %v1771 = vunpack.c.l.b16 %v497
    %v1772 = vunpack.c.h.b16 %v497
    %v1773 = vunpack.c.l.b16 %v498
    %v1774 = vunpack.c.h.b16 %v498
    %v1775 = vunpack.c.l.b16 %v499
    %v1776 = vunpack.c.h.b16 %v499
    %v1777 = vunpack.c.l.b16 %v500
    %v1778 = vunpack.c.h.b16 %v500
    %v1779 = vunpack.c.l.b16 %v501
    %v1780 = vunpack.c.h.b16 %v501
    %v1781 = vunpack.c.l.b16 %v502
    %v1782 = vunpack.c.h.b16 %v502
    %v1783 = vunpack.c.l.b16 %v503
    %v1784 = vunpack.c.h.b16 %v503
    %v1785 = vunpack.c.l.b16 %v504
    %v1786 = vunpack.c.h.b16 %v504
    %v1787 = vunpack.c.l.b16 %v505
    %v1788 = vunpack.c.h.b16 %v505
    %v1789 = vunpack.c.l.b16 %v506
    %v1790 = vunpack.c.h.b16 %v506
    %v1791 = vunpack.c.l.b16 %v507
    %v1792 = vunpack.c.h.b16 %v507
    %v1793 = vunpack.c.l.b16 %v508
    %v1794 = vunpack.c.h.b16 %v508
    %v1795 = vunpack.c.l.b16 %v509
    %v1796 = vunpack.c.h.b16 %v509
    %v1797 = vunpack.c.l.b16 %v510
    %v1798 = vunpack.c.h.b16 %v510
    %v1799 = vunpack.c.l.b16 %v511
    %v1800 = vunpack.c.h.b16 %v511
    %v1801 = vunpack.c.l.b16 %v512
    %v1802 = vunpack.c.h.b16 %v512
    %v1803 = vunpack.c.l.b16 %v513
    %v1804 = vunpack.c.h.b16 %v513
    %v1805 = vunpack.c.l.b16 %v514
    %v1806 = vunpack.c.h.b16 %v514
    %v1807 = vunpack.c.l.b16 %v515
    %v1808 = vunpack.c.h.b16 %v515
    %v1809 = vunpack.c.l.b16 %v516
    %v1810 = vunpack.c.h.b16 %v516
    %v1811 = vunpack.c.l.b16 %v517
    %v1812 = vunpack.c.h.b16 %v517
    %v1813 = vunpack.c.l.b16 %v518
    %v1814 = vunpack.c.h.b16 %v518
    %v1815 = vunpack.c.l.b16 %v519
    %v1816 = vunpack.c.h.b16 %v519
    %v1817 = vunpack.c.l.b16 %v520
    %v1818 = vunpack.c.h.b16 %v520
    %v1819 = vunpack.c.l.b16 %v521
    %v1820 = vunpack.c.h.b16 %v521
    %v1821 = vunpack.c.l.b16 %v522
    %v1822 = vunpack.c.h.b16 %v522
    %v1823 = vunpack.c.l.b16 %v523
    %v1824 = vunpack.c.h.b16 %v523
    %v1825 = vunpack.c.l.b16 %v524
    %v1826 = vunpack.c.h.b16 %v524
    %v1827 = vunpack.c.l.b16 %v525
    %v1828 = vunpack.c.h.b16 %v525
    %v1829 = vunpack.c.l.b16 %v526
    %v1830 = vunpack.c.h.b16 %v526
    %v1831 = vunpack.c.l.b16 %v527
    %v1832 = vunpack.c.h.b16 %v527
    %v1833 = vunpack.c.l.b16 %v528
    %v1834 = vunpack.c.h.b16 %v528
    %v1835 = vunpack.c.l.b16 %v529
    %v1836 = vunpack.c.h.b16 %v529
    %v1837 = vunpack.c.l.b16 %v530
    %v1838 = vunpack.c.h.b16 %v530
    %v1839 = vunpack.c.l.b16 %v531
    %v1840 = vunpack.c.h.b16 %v531
    %v1841 = vunpack.c.l.b16 %v532
    %v1842 = vunpack.c.h.b16 %v532
    %v1843 = vunpack.c.l.b16 %v533
    %v1844 = vunpack.c.h.b16 %v533
    %v1845 = vunpack.c.l.b16 %v534
    %v1846 = vunpack.c.h.b16 %v534
    %v1847 = vunpack.c.l.b16 %v535
    %v1848 = vunpack.c.h.b16 %v535
    %v1849 = vunpack.c.l.b16 %v536
    %v1850 = vunpack.c.h.b16 %v536
    %v1851 = vunpack.c.l.b16 %v537
    %v1852 = vunpack.c.h.b16 %v537
    %v1853 = vunpack.c.l.b16 %v538
    %v1854 = vunpack.c.h.b16 %v538
    %v1855 = vunpack.c.l.b16 %v539
    %v1856 = vunpack.c.h.b16 %v539
    %v1857 = vunpack.c.l.b16 %v540
    %v1858 = vunpack.c.h.b16 %v540
    %v1859 = vunpack.c.l.b16 %v541
    %v1860 = vunpack.c.h.b16 %v541
    %v1861 = vunpack.c.l.b16 %v542
    %v1862 = vunpack.c.h.b16 %v542
    %v1863 = vunpack.c.l.b16 %v543
    %v1864 = vunpack.c.h.b16 %v543
    %v1865 = vunpack.c.l.b16 %v544
    %v1866 = vunpack.c.h.b16 %v544
    %v1867 = vunpack.c.l.b16 %v545
    %v1868 = vunpack.c.h.b16 %v545
    %v1869 = vunpack.c.l.b16 %v546
    %v1870 = vunpack.c.h.b16 %v546
    %v1871 = vunpack.c.l.b16 %v547
    %v1872 = vunpack.c.h.b16 %v547
    %v1873 = vunpack.c.l.b16 %v548
    %v1874 = vunpack.c.h.b16 %v548
    %v1875 = vunpack.c.l.b16 %v549
    %v1876 = vunpack.c.h.b16 %v549
    %v1877 = vunpack.c.l.b16 %v550
    %v1878 = vunpack.c.h.b16 %v550
    %v1879 = vunpack.c.l.b16 %v551
    %v1880 = vunpack.c.h.b16 %v551
    %v1881 = vunpack.c.l.b16 %v552
    %v1882 = vunpack.c.h.b16 %v552
    %v1883 = vunpack.c.l.b16 %v553
    %v1884 = vunpack.c.h.b16 %v553
    %v1885 = vunpack.c.l.b16 %v554
    %v1886 = vunpack.c.h.b16 %v554
    %v1887 = vunpack.c.l.b16 %v555
    %v1888 = vunpack.c.h.b16 %v555
    %v1889 = vunpack.c.l.b16 %v556
    %v1890 = vunpack.c.h.b16 %v556
    %v1891 = vunpack.c.l.b16 %v557
    %v1892 = vunpack.c.h.b16 %v557
    %v1893 = vunpack.c.l.b16 %v558
    %v1894 = vunpack.c.h.b16 %v558
    %v1895 = vunpack.c.l.b16 %v559
    %v1896 = vunpack.c.h.b16 %v559
    %v1897 = vunpack.c.l.b16 %v560
    %v1898 = vunpack.c.h.b16 %v560
    %v1899 = vunpack.c.l.b16 %v561
    %v1900 = vunpack.c.h.b16 %v561
    %v1901 = vunpack.c.l.b16 %v562
    %v1902 = vunpack.c.h.b16 %v562
    %v1903 = vunpack.c.l.b16 %v563
    %v1904 = vunpack.c.h.b16 %v563
    %v1905 = vunpack.c.l.b16 %v564
    %v1906 = vunpack.c.h.b16 %v564
    %v1907 = vunpack.c.l.b16 %v565
    %v1908 = vunpack.c.h.b16 %v565
    %v1909 = vunpack.c.l.b16 %v566
    %v1910 = vunpack.c.h.b16 %v566
    %v1911 = vunpack.c.l.b16 %v567
    %v1912 = vunpack.c.h.b16 %v567
    %v1913 = vunpack.c.l.b16 %v568
    %v1914 = vunpack.c.h.b16 %v568
    %v1915 = vunpack.c.l.b16 %v569
    %v1916 = vunpack.c.h.b16 %v569
    %v1917 = vunpack.c.l.b16 %v570
    %v1918 = vunpack.c.h.b16 %v570
    %v1919 = vunpack.c.l.b16 %v571
    %v1920 = vunpack.c.h.b16 %v571
    %v1921 = vunpack.c.l.b16 %v572
    %v1922 = vunpack.c.h.b16 %v572
    %v1923 = vunpack.c.l.b16 %v573
    %v1924 = vunpack.c.h.b16 %v573
    %v1925 = vunpack.c.l.b16 %v574
    %v1926 = vunpack.c.h.b16 %v574
    %v1927 = vunpack.c.l.b16 %v575
    %v1928 = vunpack.c.h.b16 %v575
    %v1929 = vunpack.c.l.b16 %v576
    %v1930 = vunpack.c.h.b16 %v576
    %v1931 = vunpack.c.l.b16 %v577
    %v1932 = vunpack.c.h.b16 %v577
    %v1933 = vunpack.c.l.b16 %v578
    %v1934 = vunpack.c.h.b16 %v578
    %v1935 = vunpack.c.l.b16 %v579
    %v1936 = vunpack.c.h.b16 %v579
    %v1937 = vunpack.c.l.b16 %v580
    %v1938 = vunpack.c.h.b16 %v580
    %v1939 = vunpack.c.l.b16 %v581
    %v1940 = vunpack.c.h.b16 %v581
    %v1941 = vunpack.c.l.b16 %v582
    %v1942 = vunpack.c.h.b16 %v582
    %v1943 = vunpack.c.l.b16 %v583
    %v1944 = vunpack.c.h.b16 %v583
    %v1945 = vunpack.c.l.b16 %v584
    %v1946 = vunpack.c.h.b16 %v584
    %v1947 = vunpack.c.l.b16 %v585
    %v1948 = vunpack.c.h.b16 %v585
    %v1949 = vunpack.c.l.b16 %v586
    %v1950 = vunpack.c.h.b16 %v586
    %v1951 = vunpack.c.l.b16 %v587
    %v1952 = vunpack.c.h.b16 %v587
    %v1953 = vunpack.c.l.b16 %v588
    %v1954 = vunpack.c.h.b16 %v588
    %v1955 = vunpack.c.l.b16 %v589
    %v1956 = vunpack.c.h.b16 %v589
    %v1957 = vunpack.c.l.b16 %v590
    %v1958 = vunpack.c.h.b16 %v590
    %v1959 = vunpack.c.l.b16 %v591
    %v1960 = vunpack.c.h.b16 %v591
    %v1961 = vunpack.c.l.b16 %v592
    %v1962 = vunpack.c.h.b16 %v592
    %v1963 = vunpack.c.l.b16 %v593
    %v1964 = vunpack.c.h.b16 %v593
    %v1965 = vunpack.c.l.b16 %v594
    %v1966 = vunpack.c.h.b16 %v594
    %v1967 = vunpack.c.l.b16 %v595
    %v1968 = vunpack.c.h.b16 %v595
    %v1969 = vunpack.c.l.b16 %v596
    %v1970 = vunpack.c.h.b16 %v596
    %v1971 = vunpack.c.l.b16 %v597
    %v1972 = vunpack.c.h.b16 %v597
    %v1973 = vunpack.c.l.b16 %v598
    %v1974 = vunpack.c.h.b16 %v598
    %v1975 = vunpack.c.l.b16 %v599
    %v1976 = vunpack.c.h.b16 %v599
    %v1977 = vunpack.c.l.b16 %v600
    %v1978 = vunpack.c.h.b16 %v600
    %v1979 = vunpack.c.l.b16 %v601
    %v1980 = vunpack.c.h.b16 %v601
    %v1981 = vunpack.c.l.b16 %v602
    %v1982 = vunpack.c.h.b16 %v602
    %v1983 = vunpack.c.l.b16 %v603
    %v1984 = vunpack.c.h.b16 %v603
    %v1985 = vunpack.c.l.b16 %v604
    %v1986 = vunpack.c.h.b16 %v604
    %v1987 = vunpack.c.l.b16 %v605
    %v1988 = vunpack.c.h.b16 %v605
    %v1989 = vunpack.c.l.b16 %v606
    %v1990 = vunpack.c.h.b16 %v606
    %v1991 = vunpack.c.l.b16 %v607
    %v1992 = vunpack.c.h.b16 %v607
    %v1993 = vunpack.c.l.b16 %v608
    %v1994 = vunpack.c.h.b16 %v608
    %v1995 = vunpack.c.l.b16 %v609
    %v1996 = vunpack.c.h.b16 %v609
    %v1997 = vunpack.c.l.b16 %v610
    %v1998 = vunpack.c.h.b16 %v610
    %v1999 = vunpack.c.l.b16 %v611
    %v2000 = vunpack.c.h.b16 %v611
    %v2001 = vunpack.c.l.b16 %v612
    %v2002 = vunpack.c.h.b16 %v612
    %v2003 = vunpack.c.l.b16 %v613
    %v2004 = vunpack.c.h.b16 %v613
    %v2005 = vunpack.c.l.b16 %v614
    %v2006 = vunpack.c.h.b16 %v614
    %v2007 = vunpack.c.l.b16 %v615
    %v2008 = vunpack.c.h.b16 %v615
    %v2009 = vunpack.c.l.b16 %v616
    %v2010 = vunpack.c.h.b16 %v616
    %v2011 = vunpack.c.l.b16 %v617
    %v2012 = vunpack.c.h.b16 %v617
    %v2013 = vunpack.c.l.b16 %v618
    %v2014 = vunpack.c.h.b16 %v618
    %v2015 = vunpack.c.l.b16 %v619
    %v2016 = vunpack.c.h.b16 %v619
    %v2017 = vunpack.c.l.b16 %v620
    %v2018 = vunpack.c.h.b16 %v620
    %v2019 = vunpack.c.l.b16 %v621
    %v2020 = vunpack.c.h.b16 %v621
    %v2021 = vunpack.c.l.b16 %v622
    %v2022 = vunpack.c.h.b16 %v622
    %v2023 = vunpack.c.l.b16 %v623
    %v2024 = vunpack.c.h.b16 %v623
    %v2025 = vunpack.c.l.b16 %v624
    %v2026 = vunpack.c.h.b16 %v624
    %v2027 = vunpack.c.l.b16 %v625
    %v2028 = vunpack.c.h.b16 %v625
    %v2029 = vunpack.c.l.b16 %v626
    %v2030 = vunpack.c.h.b16 %v626
    %v2031 = vunpack.c.l.b16 %v627
    %v2032 = vunpack.c.h.b16 %v627
    %v2033 = vunpack.c.l.b16 %v628
    %v2034 = vunpack.c.h.b16 %v628
    %v2035 = vunpack.c.l.b16 %v629
    %v2036 = vunpack.c.h.b16 %v629
    %v2037 = vunpack.c.l.b16 %v630
    %v2038 = vunpack.c.h.b16 %v630
    %v2039 = vunpack.c.l.b16 %v631
    %v2040 = vunpack.c.h.b16 %v631
    %v2041 = vunpack.c.l.b16 %v632
    %v2042 = vunpack.c.h.b16 %v632
    %v2043 = vunpack.c.l.b16 %v633
    %v2044 = vunpack.c.h.b16 %v633
    %v2045 = vunpack.c.l.b16 %v634
    %v2046 = vunpack.c.h.b16 %v634
    %v2047 = vunpack.c.l.b16 %v635
    %v2048 = vunpack.c.h.b16 %v635
    %v2049 = vunpack.c.l.b16 %v636
    %v2050 = vunpack.c.h.b16 %v636
    %v2051 = vunpack.c.l.b16 %v637
    %v2052 = vunpack.c.h.b16 %v637
    %v2053 = vunpack.c.l.b16 %v638
    %v2054 = vunpack.c.h.b16 %v638
    %v2055 = vunpack.c.l.b16 %v639
    %v2056 = vunpack.c.h.b16 %v639
    %v2057 = vunpack.c.l.b16 %v640
    %v2058 = vunpack.c.h.b16 %v640
    %v2059 = vunpack.c.l.b16 %v641
    %v2060 = vunpack.c.h.b16 %v641
    %v2061 = vunpack.c.l.b16 %v642
    %v2062 = vunpack.c.h.b16 %v642
    %v2063 = vunpack.c.l.b16 %v643
    %v2064 = vunpack.c.h.b16 %v643
    %v2065 = vunpack.c.l.b16 %v644
    %v2066 = vunpack.c.h.b16 %v644
    %v2067 = vunpack.c.l.b16 %v645
    %v2068 = vunpack.c.h.b16 %v645
    %v2069 = vunpack.c.l.b16 %v646
    %v2070 = vunpack.c.h.b16 %v646
    %v2071 = vunpack.c.l.b16 %v647
    %v2072 = vunpack.c.h.b16 %v647
    %v2073 = vunpack.c.l.b16 %v648
    %v2074 = vunpack.c.h.b16 %v648
    %v2075 = vunpack.c.l.b16 %v649
    %v2076 = vunpack.c.h.b16 %v649
    %v2077 = vunpack.c.l.b16 %v650
    %v2078 = vunpack.c.h.b16 %v650
    %v2079 = vunpack.c.l.b16 %v651
    %v2080 = vunpack.c.h.b16 %v651
    %v2081 = vunpack.c.l.b16 %v652
    %v2082 = vunpack.c.h.b16 %v652
    %v2083 = vunpack.c.l.b16 %v653
    %v2084 = vunpack.c.h.b16 %v653
    %v2085 = vunpack.c.l.b16 %v654
    %v2086 = vunpack.c.h.b16 %v654
    %v2087 = vunpack.c.l.b16 %v655
    %v2088 = vunpack.c.h.b16 %v655
    %v2089 = vunpack.c.l.b16 %v656
    %v2090 = vunpack.c.h.b16 %v656
    %v2091 = vunpack.c.l.b16 %v657
    %v2092 = vunpack.c.h.b16 %v657
    %v2093 = vunpack.c.l.b16 %v658
    %v2094 = vunpack.c.h.b16 %v658
    %v2095 = vunpack.c.l.b16 %v659
    %v2096 = vunpack.c.h.b16 %v659
    %v2097 = vunpack.c.l.b16 %v660
    %v2098 = vunpack.c.h.b16 %v660
    %v2099 = vunpack.c.l.b16 %v661
    %v2100 = vunpack.c.h.b16 %v661
    %v2101 = vunpack.c.l.b16 %v662
    %v2102 = vunpack.c.h.b16 %v662
    %v2103 = vunpack.c.l.b16 %v663
    %v2104 = vunpack.c.h.b16 %v663
    %v2105 = vunpack.c.l.b16 %v664
    %v2106 = vunpack.c.h.b16 %v664
    %v2107 = vunpack.c.l.b16 %v665
    %v2108 = vunpack.c.h.b16 %v665
    %v2109 = vunpack.c.l.b16 %v666
    %v2110 = vunpack.c.h.b16 %v666
    %v2111 = vunpack.c.l.b16 %v667
    %v2112 = vunpack.c.h.b16 %v667
    %v2113 = vunpack.c.l.b16 %v668
    %v2114 = vunpack.c.h.b16 %v668
    %v2115 = vunpack.c.l.b16 %v669
    %v2116 = vunpack.c.h.b16 %v669
    %v2117 = vpack.c.b16 %v1221, %v1217
    %v2118 = vpack.c.b16 %v1222, %v1218
    %v2119 = vpack.c.b16 %v1223, %v1219
    %v2120 = vpack.c.b16 %v1224, %v1220
    %v2121 = vpack.c.b16 %v1229, %v1225
    %v2122 = vpack.c.b16 %v1230, %v1226
    %v2123 = vpack.c.b16 %v1231, %v1227
    %v2124 = vpack.c.b16 %v1232, %v1228
    %v2125 = vpack.c.b16 %v1237, %v1233
    %v2126 = vpack.c.b16 %v1238, %v1234
    %v2127 = vpack.c.b16 %v1239, %v1235
    %v2128 = vpack.c.b16 %v1240, %v1236
    %v2129 = vpack.c.b16 %v1245, %v1241
    %v2130 = vpack.c.b16 %v1246, %v1242
    %v2131 = vpack.c.b16 %v1247, %v1243
    %v2132 = vpack.c.b16 %v1248, %v1244
    %v2133 = vpack.c.b16 %v1253, %v1249
    %v2134 = vpack.c.b16 %v1254, %v1250
    %v2135 = vpack.c.b16 %v1255, %v1251
    %v2136 = vpack.c.b16 %v1256, %v1252
    %v2137 = vpack.c.b16 %v1261, %v1257
    %v2138 = vpack.c.b16 %v1262, %v1258
    %v2139 = vpack.c.b16 %v1263, %v1259
    %v2140 = vpack.c.b16 %v1264, %v1260
    %v2141 = vpack.c.b16 %v1269, %v1265
    %v2142 = vpack.c.b16 %v1270, %v1266
    %v2143 = vpack.c.b16 %v1271, %v1267
    %v2144 = vpack.c.b16 %v1272, %v1268
    %v2145 = vpack.c.b16 %v1277, %v1273
    %v2146 = vpack.c.b16 %v1278, %v1274
    %v2147 = vpack.c.b16 %v1279, %v1275
    %v2148 = vpack.c.b16 %v1280, %v1276
    %v2149 = vpack.c.b16 %v1285, %v1281
    %v2150 = vpack.c.b16 %v1286, %v1282
    %v2151 = vpack.c.b16 %v1287, %v1283
    %v2152 = vpack.c.b16 %v1288, %v1284
    %v2153 = vpack.c.b16 %v1293, %v1289
    %v2154 = vpack.c.b16 %v1294, %v1290
    %v2155 = vpack.c.b16 %v1295, %v1291
    %v2156 = vpack.c.b16 %v1296, %v1292
    %v2157 = vpack.c.b16 %v1301, %v1297
    %v2158 = vpack.c.b16 %v1302, %v1298
    %v2159 = vpack.c.b16 %v1303, %v1299
    %v2160 = vpack.c.b16 %v1304, %v1300
    %v2161 = vpack.c.b16 %v1309, %v1305
    %v2162 = vpack.c.b16 %v1310, %v1306
    %v2163 = vpack.c.b16 %v1311, %v1307
    %v2164 = vpack.c.b16 %v1312, %v1308
    %v2165 = vpack.c.b16 %v1317, %v1313
    %v2166 = vpack.c.b16 %v1318, %v1314
    %v2167 = vpack.c.b16 %v1319, %v1315
    %v2168 = vpack.c.b16 %v1320, %v1316
    %v2169 = vpack.c.b16 %v1325, %v1321
    %v2170 = vpack.c.b16 %v1326, %v1322
    %v2171 = vpack.c.b16 %v1327, %v1323
    %v2172 = vpack.c.b16 %v1328, %v1324
    %v2173 = vpack.c.b16 %v1333, %v1329
    %v2174 = vpack.c.b16 %v1334, %v1330
    %v2175 = vpack.c.b16 %v1335, %v1331
    %v2176 = vpack.c.b16 %v1336, %v1332
    %v2177 = vpack.c.b16 %v1341, %v1337
    %v2178 = vpack.c.b16 %v1342, %v1338
    %v2179 = vpack.c.b16 %v1343, %v1339
    %v2180 = vpack.c.b16 %v1344, %v1340
    %v2181 = vpack.c.b16 %v1349, %v1345
    %v2182 = vpack.c.b16 %v1350, %v1346
    %v2183 = vpack.c.b16 %v1351, %v1347
    %v2184 = vpack.c.b16 %v1352, %v1348
    %v2185 = vpack.c.b16 %v1357, %v1353
    %v2186 = vpack.c.b16 %v1358, %v1354
    %v2187 = vpack.c.b16 %v1359, %v1355
    %v2188 = vpack.c.b16 %v1360, %v1356
    %v2189 = vpack.c.b16 %v1365, %v1361
    %v2190 = vpack.c.b16 %v1366, %v1362
    %v2191 = vpack.c.b16 %v1367, %v1363
    %v2192 = vpack.c.b16 %v1368, %v1364
    %v2193 = vpack.c.b16 %v1373, %v1369
    %v2194 = vpack.c.b16 %v1374, %v1370
    %v2195 = vpack.c.b16 %v1375, %v1371
    %v2196 = vpack.c.b16 %v1376, %v1372
    %v2197 = vpack.c.b16 %v1381, %v1377
    %v2198 = vpack.c.b16 %v1382, %v1378
    %v2199 = vpack.c.b16 %v1383, %v1379
    %v2200 = vpack.c.b16 %v1384, %v1380
    %v2201 = vpack.c.b16 %v1389, %v1385
    %v2202 = vpack.c.b16 %v1390, %v1386
    %v2203 = vpack.c.b16 %v1391, %v1387
    %v2204 = vpack.c.b16 %v1392, %v1388
    %v2205 = vpack.c.b16 %v1397, %v1393
    %v2206 = vpack.c.b16 %v1398, %v1394
    %v2207 = vpack.c.b16 %v1399, %v1395
    %v2208 = vpack.c.b16 %v1400, %v1396
    %v2209 = vpack.c.b16 %v1405, %v1401
    %v2210 = vpack.c.b16 %v1406, %v1402
    %v2211 = vpack.c.b16 %v1407, %v1403
    %v2212 = vpack.c.b16 %v1408, %v1404
    %v2213 = vpack.c.b16 %v1413, %v1409
    %v2214 = vpack.c.b16 %v1414, %v1410
    %v2215 = vpack.c.b16 %v1415, %v1411
    %v2216 = vpack.c.b16 %v1416, %v1412
    %v2217 = vpack.c.b16 %v1421, %v1417
    %v2218 = vpack.c.b16 %v1422, %v1418
    %v2219 = vpack.c.b16 %v1423, %v1419
    %v2220 = vpack.c.b16 %v1424, %v1420
    %v2221 = vpack.c.b16 %v1429, %v1425
    %v2222 = vpack.c.b16 %v1430, %v1426
    %v2223 = vpack.c.b16 %v1431, %v1427
    %v2224 = vpack.c.b16 %v1432, %v1428
    %v2225 = vpack.c.b16 %v1437, %v1433
    %v2226 = vpack.c.b16 %v1438, %v1434
    %v2227 = vpack.c.b16 %v1439, %v1435
    %v2228 = vpack.c.b16 %v1440, %v1436
    %v2229 = vpack.c.b16 %v1445, %v1441
    %v2230 = vpack.c.b16 %v1446, %v1442
    %v2231 = vpack.c.b16 %v1447, %v1443
    %v2232 = vpack.c.b16 %v1448, %v1444
    %v2233 = vpack.c.b16 %v1453, %v1449
    %v2234 = vpack.c.b16 %v1454, %v1450
    %v2235 = vpack.c.b16 %v1455, %v1451
    %v2236 = vpack.c.b16 %v1456, %v1452
    %v2237 = vpack.c.b16 %v1461, %v1457
    %v2238 = vpack.c.b16 %v1462, %v1458
    %v2239 = vpack.c.b16 %v1463, %v1459
    %v2240 = vpack.c.b16 %v1464, %v1460
    %v2241 = vpack.c.b16 %v1469, %v1465
    %v2242 = vpack.c.b16 %v1470, %v1466
    %v2243 = vpack.c.b16 %v1471, %v1467
    %v2244 = vpack.c.b16 %v1472, %v1468
    %v2245 = vpack.c.b16 %v1477, %v1473
    %v2246 = vpack.c.b16 %v1478, %v1474
    %v2247 = vpack.c.b16 %v1479, %v1475
    %v2248 = vpack.c.b16 %v1480, %v1476
    %v2249 = vpack.c.b16 %v1485, %v1481
    %v2250 = vpack.c.b16 %v1486, %v1482
    %v2251 = vpack.c.b16 %v1487, %v1483
    %v2252 = vpack.c.b16 %v1488, %v1484
    %v2253 = vpack.c.b16 %v1493, %v1489
    %v2254 = vpack.c.b16 %v1494, %v1490
    %v2255 = vpack.c.b16 %v1495, %v1491
    %v2256 = vpack.c.b16 %v1496, %v1492
    %v2257 = vpack.c.b16 %v1501, %v1497
    %v2258 = vpack.c.b16 %v1502, %v1498
    %v2259 = vpack.c.b16 %v1503, %v1499
    %v2260 = vpack.c.b16 %v1504, %v1500
    %v2261 = vpack.c.b16 %v1509, %v1505
    %v2262 = vpack.c.b16 %v1510, %v1506
    %v2263 = vpack.c.b16 %v1511, %v1507
    %v2264 = vpack.c.b16 %v1512, %v1508
    %v2265 = vpack.c.b16 %v1517, %v1513
    %v2266 = vpack.c.b16 %v1518, %v1514
    %v2267 = vpack.c.b16 %v1519, %v1515
    %v2268 = vpack.c.b16 %v1520, %v1516
    %v2269 = vpack.c.b16 %v1525, %v1521
    %v2270 = vpack.c.b16 %v1526, %v1522
    %v2271 = vpack.c.b16 %v1527, %v1523
    %v2272 = vpack.c.b16 %v1528, %v1524
    %v2273 = vpack.c.b16 %v1533, %v1529
    %v2274 = vpack.c.b16 %v1534, %v1530
    %v2275 = vpack.c.b16 %v1535, %v1531
    %v2276 = vpack.c.b16 %v1536, %v1532
    %v2277 = vpack.c.b16 %v1541, %v1537
    %v2278 = vpack.c.b16 %v1542, %v1538
    %v2279 = vpack.c.b16 %v1543, %v1539
    %v2280 = vpack.c.b16 %v1544, %v1540
    %v2281 = vpack.c.b16 %v1549, %v1545
    %v2282 = vpack.c.b16 %v1550, %v1546
    %v2283 = vpack.c.b16 %v1551, %v1547
    %v2284 = vpack.c.b16 %v1552, %v1548
    %v2285 = vpack.c.b16 %v1557, %v1553
    %v2286 = vpack.c.b16 %v1558, %v1554
    %v2287 = vpack.c.b16 %v1559, %v1555
    %v2288 = vpack.c.b16 %v1560, %v1556
    %v2289 = vpack.c.b16 %v1565, %v1561
    %v2290 = vpack.c.b16 %v1566, %v1562
    %v2291 = vpack.c.b16 %v1567, %v1563
    %v2292 = vpack.c.b16 %v1568, %v1564
    %v2293 = vpack.c.b16 %v1573, %v1569
    %v2294 = vpack.c.b16 %v1574, %v1570
    %v2295 = vpack.c.b16 %v1575, %v1571
    %v2296 = vpack.c.b16 %v1576, %v1572
    %v2297 = vpack.c.b16 %v1581, %v1577
    %v2298 = vpack.c.b16 %v1582, %v1578
    %v2299 = vpack.c.b16 %v1583, %v1579
    %v2300 = vpack.c.b16 %v1584, %v1580
    %v2301 = vpack.c.b16 %v1589, %v1585
    %v2302 = vpack.c.b16 %v1590, %v1586
    %v2303 = vpack.c.b16 %v1591, %v1587
    %v2304 = vpack.c.b16 %v1592, %v1588
    %v2305 = vpack.c.b16 %v1597, %v1593
    %v2306 = vpack.c.b16 %v1598, %v1594
    %v2307 = vpack.c.b16 %v1599, %v1595
    %v2308 = vpack.c.b16 %v1600, %v1596
    %v2309 = vpack.c.b16 %v1605, %v1601
    %v2310 = vpack.c.b16 %v1606, %v1602
    %v2311 = vpack.c.b16 %v1607, %v1603
    %v2312 = vpack.c.b16 %v1608, %v1604
    %v2313 = vpack.c.b16 %v1613, %v1609
    %v2314 = vpack.c.b16 %v1614, %v1610
    %v2315 = vpack.c.b16 %v1615, %v1611
    %v2316 = vpack.c.b16 %v1616, %v1612
    %v2317 = vpack.c.b16 %v1621, %v1617
    %v2318 = vpack.c.b16 %v1622, %v1618
    %v2319 = vpack.c.b16 %v1623, %v1619
    %v2320 = vpack.c.b16 %v1624, %v1620
    %v2321 = vpack.c.b16 %v1629, %v1625
    %v2322 = vpack.c.b16 %v1630, %v1626
    %v2323 = vpack.c.b16 %v1631, %v1627
    %v2324 = vpack.c.b16 %v1632, %v1628
    %v2325 = vpack.c.b16 %v1637, %v1633
    %v2326 = vpack.c.b16 %v1638, %v1634
    %v2327 = vpack.c.b16 %v1639, %v1635
    %v2328 = vpack.c.b16 %v1640, %v1636
    %v2329 = vpack.c.b16 %v1645, %v1641
    %v2330 = vpack.c.b16 %v1646, %v1642
    %v2331 = vpack.c.b16 %v1647, %v1643
    %v2332 = vpack.c.b16 %v1648, %v1644
    %v2333 = vpack.c.b16 %v1653, %v1649
    %v2334 = vpack.c.b16 %v1654, %v1650
    %v2335 = vpack.c.b16 %v1655, %v1651
    %v2336 = vpack.c.b16 %v1656, %v1652
    %v2337 = vpack.c.b16 %v1661, %v1657
    %v2338 = vpack.c.b16 %v1662, %v1658
    %v2339 = vpack.c.b16 %v1663, %v1659
    %v2340 = vpack.c.b16 %v1664, %v1660
    %v2341 = vpack.c.b16 %v1669, %v1665
    %v2342 = vpack.c.b16 %v1670, %v1666
    %v2343 = vpack.c.b16 %v1671, %v1667
    %v2344 = vpack.c.b16 %v1672, %v1668
    %v2345 = vpack.c.b16 %v1677, %v1673
    %v2346 = vpack.c.b16 %v1678, %v1674
    %v2347 = vpack.c.b16 %v1679, %v1675
    %v2348 = vpack.c.b16 %v1680, %v1676
    %v2349 = vpack.c.b16 %v1685, %v1681
    %v2350 = vpack.c.b16 %v1686, %v1682
    %v2351 = vpack.c.b16 %v1687, %v1683
    %v2352 = vpack.c.b16 %v1688, %v1684
    %v2353 = vpack.c.b16 %v1693, %v1689
    %v2354 = vpack.c.b16 %v1694, %v1690
    %v2355 = vpack.c.b16 %v1695, %v1691
    %v2356 = vpack.c.b16 %v1696, %v1692
    %v2357 = vpack.c.b16 %v1701, %v1697
    %v2358 = vpack.c.b16 %v1702, %v1698
    %v2359 = vpack.c.b16 %v1703, %v1699
    %v2360 = vpack.c.b16 %v1704, %v1700
    %v2361 = vpack.c.b16 %v1709, %v1705
    %v2362 = vpack.c.b16 %v1710, %v1706
    %v2363 = vpack.c.b16 %v1711, %v1707
    %v2364 = vpack.c.b16 %v1712, %v1708
    %v2365 = vpack.c.b16 %v1717, %v1713
    %v2366 = vpack.c.b16 %v1718, %v1714
    %v2367 = vpack.c.b16 %v1719, %v1715
    %v2368 = vpack.c.b16 %v1720, %v1716
    %v2369 = vpack.c.b16 %v1725, %v1721
    %v2370 = vpack.c.b16 %v1726, %v1722
    %v2371 = vpack.c.b16 %v1727, %v1723
    %v2372 = vpack.c.b16 %v1728, %v1724
    %v2373 = vpack.c.b16 %v1733, %v1729
    %v2374 = vpack.c.b16 %v1734, %v1730
    %v2375 = vpack.c.b16 %v1735, %v1731
    %v2376 = vpack.c.b16 %v1736, %v1732
    %v2377 = vpack.c.b16 %v1741, %v1737
    %v2378 = vpack.c.b16 %v1742, %v1738
    %v2379 = vpack.c.b16 %v1743, %v1739
    %v2380 = vpack.c.b16 %v1744, %v1740
    %v2381 = vpack.c.b16 %v1749, %v1745
    %v2382 = vpack.c.b16 %v1750, %v1746
    %v2383 = vpack.c.b16 %v1751, %v1747
    %v2384 = vpack.c.b16 %v1752, %v1748
    %v2385 = vpack.c.b16 %v1757, %v1753
    %v2386 = vpack.c.b16 %v1758, %v1754
    %v2387 = vpack.c.b16 %v1759, %v1755
    %v2388 = vpack.c.b16 %v1760, %v1756
    %v2389 = vpack.c.b16 %v1765, %v1761
    %v2390 = vpack.c.b16 %v1766, %v1762
    %v2391 = vpack.c.b16 %v1767, %v1763
    %v2392 = vpack.c.b16 %v1768, %v1764
    %v2393 = vpack.c.b16 %v1773, %v1769
    %v2394 = vpack.c.b16 %v1774, %v1770
    %v2395 = vpack.c.b16 %v1775, %v1771
    %v2396 = vpack.c.b16 %v1776, %v1772
    %v2397 = vpack.c.b16 %v1781, %v1777
    %v2398 = vpack.c.b16 %v1782, %v1778
    %v2399 = vpack.c.b16 %v1783, %v1779
    %v2400 = vpack.c.b16 %v1784, %v1780
    %v2401 = vpack.c.b16 %v1789, %v1785
    %v2402 = vpack.c.b16 %v1790, %v1786
    %v2403 = vpack.c.b16 %v1791, %v1787
    %v2404 = vpack.c.b16 %v1792, %v1788
    %v2405 = vpack.c.b16 %v1797, %v1793
    %v2406 = vpack.c.b16 %v1798, %v1794
    %v2407 = vpack.c.b16 %v1799, %v1795
    %v2408 = vpack.c.b16 %v1800, %v1796
    %v2409 = vpack.c.b16 %v1805, %v1801
    %v2410 = vpack.c.b16 %v1806, %v1802
    %v2411 = vpack.c.b16 %v1807, %v1803
    %v2412 = vpack.c.b16 %v1808, %v1804
    %v2413 = vpack.c.b16 %v1813, %v1809
    %v2414 = vpack.c.b16 %v1814, %v1810
    %v2415 = vpack.c.b16 %v1815, %v1811
    %v2416 = vpack.c.b16 %v1816, %v1812
    %v2417 = vpack.c.b16 %v1821, %v1817
    %v2418 = vpack.c.b16 %v1822, %v1818
    %v2419 = vpack.c.b16 %v1823, %v1819
    %v2420 = vpack.c.b16 %v1824, %v1820
    %v2421 = vpack.c.b16 %v1829, %v1825
    %v2422 = vpack.c.b16 %v1830, %v1826
    %v2423 = vpack.c.b16 %v1831, %v1827
    %v2424 = vpack.c.b16 %v1832, %v1828
    %v2425 = vpack.c.b16 %v1837, %v1833
    %v2426 = vpack.c.b16 %v1838, %v1834
    %v2427 = vpack.c.b16 %v1839, %v1835
    %v2428 = vpack.c.b16 %v1840, %v1836
    %v2429 = vpack.c.b16 %v1845, %v1841
    %v2430 = vpack.c.b16 %v1846, %v1842
    %v2431 = vpack.c.b16 %v1847, %v1843
    %v2432 = vpack.c.b16 %v1848, %v1844
    %v2433 = vpack.c.b16 %v1853, %v1849
    %v2434 = vpack.c.b16 %v1854, %v1850
    %v2435 = vpack.c.b16 %v1855, %v1851
    %v2436 = vpack.c.b16 %v1856, %v1852
    %v2437 = vpack.c.b16 %v1861, %v1857
    %v2438 = vpack.c.b16 %v1862, %v1858
    %v2439 = vpack.c.b16 %v1863, %v1859
    %v2440 = vpack.c.b16 %v1864, %v1860
    %v2441 = vpack.c.b16 %v1869, %v1865
    %v2442 = vpack.c.b16 %v1870, %v1866
    %v2443 = vpack.c.b16 %v1871, %v1867
    %v2444 = vpack.c.b16 %v1872, %v1868
    %v2445 = vpack.c.b16 %v1877, %v1873
    %v2446 = vpack.c.b16 %v1878, %v1874
    %v2447 = vpack.c.b16 %v1879, %v1875
    %v2448 = vpack.c.b16 %v1880, %v1876
    %v2449 = vpack.c.b16 %v1885, %v1881
    %v2450 = vpack.c.b16 %v1886, %v1882
    %v2451 = vpack.c.b16 %v1887, %v1883
    %v2452 = vpack.c.b16 %v1888, %v1884
    %v2453 = vpack.c.b16 %v1893, %v1889
    %v2454 = vpack.c.b16 %v1894, %v1890
    %v2455 = vpack.c.b16 %v1895, %v1891
    %v2456 = vpack.c.b16 %v1896, %v1892
    %v2457 = vpack.c.b16 %v1901, %v1897
    %v2458 = vpack.c.b16 %v1902, %v1898
    %v2459 = vpack.c.b16 %v1903, %v1899
    %v2460 = vpack.c.b16 %v1904, %v1900
    %v2461 = vpack.c.b16 %v1909, %v1905
    %v2462 = vpack.c.b16 %v1910, %v1906
    %v2463 = vpack.c.b16 %v1911, %v1907
    %v2464 = vpack.c.b16 %v1912, %v1908
    %v2465 = vpack.c.b16 %v1917, %v1913
    %v2466 = vpack.c.b16 %v1918, %v1914
    %v2467 = vpack.c.b16 %v1919, %v1915
    %v2468 = vpack.c.b16 %v1920, %v1916
    %v2469 = vpack.c.b16 %v1925, %v1921
    %v2470 = vpack.c.b16 %v1926, %v1922
    %v2471 = vpack.c.b16 %v1927, %v1923
    %v2472 = vpack.c.b16 %v1928, %v1924
    %v2473 = vpack.c.b16 %v1933, %v1929
    %v2474 = vpack.c.b16 %v1934, %v1930
    %v2475 = vpack.c.b16 %v1935, %v1931
    %v2476 = vpack.c.b16 %v1936, %v1932
    %v2477 = vpack.c.b16 %v1941, %v1937
    %v2478 = vpack.c.b16 %v1942, %v1938
    %v2479 = vpack.c.b16 %v1943, %v1939
    %v2480 = vpack.c.b16 %v1944, %v1940
    %v2481 = vpack.c.b16 %v1949, %v1945
    %v2482 = vpack.c.b16 %v1950, %v1946
    %v2483 = vpack.c.b16 %v1951, %v1947
    %v2484 = vpack.c.b16 %v1952, %v1948
    %v2485 = vpack.c.b16 %v1957, %v1953
    %v2486 = vpack.c.b16 %v1958, %v1954
    %v2487 = vpack.c.b16 %v1959, %v1955
    %v2488 = vpack.c.b16 %v1960, %v1956
    %v2489 = vpack.c.b16 %v1965, %v1961
    %v2490 = vpack.c.b16 %v1966, %v1962
    %v2491 = vpack.c.b16 %v1967, %v1963
    %v2492 = vpack.c.b16 %v1968, %v1964
    %v2493 = vpack.c.b16 %v1973, %v1969
    %v2494 = vpack.c.b16 %v1974, %v1970
    %v2495 = vpack.c.b16 %v1975, %v1971
    %v2496 = vpack.c.b16 %v1976, %v1972
    %v2497 = vpack.c.b16 %v1981, %v1977
    %v2498 = vpack.c.b16 %v1982, %v1978
    %v2499 = vpack.c.b16 %v1983, %v1979
    %v2500 = vpack.c.b16 %v1984, %v1980
    %v2501 = vpack.c.b16 %v1989, %v1985
    %v2502 = vpack.c.b16 %v1990, %v1986
    %v2503 = vpack.c.b16 %v1991, %v1987
    %v2504 = vpack.c.b16 %v1992, %v1988
    %v2505 = vpack.c.b16 %v1997, %v1993
    %v2506 = vpack.c.b16 %v1998, %v1994
    %v2507 = vpack.c.b16 %v1999, %v1995
    %v2508 = vpack.c.b16 %v2000, %v1996
    %v2509 = vpack.c.b16 %v2005, %v2001
    %v2510 = vpack.c.b16 %v2006, %v2002
    %v2511 = vpack.c.b16 %v2007, %v2003
    %v2512 = vpack.c.b16 %v2008, %v2004
    %v2513 = vpack.c.b16 %v2013, %v2009
    %v2514 = vpack.c.b16 %v2014, %v2010
    %v2515 = vpack.c.b16 %v2015, %v2011
    %v2516 = vpack.c.b16 %v2016, %v2012
    %v2517 = vpack.c.b16 %v2021, %v2017
    %v2518 = vpack.c.b16 %v2022, %v2018
    %v2519 = vpack.c.b16 %v2023, %v2019
    %v2520 = vpack.c.b16 %v2024, %v2020
    %v2521 = vpack.c.b16 %v2029, %v2025
    %v2522 = vpack.c.b16 %v2030, %v2026
    %v2523 = vpack.c.b16 %v2031, %v2027
    %v2524 = vpack.c.b16 %v2032, %v2028
    %v2525 = vpack.c.b16 %v2037, %v2033
    %v2526 = vpack.c.b16 %v2038, %v2034
    %v2527 = vpack.c.b16 %v2039, %v2035
    %v2528 = vpack.c.b16 %v2040, %v2036
    %v2529 = vpack.c.b16 %v2045, %v2041
    %v2530 = vpack.c.b16 %v2046, %v2042
    %v2531 = vpack.c.b16 %v2047, %v2043
    %v2532 = vpack.c.b16 %v2048, %v2044
    %v2533 = vpack.c.b16 %v2053, %v2049
    %v2534 = vpack.c.b16 %v2054, %v2050
    %v2535 = vpack.c.b16 %v2055, %v2051
    %v2536 = vpack.c.b16 %v2056, %v2052
    %v2537 = vpack.c.b16 %v2061, %v2057
    %v2538 = vpack.c.b16 %v2062, %v2058
    %v2539 = vpack.c.b16 %v2063, %v2059
    %v2540 = vpack.c.b16 %v2064, %v2060
    %v2541 = vpack.c.b16 %v2069, %v2065
    %v2542 = vpack.c.b16 %v2070, %v2066
    %v2543 = vpack.c.b16 %v2071, %v2067
    %v2544 = vpack.c.b16 %v2072, %v2068
    %v2545 = vpack.c.b16 %v2077, %v2073
    %v2546 = vpack.c.b16 %v2078, %v2074
    %v2547 = vpack.c.b16 %v2079, %v2075
    %v2548 = vpack.c.b16 %v2080, %v2076
    %v2549 = vpack.c.b16 %v2085, %v2081
    %v2550 = vpack.c.b16 %v2086, %v2082
    %v2551 = vpack.c.b16 %v2087, %v2083
    %v2552 = vpack.c.b16 %v2088, %v2084
    %v2553 = vpack.c.b16 %v2093, %v2089
    %v2554 = vpack.c.b16 %v2094, %v2090
    %v2555 = vpack.c.b16 %v2095, %v2091
    %v2556 = vpack.c.b16 %v2096, %v2092
    %v2557 = vpack.c.b16 %v2101, %v2097
    %v2558 = vpack.c.b16 %v2102, %v2098
    %v2559 = vpack.c.b16 %v2103, %v2099
    %v2560 = vpack.c.b16 %v2104, %v2100
    %v2561 = vpack.c.b16 %v2109, %v2105
    %v2562 = vpack.c.b16 %v2110, %v2106
    %v2563 = vpack.c.b16 %v2111, %v2107
    %v2564 = vpack.c.b16 %v2112, %v2108
    %v2565 = vpack.c.b16 %v2113, %v2113
    %v2566 = vpack.c.b16 %v2114, %v2114
    %v2567 = vpack.c.b16 %v2115, %v2115
    %v2568 = vpack.c.b16 %v2116, %v2116
    %vm3017 = vcmask 64512
    %v3019 = vsel %vm3017, %v752, 0
    %vm3021 = vcmask 1043456
    %v3023 = vsel %vm3021, %v2565, 0
    %v3026 = vsel %vm3021, %v2566, 0
    %v3029 = vsel %vm3021, %v2567, 0
    %v3032 = vsel %vm3021, %v2568, 0
    %3034 = vmatprep.subr.bf16.mxu0 %v2118
    %3035 = vmatpush1.bf16.msra.mxu0 %v2117
    %3036 = vmatprep.subr.bf16.mxu0 %v2122
    %3037 = vmatpush1.bf16.msra.mxu0 %v2121
    %3038 = vmatprep.subr.bf16.mxu0 %v2126
    %3039 = vmatpush1.bf16.msra.mxu0 %v2125
    %3040 = vmatprep.subr.bf16.mxu0 %v2130
    %3041 = vmatpush1.bf16.msra.mxu0 %v2129
    %3042 = vmatprep.subr.bf16.mxu0 %v2134
    %3043 = vmatpush1.bf16.msra.mxu0 %v2133
    %3044 = vmatprep.subr.bf16.mxu0 %v2138
    %3045 = vmatpush1.bf16.msra.mxu0 %v2137
    %3046 = vmatprep.subr.bf16.mxu0 %v2142
    %3047 = vmatpush1.bf16.msra.mxu0 %v2141
    %3048 = vmatprep.subr.bf16.mxu0 %v2146
    %3049 = vmatpush1.bf16.msra.mxu0 %v2145
    %3050 = vmatprep.subr.bf16.mxu0 %v2150
    %3051 = vmatpush1.bf16.msra.mxu0 %v2149
    %3052 = vmatprep.subr.bf16.mxu0 %v2154
    %3053 = vmatpush1.bf16.msra.mxu0 %v2153
    %3054 = vmatprep.subr.bf16.mxu0 %v2158
    %3055 = vmatpush1.bf16.msra.mxu0 %v2157
    %3056 = vmatprep.subr.bf16.mxu0 %v2162
    %3057 = vmatpush1.bf16.msra.mxu0 %v2161
    %3058 = vmatprep.subr.bf16.mxu0 %v2166
    %3059 = vmatpush1.bf16.msra.mxu0 %v2165
    %3060 = vmatprep.subr.bf16.mxu0 %v2170
    %3061 = vmatpush1.bf16.msra.mxu0 %v2169
    %3062 = vmatprep.subr.bf16.mxu0 %v2174
    %3063 = vmatpush1.bf16.msra.mxu0 %v2173
    %3064 = vmatprep.subr.bf16.mxu0 %v2178
    %3065 = vmatpush1.bf16.msra.mxu0 %v2177
    %3066 = vmatprep.mubr.bf16.mxu0 %v739
    %3067 = vmatmul.mubr.bf16.gmra.mrb[0].mxu0 %v738
    %v3068 = vpop.f32.mrb[0].mxu0
    %v3069 = vadd.f32 %v675, %v3068
    %v3070 = vpop.f32.mrb[0].mxu0
    %v3071 = vadd.f32 %v679, %v3070
    %v3072 = vpop.f32.mrb[0].mxu0
    %v3073 = vadd.f32 %v675, %v3072
    %v3074 = vpop.f32.mrb[0].mxu0
    %v3075 = vadd.f32 %v679, %v3074
    %3076 = vdwg.mxu0
    %3077 = vmatprep.subr.bf16.mxu0 %v2182
    %3078 = vmatpush1.bf16.msra.mxu0 %v2181
    %3079 = vmatprep.subr.bf16.mxu0 %v2186
    %3080 = vmatpush1.bf16.msra.mxu0 %v2185
    %3081 = vmatprep.subr.bf16.mxu0 %v2190
    %3082 = vmatpush1.bf16.msra.mxu0 %v2189
    %3083 = vmatprep.subr.bf16.mxu0 %v2194
    %3084 = vmatpush1.bf16.msra.mxu0 %v2193
    %3085 = vmatprep.subr.bf16.mxu0 %v2198
    %3086 = vmatpush1.bf16.msra.mxu0 %v2197
    %3087 = vmatprep.subr.bf16.mxu0 %v2202
    %3088 = vmatpush1.bf16.msra.mxu0 %v2201
    %3089 = vmatprep.subr.bf16.mxu0 %v2206
    %3090 = vmatpush1.bf16.msra.mxu0 %v2205
    %3091 = vmatprep.subr.bf16.mxu0 %v2210
    %3092 = vmatpush1.bf16.msra.mxu0 %v2209
    %3093 = vmatprep.subr.bf16.mxu0 %v2214
    %3094 = vmatpush1.bf16.msra.mxu0 %v2213
    %3095 = vmatprep.subr.bf16.mxu0 %v2218
    %3096 = vmatpush1.bf16.msra.mxu0 %v2217
    %3097 = vmatprep.subr.bf16.mxu0 %v2222
    %3098 = vmatpush1.bf16.msra.mxu0 %v2221
    %3099 = vmatprep.subr.bf16.mxu0 %v2226
    %3100 = vmatpush1.bf16.msra.mxu0 %v2225
    %3101 = vmatprep.subr.bf16.mxu0 %v2230
    %3102 = vmatpush1.bf16.msra.mxu0 %v2229
    %3103 = vmatprep.subr.bf16.mxu0 %v2234
    %3104 = vmatpush1.bf16.msra.mxu0 %v2233
    %3105 = vmatprep.subr.bf16.mxu0 %v2238
    %3106 = vmatpush1.bf16.msra.mxu0 %v2237
    %3107 = vmatprep.subr.bf16.mxu0 %v2242
    %3108 = vmatpush1.bf16.msra.mxu0 %v2241
    %3109 = vmatprep.mubr.bf16.mxu0 %v741
    %3110 = vmatmul.mubr.bf16.gmra.mrb[0].mxu0 %v740
    %v3111 = vpop.f32.mrb[0].mxu0
    %v3112 = vadd.f32 %v3069, %v3111
    %v3113 = vpop.f32.mrb[0].mxu0
    %v3114 = vadd.f32 %v3071, %v3113
    %v3115 = vpop.f32.mrb[0].mxu0
    %v3116 = vadd.f32 %v3073, %v3115
    %v3117 = vpop.f32.mrb[0].mxu0
    %v3118 = vadd.f32 %v3075, %v3117
    %3119 = vdwg.mxu0
    %3120 = vmatprep.subr.bf16.mxu0 %v2246
    %3121 = vmatpush1.bf16.msra.mxu0 %v2245
    %3122 = vmatprep.subr.bf16.mxu0 %v2250
    %3123 = vmatpush1.bf16.msra.mxu0 %v2249
    %3124 = vmatprep.subr.bf16.mxu0 %v2254
    %3125 = vmatpush1.bf16.msra.mxu0 %v2253
    %3126 = vmatprep.subr.bf16.mxu0 %v2258
    %3127 = vmatpush1.bf16.msra.mxu0 %v2257
    %3128 = vmatprep.subr.bf16.mxu0 %v2262
    %3129 = vmatpush1.bf16.msra.mxu0 %v2261
    %3130 = vmatprep.subr.bf16.mxu0 %v2266
    %3131 = vmatpush1.bf16.msra.mxu0 %v2265
    %3132 = vmatprep.subr.bf16.mxu0 %v2270
    %3133 = vmatpush1.bf16.msra.mxu0 %v2269
    %3134 = vmatprep.subr.bf16.mxu0 %v2274
    %3135 = vmatpush1.bf16.msra.mxu0 %v2273
    %3136 = vmatprep.subr.bf16.mxu0 %v2278
    %3137 = vmatpush1.bf16.msra.mxu0 %v2277
    %3138 = vmatprep.subr.bf16.mxu0 %v2282
    %3139 = vmatpush1.bf16.msra.mxu0 %v2281
    %3140 = vmatprep.subr.bf16.mxu0 %v2286
    %3141 = vmatpush1.bf16.msra.mxu0 %v2285
    %3142 = vmatprep.subr.bf16.mxu0 %v2290
    %3143 = vmatpush1.bf16.msra.mxu0 %v2289
    %3144 = vmatprep.subr.bf16.mxu0 %v2294
    %3145 = vmatpush1.bf16.msra.mxu0 %v2293
    %3146 = vmatprep.subr.bf16.mxu0 %v2298
    %3147 = vmatpush1.bf16.msra.mxu0 %v2297
    %3148 = vmatprep.subr.bf16.mxu0 %v2302
    %3149 = vmatpush1.bf16.msra.mxu0 %v2301
    %3150 = vmatprep.subr.bf16.mxu0 %v2306
    %3151 = vmatpush1.bf16.msra.mxu0 %v2305
    %3152 = vmatprep.mubr.bf16.mxu0 %v743
    %3153 = vmatmul.mubr.bf16.gmra.mrb[0].mxu0 %v742
    %v3154 = vpop.f32.mrb[0].mxu0
    %v3155 = vadd.f32 %v3112, %v3154
    %v3156 = vpop.f32.mrb[0].mxu0
    %v3157 = vadd.f32 %v3114, %v3156
    %v3158 = vpop.f32.mrb[0].mxu0
    %v3159 = vadd.f32 %v3116, %v3158
    %v3160 = vpop.f32.mrb[0].mxu0
    %v3161 = vadd.f32 %v3118, %v3160
    %3162 = vdwg.mxu0
    %3163 = vmatprep.subr.bf16.mxu0 %v2310
    %3164 = vmatpush1.bf16.msra.mxu0 %v2309
    %3165 = vmatprep.subr.bf16.mxu0 %v2314
    %3166 = vmatpush1.bf16.msra.mxu0 %v2313
    %3167 = vmatprep.subr.bf16.mxu0 %v2318
    %3168 = vmatpush1.bf16.msra.mxu0 %v2317
    %3169 = vmatprep.subr.bf16.mxu0 %v2322
    %3170 = vmatpush1.bf16.msra.mxu0 %v2321
    %3171 = vmatprep.subr.bf16.mxu0 %v2326
    %3172 = vmatpush1.bf16.msra.mxu0 %v2325
    %3173 = vmatprep.subr.bf16.mxu0 %v2330
    %3174 = vmatpush1.bf16.msra.mxu0 %v2329
    %3175 = vmatprep.subr.bf16.mxu0 %v2334
    %3176 = vmatpush1.bf16.msra.mxu0 %v2333
    %3177 = vmatprep.subr.bf16.mxu0 %v2338
    %3178 = vmatpush1.bf16.msra.mxu0 %v2337
    %3179 = vmatprep.subr.bf16.mxu0 %v2342
    %3180 = vmatpush1.bf16.msra.mxu0 %v2341
    %3181 = vmatprep.subr.bf16.mxu0 %v2346
    %3182 = vmatpush1.bf16.msra.mxu0 %v2345
    %3183 = vmatprep.subr.bf16.mxu0 %v2350
    %3184 = vmatpush1.bf16.msra.mxu0 %v2349
    %3185 = vmatprep.subr.bf16.mxu0 %v2354
    %3186 = vmatpush1.bf16.msra.mxu0 %v2353
    %3187 = vmatprep.subr.bf16.mxu0 %v2358
    %3188 = vmatpush1.bf16.msra.mxu0 %v2357
    %3189 = vmatprep.subr.bf16.mxu0 %v2362
    %3190 = vmatpush1.bf16.msra.mxu0 %v2361
    %3191 = vmatprep.subr.bf16.mxu0 %v2366
    %3192 = vmatpush1.bf16.msra.mxu0 %v2365
    %3193 = vmatprep.subr.bf16.mxu0 %v2370
    %3194 = vmatpush1.bf16.msra.mxu0 %v2369
    %3195 = vmatprep.mubr.bf16.mxu0 %v745
    %3196 = vmatmul.mubr.bf16.gmra.mrb[0].mxu0 %v744
    %v3197 = vpop.f32.mrb[0].mxu0
    %v3198 = vadd.f32 %v3155, %v3197
    %v3199 = vpop.f32.mrb[0].mxu0
    %v3200 = vadd.f32 %v3157, %v3199
    %v3201 = vpop.f32.mrb[0].mxu0
    %v3202 = vadd.f32 %v3159, %v3201
    %v3203 = vpop.f32.mrb[0].mxu0
    %v3204 = vadd.f32 %v3161, %v3203
    %3205 = vdwg.mxu0
    %3206 = vmatprep.subr.bf16.mxu0 %v2374
    %3207 = vmatpush1.bf16.msra.mxu0 %v2373
    %3208 = vmatprep.subr.bf16.mxu0 %v2378
    %3209 = vmatpush1.bf16.msra.mxu0 %v2377
    %3210 = vmatprep.subr.bf16.mxu0 %v2382
    %3211 = vmatpush1.bf16.msra.mxu0 %v2381
    %3212 = vmatprep.subr.bf16.mxu0 %v2386
    %3213 = vmatpush1.bf16.msra.mxu0 %v2385
    %3214 = vmatprep.subr.bf16.mxu0 %v2390
    %3215 = vmatpush1.bf16.msra.mxu0 %v2389
    %3216 = vmatprep.subr.bf16.mxu0 %v2394
    %3217 = vmatpush1.bf16.msra.mxu0 %v2393
    %3218 = vmatprep.subr.bf16.mxu0 %v2398
    %3219 = vmatpush1.bf16.msra.mxu0 %v2397
    %3220 = vmatprep.subr.bf16.mxu0 %v2402
    %3221 = vmatpush1.bf16.msra.mxu0 %v2401
    %3222 = vmatprep.subr.bf16.mxu0 %v2406
    %3223 = vmatpush1.bf16.msra.mxu0 %v2405
    %3224 = vmatprep.subr.bf16.mxu0 %v2410
    %3225 = vmatpush1.bf16.msra.mxu0 %v2409
    %3226 = vmatprep.subr.bf16.mxu0 %v2414
    %3227 = vmatpush1.bf16.msra.mxu0 %v2413
    %3228 = vmatprep.subr.bf16.mxu0 %v2418
    %3229 = vmatpush1.bf16.msra.mxu0 %v2417
    %3230 = vmatprep.subr.bf16.mxu0 %v2422
    %3231 = vmatpush1.bf16.msra.mxu0 %v2421
    %3232 = vmatprep.subr.bf16.mxu0 %v2426
    %3233 = vmatpush1.bf16.msra.mxu0 %v2425
    %3234 = vmatprep.subr.bf16.mxu0 %v2430
    %3235 = vmatpush1.bf16.msra.mxu0 %v2429
    %3236 = vmatprep.subr.bf16.mxu0 %v2434
    %3237 = vmatpush1.bf16.msra.mxu0 %v2433
    %3238 = vmatprep.mubr.bf16.mxu0 %v747
    %3239 = vmatmul.mubr.bf16.gmra.mrb[0].mxu0 %v746
    %v3240 = vpop.f32.mrb[0].mxu0
    %v3241 = vadd.f32 %v3198, %v3240
    %v3242 = vpop.f32.mrb[0].mxu0
    %v3243 = vadd.f32 %v3200, %v3242
    %v3244 = vpop.f32.mrb[0].mxu0
    %v3245 = vadd.f32 %v3202, %v3244
    %v3246 = vpop.f32.mrb[0].mxu0
    %v3247 = vadd.f32 %v3204, %v3246
    %3248 = vdwg.mxu0
    %3249 = vmatprep.subr.bf16.mxu0 %v2438
    %3250 = vmatpush1.bf16.msra.mxu0 %v2437
    %3251 = vmatprep.subr.bf16.mxu0 %v2442
    %3252 = vmatpush1.bf16.msra.mxu0 %v2441
    %3253 = vmatprep.subr.bf16.mxu0 %v2446
    %3254 = vmatpush1.bf16.msra.mxu0 %v2445
    %3255 = vmatprep.subr.bf16.mxu0 %v2450
    %3256 = vmatpush1.bf16.msra.mxu0 %v2449
    %3257 = vmatprep.subr.bf16.mxu0 %v2454
    %3258 = vmatpush1.bf16.msra.mxu0 %v2453
    %3259 = vmatprep.subr.bf16.mxu0 %v2458
    %3260 = vmatpush1.bf16.msra.mxu0 %v2457
    %3261 = vmatprep.subr.bf16.mxu0 %v2462
    %3262 = vmatpush1.bf16.msra.mxu0 %v2461
    %3263 = vmatprep.subr.bf16.mxu0 %v2466
    %3264 = vmatpush1.bf16.msra.mxu0 %v2465
    %3265 = vmatprep.subr.bf16.mxu0 %v2470
    %3266 = vmatpush1.bf16.msra.mxu0 %v2469
    %3267 = vmatprep.subr.bf16.mxu0 %v2474
    %3268 = vmatpush1.bf16.msra.mxu0 %v2473
    %3269 = vmatprep.subr.bf16.mxu0 %v2478
    %3270 = vmatpush1.bf16.msra.mxu0 %v2477
    %3271 = vmatprep.subr.bf16.mxu0 %v2482
    %3272 = vmatpush1.bf16.msra.mxu0 %v2481
    %3273 = vmatprep.subr.bf16.mxu0 %v2486
    %3274 = vmatpush1.bf16.msra.mxu0 %v2485
    %3275 = vmatprep.subr.bf16.mxu0 %v2490
    %3276 = vmatpush1.bf16.msra.mxu0 %v2489
    %3277 = vmatprep.subr.bf16.mxu0 %v2494
    %3278 = vmatpush1.bf16.msra.mxu0 %v2493
    %3279 = vmatprep.subr.bf16.mxu0 %v2498
    %3280 = vmatpush1.bf16.msra.mxu0 %v2497
    %3281 = vmatprep.mubr.bf16.mxu0 %v749
    %3282 = vmatmul.mubr.bf16.gmra.mrb[0].mxu0 %v748
    %v3283 = vpop.f32.mrb[0].mxu0
    %v3284 = vadd.f32 %v3241, %v3283
    %v3285 = vpop.f32.mrb[0].mxu0
    %v3286 = vadd.f32 %v3243, %v3285
    %v3287 = vpop.f32.mrb[0].mxu0
    %v3288 = vadd.f32 %v3245, %v3287
    %v3289 = vpop.f32.mrb[0].mxu0
    %v3290 = vadd.f32 %v3247, %v3289
    %3291 = vdwg.mxu0
    %3292 = vmatprep.subr.bf16.mxu0 %v2502
    %3293 = vmatpush1.bf16.msra.mxu0 %v2501
    %3294 = vmatprep.subr.bf16.mxu0 %v2506
    %3295 = vmatpush1.bf16.msra.mxu0 %v2505
    %3296 = vmatprep.subr.bf16.mxu0 %v2510
    %3297 = vmatpush1.bf16.msra.mxu0 %v2509
    %3298 = vmatprep.subr.bf16.mxu0 %v2514
    %3299 = vmatpush1.bf16.msra.mxu0 %v2513
    %3300 = vmatprep.subr.bf16.mxu0 %v2518
    %3301 = vmatpush1.bf16.msra.mxu0 %v2517
    %3302 = vmatprep.subr.bf16.mxu0 %v2522
    %3303 = vmatpush1.bf16.msra.mxu0 %v2521
    %3304 = vmatprep.subr.bf16.mxu0 %v2526
    %3305 = vmatpush1.bf16.msra.mxu0 %v2525
    %3306 = vmatprep.subr.bf16.mxu0 %v2530
    %3307 = vmatpush1.bf16.msra.mxu0 %v2529
    %3308 = vmatprep.subr.bf16.mxu0 %v2534
    %3309 = vmatpush1.bf16.msra.mxu0 %v2533
    %3310 = vmatprep.subr.bf16.mxu0 %v2538
    %3311 = vmatpush1.bf16.msra.mxu0 %v2537
    %3312 = vmatprep.subr.bf16.mxu0 %v2542
    %3313 = vmatpush1.bf16.msra.mxu0 %v2541
    %3314 = vmatprep.subr.bf16.mxu0 %v2546
    %3315 = vmatpush1.bf16.msra.mxu0 %v2545
    %3316 = vmatprep.subr.bf16.mxu0 %v2550
    %3317 = vmatpush1.bf16.msra.mxu0 %v2549
    %3318 = vmatprep.subr.bf16.mxu0 %v2554
    %3319 = vmatpush1.bf16.msra.mxu0 %v2553
    %3320 = vmatprep.subr.bf16.mxu0 %v2558
    %3321 = vmatpush1.bf16.msra.mxu0 %v2557
    %3322 = vmatprep.subr.bf16.mxu0 %v2562
    %3323 = vmatpush1.bf16.msra.mxu0 %v2561
    %3324 = vmatprep.mubr.bf16.mxu0 %v751
    %3325 = vmatmul.mubr.bf16.gmra.mrb[0].mxu0 %v750
    %v3326 = vpop.f32.mrb[0].mxu0
    %v3327 = vadd.f32 %v3284, %v3326
    %v3328 = vpop.f32.mrb[0].mxu0
    %v3329 = vadd.f32 %v3286, %v3328
    %v3330 = vpop.f32.mrb[0].mxu0
    %v3331 = vadd.f32 %v3288, %v3330
    %v3332 = vpop.f32.mrb[0].mxu0
    %v3333 = vadd.f32 %v3290, %v3332
    %3334 = vdwg.mxu0
    %3335 = vmatprep.subr.bf16.mxu0 %v3026
    %3336 = vmatpush1.bf16.msra.mxu0 %v3023
    %3337 = vmatprep.subr.bf16.mxu0 0
    %3338 = vmatpush1.bf16.msra.mxu0 0
    %3339 = vmatprep.subr.bf16.mxu0 0
    %3340 = vmatpush1.bf16.msra.mxu0 0
    %3341 = vmatprep.subr.bf16.mxu0 0
    %3342 = vmatpush1.bf16.msra.mxu0 0
    %3343 = vmatprep.subr.bf16.mxu0 0
    %3344 = vmatpush1.bf16.msra.mxu0 0
    %3345 = vmatprep.subr.bf16.mxu0 0
    %3346 = vmatpush1.bf16.msra.mxu0 0
    %3347 = vmatprep.subr.bf16.mxu0 0
    %3348 = vmatpush1.bf16.msra.mxu0 0
    %3349 = vmatprep.subr.bf16.mxu0 0
    %3350 = vmatpush1.bf16.msra.mxu0 0
    %3351 = vmatprep.subr.bf16.mxu0 0
    %3352 = vmatpush1.bf16.msra.mxu0 0
    %3353 = vmatprep.subr.bf16.mxu0 0
    %3354 = vmatpush1.bf16.msra.mxu0 0
    %3355 = vmatprep.subr.bf16.mxu0 0
    %3356 = vmatpush1.bf16.msra.mxu0 0
    %3357 = vmatprep.subr.bf16.mxu0 0
    %3358 = vmatpush1.bf16.msra.mxu0 0
    %3359 = vmatprep.subr.bf16.mxu0 0
    %3360 = vmatpush1.bf16.msra.mxu0 0
    %3361 = vmatprep.subr.bf16.mxu0 0
    %3362 = vmatpush1.bf16.msra.mxu0 0
    %3363 = vmatprep.subr.bf16.mxu0 0
    %3364 = vmatpush1.bf16.msra.mxu0 0
    %3365 = vmatprep.subr.bf16.mxu0 0
    %3366 = vmatpush1.bf16.msra.mxu0 0
    %3367 = vmatprep.mubr.bf16.mxu0 0
    %3368 = vmatmul.mubr.bf16.gmra.mrb[0].mxu0 %v3019
    %v3369 = vpop.f32.mrb[0].mxu0
    %v3370 = vadd.f32 %v3327, %v3369
    %v3371 = vpop.f32.mrb[0].mxu0
    %v3372 = vadd.f32 %v3329, %v3371
    %v3373 = vpop.f32.mrb[0].mxu0
    %v3374 = vadd.f32 %v3331, %v3373
    %v3375 = vpop.f32.mrb[0].mxu0
    %v3376 = vadd.f32 %v3333, %v3375
    %3377 = vdwg.mxu0
    %3378 = vmatprep.subr.bf16.mxu0 %v2120
    %3379 = vmatpush1.bf16.msra.mxu0 %v2119
    %3380 = vmatprep.subr.bf16.mxu0 %v2124
    %3381 = vmatpush1.bf16.msra.mxu0 %v2123
    %3382 = vmatprep.subr.bf16.mxu0 %v2128
    %3383 = vmatpush1.bf16.msra.mxu0 %v2127
    %3384 = vmatprep.subr.bf16.mxu0 %v2132
    %3385 = vmatpush1.bf16.msra.mxu0 %v2131
    %3386 = vmatprep.subr.bf16.mxu0 %v2136
    %3387 = vmatpush1.bf16.msra.mxu0 %v2135
    %3388 = vmatprep.subr.bf16.mxu0 %v2140
    %3389 = vmatpush1.bf16.msra.mxu0 %v2139
    %3390 = vmatprep.subr.bf16.mxu0 %v2144
    %3391 = vmatpush1.bf16.msra.mxu0 %v2143
    %3392 = vmatprep.subr.bf16.mxu0 %v2148
    %3393 = vmatpush1.bf16.msra.mxu0 %v2147
    %3394 = vmatprep.subr.bf16.mxu0 %v2152
    %3395 = vmatpush1.bf16.msra.mxu0 %v2151
    %3396 = vmatprep.subr.bf16.mxu0 %v2156
    %3397 = vmatpush1.bf16.msra.mxu0 %v2155
    %3398 = vmatprep.subr.bf16.mxu0 %v2160
    %3399 = vmatpush1.bf16.msra.mxu0 %v2159
    %3400 = vmatprep.subr.bf16.mxu0 %v2164
    %3401 = vmatpush1.bf16.msra.mxu0 %v2163
    %3402 = vmatprep.subr.bf16.mxu0 %v2168
    %3403 = vmatpush1.bf16.msra.mxu0 %v2167
    %3404 = vmatprep.subr.bf16.mxu0 %v2172
    %3405 = vmatpush1.bf16.msra.mxu0 %v2171
    %3406 = vmatprep.subr.bf16.mxu0 %v2176
    %3407 = vmatpush1.bf16.msra.mxu0 %v2175
    %3408 = vmatprep.subr.bf16.mxu0 %v2180
    %3409 = vmatpush1.bf16.msra.mxu0 %v2179
    %3410 = vmatprep.mubr.bf16.mxu0 %v739
    %3411 = vmatmul.mubr.bf16.gmra.mrb[0].mxu0 %v738
    %v3412 = vpop.f32.mrb[0].mxu0
    %v3413 = vadd.f32 %v683, %v3412
    %v3414 = vpop.f32.mrb[0].mxu0
    %v3415 = vadd.f32 %v687, %v3414
    %v3416 = vpop.f32.mrb[0].mxu0
    %v3417 = vadd.f32 %v683, %v3416
    %v3418 = vpop.f32.mrb[0].mxu0
    %v3419 = vadd.f32 %v687, %v3418
    %3420 = vdwg.mxu0
    %3421 = vmatprep.subr.bf16.mxu0 %v2184
    %3422 = vmatpush1.bf16.msra.mxu0 %v2183
    %3423 = vmatprep.subr.bf16.mxu0 %v2188
    %3424 = vmatpush1.bf16.msra.mxu0 %v2187
    %3425 = vmatprep.subr.bf16.mxu0 %v2192
    %3426 = vmatpush1.bf16.msra.mxu0 %v2191
    %3427 = vmatprep.subr.bf16.mxu0 %v2196
    %3428 = vmatpush1.bf16.msra.mxu0 %v2195
    %3429 = vmatprep.subr.bf16.mxu0 %v2200
    %3430 = vmatpush1.bf16.msra.mxu0 %v2199
    %3431 = vmatprep.subr.bf16.mxu0 %v2204
    %3432 = vmatpush1.bf16.msra.mxu0 %v2203
    %3433 = vmatprep.subr.bf16.mxu0 %v2208
    %3434 = vmatpush1.bf16.msra.mxu0 %v2207
    %3435 = vmatprep.subr.bf16.mxu0 %v2212
    %3436 = vmatpush1.bf16.msra.mxu0 %v2211
    %3437 = vmatprep.subr.bf16.mxu0 %v2216
    %3438 = vmatpush1.bf16.msra.mxu0 %v2215
    %3439 = vmatprep.subr.bf16.mxu0 %v2220
    %3440 = vmatpush1.bf16.msra.mxu0 %v2219
    %3441 = vmatprep.subr.bf16.mxu0 %v2224
    %3442 = vmatpush1.bf16.msra.mxu0 %v2223
    %3443 = vmatprep.subr.bf16.mxu0 %v2228
    %3444 = vmatpush1.bf16.msra.mxu0 %v2227
    %3445 = vmatprep.subr.bf16.mxu0 %v2232
    %3446 = vmatpush1.bf16.msra.mxu0 %v2231
    %3447 = vmatprep.subr.bf16.mxu0 %v2236
    %3448 = vmatpush1.bf16.msra.mxu0 %v2235
    %3449 = vmatprep.subr.bf16.mxu0 %v2240
    %3450 = vmatpush1.bf16.msra.mxu0 %v2239
    %3451 = vmatprep.subr.bf16.mxu0 %v2244
    %3452 = vmatpush1.bf16.msra.mxu0 %v2243
    %3453 = vmatprep.mubr.bf16.mxu0 %v741
    %3454 = vmatmul.mubr.bf16.gmra.mrb[0].mxu0 %v740
    %v3455 = vpop.f32.mrb[0].mxu0
    %v3456 = vadd.f32 %v3413, %v3455
    %v3457 = vpop.f32.mrb[0].mxu0
    %v3458 = vadd.f32 %v3415, %v3457
    %v3459 = vpop.f32.mrb[0].mxu0
    %v3460 = vadd.f32 %v3417, %v3459
    %v3461 = vpop.f32.mrb[0].mxu0
    %v3462 = vadd.f32 %v3419, %v3461
    %3463 = vdwg.mxu0
    %3464 = vmatprep.subr.bf16.mxu0 %v2248
    %3465 = vmatpush1.bf16.msra.mxu0 %v2247
    %3466 = vmatprep.subr.bf16.mxu0 %v2252
    %3467 = vmatpush1.bf16.msra.mxu0 %v2251
    %3468 = vmatprep.subr.bf16.mxu0 %v2256
    %3469 = vmatpush1.bf16.msra.mxu0 %v2255
    %3470 = vmatprep.subr.bf16.mxu0 %v2260
    %3471 = vmatpush1.bf16.msra.mxu0 %v2259
    %3472 = vmatprep.subr.bf16.mxu0 %v2264
    %3473 = vmatpush1.bf16.msra.mxu0 %v2263
    %3474 = vmatprep.subr.bf16.mxu0 %v2268
    %3475 = vmatpush1.bf16.msra.mxu0 %v2267
    %3476 = vmatprep.subr.bf16.mxu0 %v2272
    %3477 = vmatpush1.bf16.msra.mxu0 %v2271
    %3478 = vmatprep.subr.bf16.mxu0 %v2276
    %3479 = vmatpush1.bf16.msra.mxu0 %v2275
    %3480 = vmatprep.subr.bf16.mxu0 %v2280
    %3481 = vmatpush1.bf16.msra.mxu0 %v2279
    %3482 = vmatprep.subr.bf16.mxu0 %v2284
    %3483 = vmatpush1.bf16.msra.mxu0 %v2283
    %3484 = vmatprep.subr.bf16.mxu0 %v2288
    %3485 = vmatpush1.bf16.msra.mxu0 %v2287
    %3486 = vmatprep.subr.bf16.mxu0 %v2292
    %3487 = vmatpush1.bf16.msra.mxu0 %v2291
    %3488 = vmatprep.subr.bf16.mxu0 %v2296
    %3489 = vmatpush1.bf16.msra.mxu0 %v2295
    %3490 = vmatprep.subr.bf16.mxu0 %v2300
    %3491 = vmatpush1.bf16.msra.mxu0 %v2299
    %3492 = vmatprep.subr.bf16.mxu0 %v2304
    %3493 = vmatpush1.bf16.msra.mxu0 %v2303
    %3494 = vmatprep.subr.bf16.mxu0 %v2308
    %3495 = vmatpush1.bf16.msra.mxu0 %v2307
    %3496 = vmatprep.mubr.bf16.mxu0 %v743
    %3497 = vmatmul.mubr.bf16.gmra.mrb[0].mxu0 %v742
    %v3498 = vpop.f32.mrb[0].mxu0
    %v3499 = vadd.f32 %v3456, %v3498
    %v3500 = vpop.f32.mrb[0].mxu0
    %v3501 = vadd.f32 %v3458, %v3500
    %v3502 = vpop.f32.mrb[0].mxu0
    %v3503 = vadd.f32 %v3460, %v3502
    %v3504 = vpop.f32.mrb[0].mxu0
    %v3505 = vadd.f32 %v3462, %v3504
    %3506 = vdwg.mxu0
    %3507 = vmatprep.subr.bf16.mxu0 %v2312
    %3508 = vmatpush1.bf16.msra.mxu0 %v2311
    %3509 = vmatprep.subr.bf16.mxu0 %v2316
    %3510 = vmatpush1.bf16.msra.mxu0 %v2315
    %3511 = vmatprep.subr.bf16.mxu0 %v2320
    %3512 = vmatpush1.bf16.msra.mxu0 %v2319
    %3513 = vmatprep.subr.bf16.mxu0 %v2324
    %3514 = vmatpush1.bf16.msra.mxu0 %v2323
    %3515 = vmatprep.subr.bf16.mxu0 %v2328
    %3516 = vmatpush1.bf16.msra.mxu0 %v2327
    %3517 = vmatprep.subr.bf16.mxu0 %v2332
    %3518 = vmatpush1.bf16.msra.mxu0 %v2331
    %3519 = vmatprep.subr.bf16.mxu0 %v2336
    %3520 = vmatpush1.bf16.msra.mxu0 %v2335
    %3521 = vmatprep.subr.bf16.mxu0 %v2340
    %3522 = vmatpush1.bf16.msra.mxu0 %v2339
    %3523 = vmatprep.subr.bf16.mxu0 %v2344
    %3524 = vmatpush1.bf16.msra.mxu0 %v2343
    %3525 = vmatprep.subr.bf16.mxu0 %v2348
    %3526 = vmatpush1.bf16.msra.mxu0 %v2347
    %3527 = vmatprep.subr.bf16.mxu0 %v2352
    %3528 = vmatpush1.bf16.msra.mxu0 %v2351
    %3529 = vmatprep.subr.bf16.mxu0 %v2356
    %3530 = vmatpush1.bf16.msra.mxu0 %v2355
    %3531 = vmatprep.subr.bf16.mxu0 %v2360
    %3532 = vmatpush1.bf16.msra.mxu0 %v2359
    %3533 = vmatprep.subr.bf16.mxu0 %v2364
    %3534 = vmatpush1.bf16.msra.mxu0 %v2363
    %3535 = vmatprep.subr.bf16.mxu0 %v2368
    %3536 = vmatpush1.bf16.msra.mxu0 %v2367
    %3537 = vmatprep.subr.bf16.mxu0 %v2372
    %3538 = vmatpush1.bf16.msra.mxu0 %v2371
    %3539 = vmatprep.mubr.bf16.mxu0 %v745
    %3540 = vmatmul.mubr.bf16.gmra.mrb[0].mxu0 %v744
    %v3541 = vpop.f32.mrb[0].mxu0
    %v3542 = vadd.f32 %v3499, %v3541
    %v3543 = vpop.f32.mrb[0].mxu0
    %v3544 = vadd.f32 %v3501, %v3543
    %v3545 = vpop.f32.mrb[0].mxu0
    %v3546 = vadd.f32 %v3503, %v3545
    %v3547 = vpop.f32.mrb[0].mxu0
    %v3548 = vadd.f32 %v3505, %v3547
    %3549 = vdwg.mxu0
    %3550 = vmatprep.subr.bf16.mxu0 %v2376
    %3551 = vmatpush1.bf16.msra.mxu0 %v2375
    %3552 = vmatprep.subr.bf16.mxu0 %v2380
    %3553 = vmatpush1.bf16.msra.mxu0 %v2379
    %3554 = vmatprep.subr.bf16.mxu0 %v2384
    %3555 = vmatpush1.bf16.msra.mxu0 %v2383
    %3556 = vmatprep.subr.bf16.mxu0 %v2388
    %3557 = vmatpush1.bf16.msra.mxu0 %v2387
    %3558 = vmatprep.subr.bf16.mxu0 %v2392
    %3559 = vmatpush1.bf16.msra.mxu0 %v2391
    %3560 = vmatprep.subr.bf16.mxu0 %v2396
    %3561 = vmatpush1.bf16.msra.mxu0 %v2395
    %3562 = vmatprep.subr.bf16.mxu0 %v2400
    %3563 = vmatpush1.bf16.msra.mxu0 %v2399
    %3564 = vmatprep.subr.bf16.mxu0 %v2404
    %3565 = vmatpush1.bf16.msra.mxu0 %v2403
    %3566 = vmatprep.subr.bf16.mxu0 %v2408
    %3567 = vmatpush1.bf16.msra.mxu0 %v2407
    %3568 = vmatprep.subr.bf16.mxu0 %v2412
    %3569 = vmatpush1.bf16.msra.mxu0 %v2411
    %3570 = vmatprep.subr.bf16.mxu0 %v2416
    %3571 = vmatpush1.bf16.msra.mxu0 %v2415
    %3572 = vmatprep.subr.bf16.mxu0 %v2420
    %3573 = vmatpush1.bf16.msra.mxu0 %v2419
    %3574 = vmatprep.subr.bf16.mxu0 %v2424
    %3575 = vmatpush1.bf16.msra.mxu0 %v2423
    %3576 = vmatprep.subr.bf16.mxu0 %v2428
    %3577 = vmatpush1.bf16.msra.mxu0 %v2427
    %3578 = vmatprep.subr.bf16.mxu0 %v2432
    %3579 = vmatpush1.bf16.msra.mxu0 %v2431
    %3580 = vmatprep.subr.bf16.mxu0 %v2436
    %3581 = vmatpush1.bf16.msra.mxu0 %v2435
    %3582 = vmatprep.mubr.bf16.mxu0 %v747
    %3583 = vmatmul.mubr.bf16.gmra.mrb[0].mxu0 %v746
    %v3584 = vpop.f32.mrb[0].mxu0
    %v3585 = vadd.f32 %v3542, %v3584
    %v3586 = vpop.f32.mrb[0].mxu0
    %v3587 = vadd.f32 %v3544, %v3586
    %v3588 = vpop.f32.mrb[0].mxu0
    %v3589 = vadd.f32 %v3546, %v3588
    %v3590 = vpop.f32.mrb[0].mxu0
    %v3591 = vadd.f32 %v3548, %v3590
    %3592 = vdwg.mxu0
    %3593 = vmatprep.subr.bf16.mxu0 %v2440
    %3594 = vmatpush1.bf16.msra.mxu0 %v2439
    %3595 = vmatprep.subr.bf16.mxu0 %v2444
    %3596 = vmatpush1.bf16.msra.mxu0 %v2443
    %3597 = vmatprep.subr.bf16.mxu0 %v2448
    %3598 = vmatpush1.bf16.msra.mxu0 %v2447
    %3599 = vmatprep.subr.bf16.mxu0 %v2452
    %3600 = vmatpush1.bf16.msra.mxu0 %v2451
    %3601 = vmatprep.subr.bf16.mxu0 %v2456
    %3602 = vmatpush1.bf16.msra.mxu0 %v2455
    %3603 = vmatprep.subr.bf16.mxu0 %v2460
    %3604 = vmatpush1.bf16.msra.mxu0 %v2459
    %3605 = vmatprep.subr.bf16.mxu0 %v2464
    %3606 = vmatpush1.bf16.msra.mxu0 %v2463
    %3607 = vmatprep.subr.bf16.mxu0 %v2468
    %3608 = vmatpush1.bf16.msra.mxu0 %v2467
    %3609 = vmatprep.subr.bf16.mxu0 %v2472
    %3610 = vmatpush1.bf16.msra.mxu0 %v2471
    %3611 = vmatprep.subr.bf16.mxu0 %v2476
    %3612 = vmatpush1.bf16.msra.mxu0 %v2475
    %3613 = vmatprep.subr.bf16.mxu0 %v2480
    %3614 = vmatpush1.bf16.msra.mxu0 %v2479
    %3615 = vmatprep.subr.bf16.mxu0 %v2484
    %3616 = vmatpush1.bf16.msra.mxu0 %v2483
    %3617 = vmatprep.subr.bf16.mxu0 %v2488
    %3618 = vmatpush1.bf16.msra.mxu0 %v2487
    %3619 = vmatprep.subr.bf16.mxu0 %v2492
    %3620 = vmatpush1.bf16.msra.mxu0 %v2491
    %3621 = vmatprep.subr.bf16.mxu0 %v2496
    %3622 = vmatpush1.bf16.msra.mxu0 %v2495
    %3623 = vmatprep.subr.bf16.mxu0 %v2500
    %3624 = vmatpush1.bf16.msra.mxu0 %v2499
    %3625 = vmatprep.mubr.bf16.mxu0 %v749
    %3626 = vmatmul.mubr.bf16.gmra.mrb[0].mxu0 %v748
    %v3627 = vpop.f32.mrb[0].mxu0
    %v3628 = vadd.f32 %v3585, %v3627
    %v3629 = vpop.f32.mrb[0].mxu0
    %v3630 = vadd.f32 %v3587, %v3629
    %v3631 = vpop.f32.mrb[0].mxu0
    %v3632 = vadd.f32 %v3589, %v3631
    %v3633 = vpop.f32.mrb[0].mxu0
    %v3634 = vadd.f32 %v3591, %v3633
    %3635 = vdwg.mxu0
    %3636 = vmatprep.subr.bf16.mxu0 %v2504
    %3637 = vmatpush1.bf16.msra.mxu0 %v2503
    %3638 = vmatprep.subr.bf16.mxu0 %v2508
    %3639 = vmatpush1.bf16.msra.mxu0 %v2507
    %3640 = vmatprep.subr.bf16.mxu0 %v2512
    %3641 = vmatpush1.bf16.msra.mxu0 %v2511
    %3642 = vmatprep.subr.bf16.mxu0 %v2516
    %3643 = vmatpush1.bf16.msra.mxu0 %v2515
    %3644 = vmatprep.subr.bf16.mxu0 %v2520
    %3645 = vmatpush1.bf16.msra.mxu0 %v2519
    %3646 = vmatprep.subr.bf16.mxu0 %v2524
    %3647 = vmatpush1.bf16.msra.mxu0 %v2523
    %3648 = vmatprep.subr.bf16.mxu0 %v2528
    %3649 = vmatpush1.bf16.msra.mxu0 %v2527
    %3650 = vmatprep.subr.bf16.mxu0 %v2532
    %3651 = vmatpush1.bf16.msra.mxu0 %v2531
    %3652 = vmatprep.subr.bf16.mxu0 %v2536
    %3653 = vmatpush1.bf16.msra.mxu0 %v2535
    %3654 = vmatprep.subr.bf16.mxu0 %v2540
    %3655 = vmatpush1.bf16.msra.mxu0 %v2539
    %3656 = vmatprep.subr.bf16.mxu0 %v2544
    %3657 = vmatpush1.bf16.msra.mxu0 %v2543
    %3658 = vmatprep.subr.bf16.mxu0 %v2548
    %3659 = vmatpush1.bf16.msra.mxu0 %v2547
    %3660 = vmatprep.subr.bf16.mxu0 %v2552
    %3661 = vmatpush1.bf16.msra.mxu0 %v2551
    %3662 = vmatprep.subr.bf16.mxu0 %v2556
    %3663 = vmatpush1.bf16.msra.mxu0 %v2555
    %3664 = vmatprep.subr.bf16.mxu0 %v2560
    %3665 = vmatpush1.bf16.msra.mxu0 %v2559
    %3666 = vmatprep.subr.bf16.mxu0 %v2564
    %3667 = vmatpush1.bf16.msra.mxu0 %v2563
    %3668 = vmatprep.mubr.bf16.mxu0 %v751
    %3669 = vmatmul.mubr.bf16.gmra.mrb[0].mxu0 %v750
    %v3670 = vpop.f32.mrb[0].mxu0
    %v3671 = vadd.f32 %v3628, %v3670
    %v3672 = vpop.f32.mrb[0].mxu0
    %v3673 = vadd.f32 %v3630, %v3672
    %v3674 = vpop.f32.mrb[0].mxu0
    %v3675 = vadd.f32 %v3632, %v3674
    %v3676 = vpop.f32.mrb[0].mxu0
    %v3677 = vadd.f32 %v3634, %v3676
    %3678 = vdwg.mxu0
    %3679 = vmatprep.subr.bf16.mxu0 %v3032
    %3680 = vmatpush1.bf16.msra.mxu0 %v3029
    %3681 = vmatprep.subr.bf16.mxu0 0
    %3682 = vmatpush1.bf16.msra.mxu0 0
    %3683 = vmatprep.subr.bf16.mxu0 0
    %3684 = vmatpush1.bf16.msra.mxu0 0
    %3685 = vmatprep.subr.bf16.mxu0 0
    %3686 = vmatpush1.bf16.msra.mxu0 0
    %3687 = vmatprep.subr.bf16.mxu0 0
    %3688 = vmatpush1.bf16.msra.mxu0 0
    %3689 = vmatprep.subr.bf16.mxu0 0
    %3690 = vmatpush1.bf16.msra.mxu0 0
    %3691 = vmatprep.subr.bf16.mxu0 0
    %3692 = vmatpush1.bf16.msra.mxu0 0
    %3693 = vmatprep.subr.bf16.mxu0 0
    %3694 = vmatpush1.bf16.msra.mxu0 0
    %3695 = vmatprep.subr.bf16.mxu0 0
    %3696 = vmatpush1.bf16.msra.mxu0 0
    %3697 = vmatprep.subr.bf16.mxu0 0
    %3698 = vmatpush1.bf16.msra.mxu0 0
    %3699 = vmatprep.subr.bf16.mxu0 0
    %3700 = vmatpush1.bf16.msra.mxu0 0
    %3701 = vmatprep.subr.bf16.mxu0 0
    %3702 = vmatpush1.bf16.msra.mxu0 0
    %3703 = vmatprep.subr.bf16.mxu0 0
    %3704 = vmatpush1.bf16.msra.mxu0 0
    %3705 = vmatprep.subr.bf16.mxu0 0
    %3706 = vmatpush1.bf16.msra.mxu0 0
    %3707 = vmatprep.subr.bf16.mxu0 0
    %3708 = vmatpush1.bf16.msra.mxu0 0
    %3709 = vmatprep.subr.bf16.mxu0 0
    %3710 = vmatpush1.bf16.msra.mxu0 0
    %3711 = vmatprep.mubr.bf16.mxu0 0
    %3712 = vmatmul.mubr.bf16.gmra.mrb[0].mxu0 %v3019
    %v3713 = vpop.f32.mrb[0].mxu0
    %v3714 = vadd.f32 %v3671, %v3713
    %v3715 = vpop.f32.mrb[0].mxu0
    %v3716 = vadd.f32 %v3673, %v3715
    %v3717 = vpop.f32.mrb[0].mxu0
    %v3718 = vadd.f32 %v3675, %v3717
    %v3719 = vpop.f32.mrb[0].mxu0
    %v3720 = vadd.f32 %v3677, %v3719
    %3721 = vdwg.mxu0
    %v3722 = vmax.f32 %v3370, 0.0
    %v3723 = vmax.f32 %v3372, 0.0
    %v3724 = vmax.f32 %v3714, 0.0
    %v3725 = vmax.f32 %v3716, 0.0
    %v3726 = vmax.f32 %v3374, 0.0
    %v3727 = vmax.f32 %v3376, 0.0
    %v3728 = vmax.f32 %v3718, 0.0
    %v3729 = vmax.f32 %v3720, 0.0
    %v3730 = vpack.c.bf16 %v3726, %v3722
    %v3731 = vpack.c.bf16 %v3727, %v3723
    %v3732 = vpack.c.bf16 %v3728, %v3724
    %v3733 = vpack.c.bf16 %v3729, %v3725
    %v3734 = vld [vmem:[#allocation7] sm:$0xff]
    %v3735 = vld [vmem:[#allocation7 + $0x8] sm:$0xff]
    %v3736 = vld [vmem:[#allocation7 + $0x10] sm:$0xff]
    %v3737 = vld [vmem:[#allocation7 + $0x18] sm:$0xff]
    %v3738 = vld [vmem:[#allocation7 + $0x20] sm:$0xff]
    %v3739 = vld [vmem:[#allocation7 + $0x28] sm:$0xff]
    %v3740 = vld [vmem:[#allocation7 + $0x30] sm:$0xff]
    %v3741 = vld [vmem:[#allocation7 + $0x38] sm:$0xff]
    %v3742 = vld [vmem:[#allocation7 + $0x40] sm:$0xff]
    %v3743 = vld [vmem:[#allocation7 + $0x48] sm:$0xff]
    %v3744 = vld [vmem:[#allocation7 + $0x50] sm:$0xff]
    %v3745 = vld [vmem:[#allocation7 + $0x58] sm:$0xff]
    %v3746 = vld [vmem:[#allocation7 + $0x60] sm:$0xff]
    %v3747 = vld [vmem:[#allocation7 + $0x68] sm:$0xff]
    %v3748 = vld [vmem:[#allocation7 + $0x70] sm:$0xff]
    %v3749 = vld [vmem:[#allocation7 + $0x78] sm:$0xff]
    %v3750 = vld [vmem:[#allocation7 + $0x80] sm:$0xff]
    %v3751 = vld [vmem:[#allocation7 + $0x88] sm:$0xff]
    %v3752 = vld [vmem:[#allocation7 + $0x90] sm:$0xff]
    %v3753 = vld [vmem:[#allocation7 + $0x98] sm:$0xff]
    %v3754 = vld [vmem:[#allocation7 + $0xa0] sm:$0xff]
    %v3755 = vld [vmem:[#allocation7 + $0xa8] sm:$0xff]
    %v3756 = vld [vmem:[#allocation7 + $0xb0] sm:$0xff]
    %v3757 = vld [vmem:[#allocation7 + $0xb8] sm:$0xff]
    %v3758 = vld [vmem:[#allocation7 + $0xc0] sm:$0xff]
    %v3759 = vld [vmem:[#allocation7 + $0xc8] sm:$0xff]
    %v3760 = vld [vmem:[#allocation7 + $0xd0] sm:$0xff]
    %v3761 = vld [vmem:[#allocation7 + $0xd8] sm:$0xff]
    %v3762 = vld [vmem:[#allocation7 + $0xe0] sm:$0xff]
    %v3763 = vld [vmem:[#allocation7 + $0xe8] sm:$0xff]
    %v3764 = vld [vmem:[#allocation7 + $0xf0] sm:$0xff]
    %v3765 = vld [vmem:[#allocation7 + $0xf8] sm:$0xff]
    %v3766 = vld [vmem:[#allocation7 + $0x100] sm:$0xff]
    %v3767 = vld [vmem:[#allocation7 + $0x108] sm:$0xff]
    %v3768 = vld [vmem:[#allocation7 + $0x110] sm:$0xff]
    %v3769 = vld [vmem:[#allocation7 + $0x118] sm:$0xff]
    %v3770 = vld [vmem:[#allocation7 + $0x120] sm:$0xff]
    %v3771 = vld [vmem:[#allocation7 + $0x128] sm:$0xff]
    %v3772 = vld [vmem:[#allocation7 + $0x130] sm:$0xff]
    %v3773 = vld [vmem:[#allocation7 + $0x138] sm:$0xff]
    %v3774 = vld [vmem:[#allocation7 + $0x140] sm:$0xff]
    %v3775 = vld [vmem:[#allocation7 + $0x148] sm:$0xff]
    %v3776 = vld [vmem:[#allocation7 + $0x150] sm:$0xff]
    %v3777 = vld [vmem:[#allocation7 + $0x158] sm:$0xff]
    %v3778 = vld [vmem:[#allocation7 + $0x160] sm:$0xff]
    %v3779 = vld [vmem:[#allocation7 + $0x168] sm:$0xff]
    %v3780 = vld [vmem:[#allocation7 + $0x170] sm:$0xff]
    %v3781 = vld [vmem:[#allocation7 + $0x178] sm:$0xff]
    %v3782 = vld [vmem:[#allocation7 + $0x180] sm:$0xff]
    %v3783 = vld [vmem:[#allocation7 + $0x188] sm:$0xff]
    %v3784 = vld [vmem:[#allocation7 + $0x190] sm:$0xff]
    %v3785 = vld [vmem:[#allocation7 + $0x198] sm:$0xff]
    %v3786 = vld [vmem:[#allocation7 + $0x1a0] sm:$0xff]
    %v3787 = vld [vmem:[#allocation7 + $0x1a8] sm:$0xff]
    %v3788 = vld [vmem:[#allocation7 + $0x1b0] sm:$0xff]
    %v3789 = vld [vmem:[#allocation7 + $0x1b8] sm:$0xff]
    %v3790 = vld [vmem:[#allocation7 + $0x1c0] sm:$0xff]
    %v3791 = vld [vmem:[#allocation7 + $0x1c8] sm:$0xff]
    %v3792 = vld [vmem:[#allocation7 + $0x1d0] sm:$0xff]
    %v3793 = vld [vmem:[#allocation7 + $0x1d8] sm:$0xff]
    %v3794 = vld [vmem:[#allocation7 + $0x1e0] sm:$0xff]
    %v3795 = vld [vmem:[#allocation7 + $0x1e8] sm:$0xff]
    %v3796 = vld [vmem:[#allocation7 + $0x1f0] sm:$0xff]
    %v3797 = vld [vmem:[#allocation7 + $0x1f8] sm:$0xff]
    %v3798 = vld [vmem:[#allocation8] sm:$0x3]
    %v3800 = vlaneseq
    %v3801 = vshrl.u32 %v3800, 7
    %v3802 = vsub.s32 0, %v3801
    %v3803 = vrot.slane %v3798, %v3802
    %v3804 = vlaneseq
    %v3805 = vshrl.u32 %v3804, 7
    %v3806 = vsub.s32 1, %v3805
    %v3807 = vrot.slane %v3798, %v3806
    %v3874 = vunpack.c.l.b16 %v3734
    %v3875 = vunpack.c.h.b16 %v3734
    %v3876 = vunpack.c.l.b16 %v3735
    %v3877 = vunpack.c.h.b16 %v3735
    %v3878 = vunpack.c.l.b16 %v3736
    %v3879 = vunpack.c.h.b16 %v3736
    %v3880 = vunpack.c.l.b16 %v3737
    %v3881 = vunpack.c.h.b16 %v3737
    %v3882 = vunpack.c.l.b16 %v3738
    %v3883 = vunpack.c.h.b16 %v3738
    %v3884 = vunpack.c.l.b16 %v3739
    %v3885 = vunpack.c.h.b16 %v3739
    %v3886 = vunpack.c.l.b16 %v3740
    %v3887 = vunpack.c.h.b16 %v3740
    %v3888 = vunpack.c.l.b16 %v3741
    %v3889 = vunpack.c.h.b16 %v3741
    %v3890 = vunpack.c.l.b16 %v3742
    %v3891 = vunpack.c.h.b16 %v3742
    %v3892 = vunpack.c.l.b16 %v3743
    %v3893 = vunpack.c.h.b16 %v3743
    %v3894 = vunpack.c.l.b16 %v3744
    %v3895 = vunpack.c.h.b16 %v3744
    %v3896 = vunpack.c.l.b16 %v3745
    %v3897 = vunpack.c.h.b16 %v3745
    %v3898 = vunpack.c.l.b16 %v3746
    %v3899 = vunpack.c.h.b16 %v3746
    %v3900 = vunpack.c.l.b16 %v3747
    %v3901 = vunpack.c.h.b16 %v3747
    %v3902 = vunpack.c.l.b16 %v3748
    %v3903 = vunpack.c.h.b16 %v3748
    %v3904 = vunpack.c.l.b16 %v3749
    %v3905 = vunpack.c.h.b16 %v3749
    %v3906 = vunpack.c.l.b16 %v3750
    %v3907 = vunpack.c.h.b16 %v3750
    %v3908 = vunpack.c.l.b16 %v3751
    %v3909 = vunpack.c.h.b16 %v3751
    %v3910 = vunpack.c.l.b16 %v3752
    %v3911 = vunpack.c.h.b16 %v3752
    %v3912 = vunpack.c.l.b16 %v3753
    %v3913 = vunpack.c.h.b16 %v3753
    %v3914 = vunpack.c.l.b16 %v3754
    %v3915 = vunpack.c.h.b16 %v3754
    %v3916 = vunpack.c.l.b16 %v3755
    %v3917 = vunpack.c.h.b16 %v3755
    %v3918 = vunpack.c.l.b16 %v3756
    %v3919 = vunpack.c.h.b16 %v3756
    %v3920 = vunpack.c.l.b16 %v3757
    %v3921 = vunpack.c.h.b16 %v3757
    %v3922 = vunpack.c.l.b16 %v3758
    %v3923 = vunpack.c.h.b16 %v3758
    %v3924 = vunpack.c.l.b16 %v3759
    %v3925 = vunpack.c.h.b16 %v3759
    %v3926 = vunpack.c.l.b16 %v3760
    %v3927 = vunpack.c.h.b16 %v3760
    %v3928 = vunpack.c.l.b16 %v3761
    %v3929 = vunpack.c.h.b16 %v3761
    %v3930 = vunpack.c.l.b16 %v3762
    %v3931 = vunpack.c.h.b16 %v3762
    %v3932 = vunpack.c.l.b16 %v3763
    %v3933 = vunpack.c.h.b16 %v3763
    %v3934 = vunpack.c.l.b16 %v3764
    %v3935 = vunpack.c.h.b16 %v3764
    %v3936 = vunpack.c.l.b16 %v3765
    %v3937 = vunpack.c.h.b16 %v3765
    %v3938 = vunpack.c.l.b16 %v3766
    %v3939 = vunpack.c.h.b16 %v3766
    %v3940 = vunpack.c.l.b16 %v3767
    %v3941 = vunpack.c.h.b16 %v3767
    %v3942 = vunpack.c.l.b16 %v3768
    %v3943 = vunpack.c.h.b16 %v3768
    %v3944 = vunpack.c.l.b16 %v3769
    %v3945 = vunpack.c.h.b16 %v3769
    %v3946 = vunpack.c.l.b16 %v3770
    %v3947 = vunpack.c.h.b16 %v3770
    %v3948 = vunpack.c.l.b16 %v3771
    %v3949 = vunpack.c.h.b16 %v3771
    %v3950 = vunpack.c.l.b16 %v3772
    %v3951 = vunpack.c.h.b16 %v3772
    %v3952 = vunpack.c.l.b16 %v3773
    %v3953 = vunpack.c.h.b16 %v3773
    %v3954 = vunpack.c.l.b16 %v3774
    %v3955 = vunpack.c.h.b16 %v3774
    %v3956 = vunpack.c.l.b16 %v3775
    %v3957 = vunpack.c.h.b16 %v3775
    %v3958 = vunpack.c.l.b16 %v3776
    %v3959 = vunpack.c.h.b16 %v3776
    %v3960 = vunpack.c.l.b16 %v3777
    %v3961 = vunpack.c.h.b16 %v3777
    %v3962 = vunpack.c.l.b16 %v3778
    %v3963 = vunpack.c.h.b16 %v3778
    %v3964 = vunpack.c.l.b16 %v3779
    %v3965 = vunpack.c.h.b16 %v3779
    %v3966 = vunpack.c.l.b16 %v3780
    %v3967 = vunpack.c.h.b16 %v3780
    %v3968 = vunpack.c.l.b16 %v3781
    %v3969 = vunpack.c.h.b16 %v3781
    %v3970 = vunpack.c.l.b16 %v3782
    %v3971 = vunpack.c.h.b16 %v3782
    %v3972 = vunpack.c.l.b16 %v3783
    %v3973 = vunpack.c.h.b16 %v3783
    %v3974 = vunpack.c.l.b16 %v3784
    %v3975 = vunpack.c.h.b16 %v3784
    %v3976 = vunpack.c.l.b16 %v3785
    %v3977 = vunpack.c.h.b16 %v3785
    %v3978 = vunpack.c.l.b16 %v3786
    %v3979 = vunpack.c.h.b16 %v3786
    %v3980 = vunpack.c.l.b16 %v3787
    %v3981 = vunpack.c.h.b16 %v3787
    %v3982 = vunpack.c.l.b16 %v3788
    %v3983 = vunpack.c.h.b16 %v3788
    %v3984 = vunpack.c.l.b16 %v3789
    %v3985 = vunpack.c.h.b16 %v3789
    %v3986 = vunpack.c.l.b16 %v3790
    %v3987 = vunpack.c.h.b16 %v3790
    %v3988 = vunpack.c.l.b16 %v3791
    %v3989 = vunpack.c.h.b16 %v3791
    %v3990 = vunpack.c.l.b16 %v3792
    %v3991 = vunpack.c.h.b16 %v3792
    %v3992 = vunpack.c.l.b16 %v3793
    %v3993 = vunpack.c.h.b16 %v3793
    %v3994 = vunpack.c.l.b16 %v3794
    %v3995 = vunpack.c.h.b16 %v3794
    %v3996 = vunpack.c.l.b16 %v3795
    %v3997 = vunpack.c.h.b16 %v3795
    %v3998 = vunpack.c.l.b16 %v3796
    %v3999 = vunpack.c.h.b16 %v3796
    %v4000 = vunpack.c.l.b16 %v3797
    %v4001 = vunpack.c.h.b16 %v3797
    %v4002 = vpack.c.b16 %v3876, %v3874
    %v4003 = vpack.c.b16 %v3877, %v3875
    %v4004 = vpack.c.b16 %v3880, %v3878
    %v4005 = vpack.c.b16 %v3881, %v3879
    %v4006 = vpack.c.b16 %v3884, %v3882
    %v4007 = vpack.c.b16 %v3885, %v3883
    %v4008 = vpack.c.b16 %v3888, %v3886
    %v4009 = vpack.c.b16 %v3889, %v3887
    %v4010 = vpack.c.b16 %v3892, %v3890
    %v4011 = vpack.c.b16 %v3893, %v3891
    %v4012 = vpack.c.b16 %v3896, %v3894
    %v4013 = vpack.c.b16 %v3897, %v3895
    %v4014 = vpack.c.b16 %v3900, %v3898
    %v4015 = vpack.c.b16 %v3901, %v3899
    %v4016 = vpack.c.b16 %v3904, %v3902
    %v4017 = vpack.c.b16 %v3905, %v3903
    %v4018 = vpack.c.b16 %v3908, %v3906
    %v4019 = vpack.c.b16 %v3909, %v3907
    %v4020 = vpack.c.b16 %v3912, %v3910
    %v4021 = vpack.c.b16 %v3913, %v3911
    %v4022 = vpack.c.b16 %v3916, %v3914
    %v4023 = vpack.c.b16 %v3917, %v3915
    %v4024 = vpack.c.b16 %v3920, %v3918
    %v4025 = vpack.c.b16 %v3921, %v3919
    %v4026 = vpack.c.b16 %v3924, %v3922
    %v4027 = vpack.c.b16 %v3925, %v3923
    %v4028 = vpack.c.b16 %v3928, %v3926
    %v4029 = vpack.c.b16 %v3929, %v3927
    %v4030 = vpack.c.b16 %v3932, %v3930
    %v4031 = vpack.c.b16 %v3933, %v3931
    %v4032 = vpack.c.b16 %v3936, %v3934
    %v4033 = vpack.c.b16 %v3937, %v3935
    %v4034 = vpack.c.b16 %v3940, %v3938
    %v4035 = vpack.c.b16 %v3941, %v3939
    %v4036 = vpack.c.b16 %v3944, %v3942
    %v4037 = vpack.c.b16 %v3945, %v3943
    %v4038 = vpack.c.b16 %v3948, %v3946
    %v4039 = vpack.c.b16 %v3949, %v3947
    %v4040 = vpack.c.b16 %v3952, %v3950
    %v4041 = vpack.c.b16 %v3953, %v3951
    %v4042 = vpack.c.b16 %v3956, %v3954
    %v4043 = vpack.c.b16 %v3957, %v3955
    %v4044 = vpack.c.b16 %v3960, %v3958
    %v4045 = vpack.c.b16 %v3961, %v3959
    %v4046 = vpack.c.b16 %v3964, %v3962
    %v4047 = vpack.c.b16 %v3965, %v3963
    %v4048 = vpack.c.b16 %v3968, %v3966
    %v4049 = vpack.c.b16 %v3969, %v3967
    %v4050 = vpack.c.b16 %v3972, %v3970
    %v4051 = vpack.c.b16 %v3973, %v3971
    %v4052 = vpack.c.b16 %v3976, %v3974
    %v4053 = vpack.c.b16 %v3977, %v3975
    %v4054 = vpack.c.b16 %v3980, %v3978
    %v4055 = vpack.c.b16 %v3981, %v3979
    %v4056 = vpack.c.b16 %v3984, %v3982
    %v4057 = vpack.c.b16 %v3985, %v3983
    %v4058 = vpack.c.b16 %v3988, %v3986
    %v4059 = vpack.c.b16 %v3989, %v3987
    %v4060 = vpack.c.b16 %v3992, %v3990
    %v4061 = vpack.c.b16 %v3993, %v3991
    %v4062 = vpack.c.b16 %v3996, %v3994
    %v4063 = vpack.c.b16 %v3997, %v3995
    %v4064 = vpack.c.b16 %v4000, %v3998
    %v4065 = vpack.c.b16 %v4001, %v3999
    %4130 = vmatprep.subr.bf16.mxu0 %v4003
    %4131 = vmatpush1.bf16.msra.mxu0 %v4002
    %4132 = vmatprep.subr.bf16.mxu0 %v4005
    %4133 = vmatpush1.bf16.msra.mxu0 %v4004
    %4134 = vmatprep.subr.bf16.mxu0 %v4007
    %4135 = vmatpush1.bf16.msra.mxu0 %v4006
    %4136 = vmatprep.subr.bf16.mxu0 %v4009
    %4137 = vmatpush1.bf16.msra.mxu0 %v4008
    %4138 = vmatprep.subr.bf16.mxu0 %v4011
    %4139 = vmatpush1.bf16.msra.mxu0 %v4010
    %4140 = vmatprep.subr.bf16.mxu0 %v4013
    %4141 = vmatpush1.bf16.msra.mxu0 %v4012
    %4142 = vmatprep.subr.bf16.mxu0 %v4015
    %4143 = vmatpush1.bf16.msra.mxu0 %v4014
    %4144 = vmatprep.subr.bf16.mxu0 %v4017
    %4145 = vmatpush1.bf16.msra.mxu0 %v4016
    %4146 = vmatprep.subr.bf16.mxu0 %v4019
    %4147 = vmatpush1.bf16.msra.mxu0 %v4018
    %4148 = vmatprep.subr.bf16.mxu0 %v4021
    %4149 = vmatpush1.bf16.msra.mxu0 %v4020
    %4150 = vmatprep.subr.bf16.mxu0 %v4023
    %4151 = vmatpush1.bf16.msra.mxu0 %v4022
    %4152 = vmatprep.subr.bf16.mxu0 %v4025
    %4153 = vmatpush1.bf16.msra.mxu0 %v4024
    %4154 = vmatprep.subr.bf16.mxu0 %v4027
    %4155 = vmatpush1.bf16.msra.mxu0 %v4026
    %4156 = vmatprep.subr.bf16.mxu0 %v4029
    %4157 = vmatpush1.bf16.msra.mxu0 %v4028
    %4158 = vmatprep.subr.bf16.mxu0 %v4031
    %4159 = vmatpush1.bf16.msra.mxu0 %v4030
    %4160 = vmatprep.subr.bf16.mxu0 %v4033
    %4161 = vmatpush1.bf16.msra.mxu0 %v4032
    %4162 = vmatprep.mubr.bf16.mxu0 %v3731
    %4163 = vmatmul.mubr.bf16.gmra.mrb[0].mxu0 %v3730
    %v4164 = vpop.f32.mrb[0].mxu0
    %v4165 = vadd.f32 %v3803, %v4164
    %v4166 = vpop.f32.mrb[0].mxu0
    %v4167 = vadd.f32 %v3807, %v4166
    %v4168 = vpop.f32.mrb[0].mxu0
    %v4169 = vadd.f32 %v3803, %v4168
    %v4170 = vpop.f32.mrb[0].mxu0
    %v4171 = vadd.f32 %v3807, %v4170
    %4172 = vdwg.mxu0
    %4173 = vmatprep.subr.bf16.mxu0 %v4035
    %4174 = vmatpush1.bf16.msra.mxu0 %v4034
    %4175 = vmatprep.subr.bf16.mxu0 %v4037
    %4176 = vmatpush1.bf16.msra.mxu0 %v4036
    %4177 = vmatprep.subr.bf16.mxu0 %v4039
    %4178 = vmatpush1.bf16.msra.mxu0 %v4038
    %4179 = vmatprep.subr.bf16.mxu0 %v4041
    %4180 = vmatpush1.bf16.msra.mxu0 %v4040
    %4181 = vmatprep.subr.bf16.mxu0 %v4043
    %4182 = vmatpush1.bf16.msra.mxu0 %v4042
    %4183 = vmatprep.subr.bf16.mxu0 %v4045
    %4184 = vmatpush1.bf16.msra.mxu0 %v4044
    %4185 = vmatprep.subr.bf16.mxu0 %v4047
    %4186 = vmatpush1.bf16.msra.mxu0 %v4046
    %4187 = vmatprep.subr.bf16.mxu0 %v4049
    %4188 = vmatpush1.bf16.msra.mxu0 %v4048
    %4189 = vmatprep.subr.bf16.mxu0 %v4051
    %4190 = vmatpush1.bf16.msra.mxu0 %v4050
    %4191 = vmatprep.subr.bf16.mxu0 %v4053
    %4192 = vmatpush1.bf16.msra.mxu0 %v4052
    %4193 = vmatprep.subr.bf16.mxu0 %v4055
    %4194 = vmatpush1.bf16.msra.mxu0 %v4054
    %4195 = vmatprep.subr.bf16.mxu0 %v4057
    %4196 = vmatpush1.bf16.msra.mxu0 %v4056
    %4197 = vmatprep.subr.bf16.mxu0 %v4059
    %4198 = vmatpush1.bf16.msra.mxu0 %v4058
    %4199 = vmatprep.subr.bf16.mxu0 %v4061
    %4200 = vmatpush1.bf16.msra.mxu0 %v4060
    %4201 = vmatprep.subr.bf16.mxu0 %v4063
    %4202 = vmatpush1.bf16.msra.mxu0 %v4062
    %4203 = vmatprep.subr.bf16.mxu0 %v4065
    %4204 = vmatpush1.bf16.msra.mxu0 %v4064
    %4205 = vmatprep.mubr.bf16.mxu0 %v3733
    %4206 = vmatmul.mubr.bf16.gmra.mrb[0].mxu0 %v3732
    %v4207 = vpop.f32.mrb[0].mxu0
    %v4208 = vadd.f32 %v4165, %v4207
    %v4209 = vpop.f32.mrb[0].mxu0
    %v4210 = vadd.f32 %v4167, %v4209
    %v4211 = vpop.f32.mrb[0].mxu0
    %v4212 = vadd.f32 %v4169, %v4211
    %v4213 = vpop.f32.mrb[0].mxu0
    %v4214 = vadd.f32 %v4171, %v4213
    %4215 = vdwg.mxu0
    %v4216 = vmax.f32 %v4208, 0.0
    %v4217 = vmax.f32 %v4210, 0.0
    %v4218 = vmax.f32 %v4212, 0.0
    %v4219 = vmax.f32 %v4214, 0.0
    %v4220 = vpack.c.bf16 %v4218, %v4216
    %v4221 = vpack.c.bf16 %v4219, %v4217
    %v4222 = vld [vmem:[#allocation10] sm:$0xff]
    %v4223 = vld [vmem:[#allocation10 + $0x8] sm:$0xff]
    %v4224 = vld [vmem:[#allocation10 + $0x10] sm:$0xff]
    %v4225 = vld [vmem:[#allocation10 + $0x18] sm:$0xff]
    %v4226 = vld [vmem:[#allocation10 + $0x20] sm:$0xff]
    %v4227 = vld [vmem:[#allocation10 + $0x28] sm:$0xff]
    %v4228 = vld [vmem:[#allocation10 + $0x30] sm:$0xff]
    %v4229 = vld [vmem:[#allocation10 + $0x38] sm:$0xff]
    %v4230 = vld [vmem:[#allocation10 + $0x40] sm:$0xff]
    %v4231 = vld [vmem:[#allocation10 + $0x48] sm:$0xff]
    %v4232 = vld [vmem:[#allocation10 + $0x50] sm:$0xff]
    %v4233 = vld [vmem:[#allocation10 + $0x58] sm:$0xff]
    %v4234 = vld [vmem:[#allocation10 + $0x60] sm:$0xff]
    %v4235 = vld [vmem:[#allocation10 + $0x68] sm:$0xff]
    %v4236 = vld [vmem:[#allocation10 + $0x70] sm:$0xff]
    %v4237 = vld [vmem:[#allocation10 + $0x78] sm:$0xff]
    %v4238 = vld [vmem:[#allocation10 + $0x80] sm:$0xff]
    %v4239 = vld [vmem:[#allocation10 + $0x88] sm:$0xff]
    %v4240 = vld [vmem:[#allocation10 + $0x90] sm:$0xff]
    %v4241 = vld [vmem:[#allocation10 + $0x98] sm:$0xff]
    %v4242 = vld [vmem:[#allocation10 + $0xa0] sm:$0xff]
    %v4243 = vld [vmem:[#allocation10 + $0xa8] sm:$0xff]
    %v4244 = vld [vmem:[#allocation10 + $0xb0] sm:$0xff]
    %v4245 = vld [vmem:[#allocation10 + $0xb8] sm:$0xff]
    %v4246 = vld [vmem:[#allocation10 + $0xc0] sm:$0xff]
    %v4247 = vld [vmem:[#allocation10 + $0xc8] sm:$0xff]
    %v4248 = vld [vmem:[#allocation10 + $0xd0] sm:$0xff]
    %v4249 = vld [vmem:[#allocation10 + $0xd8] sm:$0xff]
    %v4250 = vld [vmem:[#allocation10 + $0xe0] sm:$0xff]
    %v4251 = vld [vmem:[#allocation10 + $0xe8] sm:$0xff]
    %v4252 = vld [vmem:[#allocation10 + $0xf0] sm:$0xff]
    %v4253 = vld [vmem:[#allocation10 + $0xf8] sm:$0xff]
    %v4254 = vld [vmem:[#allocation11] sm:$0x3]
    %v4256 = vlaneseq
    %v4257 = vshrl.u32 %v4256, 7
    %v4258 = vsub.s32 0, %v4257
    %v4259 = vrot.slane %v4254, %v4258
    %v4260 = vlaneseq
    %v4261 = vshrl.u32 %v4260, 7
    %v4262 = vsub.s32 1, %v4261
    %v4263 = vrot.slane %v4254, %v4262
    %v4298 = vunpack.c.l.b16 %v4222
    %v4299 = vunpack.c.h.b16 %v4222
    %v4300 = vunpack.c.l.b16 %v4223
    %v4301 = vunpack.c.h.b16 %v4223
    %v4302 = vunpack.c.l.b16 %v4224
    %v4303 = vunpack.c.h.b16 %v4224
    %v4304 = vunpack.c.l.b16 %v4225
    %v4305 = vunpack.c.h.b16 %v4225
    %v4306 = vunpack.c.l.b16 %v4226
    %v4307 = vunpack.c.h.b16 %v4226
    %v4308 = vunpack.c.l.b16 %v4227
    %v4309 = vunpack.c.h.b16 %v4227
    %v4310 = vunpack.c.l.b16 %v4228
    %v4311 = vunpack.c.h.b16 %v4228
    %v4312 = vunpack.c.l.b16 %v4229
    %v4313 = vunpack.c.h.b16 %v4229
    %v4314 = vunpack.c.l.b16 %v4230
    %v4315 = vunpack.c.h.b16 %v4230
    %v4316 = vunpack.c.l.b16 %v4231
    %v4317 = vunpack.c.h.b16 %v4231
    %v4318 = vunpack.c.l.b16 %v4232
    %v4319 = vunpack.c.h.b16 %v4232
    %v4320 = vunpack.c.l.b16 %v4233
    %v4321 = vunpack.c.h.b16 %v4233
    %v4322 = vunpack.c.l.b16 %v4234
    %v4323 = vunpack.c.h.b16 %v4234
    %v4324 = vunpack.c.l.b16 %v4235
    %v4325 = vunpack.c.h.b16 %v4235
    %v4326 = vunpack.c.l.b16 %v4236
    %v4327 = vunpack.c.h.b16 %v4236
    %v4328 = vunpack.c.l.b16 %v4237
    %v4329 = vunpack.c.h.b16 %v4237
    %v4330 = vunpack.c.l.b16 %v4238
    %v4331 = vunpack.c.h.b16 %v4238
    %v4332 = vunpack.c.l.b16 %v4239
    %v4333 = vunpack.c.h.b16 %v4239
    %v4334 = vunpack.c.l.b16 %v4240
    %v4335 = vunpack.c.h.b16 %v4240
    %v4336 = vunpack.c.l.b16 %v4241
    %v4337 = vunpack.c.h.b16 %v4241
    %v4338 = vunpack.c.l.b16 %v4242
    %v4339 = vunpack.c.h.b16 %v4242
    %v4340 = vunpack.c.l.b16 %v4243
    %v4341 = vunpack.c.h.b16 %v4243
    %v4342 = vunpack.c.l.b16 %v4244
    %v4343 = vunpack.c.h.b16 %v4244
    %v4344 = vunpack.c.l.b16 %v4245
    %v4345 = vunpack.c.h.b16 %v4245
    %v4346 = vunpack.c.l.b16 %v4246
    %v4347 = vunpack.c.h.b16 %v4246
    %v4348 = vunpack.c.l.b16 %v4247
    %v4349 = vunpack.c.h.b16 %v4247
    %v4350 = vunpack.c.l.b16 %v4248
    %v4351 = vunpack.c.h.b16 %v4248
    %v4352 = vunpack.c.l.b16 %v4249
    %v4353 = vunpack.c.h.b16 %v4249
    %v4354 = vunpack.c.l.b16 %v4250
    %v4355 = vunpack.c.h.b16 %v4250
    %v4356 = vunpack.c.l.b16 %v4251
    %v4357 = vunpack.c.h.b16 %v4251
    %v4358 = vunpack.c.l.b16 %v4252
    %v4359 = vunpack.c.h.b16 %v4252
    %v4360 = vunpack.c.l.b16 %v4253
    %v4361 = vunpack.c.h.b16 %v4253
    %v4362 = vpack.c.b16 %v4300, %v4298
    %v4363 = vpack.c.b16 %v4301, %v4299
    %v4364 = vpack.c.b16 %v4304, %v4302
    %v4365 = vpack.c.b16 %v4305, %v4303
    %v4366 = vpack.c.b16 %v4308, %v4306
    %v4367 = vpack.c.b16 %v4309, %v4307
    %v4368 = vpack.c.b16 %v4312, %v4310
    %v4369 = vpack.c.b16 %v4313, %v4311
    %v4370 = vpack.c.b16 %v4316, %v4314
    %v4371 = vpack.c.b16 %v4317, %v4315
    %v4372 = vpack.c.b16 %v4320, %v4318
    %v4373 = vpack.c.b16 %v4321, %v4319
    %v4374 = vpack.c.b16 %v4324, %v4322
    %v4375 = vpack.c.b16 %v4325, %v4323
    %v4376 = vpack.c.b16 %v4328, %v4326
    %v4377 = vpack.c.b16 %v4329, %v4327
    %v4378 = vpack.c.b16 %v4332, %v4330
    %v4379 = vpack.c.b16 %v4333, %v4331
    %v4380 = vpack.c.b16 %v4336, %v4334
    %v4381 = vpack.c.b16 %v4337, %v4335
    %v4382 = vpack.c.b16 %v4340, %v4338
    %v4383 = vpack.c.b16 %v4341, %v4339
    %v4384 = vpack.c.b16 %v4344, %v4342
    %v4385 = vpack.c.b16 %v4345, %v4343
    %v4386 = vpack.c.b16 %v4348, %v4346
    %v4387 = vpack.c.b16 %v4349, %v4347
    %v4388 = vpack.c.b16 %v4352, %v4350
    %v4389 = vpack.c.b16 %v4353, %v4351
    %v4390 = vpack.c.b16 %v4356, %v4354
    %v4391 = vpack.c.b16 %v4357, %v4355
    %v4392 = vpack.c.b16 %v4360, %v4358
    %v4393 = vpack.c.b16 %v4361, %v4359
    %4426 = vmatprep.subr.bf16.mxu0 %v4363
    %4427 = vmatpush1.bf16.msra.mxu0 %v4362
    %4428 = vmatprep.subr.bf16.mxu0 %v4365
    %4429 = vmatpush1.bf16.msra.mxu0 %v4364
    %4430 = vmatprep.subr.bf16.mxu0 %v4367
    %4431 = vmatpush1.bf16.msra.mxu0 %v4366
    %4432 = vmatprep.subr.bf16.mxu0 %v4369
    %4433 = vmatpush1.bf16.msra.mxu0 %v4368
    %4434 = vmatprep.subr.bf16.mxu0 %v4371
    %4435 = vmatpush1.bf16.msra.mxu0 %v4370
    %4436 = vmatprep.subr.bf16.mxu0 %v4373
    %4437 = vmatpush1.bf16.msra.mxu0 %v4372
    %4438 = vmatprep.subr.bf16.mxu0 %v4375
    %4439 = vmatpush1.bf16.msra.mxu0 %v4374
    %4440 = vmatprep.subr.bf16.mxu0 %v4377
    %4441 = vmatpush1.bf16.msra.mxu0 %v4376
    %4442 = vmatprep.subr.bf16.mxu0 %v4379
    %4443 = vmatpush1.bf16.msra.mxu0 %v4378
    %4444 = vmatprep.subr.bf16.mxu0 %v4381
    %4445 = vmatpush1.bf16.msra.mxu0 %v4380
    %4446 = vmatprep.subr.bf16.mxu0 %v4383
    %4447 = vmatpush1.bf16.msra.mxu0 %v4382
    %4448 = vmatprep.subr.bf16.mxu0 %v4385
    %4449 = vmatpush1.bf16.msra.mxu0 %v4384
    %4450 = vmatprep.subr.bf16.mxu0 %v4387
    %4451 = vmatpush1.bf16.msra.mxu0 %v4386
    %4452 = vmatprep.subr.bf16.mxu0 %v4389
    %4453 = vmatpush1.bf16.msra.mxu0 %v4388
    %4454 = vmatprep.subr.bf16.mxu0 %v4391
    %4455 = vmatpush1.bf16.msra.mxu0 %v4390
    %4456 = vmatprep.subr.bf16.mxu0 %v4393
    %4457 = vmatpush1.bf16.msra.mxu0 %v4392
    %4458 = vmatprep.mubr.bf16.mxu0 %v4221
    %4459 = vmatmul.mubr.bf16.gmra.mrb[0].mxu0 %v4220
    %v4460 = vpop.f32.mrb[0].mxu0
    %v4461 = vadd.f32 %v4259, %v4460
    %v4462 = vpop.f32.mrb[0].mxu0
    %v4463 = vadd.f32 %v4263, %v4462
    %v4464 = vpop.f32.mrb[0].mxu0
    %v4465 = vadd.f32 %v4259, %v4464
    %v4466 = vpop.f32.mrb[0].mxu0
    %v4467 = vadd.f32 %v4263, %v4466
    %4468 = vdwg.mxu0
    %v4469 = vmul.f32 %v4463, 0.5
    %v4470 = vmul.f32 %v4467, 0.5
    %v4471 = vmul.f32 %v4469, 1.442695
    %v4472 = vpow.pop %v4471
    %v4473 = vmul.f32 %v4470, 1.442695
    %v4474 = vpow.pop %v4473
    %v4475 = vld [vmem:[%s1] sm:$0xff]
    %v4476 = vld [vmem:[%s1 + $0x8] sm:$0xff]
    %v4477 = vmul.f32 %v4472, %v4475
    %v4478 = vmul.f32 %v4474, %v4476
    %v4479 = vadd.f32 %v4461, %v4477
    %v4480 = vadd.f32 %v4465, %v4478
    %v4481 = vpack.c.bf16 %v4480, %v4479
    %v4482 = vld [vmem:[#allocation13] sm:$0xff]
    %v4483 = vld [vmem:[#allocation13 + $0x8] sm:$0xff]
    %v4484 = vld [vmem:[#allocation13 + $0x10] sm:$0xff]
    %v4485 = vld [vmem:[#allocation13 + $0x18] sm:$0xff]
    %v4486 = vld [vmem:[#allocation13 + $0x20] sm:$0xff]
    %v4487 = vld [vmem:[#allocation13 + $0x28] sm:$0xff]
    %v4488 = vld [vmem:[#allocation13 + $0x30] sm:$0xff]
    %v4489 = vld [vmem:[#allocation13 + $0x38] sm:$0xff]
    %v4490 = vld [vmem:[#allocation13 + $0x40] sm:$0xff]
    %v4491 = vld [vmem:[#allocation13 + $0x48] sm:$0xff]
    %v4492 = vld [vmem:[#allocation13 + $0x50] sm:$0xff]
    %v4493 = vld [vmem:[#allocation13 + $0x58] sm:$0xff]
    %v4494 = vld [vmem:[#allocation13 + $0x60] sm:$0xff]
    %v4495 = vld [vmem:[#allocation13 + $0x68] sm:$0xff]
    %v4496 = vld [vmem:[#allocation13 + $0x70] sm:$0xff]
    %v4497 = vld [vmem:[#allocation13 + $0x78] sm:$0xff]
    %v4498 = vld [vmem:[#allocation14] sm:$0x3]
    %v4500 = vlaneseq
    %v4501 = vshrl.u32 %v4500, 7
    %v4502 = vsub.s32 0, %v4501
    %v4503 = vrot.slane %v4498, %v4502
    %v4504 = vlaneseq
    %v4505 = vshrl.u32 %v4504, 7
    %v4506 = vsub.s32 1, %v4505
    %v4507 = vrot.slane %v4498, %v4506
    %v4526 = vunpack.c.l.b16 %v4482
    %v4527 = vunpack.c.h.b16 %v4482
    %v4528 = vunpack.c.l.b16 %v4483
    %v4529 = vunpack.c.h.b16 %v4483
    %v4530 = vunpack.c.l.b16 %v4484
    %v4531 = vunpack.c.h.b16 %v4484
    %v4532 = vunpack.c.l.b16 %v4485
    %v4533 = vunpack.c.h.b16 %v4485
    %v4534 = vunpack.c.l.b16 %v4486
    %v4535 = vunpack.c.h.b16 %v4486
    %v4536 = vunpack.c.l.b16 %v4487
    %v4537 = vunpack.c.h.b16 %v4487
    %v4538 = vunpack.c.l.b16 %v4488
    %v4539 = vunpack.c.h.b16 %v4488
    %v4540 = vunpack.c.l.b16 %v4489
    %v4541 = vunpack.c.h.b16 %v4489
    %v4542 = vunpack.c.l.b16 %v4490
    %v4543 = vunpack.c.h.b16 %v4490
    %v4544 = vunpack.c.l.b16 %v4491
    %v4545 = vunpack.c.h.b16 %v4491
    %v4546 = vunpack.c.l.b16 %v4492
    %v4547 = vunpack.c.h.b16 %v4492
    %v4548 = vunpack.c.l.b16 %v4493
    %v4549 = vunpack.c.h.b16 %v4493
    %v4550 = vunpack.c.l.b16 %v4494
    %v4551 = vunpack.c.h.b16 %v4494
    %v4552 = vunpack.c.l.b16 %v4495
    %v4553 = vunpack.c.h.b16 %v4495
    %v4554 = vunpack.c.l.b16 %v4496
    %v4555 = vunpack.c.h.b16 %v4496
    %v4556 = vunpack.c.l.b16 %v4497
    %v4557 = vunpack.c.h.b16 %v4497
    %v4558 = vpack.c.b16 %v4528, %v4526
    %v4559 = vpack.c.b16 %v4529, %v4527
    %v4560 = vpack.c.b16 %v4532, %v4530
    %v4561 = vpack.c.b16 %v4533, %v4531
    %v4562 = vpack.c.b16 %v4536, %v4534
    %v4563 = vpack.c.b16 %v4537, %v4535
    %v4564 = vpack.c.b16 %v4540, %v4538
    %v4565 = vpack.c.b16 %v4541, %v4539
    %v4566 = vpack.c.b16 %v4544, %v4542
    %v4567 = vpack.c.b16 %v4545, %v4543
    %v4568 = vpack.c.b16 %v4548, %v4546
    %v4569 = vpack.c.b16 %v4549, %v4547
    %v4570 = vpack.c.b16 %v4552, %v4550
    %v4571 = vpack.c.b16 %v4553, %v4551
    %v4572 = vpack.c.b16 %v4556, %v4554
    %v4573 = vpack.c.b16 %v4557, %v4555
    %4590 = vmatprep.subr.bf16.mxu0 %v4559
    %4591 = vmatpush1.bf16.msra.mxu0 %v4558
    %4592 = vmatprep.subr.bf16.mxu0 %v4561
    %4593 = vmatpush1.bf16.msra.mxu0 %v4560
    %4594 = vmatprep.subr.bf16.mxu0 %v4563
    %4595 = vmatpush1.bf16.msra.mxu0 %v4562
    %4596 = vmatprep.subr.bf16.mxu0 %v4565
    %4597 = vmatpush1.bf16.msra.mxu0 %v4564
    %4598 = vmatprep.subr.bf16.mxu0 %v4567
    %4599 = vmatpush1.bf16.msra.mxu0 %v4566
    %4600 = vmatprep.subr.bf16.mxu0 %v4569
    %4601 = vmatpush1.bf16.msra.mxu0 %v4568
    %4602 = vmatprep.subr.bf16.mxu0 %v4571
    %4603 = vmatpush1.bf16.msra.mxu0 %v4570
    %4604 = vmatprep.subr.bf16.mxu0 %v4573
    %4605 = vmatpush1.bf16.msra.mxu0 %v4572
    %4606 = vmatprep.subr.bf16.mxu0 0
    %4607 = vmatpush1.bf16.msra.mxu0 0
    %4608 = vmatprep.subr.bf16.mxu0 0
    %4609 = vmatpush1.bf16.msra.mxu0 0
    %4610 = vmatprep.subr.bf16.mxu0 0
    %4611 = vmatpush1.bf16.msra.mxu0 0
    %4612 = vmatprep.subr.bf16.mxu0 0
    %4613 = vmatpush1.bf16.msra.mxu0 0
    %4614 = vmatprep.subr.bf16.mxu0 0
    %4615 = vmatpush1.bf16.msra.mxu0 0
    %4616 = vmatprep.subr.bf16.mxu0 0
    %4617 = vmatpush1.bf16.msra.mxu0 0
    %4618 = vmatprep.subr.bf16.mxu0 0
    %4619 = vmatpush1.bf16.msra.mxu0 0
    %4620 = vmatprep.subr.bf16.mxu0 0
    %4621 = vmatpush1.bf16.msra.mxu0 0
    %4622 = vmatprep.mubr.bf16.mxu0 0
    %4623 = vmatmul.mubr.bf16.gmra.mrb[0].mxu0 %v4481
    %v4624 = vpop.f32.mrb[0].mxu0
    %v4625 = vadd.f32 %v4503, %v4624
    %v4626 = vpop.f32.mrb[0].mxu0
    %v4627 = vadd.f32 %v4507, %v4626
    %v4628 = vpop.f32.mrb[0].mxu0
    %v4629 = vadd.f32 %v4503, %v4628
    %v4630 = vpop.f32.mrb[0].mxu0
    %v4631 = vadd.f32 %v4507, %v4630
    %4632 = vdwg.mxu0
    %v4633 = vmax.f32 %v4625, 0.0
    %v4634 = vmax.f32 %v4627, 0.0
    %v4635 = vmax.f32 %v4629, 0.0
    %v4636 = vmax.f32 %v4631, 0.0
    %v4637 = vpack.c.bf16 %v4635, %v4633
    %v4638 = vpack.c.bf16 %v4636, %v4634
    %v4639 = vld [vmem:[#allocation16] sm:$0xff]
    %v4640 = vld [vmem:[#allocation16 + $0x8] sm:$0xff]
    %v4641 = vld [vmem:[#allocation16 + $0x10] sm:$0xff]
    %v4642 = vld [vmem:[#allocation16 + $0x18] sm:$0xff]
    %v4643 = vld [vmem:[#allocation16 + $0x20] sm:$0xff]
    %v4644 = vld [vmem:[#allocation16 + $0x28] sm:$0xff]
    %v4645 = vld [vmem:[#allocation16 + $0x30] sm:$0xff]
    %v4646 = vld [vmem:[#allocation16 + $0x38] sm:$0xff]
    %v4647 = vld [vmem:[#allocation16 + $0x40] sm:$0xff]
    %v4648 = vld [vmem:[#allocation16 + $0x48] sm:$0xff]
    %v4649 = vld [vmem:[#allocation16 + $0x50] sm:$0xff]
    %v4650 = vld [vmem:[#allocation16 + $0x58] sm:$0xff]
    %v4651 = vld [vmem:[#allocation16 + $0x60] sm:$0xff]
    %v4652 = vld [vmem:[#allocation16 + $0x68] sm:$0xff]
    %v4653 = vld [vmem:[#allocation16 + $0x70] sm:$0xff]
    %v4654 = vld [vmem:[#allocation16 + $0x78] sm:$0xff]
    %v4655 = vld [vmem:[#allocation16 + $0x80] sm:$0xff]
    %v4656 = vld [vmem:[#allocation16 + $0x88] sm:$0xff]
    %v4657 = vld [vmem:[#allocation16 + $0x90] sm:$0xff]
    %v4658 = vld [vmem:[#allocation16 + $0x98] sm:$0xff]
    %v4659 = vld [vmem:[#allocation16 + $0xa0] sm:$0xff]
    %v4660 = vld [vmem:[#allocation16 + $0xa8] sm:$0xff]
    %v4661 = vld [vmem:[#allocation16 + $0xb0] sm:$0xff]
    %v4662 = vld [vmem:[#allocation16 + $0xb8] sm:$0xff]
    %v4663 = vld [vmem:[#allocation16 + $0xc0] sm:$0xff]
    %v4664 = vld [vmem:[#allocation16 + $0xc8] sm:$0xff]
    %v4665 = vld [vmem:[#allocation16 + $0xd0] sm:$0xff]
    %v4666 = vld [vmem:[#allocation16 + $0xd8] sm:$0xff]
    %v4667 = vld [vmem:[#allocation16 + $0xe0] sm:$0xff]
    %v4668 = vld [vmem:[#allocation16 + $0xe8] sm:$0xff]
    %v4669 = vld [vmem:[#allocation16 + $0xf0] sm:$0xff]
    %v4670 = vld [vmem:[#allocation16 + $0xf8] sm:$0xff]
    %v4671 = vld [vmem:[#allocation16 + $0x100] sm:$0xff]
    %v4672 = vld [vmem:[#allocation16 + $0x108] sm:$0xff]
    %v4673 = vld [vmem:[#allocation16 + $0x110] sm:$0xff]
    %v4674 = vld [vmem:[#allocation16 + $0x118] sm:$0xff]
    %v4675 = vld [vmem:[#allocation16 + $0x120] sm:$0xff]
    %v4676 = vld [vmem:[#allocation16 + $0x128] sm:$0xff]
    %v4677 = vld [vmem:[#allocation16 + $0x130] sm:$0xff]
    %v4678 = vld [vmem:[#allocation16 + $0x138] sm:$0xff]
    %v4679 = vld [vmem:[#allocation16 + $0x140] sm:$0xff]
    %v4680 = vld [vmem:[#allocation16 + $0x148] sm:$0xff]
    %v4681 = vld [vmem:[#allocation16 + $0x150] sm:$0xff]
    %v4682 = vld [vmem:[#allocation16 + $0x158] sm:$0xff]
    %v4683 = vld [vmem:[#allocation16 + $0x160] sm:$0xff]
    %v4684 = vld [vmem:[#allocation16 + $0x168] sm:$0xff]
    %v4685 = vld [vmem:[#allocation16 + $0x170] sm:$0xff]
    %v4686 = vld [vmem:[#allocation16 + $0x178] sm:$0xff]
    %v4687 = vld [vmem:[#allocation16 + $0x180] sm:$0xff]
    %v4688 = vld [vmem:[#allocation16 + $0x188] sm:$0xff]
    %v4689 = vld [vmem:[#allocation16 + $0x190] sm:$0xff]
    %v4690 = vld [vmem:[#allocation16 + $0x198] sm:$0xff]
    %v4691 = vld [vmem:[#allocation16 + $0x1a0] sm:$0xff]
    %v4692 = vld [vmem:[#allocation16 + $0x1a8] sm:$0xff]
    %v4693 = vld [vmem:[#allocation16 + $0x1b0] sm:$0xff]
    %v4694 = vld [vmem:[#allocation16 + $0x1b8] sm:$0xff]
    %v4695 = vld [vmem:[#allocation16 + $0x1c0] sm:$0xff]
    %v4696 = vld [vmem:[#allocation16 + $0x1c8] sm:$0xff]
    %v4697 = vld [vmem:[#allocation16 + $0x1d0] sm:$0xff]
    %v4698 = vld [vmem:[#allocation16 + $0x1d8] sm:$0xff]
    %v4699 = vld [vmem:[#allocation16 + $0x1e0] sm:$0xff]
    %v4700 = vld [vmem:[#allocation16 + $0x1e8] sm:$0xff]
    %v4701 = vld [vmem:[#allocation16 + $0x1f0] sm:$0xff]
    %v4702 = vld [vmem:[#allocation16 + $0x1f8] sm:$0xff]
    %v4703 = vld [vmem:[#allocation17] sm:$0xf]
    %v4705 = vlaneseq
    %v4706 = vshrl.u32 %v4705, 7
    %v4707 = vsub.s32 0, %v4706
    %v4708 = vrot.slane %v4703, %v4707
    %v4709 = vlaneseq
    %v4710 = vshrl.u32 %v4709, 7
    %v4711 = vsub.s32 1, %v4710
    %v4712 = vrot.slane %v4703, %v4711
    %v4713 = vlaneseq
    %v4714 = vshrl.u32 %v4713, 7
    %v4715 = vsub.s32 2, %v4714
    %v4716 = vrot.slane %v4703, %v4715
    %v4717 = vlaneseq
    %v4718 = vshrl.u32 %v4717, 7
    %v4719 = vsub.s32 3, %v4718
    %v4720 = vrot.slane %v4703, %v4719
    %v4789 = vunpack.c.l.b16 %v4639
    %v4790 = vunpack.c.h.b16 %v4639
    %v4791 = vunpack.c.l.b16 %v4640
    %v4792 = vunpack.c.h.b16 %v4640
    %v4793 = vunpack.c.l.b16 %v4641
    %v4794 = vunpack.c.h.b16 %v4641
    %v4795 = vunpack.c.l.b16 %v4642
    %v4796 = vunpack.c.h.b16 %v4642
    %v4797 = vunpack.c.l.b16 %v4643
    %v4798 = vunpack.c.h.b16 %v4643
    %v4799 = vunpack.c.l.b16 %v4644
    %v4800 = vunpack.c.h.b16 %v4644
    %v4801 = vunpack.c.l.b16 %v4645
    %v4802 = vunpack.c.h.b16 %v4645
    %v4803 = vunpack.c.l.b16 %v4646
    %v4804 = vunpack.c.h.b16 %v4646
    %v4805 = vunpack.c.l.b16 %v4647
    %v4806 = vunpack.c.h.b16 %v4647
    %v4807 = vunpack.c.l.b16 %v4648
    %v4808 = vunpack.c.h.b16 %v4648
    %v4809 = vunpack.c.l.b16 %v4649
    %v4810 = vunpack.c.h.b16 %v4649
    %v4811 = vunpack.c.l.b16 %v4650
    %v4812 = vunpack.c.h.b16 %v4650
    %v4813 = vunpack.c.l.b16 %v4651
    %v4814 = vunpack.c.h.b16 %v4651
    %v4815 = vunpack.c.l.b16 %v4652
    %v4816 = vunpack.c.h.b16 %v4652
    %v4817 = vunpack.c.l.b16 %v4653
    %v4818 = vunpack.c.h.b16 %v4653
    %v4819 = vunpack.c.l.b16 %v4654
    %v4820 = vunpack.c.h.b16 %v4654
    %v4821 = vunpack.c.l.b16 %v4655
    %v4822 = vunpack.c.h.b16 %v4655
    %v4823 = vunpack.c.l.b16 %v4656
    %v4824 = vunpack.c.h.b16 %v4656
    %v4825 = vunpack.c.l.b16 %v4657
    %v4826 = vunpack.c.h.b16 %v4657
    %v4827 = vunpack.c.l.b16 %v4658
    %v4828 = vunpack.c.h.b16 %v4658
    %v4829 = vunpack.c.l.b16 %v4659
    %v4830 = vunpack.c.h.b16 %v4659
    %v4831 = vunpack.c.l.b16 %v4660
    %v4832 = vunpack.c.h.b16 %v4660
    %v4833 = vunpack.c.l.b16 %v4661
    %v4834 = vunpack.c.h.b16 %v4661
    %v4835 = vunpack.c.l.b16 %v4662
    %v4836 = vunpack.c.h.b16 %v4662
    %v4837 = vunpack.c.l.b16 %v4663
    %v4838 = vunpack.c.h.b16 %v4663
    %v4839 = vunpack.c.l.b16 %v4664
    %v4840 = vunpack.c.h.b16 %v4664
    %v4841 = vunpack.c.l.b16 %v4665
    %v4842 = vunpack.c.h.b16 %v4665
    %v4843 = vunpack.c.l.b16 %v4666
    %v4844 = vunpack.c.h.b16 %v4666
    %v4845 = vunpack.c.l.b16 %v4667
    %v4846 = vunpack.c.h.b16 %v4667
    %v4847 = vunpack.c.l.b16 %v4668
    %v4848 = vunpack.c.h.b16 %v4668
    %v4849 = vunpack.c.l.b16 %v4669
    %v4850 = vunpack.c.h.b16 %v4669
    %v4851 = vunpack.c.l.b16 %v4670
    %v4852 = vunpack.c.h.b16 %v4670
    %v4853 = vunpack.c.l.b16 %v4671
    %v4854 = vunpack.c.h.b16 %v4671
    %v4855 = vunpack.c.l.b16 %v4672
    %v4856 = vunpack.c.h.b16 %v4672
    %v4857 = vunpack.c.l.b16 %v4673
    %v4858 = vunpack.c.h.b16 %v4673
    %v4859 = vunpack.c.l.b16 %v4674
    %v4860 = vunpack.c.h.b16 %v4674
    %v4861 = vunpack.c.l.b16 %v4675
    %v4862 = vunpack.c.h.b16 %v4675
    %v4863 = vunpack.c.l.b16 %v4676
    %v4864 = vunpack.c.h.b16 %v4676
    %v4865 = vunpack.c.l.b16 %v4677
    %v4866 = vunpack.c.h.b16 %v4677
    %v4867 = vunpack.c.l.b16 %v4678
    %v4868 = vunpack.c.h.b16 %v4678
    %v4869 = vunpack.c.l.b16 %v4679
    %v4870 = vunpack.c.h.b16 %v4679
    %v4871 = vunpack.c.l.b16 %v4680
    %v4872 = vunpack.c.h.b16 %v4680
    %v4873 = vunpack.c.l.b16 %v4681
    %v4874 = vunpack.c.h.b16 %v4681
    %v4875 = vunpack.c.l.b16 %v4682
    %v4876 = vunpack.c.h.b16 %v4682
    %v4877 = vunpack.c.l.b16 %v4683
    %v4878 = vunpack.c.h.b16 %v4683
    %v4879 = vunpack.c.l.b16 %v4684
    %v4880 = vunpack.c.h.b16 %v4684
    %v4881 = vunpack.c.l.b16 %v4685
    %v4882 = vunpack.c.h.b16 %v4685
    %v4883 = vunpack.c.l.b16 %v4686
    %v4884 = vunpack.c.h.b16 %v4686
    %v4885 = vunpack.c.l.b16 %v4687
    %v4886 = vunpack.c.h.b16 %v4687
    %v4887 = vunpack.c.l.b16 %v4688
    %v4888 = vunpack.c.h.b16 %v4688
    %v4889 = vunpack.c.l.b16 %v4689
    %v4890 = vunpack.c.h.b16 %v4689
    %v4891 = vunpack.c.l.b16 %v4690
    %v4892 = vunpack.c.h.b16 %v4690
    %v4893 = vunpack.c.l.b16 %v4691
    %v4894 = vunpack.c.h.b16 %v4691
    %v4895 = vunpack.c.l.b16 %v4692
    %v4896 = vunpack.c.h.b16 %v4692
    %v4897 = vunpack.c.l.b16 %v4693
    %v4898 = vunpack.c.h.b16 %v4693
    %v4899 = vunpack.c.l.b16 %v4694
    %v4900 = vunpack.c.h.b16 %v4694
    %v4901 = vunpack.c.l.b16 %v4695
    %v4902 = vunpack.c.h.b16 %v4695
    %v4903 = vunpack.c.l.b16 %v4696
    %v4904 = vunpack.c.h.b16 %v4696
    %v4905 = vunpack.c.l.b16 %v4697
    %v4906 = vunpack.c.h.b16 %v4697
    %v4907 = vunpack.c.l.b16 %v4698
    %v4908 = vunpack.c.h.b16 %v4698
    %v4909 = vunpack.c.l.b16 %v4699
    %v4910 = vunpack.c.h.b16 %v4699
    %v4911 = vunpack.c.l.b16 %v4700
    %v4912 = vunpack.c.h.b16 %v4700
    %v4913 = vunpack.c.l.b16 %v4701
    %v4914 = vunpack.c.h.b16 %v4701
    %v4915 = vunpack.c.l.b16 %v4702
    %v4916 = vunpack.c.h.b16 %v4702
    %v4917 = vpack.c.b16 %v4793, %v4789
    %v4918 = vpack.c.b16 %v4794, %v4790
    %v4919 = vpack.c.b16 %v4795, %v4791
    %v4920 = vpack.c.b16 %v4796, %v4792
    %v4921 = vpack.c.b16 %v4801, %v4797
    %v4922 = vpack.c.b16 %v4802, %v4798
    %v4923 = vpack.c.b16 %v4803, %v4799
    %v4924 = vpack.c.b16 %v4804, %v4800
    %v4925 = vpack.c.b16 %v4809, %v4805
    %v4926 = vpack.c.b16 %v4810, %v4806
    %v4927 = vpack.c.b16 %v4811, %v4807
    %v4928 = vpack.c.b16 %v4812, %v4808
    %v4929 = vpack.c.b16 %v4817, %v4813
    %v4930 = vpack.c.b16 %v4818, %v4814
    %v4931 = vpack.c.b16 %v4819, %v4815
    %v4932 = vpack.c.b16 %v4820, %v4816
    %v4933 = vpack.c.b16 %v4825, %v4821
    %v4934 = vpack.c.b16 %v4826, %v4822
    %v4935 = vpack.c.b16 %v4827, %v4823
    %v4936 = vpack.c.b16 %v4828, %v4824
    %v4937 = vpack.c.b16 %v4833, %v4829
    %v4938 = vpack.c.b16 %v4834, %v4830
    %v4939 = vpack.c.b16 %v4835, %v4831
    %v4940 = vpack.c.b16 %v4836, %v4832
    %v4941 = vpack.c.b16 %v4841, %v4837
    %v4942 = vpack.c.b16 %v4842, %v4838
    %v4943 = vpack.c.b16 %v4843, %v4839
    %v4944 = vpack.c.b16 %v4844, %v4840
    %v4945 = vpack.c.b16 %v4849, %v4845
    %v4946 = vpack.c.b16 %v4850, %v4846
    %v4947 = vpack.c.b16 %v4851, %v4847
    %v4948 = vpack.c.b16 %v4852, %v4848
    %v4949 = vpack.c.b16 %v4857, %v4853
    %v4950 = vpack.c.b16 %v4858, %v4854
    %v4951 = vpack.c.b16 %v4859, %v4855
    %v4952 = vpack.c.b16 %v4860, %v4856
    %v4953 = vpack.c.b16 %v4865, %v4861
    %v4954 = vpack.c.b16 %v4866, %v4862
    %v4955 = vpack.c.b16 %v4867, %v4863
    %v4956 = vpack.c.b16 %v4868, %v4864
    %v4957 = vpack.c.b16 %v4873, %v4869
    %v4958 = vpack.c.b16 %v4874, %v4870
    %v4959 = vpack.c.b16 %v4875, %v4871
    %v4960 = vpack.c.b16 %v4876, %v4872
    %v4961 = vpack.c.b16 %v4881, %v4877
    %v4962 = vpack.c.b16 %v4882, %v4878
    %v4963 = vpack.c.b16 %v4883, %v4879
    %v4964 = vpack.c.b16 %v4884, %v4880
    %v4965 = vpack.c.b16 %v4889, %v4885
    %v4966 = vpack.c.b16 %v4890, %v4886
    %v4967 = vpack.c.b16 %v4891, %v4887
    %v4968 = vpack.c.b16 %v4892, %v4888
    %v4969 = vpack.c.b16 %v4897, %v4893
    %v4970 = vpack.c.b16 %v4898, %v4894
    %v4971 = vpack.c.b16 %v4899, %v4895
    %v4972 = vpack.c.b16 %v4900, %v4896
    %v4973 = vpack.c.b16 %v4905, %v4901
    %v4974 = vpack.c.b16 %v4906, %v4902
    %v4975 = vpack.c.b16 %v4907, %v4903
    %v4976 = vpack.c.b16 %v4908, %v4904
    %v4977 = vpack.c.b16 %v4913, %v4909
    %v4978 = vpack.c.b16 %v4914, %v4910
    %v4979 = vpack.c.b16 %v4915, %v4911
    %v4980 = vpack.c.b16 %v4916, %v4912
    %5045 = vmatprep.subr.bf16.mxu0 %v4918
    %5046 = vmatpush1.bf16.msra.mxu0 %v4917
    %5047 = vmatprep.subr.bf16.mxu0 %v4922
    %5048 = vmatpush1.bf16.msra.mxu0 %v4921
    %5049 = vmatprep.subr.bf16.mxu0 %v4926
    %5050 = vmatpush1.bf16.msra.mxu0 %v4925
    %5051 = vmatprep.subr.bf16.mxu0 %v4930
    %5052 = vmatpush1.bf16.msra.mxu0 %v4929
    %5053 = vmatprep.subr.bf16.mxu0 %v4934
    %5054 = vmatpush1.bf16.msra.mxu0 %v4933
    %5055 = vmatprep.subr.bf16.mxu0 %v4938
    %5056 = vmatpush1.bf16.msra.mxu0 %v4937
    %5057 = vmatprep.subr.bf16.mxu0 %v4942
    %5058 = vmatpush1.bf16.msra.mxu0 %v4941
    %5059 = vmatprep.subr.bf16.mxu0 %v4946
    %5060 = vmatpush1.bf16.msra.mxu0 %v4945
    %5061 = vmatprep.subr.bf16.mxu0 %v4950
    %5062 = vmatpush1.bf16.msra.mxu0 %v4949
    %5063 = vmatprep.subr.bf16.mxu0 %v4954
    %5064 = vmatpush1.bf16.msra.mxu0 %v4953
    %5065 = vmatprep.subr.bf16.mxu0 %v4958
    %5066 = vmatpush1.bf16.msra.mxu0 %v4957
    %5067 = vmatprep.subr.bf16.mxu0 %v4962
    %5068 = vmatpush1.bf16.msra.mxu0 %v4961
    %5069 = vmatprep.subr.bf16.mxu0 %v4966
    %5070 = vmatpush1.bf16.msra.mxu0 %v4965
    %5071 = vmatprep.subr.bf16.mxu0 %v4970
    %5072 = vmatpush1.bf16.msra.mxu0 %v4969
    %5073 = vmatprep.subr.bf16.mxu0 %v4974
    %5074 = vmatpush1.bf16.msra.mxu0 %v4973
    %5075 = vmatprep.subr.bf16.mxu0 %v4978
    %5076 = vmatpush1.bf16.msra.mxu0 %v4977
    %5077 = vmatprep.mubr.bf16.mxu0 %v4638
    %5078 = vmatmul.mubr.bf16.gmra.mrb[0].mxu0 %v4637
    %v5079 = vpop.f32.mrb[0].mxu0
    %v5080 = vadd.f32 %v4708, %v5079
    %v5081 = vpop.f32.mrb[0].mxu0
    %v5082 = vadd.f32 %v4712, %v5081
    %v5083 = vpop.f32.mrb[0].mxu0
    %v5084 = vadd.f32 %v4708, %v5083
    %v5085 = vpop.f32.mrb[0].mxu0
    %v5086 = vadd.f32 %v4712, %v5085
    %5087 = vdwg.mxu0
    %5088 = vmatprep.subr.bf16.mxu0 %v4920
    %5089 = vmatpush1.bf16.msra.mxu0 %v4919
    %5090 = vmatprep.subr.bf16.mxu0 %v4924
    %5091 = vmatpush1.bf16.msra.mxu0 %v4923
    %5092 = vmatprep.subr.bf16.mxu0 %v4928
    %5093 = vmatpush1.bf16.msra.mxu0 %v4927
    %5094 = vmatprep.subr.bf16.mxu0 %v4932
    %5095 = vmatpush1.bf16.msra.mxu0 %v4931
    %5096 = vmatprep.subr.bf16.mxu0 %v4936
    %5097 = vmatpush1.bf16.msra.mxu0 %v4935
    %5098 = vmatprep.subr.bf16.mxu0 %v4940
    %5099 = vmatpush1.bf16.msra.mxu0 %v4939
    %5100 = vmatprep.subr.bf16.mxu0 %v4944
    %5101 = vmatpush1.bf16.msra.mxu0 %v4943
    %5102 = vmatprep.subr.bf16.mxu0 %v4948
    %5103 = vmatpush1.bf16.msra.mxu0 %v4947
    %5104 = vmatprep.subr.bf16.mxu0 %v4952
    %5105 = vmatpush1.bf16.msra.mxu0 %v4951
    %5106 = vmatprep.subr.bf16.mxu0 %v4956
    %5107 = vmatpush1.bf16.msra.mxu0 %v4955
    %5108 = vmatprep.subr.bf16.mxu0 %v4960
    %5109 = vmatpush1.bf16.msra.mxu0 %v4959
    %5110 = vmatprep.subr.bf16.mxu0 %v4964
    %5111 = vmatpush1.bf16.msra.mxu0 %v4963
    %5112 = vmatprep.subr.bf16.mxu0 %v4968
    %5113 = vmatpush1.bf16.msra.mxu0 %v4967
    %5114 = vmatprep.subr.bf16.mxu0 %v4972
    %5115 = vmatpush1.bf16.msra.mxu0 %v4971
    %5116 = vmatprep.subr.bf16.mxu0 %v4976
    %5117 = vmatpush1.bf16.msra.mxu0 %v4975
    %5118 = vmatprep.subr.bf16.mxu0 %v4980
    %5119 = vmatpush1.bf16.msra.mxu0 %v4979
    %5120 = vmatprep.mubr.bf16.mxu0 %v4638
    %5121 = vmatmul.mubr.bf16.gmra.mrb[0].mxu0 %v4637
    %v5122 = vpop.f32.mrb[0].mxu0
    %v5123 = vadd.f32 %v4716, %v5122
    %v5124 = vpop.f32.mrb[0].mxu0
    %v5125 = vadd.f32 %v4720, %v5124
    %v5126 = vpop.f32.mrb[0].mxu0
    %v5127 = vadd.f32 %v4716, %v5126
    %v5128 = vpop.f32.mrb[0].mxu0
    %v5129 = vadd.f32 %v4720, %v5128
    %5130 = vdwg.mxu0
    %v5131 = vmax.f32 %v5080, 0.0
    %v5132 = vmax.f32 %v5082, 0.0
    %v5133 = vmax.f32 %v5123, 0.0
    %v5134 = vmax.f32 %v5125, 0.0
    %v5135 = vmax.f32 %v5084, 0.0
    %v5136 = vmax.f32 %v5086, 0.0
    %v5137 = vmax.f32 %v5127, 0.0
    %v5138 = vmax.f32 %v5129, 0.0
    %v5139 = vpack.c.bf16 %v5135, %v5131
    %v5140 = vpack.c.bf16 %v5136, %v5132
    %v5141 = vpack.c.bf16 %v5137, %v5133
    %v5142 = vpack.c.bf16 %v5138, %v5134
    %v5143 = vld [vmem:[#allocation19] sm:$0xff]
    %v5144 = vld [vmem:[#allocation19 + $0x8] sm:$0xff]
    %v5145 = vld [vmem:[#allocation19 + $0x10] sm:$0xff]
    %v5146 = vld [vmem:[#allocation19 + $0x18] sm:$0xff]
    %v5147 = vld [vmem:[#allocation19 + $0x20] sm:$0xff]
    %v5148 = vld [vmem:[#allocation19 + $0x28] sm:$0xff]
    %v5149 = vld [vmem:[#allocation19 + $0x30] sm:$0xff]
    %v5150 = vld [vmem:[#allocation19 + $0x38] sm:$0xf]
    %v5151 = vld [vmem:[#allocation19 + $0x3c] sm:$0xff]
    %v5152 = vld [vmem:[#allocation19 + $0x44] sm:$0xff]
    %v5153 = vld [vmem:[#allocation19 + $0x4c] sm:$0xff]
    %v5154 = vld [vmem:[#allocation19 + $0x54] sm:$0xff]
    %v5155 = vld [vmem:[#allocation19 + $0x5c] sm:$0xff]
    %v5156 = vld [vmem:[#allocation19 + $0x64] sm:$0xff]
    %v5157 = vld [vmem:[#allocation19 + $0x6c] sm:$0xff]
    %v5158 = vld [vmem:[#allocation19 + $0x74] sm:$0xf]
    %v5159 = vld [vmem:[#allocation19 + $0x78] sm:$0xff]
    %v5160 = vld [vmem:[#allocation19 + $0x80] sm:$0xff]
    %v5161 = vld [vmem:[#allocation19 + $0x88] sm:$0xff]
    %v5162 = vld [vmem:[#allocation19 + $0x90] sm:$0xff]
    %v5163 = vld [vmem:[#allocation19 + $0x98] sm:$0xff]
    %v5164 = vld [vmem:[#allocation19 + $0xa0] sm:$0xff]
    %v5165 = vld [vmem:[#allocation19 + $0xa8] sm:$0xff]
    %v5166 = vld [vmem:[#allocation19 + $0xb0] sm:$0xf]
    %v5167 = vld [vmem:[#allocation19 + $0xb4] sm:$0xff]
    %v5168 = vld [vmem:[#allocation19 + $0xbc] sm:$0xff]
    %v5169 = vld [vmem:[#allocation19 + $0xc4] sm:$0xff]
    %v5170 = vld [vmem:[#allocation19 + $0xcc] sm:$0xff]
    %v5171 = vld [vmem:[#allocation19 + $0xd4] sm:$0xff]
    %v5172 = vld [vmem:[#allocation19 + $0xdc] sm:$0xff]
    %v5173 = vld [vmem:[#allocation19 + $0xe4] sm:$0xff]
    %v5174 = vld [vmem:[#allocation19 + $0xec] sm:$0xf]
    %v5175 = vld [vmem:[#allocation19 + $0xf0] sm:$0xff]
    %v5176 = vld [vmem:[#allocation19 + $0xf8] sm:$0xff]
    %v5177 = vld [vmem:[#allocation19 + $0x100] sm:$0xff]
    %v5178 = vld [vmem:[#allocation19 + $0x108] sm:$0xff]
    %v5179 = vld [vmem:[#allocation19 + $0x110] sm:$0xff]
    %v5180 = vld [vmem:[#allocation19 + $0x118] sm:$0xff]
    %v5181 = vld [vmem:[#allocation19 + $0x120] sm:$0xff]
    %v5182 = vld [vmem:[#allocation19 + $0x128] sm:$0xf]
    %v5183 = vld [vmem:[#allocation19 + $0x12c] sm:$0xff]
    %v5184 = vld [vmem:[#allocation19 + $0x134] sm:$0xff]
    %v5185 = vld [vmem:[#allocation19 + $0x13c] sm:$0xff]
    %v5186 = vld [vmem:[#allocation19 + $0x144] sm:$0xff]
    %v5187 = vld [vmem:[#allocation19 + $0x14c] sm:$0xff]
    %v5188 = vld [vmem:[#allocation19 + $0x154] sm:$0xff]
    %v5189 = vld [vmem:[#allocation19 + $0x15c] sm:$0xff]
    %v5190 = vld [vmem:[#allocation19 + $0x164] sm:$0xf]
    %v5191 = vld [vmem:[#allocation19 + $0x168] sm:$0xff]
    %v5192 = vld [vmem:[#allocation19 + $0x170] sm:$0xff]
    %v5193 = vld [vmem:[#allocation19 + $0x178] sm:$0xff]
    %v5194 = vld [vmem:[#allocation19 + $0x180] sm:$0xff]
    %v5195 = vld [vmem:[#allocation19 + $0x188] sm:$0xff]
    %v5196 = vld [vmem:[#allocation19 + $0x190] sm:$0xff]
    %v5197 = vld [vmem:[#allocation19 + $0x198] sm:$0xff]
    %v5198 = vld [vmem:[#allocation19 + $0x1a0] sm:$0xf]
    %v5199 = vld [vmem:[#allocation19 + $0x1a4] sm:$0xff]
    %v5200 = vld [vmem:[#allocation19 + $0x1ac] sm:$0xff]
    %v5201 = vld [vmem:[#allocation19 + $0x1b4] sm:$0xff]
    %v5202 = vld [vmem:[#allocation19 + $0x1bc] sm:$0xff]
    %v5203 = vld [vmem:[#allocation19 + $0x1c4] sm:$0xff]
    %v5204 = vld [vmem:[#allocation19 + $0x1cc] sm:$0xff]
    %v5205 = vld [vmem:[#allocation19 + $0x1d4] sm:$0xff]
    %v5206 = vld [vmem:[#allocation19 + $0x1dc] sm:$0xf]
    %v5207 = vld [vmem:[#allocation19 + $0x1e0] sm:$0xff]
    %v5208 = vld [vmem:[#allocation19 + $0x1e8] sm:$0xff]
    %v5209 = vld [vmem:[#allocation19 + $0x1f0] sm:$0xff]
    %v5210 = vld [vmem:[#allocation19 + $0x1f8] sm:$0xff]
    %v5211 = vld [vmem:[#allocation19 + $0x200] sm:$0xff]
    %v5212 = vld [vmem:[#allocation19 + $0x208] sm:$0xff]
    %v5213 = vld [vmem:[#allocation19 + $0x210] sm:$0xff]
    %v5214 = vld [vmem:[#allocation19 + $0x218] sm:$0xf]
    %v5215 = vld [vmem:[#allocation19 + $0x21c] sm:$0xff]
    %v5216 = vld [vmem:[#allocation19 + $0x224] sm:$0xff]
    %v5217 = vld [vmem:[#allocation19 + $0x22c] sm:$0xff]
    %v5218 = vld [vmem:[#allocation19 + $0x234] sm:$0xff]
    %v5219 = vld [vmem:[#allocation19 + $0x23c] sm:$0xff]
    %v5220 = vld [vmem:[#allocation19 + $0x244] sm:$0xff]
    %v5221 = vld [vmem:[#allocation19 + $0x24c] sm:$0xff]
    %v5222 = vld [vmem:[#allocation19 + $0x254] sm:$0xf]
    %v5223 = vld [vmem:[#allocation19 + $0x258] sm:$0xff]
    %v5224 = vld [vmem:[#allocation19 + $0x260] sm:$0xff]
    %v5225 = vld [vmem:[#allocation19 + $0x268] sm:$0xff]
    %v5226 = vld [vmem:[#allocation19 + $0x270] sm:$0xff]
    %v5227 = vld [vmem:[#allocation19 + $0x278] sm:$0xff]
    %v5228 = vld [vmem:[#allocation19 + $0x280] sm:$0xff]
    %v5229 = vld [vmem:[#allocation19 + $0x288] sm:$0xff]
    %v5230 = vld [vmem:[#allocation19 + $0x290] sm:$0xf]
    %v5231 = vld [vmem:[#allocation19 + $0x294] sm:$0xff]
    %v5232 = vld [vmem:[#allocation19 + $0x29c] sm:$0xff]
    %v5233 = vld [vmem:[#allocation19 + $0x2a4] sm:$0xff]
    %v5234 = vld [vmem:[#allocation19 + $0x2ac] sm:$0xff]
    %v5235 = vld [vmem:[#allocation19 + $0x2b4] sm:$0xff]
    %v5236 = vld [vmem:[#allocation19 + $0x2bc] sm:$0xff]
    %v5237 = vld [vmem:[#allocation19 + $0x2c4] sm:$0xff]
    %v5238 = vld [vmem:[#allocation19 + $0x2cc] sm:$0xf]
    %v5239 = vld [vmem:[#allocation19 + $0x2d0] sm:$0xff]
    %v5240 = vld [vmem:[#allocation19 + $0x2d8] sm:$0xff]
    %v5241 = vld [vmem:[#allocation19 + $0x2e0] sm:$0xff]
    %v5242 = vld [vmem:[#allocation19 + $0x2e8] sm:$0xff]
    %v5243 = vld [vmem:[#allocation19 + $0x2f0] sm:$0xff]
    %v5244 = vld [vmem:[#allocation19 + $0x2f8] sm:$0xff]
    %v5245 = vld [vmem:[#allocation19 + $0x300] sm:$0xff]
    %v5246 = vld [vmem:[#allocation19 + $0x308] sm:$0xf]
    %v5247 = vld [vmem:[#allocation19 + $0x30c] sm:$0xff]
    %v5248 = vld [vmem:[#allocation19 + $0x314] sm:$0xff]
    %v5249 = vld [vmem:[#allocation19 + $0x31c] sm:$0xff]
    %v5250 = vld [vmem:[#allocation19 + $0x324] sm:$0xff]
    %v5251 = vld [vmem:[#allocation19 + $0x32c] sm:$0xff]
    %v5252 = vld [vmem:[#allocation19 + $0x334] sm:$0xff]
    %v5253 = vld [vmem:[#allocation19 + $0x33c] sm:$0xff]
    %v5254 = vld [vmem:[#allocation19 + $0x344] sm:$0xf]
    %v5255 = vld [vmem:[#allocation19 + $0x348] sm:$0xff]
    %v5256 = vld [vmem:[#allocation19 + $0x350] sm:$0xff]
    %v5257 = vld [vmem:[#allocation19 + $0x358] sm:$0xff]
    %v5258 = vld [vmem:[#allocation19 + $0x360] sm:$0xff]
    %v5259 = vld [vmem:[#allocation19 + $0x368] sm:$0xff]
    %v5260 = vld [vmem:[#allocation19 + $0x370] sm:$0xff]
    %v5261 = vld [vmem:[#allocation19 + $0x378] sm:$0xff]
    %v5262 = vld [vmem:[#allocation19 + $0x380] sm:$0xf]
    %v5263 = vld [vmem:[#allocation19 + $0x384] sm:$0xff]
    %v5264 = vld [vmem:[#allocation19 + $0x38c] sm:$0xff]
    %v5265 = vld [vmem:[#allocation19 + $0x394] sm:$0xff]
    %v5266 = vld [vmem:[#allocation19 + $0x39c] sm:$0xff]
    %v5267 = vld [vmem:[#allocation19 + $0x3a4] sm:$0xff]
    %v5268 = vld [vmem:[#allocation19 + $0x3ac] sm:$0xff]
    %v5269 = vld [vmem:[#allocation19 + $0x3b4] sm:$0xff]
    %v5270 = vld [vmem:[#allocation19 + $0x3bc] sm:$0xf]
    %v5271 = vld [vmem:[#allocation19 + $0x3c0] sm:$0xff]
    %v5272 = vld [vmem:[#allocation19 + $0x3c8] sm:$0xff]
    %v5273 = vld [vmem:[#allocation19 + $0x3d0] sm:$0xff]
    %v5274 = vld [vmem:[#allocation19 + $0x3d8] sm:$0xff]
    %v5275 = vld [vmem:[#allocation19 + $0x3e0] sm:$0xff]
    %v5276 = vld [vmem:[#allocation19 + $0x3e8] sm:$0xff]
    %v5277 = vld [vmem:[#allocation19 + $0x3f0] sm:$0xff]
    %v5278 = vld [vmem:[#allocation19 + $0x3f8] sm:$0xf]
    %v5279 = vld [vmem:[#allocation19 + $0x3fc] sm:$0xff]
    %v5280 = vld [vmem:[#allocation19 + $0x404] sm:$0xff]
    %v5281 = vld [vmem:[#allocation19 + $0x40c] sm:$0xff]
    %v5282 = vld [vmem:[#allocation19 + $0x414] sm:$0xff]
    %v5283 = vld [vmem:[#allocation19 + $0x41c] sm:$0xff]
    %v5284 = vld [vmem:[#allocation19 + $0x424] sm:$0xff]
    %v5285 = vld [vmem:[#allocation19 + $0x42c] sm:$0xff]
    %v5286 = vld [vmem:[#allocation19 + $0x434] sm:$0xf]
    %v5287 = vld [vmem:[#allocation19 + $0x438] sm:$0xff]
    %v5288 = vld [vmem:[#allocation19 + $0x440] sm:$0xff]
    %v5289 = vld [vmem:[#allocation19 + $0x448] sm:$0xff]
    %v5290 = vld [vmem:[#allocation19 + $0x450] sm:$0xff]
    %v5291 = vld [vmem:[#allocation19 + $0x458] sm:$0xff]
    %v5292 = vld [vmem:[#allocation19 + $0x460] sm:$0xff]
    %v5293 = vld [vmem:[#allocation19 + $0x468] sm:$0xff]
    %v5294 = vld [vmem:[#allocation19 + $0x470] sm:$0xf]
    %v5295 = vld [vmem:[#allocation19 + $0x474] sm:$0xff]
    %v5296 = vld [vmem:[#allocation19 + $0x47c] sm:$0xff]
    %v5297 = vld [vmem:[#allocation19 + $0x484] sm:$0xff]
    %v5298 = vld [vmem:[#allocation19 + $0x48c] sm:$0xff]
    %v5299 = vld [vmem:[#allocation19 + $0x494] sm:$0xff]
    %v5300 = vld [vmem:[#allocation19 + $0x49c] sm:$0xff]
    %v5301 = vld [vmem:[#allocation19 + $0x4a4] sm:$0xff]
    %v5302 = vld [vmem:[#allocation19 + $0x4ac] sm:$0xf]
    %v5303 = vld [vmem:[#allocation19 + $0x4b0] sm:$0xff]
    %v5304 = vld [vmem:[#allocation19 + $0x4b8] sm:$0xff]
    %v5305 = vld [vmem:[#allocation19 + $0x4c0] sm:$0xff]
    %v5306 = vld [vmem:[#allocation19 + $0x4c8] sm:$0xff]
    %v5307 = vld [vmem:[#allocation19 + $0x4d0] sm:$0xff]
    %v5308 = vld [vmem:[#allocation19 + $0x4d8] sm:$0xff]
    %v5309 = vld [vmem:[#allocation19 + $0x4e0] sm:$0xff]
    %v5310 = vld [vmem:[#allocation19 + $0x4e8] sm:$0xf]
    %v5311 = vld [vmem:[#allocation19 + $0x4ec] sm:$0xff]
    %v5312 = vld [vmem:[#allocation19 + $0x4f4] sm:$0xff]
    %v5313 = vld [vmem:[#allocation19 + $0x4fc] sm:$0xff]
    %v5314 = vld [vmem:[#allocation19 + $0x504] sm:$0xff]
    %v5315 = vld [vmem:[#allocation19 + $0x50c] sm:$0xff]
    %v5316 = vld [vmem:[#allocation19 + $0x514] sm:$0xff]
    %v5317 = vld [vmem:[#allocation19 + $0x51c] sm:$0xff]
    %v5318 = vld [vmem:[#allocation19 + $0x524] sm:$0xf]
    %v5319 = vld [vmem:[#allocation19 + $0x528] sm:$0xff]
    %v5320 = vld [vmem:[#allocation19 + $0x530] sm:$0xff]
    %v5321 = vld [vmem:[#allocation19 + $0x538] sm:$0xff]
    %v5322 = vld [vmem:[#allocation19 + $0x540] sm:$0xff]
    %v5323 = vld [vmem:[#allocation19 + $0x548] sm:$0xff]
    %v5324 = vld [vmem:[#allocation19 + $0x550] sm:$0xff]
    %v5325 = vld [vmem:[#allocation19 + $0x558] sm:$0xff]
    %v5326 = vld [vmem:[#allocation19 + $0x560] sm:$0xf]
    %v5327 = vld [vmem:[#allocation19 + $0x564] sm:$0xff]
    %v5328 = vld [vmem:[#allocation19 + $0x56c] sm:$0xff]
    %v5329 = vld [vmem:[#allocation19 + $0x574] sm:$0xff]
    %v5330 = vld [vmem:[#allocation19 + $0x57c] sm:$0xff]
    %v5331 = vld [vmem:[#allocation19 + $0x584] sm:$0xff]
    %v5332 = vld [vmem:[#allocation19 + $0x58c] sm:$0xff]
    %v5333 = vld [vmem:[#allocation19 + $0x594] sm:$0xff]
    %v5334 = vld [vmem:[#allocation19 + $0x59c] sm:$0xf]
    %v5335 = vld [vmem:[#allocation19 + $0x5a0] sm:$0xff]
    %v5336 = vld [vmem:[#allocation19 + $0x5a8] sm:$0xff]
    %v5337 = vld [vmem:[#allocation19 + $0x5b0] sm:$0xff]
    %v5338 = vld [vmem:[#allocation19 + $0x5b8] sm:$0xff]
    %v5339 = vld [vmem:[#allocation19 + $0x5c0] sm:$0xff]
    %v5340 = vld [vmem:[#allocation19 + $0x5c8] sm:$0xff]
    %v5341 = vld [vmem:[#allocation19 + $0x5d0] sm:$0xff]
    %v5342 = vld [vmem:[#allocation19 + $0x5d8] sm:$0xf]
    %v5343 = vld [vmem:[#allocation19 + $0x5dc] sm:$0xff]
    %v5344 = vld [vmem:[#allocation19 + $0x5e4] sm:$0xff]
    %v5345 = vld [vmem:[#allocation19 + $0x5ec] sm:$0xff]
    %v5346 = vld [vmem:[#allocation19 + $0x5f4] sm:$0xff]
    %v5347 = vld [vmem:[#allocation19 + $0x5fc] sm:$0xff]
    %v5348 = vld [vmem:[#allocation19 + $0x604] sm:$0xff]
    %v5349 = vld [vmem:[#allocation19 + $0x60c] sm:$0xff]
    %v5350 = vld [vmem:[#allocation19 + $0x614] sm:$0xf]
    %v5351 = vld [vmem:[#allocation19 + $0x618] sm:$0xff]
    %v5352 = vld [vmem:[#allocation19 + $0x620] sm:$0xff]
    %v5353 = vld [vmem:[#allocation19 + $0x628] sm:$0xff]
    %v5354 = vld [vmem:[#allocation19 + $0x630] sm:$0xff]
    %v5355 = vld [vmem:[#allocation19 + $0x638] sm:$0xff]
    %v5356 = vld [vmem:[#allocation19 + $0x640] sm:$0xff]
    %v5357 = vld [vmem:[#allocation19 + $0x648] sm:$0xff]
    %v5358 = vld [vmem:[#allocation19 + $0x650] sm:$0xf]
    %v5359 = vld [vmem:[#allocation19 + $0x654] sm:$0xff]
    %v5360 = vld [vmem:[#allocation19 + $0x65c] sm:$0xff]
    %v5361 = vld [vmem:[#allocation19 + $0x664] sm:$0xff]
    %v5362 = vld [vmem:[#allocation19 + $0x66c] sm:$0xff]
    %v5363 = vld [vmem:[#allocation19 + $0x674] sm:$0xff]
    %v5364 = vld [vmem:[#allocation19 + $0x67c] sm:$0xff]
    %v5365 = vld [vmem:[#allocation19 + $0x684] sm:$0xff]
    %v5366 = vld [vmem:[#allocation19 + $0x68c] sm:$0xf]
    %v5367 = vld [vmem:[#allocation19 + $0x690] sm:$0xff]
    %v5368 = vld [vmem:[#allocation19 + $0x698] sm:$0xff]
    %v5369 = vld [vmem:[#allocation19 + $0x6a0] sm:$0xff]
    %v5370 = vld [vmem:[#allocation19 + $0x6a8] sm:$0xff]
    %v5371 = vld [vmem:[#allocation19 + $0x6b0] sm:$0xff]
    %v5372 = vld [vmem:[#allocation19 + $0x6b8] sm:$0xff]
    %v5373 = vld [vmem:[#allocation19 + $0x6c0] sm:$0xff]
    %v5374 = vld [vmem:[#allocation19 + $0x6c8] sm:$0xf]
    %v5375 = vld [vmem:[#allocation19 + $0x6cc] sm:$0xff]
    %v5376 = vld [vmem:[#allocation19 + $0x6d4] sm:$0xff]
    %v5377 = vld [vmem:[#allocation19 + $0x6dc] sm:$0xff]
    %v5378 = vld [vmem:[#allocation19 + $0x6e4] sm:$0xff]
    %v5379 = vld [vmem:[#allocation19 + $0x6ec] sm:$0xff]
    %v5380 = vld [vmem:[#allocation19 + $0x6f4] sm:$0xff]
    %v5381 = vld [vmem:[#allocation19 + $0x6fc] sm:$0xff]
    %v5382 = vld [vmem:[#allocation19 + $0x704] sm:$0xf]
    %v5383 = vld [vmem:[#allocation19 + $0x708] sm:$0xff]
    %v5384 = vld [vmem:[#allocation19 + $0x710] sm:$0xff]
    %v5385 = vld [vmem:[#allocation19 + $0x718] sm:$0xff]
    %v5386 = vld [vmem:[#allocation19 + $0x720] sm:$0xff]
    %v5387 = vld [vmem:[#allocation19 + $0x728] sm:$0xff]
    %v5388 = vld [vmem:[#allocation19 + $0x730] sm:$0xff]
    %v5389 = vld [vmem:[#allocation19 + $0x738] sm:$0xff]
    %v5390 = vld [vmem:[#allocation19 + $0x740] sm:$0xf]
    %v5391 = vld [vmem:[#allocation19 + $0x744] sm:$0xff]
    %v5392 = vld [vmem:[#allocation19 + $0x74c] sm:$0xff]
    %v5393 = vld [vmem:[#allocation19 + $0x754] sm:$0xff]
    %v5394 = vld [vmem:[#allocation19 + $0x75c] sm:$0xff]
    %v5395 = vld [vmem:[#allocation19 + $0x764] sm:$0xff]
    %v5396 = vld [vmem:[#allocation19 + $0x76c] sm:$0xff]
    %v5397 = vld [vmem:[#allocation19 + $0x774] sm:$0xff]
    %v5398 = vld [vmem:[#allocation19 + $0x77c] sm:$0xf]
    %v5399 = vld [vmem:[#allocation19 + $0x780] sm:$0xff]
    %v5400 = vld [vmem:[#allocation19 + $0x788] sm:$0xff]
    %v5401 = vld [vmem:[#allocation19 + $0x790] sm:$0xff]
    %v5402 = vld [vmem:[#allocation19 + $0x798] sm:$0xff]
    %v5403 = vld [vmem:[#allocation19 + $0x7a0] sm:$0xff]
    %v5404 = vld [vmem:[#allocation19 + $0x7a8] sm:$0xff]
    %v5405 = vld [vmem:[#allocation19 + $0x7b0] sm:$0xff]
    %v5406 = vld [vmem:[#allocation19 + $0x7b8] sm:$0xf]
    %v5407 = vld [vmem:[#allocation19 + $0x7bc] sm:$0xff]
    %v5408 = vld [vmem:[#allocation19 + $0x7c4] sm:$0xff]
    %v5409 = vld [vmem:[#allocation19 + $0x7cc] sm:$0xff]
    %v5410 = vld [vmem:[#allocation19 + $0x7d4] sm:$0xff]
    %v5411 = vld [vmem:[#allocation19 + $0x7dc] sm:$0xff]
    %v5412 = vld [vmem:[#allocation19 + $0x7e4] sm:$0xff]
    %v5413 = vld [vmem:[#allocation19 + $0x7ec] sm:$0xff]
    %v5414 = vld [vmem:[#allocation19 + $0x7f4] sm:$0xf]
    %v5415 = vld [vmem:[#allocation19 + $0x7f8] sm:$0xff]
    %v5416 = vld [vmem:[#allocation19 + $0x800] sm:$0xff]
    %v5417 = vld [vmem:[#allocation19 + $0x808] sm:$0xff]
    %v5418 = vld [vmem:[#allocation19 + $0x810] sm:$0xff]
    %v5419 = vld [vmem:[#allocation19 + $0x818] sm:$0xff]
    %v5420 = vld [vmem:[#allocation19 + $0x820] sm:$0xff]
    %v5421 = vld [vmem:[#allocation19 + $0x828] sm:$0xff]
    %v5422 = vld [vmem:[#allocation19 + $0x830] sm:$0xf]
    %v5423 = vld [vmem:[#allocation19 + $0x834] sm:$0xff]
    %v5424 = vld [vmem:[#allocation19 + $0x83c] sm:$0xff]
    %v5425 = vld [vmem:[#allocation19 + $0x844] sm:$0xff]
    %v5426 = vld [vmem:[#allocation19 + $0x84c] sm:$0xff]
    %v5427 = vld [vmem:[#allocation19 + $0x854] sm:$0xff]
    %v5428 = vld [vmem:[#allocation19 + $0x85c] sm:$0xff]
    %v5429 = vld [vmem:[#allocation19 + $0x864] sm:$0xff]
    %v5430 = vld [vmem:[#allocation19 + $0x86c] sm:$0xf]
    %v5431 = vld [vmem:[#allocation19 + $0x870] sm:$0xff]
    %v5432 = vld [vmem:[#allocation19 + $0x878] sm:$0xff]
    %v5433 = vld [vmem:[#allocation19 + $0x880] sm:$0xff]
    %v5434 = vld [vmem:[#allocation19 + $0x888] sm:$0xff]
    %v5435 = vld [vmem:[#allocation19 + $0x890] sm:$0xff]
    %v5436 = vld [vmem:[#allocation19 + $0x898] sm:$0xff]
    %v5437 = vld [vmem:[#allocation19 + $0x8a0] sm:$0xff]
    %v5438 = vld [vmem:[#allocation19 + $0x8a8] sm:$0xf]
    %v5439 = vld [vmem:[#allocation19 + $0x8ac] sm:$0xff]
    %v5440 = vld [vmem:[#allocation19 + $0x8b4] sm:$0xff]
    %v5441 = vld [vmem:[#allocation19 + $0x8bc] sm:$0xff]
    %v5442 = vld [vmem:[#allocation19 + $0x8c4] sm:$0xff]
    %v5443 = vld [vmem:[#allocation19 + $0x8cc] sm:$0xff]
    %v5444 = vld [vmem:[#allocation19 + $0x8d4] sm:$0xff]
    %v5445 = vld [vmem:[#allocation19 + $0x8dc] sm:$0xff]
    %v5446 = vld [vmem:[#allocation19 + $0x8e4] sm:$0xf]
    %v5447 = vld [vmem:[#allocation19 + $0x8e8] sm:$0xff]
    %v5448 = vld [vmem:[#allocation19 + $0x8f0] sm:$0xff]
    %v5449 = vld [vmem:[#allocation19 + $0x8f8] sm:$0xff]
    %v5450 = vld [vmem:[#allocation19 + $0x900] sm:$0xff]
    %v5451 = vld [vmem:[#allocation19 + $0x908] sm:$0xff]
    %v5452 = vld [vmem:[#allocation19 + $0x910] sm:$0xff]
    %v5453 = vld [vmem:[#allocation19 + $0x918] sm:$0xff]
    %v5454 = vld [vmem:[#allocation19 + $0x920] sm:$0xf]
    %v5455 = vld [vmem:[#allocation19 + $0x924] sm:$0xff]
    %v5456 = vld [vmem:[#allocation19 + $0x92c] sm:$0xff]
    %v5457 = vld [vmem:[#allocation19 + $0x934] sm:$0xff]
    %v5458 = vld [vmem:[#allocation19 + $0x93c] sm:$0xff]
    %v5459 = vld [vmem:[#allocation19 + $0x944] sm:$0xff]
    %v5460 = vld [vmem:[#allocation19 + $0x94c] sm:$0xff]
    %v5461 = vld [vmem:[#allocation19 + $0x954] sm:$0xff]
    %v5462 = vld [vmem:[#allocation19 + $0x95c] sm:$0xf]
    %v5463 = vld [vmem:[#allocation19 + $0x960] sm:$0xff]
    %v5464 = vld [vmem:[#allocation19 + $0x968] sm:$0xff]
    %v5465 = vld [vmem:[#allocation19 + $0x970] sm:$0xff]
    %v5466 = vld [vmem:[#allocation19 + $0x978] sm:$0xff]
    %v5467 = vld [vmem:[#allocation19 + $0x980] sm:$0xff]
    %v5468 = vld [vmem:[#allocation19 + $0x988] sm:$0xff]
    %v5469 = vld [vmem:[#allocation19 + $0x990] sm:$0xff]
    %v5470 = vld [vmem:[#allocation19 + $0x998] sm:$0xf]
    %v5471 = vld [vmem:[#allocation19 + $0x99c] sm:$0xff]
    %v5472 = vld [vmem:[#allocation19 + $0x9a4] sm:$0xff]
    %v5473 = vld [vmem:[#allocation19 + $0x9ac] sm:$0xff]
    %v5474 = vld [vmem:[#allocation19 + $0x9b4] sm:$0xff]
    %v5475 = vld [vmem:[#allocation19 + $0x9bc] sm:$0xff]
    %v5476 = vld [vmem:[#allocation19 + $0x9c4] sm:$0xff]
    %v5477 = vld [vmem:[#allocation19 + $0x9cc] sm:$0xff]
    %v5478 = vld [vmem:[#allocation19 + $0x9d4] sm:$0xf]
    %v5479 = vld [vmem:[#allocation19 + $0x9d8] sm:$0xff]
    %v5480 = vld [vmem:[#allocation19 + $0x9e0] sm:$0xff]
    %v5481 = vld [vmem:[#allocation19 + $0x9e8] sm:$0xff]
    %v5482 = vld [vmem:[#allocation19 + $0x9f0] sm:$0xff]
    %v5483 = vld [vmem:[#allocation19 + $0x9f8] sm:$0xff]
    %v5484 = vld [vmem:[#allocation19 + $0xa00] sm:$0xff]
    %v5485 = vld [vmem:[#allocation19 + $0xa08] sm:$0xff]
    %v5486 = vld [vmem:[#allocation19 + $0xa10] sm:$0xf]
    %v5487 = vld [vmem:[#allocation19 + $0xa14] sm:$0xff]
    %v5488 = vld [vmem:[#allocation19 + $0xa1c] sm:$0xff]
    %v5489 = vld [vmem:[#allocation19 + $0xa24] sm:$0xff]
    %v5490 = vld [vmem:[#allocation19 + $0xa2c] sm:$0xff]
    %v5491 = vld [vmem:[#allocation19 + $0xa34] sm:$0xff]
    %v5492 = vld [vmem:[#allocation19 + $0xa3c] sm:$0xff]
    %v5493 = vld [vmem:[#allocation19 + $0xa44] sm:$0xff]
    %v5494 = vld [vmem:[#allocation19 + $0xa4c] sm:$0xf]
    %v5495 = vld [vmem:[#allocation19 + $0xa50] sm:$0xff]
    %v5496 = vld [vmem:[#allocation19 + $0xa58] sm:$0xff]
    %v5497 = vld [vmem:[#allocation19 + $0xa60] sm:$0xff]
    %v5498 = vld [vmem:[#allocation19 + $0xa68] sm:$0xff]
    %v5499 = vld [vmem:[#allocation19 + $0xa70] sm:$0xff]
    %v5500 = vld [vmem:[#allocation19 + $0xa78] sm:$0xff]
    %v5501 = vld [vmem:[#allocation19 + $0xa80] sm:$0xff]
    %v5502 = vld [vmem:[#allocation19 + $0xa88] sm:$0xf]
    %v5503 = vld [vmem:[#allocation19 + $0xa8c] sm:$0xff]
    %v5504 = vld [vmem:[#allocation19 + $0xa94] sm:$0xff]
    %v5505 = vld [vmem:[#allocation19 + $0xa9c] sm:$0xff]
    %v5506 = vld [vmem:[#allocation19 + $0xaa4] sm:$0xff]
    %v5507 = vld [vmem:[#allocation19 + $0xaac] sm:$0xff]
    %v5508 = vld [vmem:[#allocation19 + $0xab4] sm:$0xff]
    %v5509 = vld [vmem:[#allocation19 + $0xabc] sm:$0xff]
    %v5510 = vld [vmem:[#allocation19 + $0xac4] sm:$0xf]
    %v5511 = vld [vmem:[#allocation19 + $0xac8] sm:$0xff]
    %v5512 = vld [vmem:[#allocation19 + $0xad0] sm:$0xff]
    %v5513 = vld [vmem:[#allocation19 + $0xad8] sm:$0xff]
    %v5514 = vld [vmem:[#allocation19 + $0xae0] sm:$0xff]
    %v5515 = vld [vmem:[#allocation19 + $0xae8] sm:$0xff]
    %v5516 = vld [vmem:[#allocation19 + $0xaf0] sm:$0xff]
    %v5517 = vld [vmem:[#allocation19 + $0xaf8] sm:$0xff]
    %v5518 = vld [vmem:[#allocation19 + $0xb00] sm:$0xf]
    %v5519 = vld [vmem:[#allocation19 + $0xb04] sm:$0xff]
    %v5520 = vld [vmem:[#allocation19 + $0xb0c] sm:$0xff]
    %v5521 = vld [vmem:[#allocation19 + $0xb14] sm:$0xff]
    %v5522 = vld [vmem:[#allocation19 + $0xb1c] sm:$0xff]
    %v5523 = vld [vmem:[#allocation19 + $0xb24] sm:$0xff]
    %v5524 = vld [vmem:[#allocation19 + $0xb2c] sm:$0xff]
    %v5525 = vld [vmem:[#allocation19 + $0xb34] sm:$0xff]
    %v5526 = vld [vmem:[#allocation19 + $0xb3c] sm:$0xf]
    %v5527 = vld [vmem:[#allocation19 + $0xb40] sm:$0xff]
    %v5528 = vld [vmem:[#allocation19 + $0xb48] sm:$0xff]
    %v5529 = vld [vmem:[#allocation19 + $0xb50] sm:$0xff]
    %v5530 = vld [vmem:[#allocation19 + $0xb58] sm:$0xff]
    %v5531 = vld [vmem:[#allocation19 + $0xb60] sm:$0xff]
    %v5532 = vld [vmem:[#allocation19 + $0xb68] sm:$0xff]
    %v5533 = vld [vmem:[#allocation19 + $0xb70] sm:$0xff]
    %v5534 = vld [vmem:[#allocation19 + $0xb78] sm:$0xf]
    %v5535 = vld [vmem:[#allocation19 + $0xb7c] sm:$0xff]
    %v5536 = vld [vmem:[#allocation19 + $0xb84] sm:$0xff]
    %v5537 = vld [vmem:[#allocation19 + $0xb8c] sm:$0xff]
    %v5538 = vld [vmem:[#allocation19 + $0xb94] sm:$0xff]
    %v5539 = vld [vmem:[#allocation19 + $0xb9c] sm:$0xff]
    %v5540 = vld [vmem:[#allocation19 + $0xba4] sm:$0xff]
    %v5541 = vld [vmem:[#allocation19 + $0xbac] sm:$0xff]
    %v5542 = vld [vmem:[#allocation19 + $0xbb4] sm:$0xf]
    %v5543 = vld [vmem:[#allocation19 + $0xbb8] sm:$0xff]
    %v5544 = vld [vmem:[#allocation19 + $0xbc0] sm:$0xff]
    %v5545 = vld [vmem:[#allocation19 + $0xbc8] sm:$0xff]
    %v5546 = vld [vmem:[#allocation19 + $0xbd0] sm:$0xff]
    %v5547 = vld [vmem:[#allocation19 + $0xbd8] sm:$0xff]
    %v5548 = vld [vmem:[#allocation19 + $0xbe0] sm:$0xff]
    %v5549 = vld [vmem:[#allocation19 + $0xbe8] sm:$0xff]
    %v5550 = vld [vmem:[#allocation19 + $0xbf0] sm:$0xf]
    %v5551 = vld [vmem:[#allocation19 + $0xbf4] sm:$0xff]
    %v5552 = vld [vmem:[#allocation19 + $0xbfc] sm:$0xff]
    %v5553 = vld [vmem:[#allocation19 + $0xc04] sm:$0xff]
    %v5554 = vld [vmem:[#allocation19 + $0xc0c] sm:$0xff]
    %v5555 = vld [vmem:[#allocation19 + $0xc14] sm:$0xff]
    %v5556 = vld [vmem:[#allocation19 + $0xc1c] sm:$0xff]
    %v5557 = vld [vmem:[#allocation19 + $0xc24] sm:$0xff]
    %v5558 = vld [vmem:[#allocation19 + $0xc2c] sm:$0xf]
    %v5559 = vld [vmem:[#allocation19 + $0xc30] sm:$0xff]
    %v5560 = vld [vmem:[#allocation19 + $0xc38] sm:$0xff]
    %v5561 = vld [vmem:[#allocation19 + $0xc40] sm:$0xff]
    %v5562 = vld [vmem:[#allocation19 + $0xc48] sm:$0xff]
    %v5563 = vld [vmem:[#allocation19 + $0xc50] sm:$0xff]
    %v5564 = vld [vmem:[#allocation19 + $0xc58] sm:$0xff]
    %v5565 = vld [vmem:[#allocation19 + $0xc60] sm:$0xff]
    %v5566 = vld [vmem:[#allocation19 + $0xc68] sm:$0xf]
    %v5567 = vld [vmem:[#allocation19 + $0xc6c] sm:$0xff]
    %v5568 = vld [vmem:[#allocation19 + $0xc74] sm:$0xff]
    %v5569 = vld [vmem:[#allocation19 + $0xc7c] sm:$0xff]
    %v5570 = vld [vmem:[#allocation19 + $0xc84] sm:$0xff]
    %v5571 = vld [vmem:[#allocation19 + $0xc8c] sm:$0xff]
    %v5572 = vld [vmem:[#allocation19 + $0xc94] sm:$0xff]
    %v5573 = vld [vmem:[#allocation19 + $0xc9c] sm:$0xff]
    %v5574 = vld [vmem:[#allocation19 + $0xca4] sm:$0xf]
    %v5575 = vld [vmem:[#allocation19 + $0xca8] sm:$0xff]
    %v5576 = vld [vmem:[#allocation19 + $0xcb0] sm:$0xff]
    %v5577 = vld [vmem:[#allocation19 + $0xcb8] sm:$0xff]
    %v5578 = vld [vmem:[#allocation19 + $0xcc0] sm:$0xff]
    %v5579 = vld [vmem:[#allocation19 + $0xcc8] sm:$0xff]
    %v5580 = vld [vmem:[#allocation19 + $0xcd0] sm:$0xff]
    %v5581 = vld [vmem:[#allocation19 + $0xcd8] sm:$0xff]
    %v5582 = vld [vmem:[#allocation19 + $0xce0] sm:$0xf]
    %v5583 = vld [vmem:[#allocation19 + $0xce4] sm:$0xff]
    %v5584 = vld [vmem:[#allocation19 + $0xcec] sm:$0xff]
    %v5585 = vld [vmem:[#allocation19 + $0xcf4] sm:$0xff]
    %v5586 = vld [vmem:[#allocation19 + $0xcfc] sm:$0xff]
    %v5587 = vld [vmem:[#allocation19 + $0xd04] sm:$0xff]
    %v5588 = vld [vmem:[#allocation19 + $0xd0c] sm:$0xff]
    %v5589 = vld [vmem:[#allocation19 + $0xd14] sm:$0xff]
    %v5590 = vld [vmem:[#allocation19 + $0xd1c] sm:$0xf]
    %v5591 = vld [vmem:[#allocation19 + $0xd20] sm:$0xff]
    %v5592 = vld [vmem:[#allocation19 + $0xd28] sm:$0xff]
    %v5593 = vld [vmem:[#allocation19 + $0xd30] sm:$0xff]
    %v5594 = vld [vmem:[#allocation19 + $0xd38] sm:$0xff]
    %v5595 = vld [vmem:[#allocation19 + $0xd40] sm:$0xff]
    %v5596 = vld [vmem:[#allocation19 + $0xd48] sm:$0xff]
    %v5597 = vld [vmem:[#allocation19 + $0xd50] sm:$0xff]
    %v5598 = vld [vmem:[#allocation19 + $0xd58] sm:$0xf]
    %v5599 = vld [vmem:[#allocation19 + $0xd5c] sm:$0xff]
    %v5600 = vld [vmem:[#allocation19 + $0xd64] sm:$0xff]
    %v5601 = vld [vmem:[#allocation19 + $0xd6c] sm:$0xff]
    %v5602 = vld [vmem:[#allocation19 + $0xd74] sm:$0xff]
    %v5603 = vld [vmem:[#allocation19 + $0xd7c] sm:$0xff]
    %v5604 = vld [vmem:[#allocation19 + $0xd84] sm:$0xff]
    %v5605 = vld [vmem:[#allocation19 + $0xd8c] sm:$0xff]
    %v5606 = vld [vmem:[#allocation19 + $0xd94] sm:$0xf]
    %v5607 = vld [vmem:[#allocation19 + $0xd98] sm:$0xff]
    %v5608 = vld [vmem:[#allocation19 + $0xda0] sm:$0xff]
    %v5609 = vld [vmem:[#allocation19 + $0xda8] sm:$0xff]
    %v5610 = vld [vmem:[#allocation19 + $0xdb0] sm:$0xff]
    %v5611 = vld [vmem:[#allocation19 + $0xdb8] sm:$0xff]
    %v5612 = vld [vmem:[#allocation19 + $0xdc0] sm:$0xff]
    %v5613 = vld [vmem:[#allocation19 + $0xdc8] sm:$0xff]
    %v5614 = vld [vmem:[#allocation19 + $0xdd0] sm:$0xf]
    %v5615 = vld [vmem:[#allocation19 + $0xdd4] sm:$0xff]
    %v5616 = vld [vmem:[#allocation19 + $0xddc] sm:$0xff]
    %v5617 = vld [vmem:[#allocation19 + $0xde4] sm:$0xff]
    %v5618 = vld [vmem:[#allocation19 + $0xdec] sm:$0xff]
    %v5619 = vld [vmem:[#allocation19 + $0xdf4] sm:$0xff]
    %v5620 = vld [vmem:[#allocation19 + $0xdfc] sm:$0xff]
    %v5621 = vld [vmem:[#allocation19 + $0xe04] sm:$0xff]
    %v5622 = vld [vmem:[#allocation19 + $0xe0c] sm:$0xf]
    %v5623 = vld [vmem:[#allocation19 + $0xe10] sm:$0xff]
    %v5624 = vld [vmem:[#allocation19 + $0xe18] sm:$0xff]
    %v5625 = vld [vmem:[#allocation19 + $0xe20] sm:$0xff]
    %v5626 = vld [vmem:[#allocation19 + $0xe28] sm:$0xff]
    %v5627 = vld [vmem:[#allocation19 + $0xe30] sm:$0xff]
    %v5628 = vld [vmem:[#allocation19 + $0xe38] sm:$0xff]
    %v5629 = vld [vmem:[#allocation19 + $0xe40] sm:$0xff]
    %v5630 = vld [vmem:[#allocation19 + $0xe48] sm:$0xf]
    %v5631 = vld [vmem:[#allocation19 + $0xe4c] sm:$0xff]
    %v5632 = vld [vmem:[#allocation19 + $0xe54] sm:$0xff]
    %v5633 = vld [vmem:[#allocation19 + $0xe5c] sm:$0xff]
    %v5634 = vld [vmem:[#allocation19 + $0xe64] sm:$0xff]
    %v5635 = vld [vmem:[#allocation19 + $0xe6c] sm:$0xff]
    %v5636 = vld [vmem:[#allocation19 + $0xe74] sm:$0xff]
    %v5637 = vld [vmem:[#allocation19 + $0xe7c] sm:$0xff]
    %v5638 = vld [vmem:[#allocation19 + $0xe84] sm:$0xf]
    %v5639 = vld [vmem:[#allocation19 + $0xe88] sm:$0xff]
    %v5640 = vld [vmem:[#allocation19 + $0xe90] sm:$0xff]
    %v5641 = vld [vmem:[#allocation19 + $0xe98] sm:$0xff]
    %v5642 = vld [vmem:[#allocation19 + $0xea0] sm:$0xff]
    %v5643 = vld [vmem:[#allocation19 + $0xea8] sm:$0xff]
    %v5644 = vld [vmem:[#allocation19 + $0xeb0] sm:$0xff]
    %v5645 = vld [vmem:[#allocation19 + $0xeb8] sm:$0xff]
    %v5646 = vld [vmem:[#allocation19 + $0xec0] sm:$0xf]
    %v5647 = vld [vmem:[#allocation19 + $0xec4] sm:$0xff]
    %v5648 = vld [vmem:[#allocation19 + $0xecc] sm:$0xff]
    %v5649 = vld [vmem:[#allocation19 + $0xed4] sm:$0xff]
    %v5650 = vld [vmem:[#allocation19 + $0xedc] sm:$0xff]
    %v5651 = vld [vmem:[#allocation19 + $0xee4] sm:$0xff]
    %v5652 = vld [vmem:[#allocation19 + $0xeec] sm:$0xff]
    %v5653 = vld [vmem:[#allocation19 + $0xef4] sm:$0xff]
    %v5654 = vld [vmem:[#allocation19 + $0xefc] sm:$0xf]
    %v5655 = vld [vmem:[#allocation20] sm:$0xff]
    %v5656 = vld [vmem:[#allocation20 + $0x8] sm:$0xff]
    %v5659 = vlaneseq
    %v5660 = vshrl.u32 %v5659, 7
    %v5661 = vsub.s32 0, %v5660
    %v5662 = vrot.slane %v5655, %v5661
    %v5663 = vlaneseq
    %v5664 = vshrl.u32 %v5663, 7
    %v5665 = vsub.s32 1, %v5664
    %v5666 = vrot.slane %v5655, %v5665
    %v5667 = vlaneseq
    %v5668 = vshrl.u32 %v5667, 7
    %v5669 = vsub.s32 2, %v5668
    %v5670 = vrot.slane %v5655, %v5669
    %v5671 = vlaneseq
    %v5672 = vshrl.u32 %v5671, 7
    %v5673 = vsub.s32 3, %v5672
    %v5674 = vrot.slane %v5655, %v5673
    %v5675 = vlaneseq
    %v5676 = vshrl.u32 %v5675, 7
    %v5677 = vsub.s32 4, %v5676
    %v5678 = vrot.slane %v5655, %v5677
    %v5679 = vlaneseq
    %v5680 = vshrl.u32 %v5679, 7
    %v5681 = vsub.s32 5, %v5680
    %v5682 = vrot.slane %v5655, %v5681
    %v5683 = vlaneseq
    %v5684 = vshrl.u32 %v5683, 7
    %v5685 = vsub.s32 6, %v5684
    %v5686 = vrot.slane %v5655, %v5685
    %v5687 = vlaneseq
    %v5688 = vshrl.u32 %v5687, 7
    %v5689 = vsub.s32 7, %v5688
    %v5690 = vrot.slane %v5655, %v5689
    %v5691 = vlaneseq
    %v5692 = vshrl.u32 %v5691, 7
    %v5693 = vsub.s32 0, %v5692
    %v5694 = vrot.slane %v5656, %v5693
    %v5695 = vlaneseq
    %v5696 = vshrl.u32 %v5695, 7
    %v5697 = vsub.s32 1, %v5696
    %v5698 = vrot.slane %v5656, %v5697
    %v5699 = vlaneseq
    %v5700 = vshrl.u32 %v5699, 7
    %v5701 = vsub.s32 2, %v5700
    %v5702 = vrot.slane %v5656, %v5701
    %v5703 = vlaneseq
    %v5704 = vshrl.u32 %v5703, 7
    %v5705 = vsub.s32 3, %v5704
    %v5706 = vrot.slane %v5656, %v5705
    %v5707 = vlaneseq
    %v5708 = vshrl.u32 %v5707, 7
    %v5709 = vsub.s32 4, %v5708
    %v5710 = vrot.slane %v5656, %v5709
    %v5711 = vlaneseq
    %v5712 = vshrl.u32 %v5711, 7
    %v5713 = vsub.s32 5, %v5712
    %v5714 = vrot.slane %v5656, %v5713
    %v5715 = vlaneseq
    %v5716 = vshrl.u32 %v5715, 7
    %v5717 = vsub.s32 6, %v5716
    %v5718 = vrot.slane %v5656, %v5717
    %v6246 = vunpack.c.l.b16 %v5143
    %v6247 = vunpack.c.h.b16 %v5143
    %v6248 = vunpack.c.l.b16 %v5144
    %v6249 = vunpack.c.h.b16 %v5144
    %v6250 = vunpack.c.l.b16 %v5145
    %v6251 = vunpack.c.h.b16 %v5145
    %v6252 = vunpack.c.l.b16 %v5146
    %v6253 = vunpack.c.h.b16 %v5146
    %v6254 = vunpack.c.l.b16 %v5147
    %v6255 = vunpack.c.h.b16 %v5147
    %v6256 = vunpack.c.l.b16 %v5148
    %v6257 = vunpack.c.h.b16 %v5148
    %v6258 = vunpack.c.l.b16 %v5149
    %v6259 = vunpack.c.h.b16 %v5149
    %v6260 = vunpack.c.l.b16 %v5150
    %v6261 = vunpack.c.l.b16 %v5151
    %v6262 = vunpack.c.h.b16 %v5151
    %v6263 = vunpack.c.l.b16 %v5152
    %v6264 = vunpack.c.h.b16 %v5152
    %v6265 = vunpack.c.l.b16 %v5153
    %v6266 = vunpack.c.h.b16 %v5153
    %v6267 = vunpack.c.l.b16 %v5154
    %v6268 = vunpack.c.h.b16 %v5154
    %v6269 = vunpack.c.l.b16 %v5155
    %v6270 = vunpack.c.h.b16 %v5155
    %v6271 = vunpack.c.l.b16 %v5156
    %v6272 = vunpack.c.h.b16 %v5156
    %v6273 = vunpack.c.l.b16 %v5157
    %v6274 = vunpack.c.h.b16 %v5157
    %v6275 = vunpack.c.l.b16 %v5158
    %v6276 = vunpack.c.l.b16 %v5159
    %v6277 = vunpack.c.h.b16 %v5159
    %v6278 = vunpack.c.l.b16 %v5160
    %v6279 = vunpack.c.h.b16 %v5160
    %v6280 = vunpack.c.l.b16 %v5161
    %v6281 = vunpack.c.h.b16 %v5161
    %v6282 = vunpack.c.l.b16 %v5162
    %v6283 = vunpack.c.h.b16 %v5162
    %v6284 = vunpack.c.l.b16 %v5163
    %v6285 = vunpack.c.h.b16 %v5163
    %v6286 = vunpack.c.l.b16 %v5164
    %v6287 = vunpack.c.h.b16 %v5164
    %v6288 = vunpack.c.l.b16 %v5165
    %v6289 = vunpack.c.h.b16 %v5165
    %v6290 = vunpack.c.l.b16 %v5166
    %v6291 = vunpack.c.l.b16 %v5167
    %v6292 = vunpack.c.h.b16 %v5167
    %v6293 = vunpack.c.l.b16 %v5168
    %v6294 = vunpack.c.h.b16 %v5168
    %v6295 = vunpack.c.l.b16 %v5169
    %v6296 = vunpack.c.h.b16 %v5169
    %v6297 = vunpack.c.l.b16 %v5170
    %v6298 = vunpack.c.h.b16 %v5170
    %v6299 = vunpack.c.l.b16 %v5171
    %v6300 = vunpack.c.h.b16 %v5171
    %v6301 = vunpack.c.l.b16 %v5172
    %v6302 = vunpack.c.h.b16 %v5172
    %v6303 = vunpack.c.l.b16 %v5173
    %v6304 = vunpack.c.h.b16 %v5173
    %v6305 = vunpack.c.l.b16 %v5174
    %v6306 = vunpack.c.l.b16 %v5175
    %v6307 = vunpack.c.h.b16 %v5175
    %v6308 = vunpack.c.l.b16 %v5176
    %v6309 = vunpack.c.h.b16 %v5176
    %v6310 = vunpack.c.l.b16 %v5177
    %v6311 = vunpack.c.h.b16 %v5177
    %v6312 = vunpack.c.l.b16 %v5178
    %v6313 = vunpack.c.h.b16 %v5178
    %v6314 = vunpack.c.l.b16 %v5179
    %v6315 = vunpack.c.h.b16 %v5179
    %v6316 = vunpack.c.l.b16 %v5180
    %v6317 = vunpack.c.h.b16 %v5180
    %v6318 = vunpack.c.l.b16 %v5181
    %v6319 = vunpack.c.h.b16 %v5181
    %v6320 = vunpack.c.l.b16 %v5182
    %v6321 = vunpack.c.l.b16 %v5183
    %v6322 = vunpack.c.h.b16 %v5183
    %v6323 = vunpack.c.l.b16 %v5184
    %v6324 = vunpack.c.h.b16 %v5184
    %v6325 = vunpack.c.l.b16 %v5185
    %v6326 = vunpack.c.h.b16 %v5185
    %v6327 = vunpack.c.l.b16 %v5186
    %v6328 = vunpack.c.h.b16 %v5186
    %v6329 = vunpack.c.l.b16 %v5187
    %v6330 = vunpack.c.h.b16 %v5187
    %v6331 = vunpack.c.l.b16 %v5188
    %v6332 = vunpack.c.h.b16 %v5188
    %v6333 = vunpack.c.l.b16 %v5189
    %v6334 = vunpack.c.h.b16 %v5189
    %v6335 = vunpack.c.l.b16 %v5190
    %v6336 = vunpack.c.l.b16 %v5191
    %v6337 = vunpack.c.h.b16 %v5191
    %v6338 = vunpack.c.l.b16 %v5192
    %v6339 = vunpack.c.h.b16 %v5192
    %v6340 = vunpack.c.l.b16 %v5193
    %v6341 = vunpack.c.h.b16 %v5193
    %v6342 = vunpack.c.l.b16 %v5194
    %v6343 = vunpack.c.h.b16 %v5194
    %v6344 = vunpack.c.l.b16 %v5195
    %v6345 = vunpack.c.h.b16 %v5195
    %v6346 = vunpack.c.l.b16 %v5196
    %v6347 = vunpack.c.h.b16 %v5196
    %v6348 = vunpack.c.l.b16 %v5197
    %v6349 = vunpack.c.h.b16 %v5197
    %v6350 = vunpack.c.l.b16 %v5198
    %v6351 = vunpack.c.l.b16 %v5199
    %v6352 = vunpack.c.h.b16 %v5199
    %v6353 = vunpack.c.l.b16 %v5200
    %v6354 = vunpack.c.h.b16 %v5200
    %v6355 = vunpack.c.l.b16 %v5201
    %v6356 = vunpack.c.h.b16 %v5201
    %v6357 = vunpack.c.l.b16 %v5202
    %v6358 = vunpack.c.h.b16 %v5202
    %v6359 = vunpack.c.l.b16 %v5203
    %v6360 = vunpack.c.h.b16 %v5203
    %v6361 = vunpack.c.l.b16 %v5204
    %v6362 = vunpack.c.h.b16 %v5204
    %v6363 = vunpack.c.l.b16 %v5205
    %v6364 = vunpack.c.h.b16 %v5205
    %v6365 = vunpack.c.l.b16 %v5206
    %v6366 = vunpack.c.l.b16 %v5207
    %v6367 = vunpack.c.h.b16 %v5207
    %v6368 = vunpack.c.l.b16 %v5208
    %v6369 = vunpack.c.h.b16 %v5208
    %v6370 = vunpack.c.l.b16 %v5209
    %v6371 = vunpack.c.h.b16 %v5209
    %v6372 = vunpack.c.l.b16 %v5210
    %v6373 = vunpack.c.h.b16 %v5210
    %v6374 = vunpack.c.l.b16 %v5211
    %v6375 = vunpack.c.h.b16 %v5211
    %v6376 = vunpack.c.l.b16 %v5212
    %v6377 = vunpack.c.h.b16 %v5212
    %v6378 = vunpack.c.l.b16 %v5213
    %v6379 = vunpack.c.h.b16 %v5213
    %v6380 = vunpack.c.l.b16 %v5214
    %v6381 = vunpack.c.l.b16 %v5215
    %v6382 = vunpack.c.h.b16 %v5215
    %v6383 = vunpack.c.l.b16 %v5216
    %v6384 = vunpack.c.h.b16 %v5216
    %v6385 = vunpack.c.l.b16 %v5217
    %v6386 = vunpack.c.h.b16 %v5217
    %v6387 = vunpack.c.l.b16 %v5218
    %v6388 = vunpack.c.h.b16 %v5218
    %v6389 = vunpack.c.l.b16 %v5219
    %v6390 = vunpack.c.h.b16 %v5219
    %v6391 = vunpack.c.l.b16 %v5220
    %v6392 = vunpack.c.h.b16 %v5220
    %v6393 = vunpack.c.l.b16 %v5221
    %v6394 = vunpack.c.h.b16 %v5221
    %v6395 = vunpack.c.l.b16 %v5222
    %v6396 = vunpack.c.l.b16 %v5223
    %v6397 = vunpack.c.h.b16 %v5223
    %v6398 = vunpack.c.l.b16 %v5224
    %v6399 = vunpack.c.h.b16 %v5224
    %v6400 = vunpack.c.l.b16 %v5225
    %v6401 = vunpack.c.h.b16 %v5225
    %v6402 = vunpack.c.l.b16 %v5226
    %v6403 = vunpack.c.h.b16 %v5226
    %v6404 = vunpack.c.l.b16 %v5227
    %v6405 = vunpack.c.h.b16 %v5227
    %v6406 = vunpack.c.l.b16 %v5228
    %v6407 = vunpack.c.h.b16 %v5228
    %v6408 = vunpack.c.l.b16 %v5229
    %v6409 = vunpack.c.h.b16 %v5229
    %v6410 = vunpack.c.l.b16 %v5230
    %v6411 = vunpack.c.l.b16 %v5231
    %v6412 = vunpack.c.h.b16 %v5231
    %v6413 = vunpack.c.l.b16 %v5232
    %v6414 = vunpack.c.h.b16 %v5232
    %v6415 = vunpack.c.l.b16 %v5233
    %v6416 = vunpack.c.h.b16 %v5233
    %v6417 = vunpack.c.l.b16 %v5234
    %v6418 = vunpack.c.h.b16 %v5234
    %v6419 = vunpack.c.l.b16 %v5235
    %v6420 = vunpack.c.h.b16 %v5235
    %v6421 = vunpack.c.l.b16 %v5236
    %v6422 = vunpack.c.h.b16 %v5236
    %v6423 = vunpack.c.l.b16 %v5237
    %v6424 = vunpack.c.h.b16 %v5237
    %v6425 = vunpack.c.l.b16 %v5238
    %v6426 = vunpack.c.l.b16 %v5239
    %v6427 = vunpack.c.h.b16 %v5239
    %v6428 = vunpack.c.l.b16 %v5240
    %v6429 = vunpack.c.h.b16 %v5240
    %v6430 = vunpack.c.l.b16 %v5241
    %v6431 = vunpack.c.h.b16 %v5241
    %v6432 = vunpack.c.l.b16 %v5242
    %v6433 = vunpack.c.h.b16 %v5242
    %v6434 = vunpack.c.l.b16 %v5243
    %v6435 = vunpack.c.h.b16 %v5243
    %v6436 = vunpack.c.l.b16 %v5244
    %v6437 = vunpack.c.h.b16 %v5244
    %v6438 = vunpack.c.l.b16 %v5245
    %v6439 = vunpack.c.h.b16 %v5245
    %v6440 = vunpack.c.l.b16 %v5246
    %v6441 = vunpack.c.l.b16 %v5247
    %v6442 = vunpack.c.h.b16 %v5247
    %v6443 = vunpack.c.l.b16 %v5248
    %v6444 = vunpack.c.h.b16 %v5248
    %v6445 = vunpack.c.l.b16 %v5249
    %v6446 = vunpack.c.h.b16 %v5249
    %v6447 = vunpack.c.l.b16 %v5250
    %v6448 = vunpack.c.h.b16 %v5250
    %v6449 = vunpack.c.l.b16 %v5251
    %v6450 = vunpack.c.h.b16 %v5251
    %v6451 = vunpack.c.l.b16 %v5252
    %v6452 = vunpack.c.h.b16 %v5252
    %v6453 = vunpack.c.l.b16 %v5253
    %v6454 = vunpack.c.h.b16 %v5253
    %v6455 = vunpack.c.l.b16 %v5254
    %v6456 = vunpack.c.l.b16 %v5255
    %v6457 = vunpack.c.h.b16 %v5255
    %v6458 = vunpack.c.l.b16 %v5256
    %v6459 = vunpack.c.h.b16 %v5256
    %v6460 = vunpack.c.l.b16 %v5257
    %v6461 = vunpack.c.h.b16 %v5257
    %v6462 = vunpack.c.l.b16 %v5258
    %v6463 = vunpack.c.h.b16 %v5258
    %v6464 = vunpack.c.l.b16 %v5259
    %v6465 = vunpack.c.h.b16 %v5259
    %v6466 = vunpack.c.l.b16 %v5260
    %v6467 = vunpack.c.h.b16 %v5260
    %v6468 = vunpack.c.l.b16 %v5261
    %v6469 = vunpack.c.h.b16 %v5261
    %v6470 = vunpack.c.l.b16 %v5262
    %v6471 = vunpack.c.l.b16 %v5263
    %v6472 = vunpack.c.h.b16 %v5263
    %v6473 = vunpack.c.l.b16 %v5264
    %v6474 = vunpack.c.h.b16 %v5264
    %v6475 = vunpack.c.l.b16 %v5265
    %v6476 = vunpack.c.h.b16 %v5265
    %v6477 = vunpack.c.l.b16 %v5266
    %v6478 = vunpack.c.h.b16 %v5266
    %v6479 = vunpack.c.l.b16 %v5267
    %v6480 = vunpack.c.h.b16 %v5267
    %v6481 = vunpack.c.l.b16 %v5268
    %v6482 = vunpack.c.h.b16 %v5268
    %v6483 = vunpack.c.l.b16 %v5269
    %v6484 = vunpack.c.h.b16 %v5269
    %v6485 = vunpack.c.l.b16 %v5270
    %v6486 = vunpack.c.l.b16 %v5271
    %v6487 = vunpack.c.h.b16 %v5271
    %v6488 = vunpack.c.l.b16 %v5272
    %v6489 = vunpack.c.h.b16 %v5272
    %v6490 = vunpack.c.l.b16 %v5273
    %v6491 = vunpack.c.h.b16 %v5273
    %v6492 = vunpack.c.l.b16 %v5274
    %v6493 = vunpack.c.h.b16 %v5274
    %v6494 = vunpack.c.l.b16 %v5275
    %v6495 = vunpack.c.h.b16 %v5275
    %v6496 = vunpack.c.l.b16 %v5276
    %v6497 = vunpack.c.h.b16 %v5276
    %v6498 = vunpack.c.l.b16 %v5277
    %v6499 = vunpack.c.h.b16 %v5277
    %v6500 = vunpack.c.l.b16 %v5278
    %v6501 = vunpack.c.l.b16 %v5279
    %v6502 = vunpack.c.h.b16 %v5279
    %v6503 = vunpack.c.l.b16 %v5280
    %v6504 = vunpack.c.h.b16 %v5280
    %v6505 = vunpack.c.l.b16 %v5281
    %v6506 = vunpack.c.h.b16 %v5281
    %v6507 = vunpack.c.l.b16 %v5282
    %v6508 = vunpack.c.h.b16 %v5282
    %v6509 = vunpack.c.l.b16 %v5283
    %v6510 = vunpack.c.h.b16 %v5283
    %v6511 = vunpack.c.l.b16 %v5284
    %v6512 = vunpack.c.h.b16 %v5284
    %v6513 = vunpack.c.l.b16 %v5285
    %v6514 = vunpack.c.h.b16 %v5285
    %v6515 = vunpack.c.l.b16 %v5286
    %v6516 = vunpack.c.l.b16 %v5287
    %v6517 = vunpack.c.h.b16 %v5287
    %v6518 = vunpack.c.l.b16 %v5288
    %v6519 = vunpack.c.h.b16 %v5288
    %v6520 = vunpack.c.l.b16 %v5289
    %v6521 = vunpack.c.h.b16 %v5289
    %v6522 = vunpack.c.l.b16 %v5290
    %v6523 = vunpack.c.h.b16 %v5290
    %v6524 = vunpack.c.l.b16 %v5291
    %v6525 = vunpack.c.h.b16 %v5291
    %v6526 = vunpack.c.l.b16 %v5292
    %v6527 = vunpack.c.h.b16 %v5292
    %v6528 = vunpack.c.l.b16 %v5293
    %v6529 = vunpack.c.h.b16 %v5293
    %v6530 = vunpack.c.l.b16 %v5294
    %v6531 = vunpack.c.l.b16 %v5295
    %v6532 = vunpack.c.h.b16 %v5295
    %v6533 = vunpack.c.l.b16 %v5296
    %v6534 = vunpack.c.h.b16 %v5296
    %v6535 = vunpack.c.l.b16 %v5297
    %v6536 = vunpack.c.h.b16 %v5297
    %v6537 = vunpack.c.l.b16 %v5298
    %v6538 = vunpack.c.h.b16 %v5298
    %v6539 = vunpack.c.l.b16 %v5299
    %v6540 = vunpack.c.h.b16 %v5299
    %v6541 = vunpack.c.l.b16 %v5300
    %v6542 = vunpack.c.h.b16 %v5300
    %v6543 = vunpack.c.l.b16 %v5301
    %v6544 = vunpack.c.h.b16 %v5301
    %v6545 = vunpack.c.l.b16 %v5302
    %v6546 = vunpack.c.l.b16 %v5303
    %v6547 = vunpack.c.h.b16 %v5303
    %v6548 = vunpack.c.l.b16 %v5304
    %v6549 = vunpack.c.h.b16 %v5304
    %v6550 = vunpack.c.l.b16 %v5305
    %v6551 = vunpack.c.h.b16 %v5305
    %v6552 = vunpack.c.l.b16 %v5306
    %v6553 = vunpack.c.h.b16 %v5306
    %v6554 = vunpack.c.l.b16 %v5307
    %v6555 = vunpack.c.h.b16 %v5307
    %v6556 = vunpack.c.l.b16 %v5308
    %v6557 = vunpack.c.h.b16 %v5308
    %v6558 = vunpack.c.l.b16 %v5309
    %v6559 = vunpack.c.h.b16 %v5309
    %v6560 = vunpack.c.l.b16 %v5310
    %v6561 = vunpack.c.l.b16 %v5311
    %v6562 = vunpack.c.h.b16 %v5311
    %v6563 = vunpack.c.l.b16 %v5312
    %v6564 = vunpack.c.h.b16 %v5312
    %v6565 = vunpack.c.l.b16 %v5313
    %v6566 = vunpack.c.h.b16 %v5313
    %v6567 = vunpack.c.l.b16 %v5314
    %v6568 = vunpack.c.h.b16 %v5314
    %v6569 = vunpack.c.l.b16 %v5315
    %v6570 = vunpack.c.h.b16 %v5315
    %v6571 = vunpack.c.l.b16 %v5316
    %v6572 = vunpack.c.h.b16 %v5316
    %v6573 = vunpack.c.l.b16 %v5317
    %v6574 = vunpack.c.h.b16 %v5317
    %v6575 = vunpack.c.l.b16 %v5318
    %v6576 = vunpack.c.l.b16 %v5319
    %v6577 = vunpack.c.h.b16 %v5319
    %v6578 = vunpack.c.l.b16 %v5320
    %v6579 = vunpack.c.h.b16 %v5320
    %v6580 = vunpack.c.l.b16 %v5321
    %v6581 = vunpack.c.h.b16 %v5321
    %v6582 = vunpack.c.l.b16 %v5322
    %v6583 = vunpack.c.h.b16 %v5322
    %v6584 = vunpack.c.l.b16 %v5323
    %v6585 = vunpack.c.h.b16 %v5323
    %v6586 = vunpack.c.l.b16 %v5324
    %v6587 = vunpack.c.h.b16 %v5324
    %v6588 = vunpack.c.l.b16 %v5325
    %v6589 = vunpack.c.h.b16 %v5325
    %v6590 = vunpack.c.l.b16 %v5326
    %v6591 = vunpack.c.l.b16 %v5327
    %v6592 = vunpack.c.h.b16 %v5327
    %v6593 = vunpack.c.l.b16 %v5328
    %v6594 = vunpack.c.h.b16 %v5328
    %v6595 = vunpack.c.l.b16 %v5329
    %v6596 = vunpack.c.h.b16 %v5329
    %v6597 = vunpack.c.l.b16 %v5330
    %v6598 = vunpack.c.h.b16 %v5330
    %v6599 = vunpack.c.l.b16 %v5331
    %v6600 = vunpack.c.h.b16 %v5331
    %v6601 = vunpack.c.l.b16 %v5332
    %v6602 = vunpack.c.h.b16 %v5332
    %v6603 = vunpack.c.l.b16 %v5333
    %v6604 = vunpack.c.h.b16 %v5333
    %v6605 = vunpack.c.l.b16 %v5334
    %v6606 = vunpack.c.l.b16 %v5335
    %v6607 = vunpack.c.h.b16 %v5335
    %v6608 = vunpack.c.l.b16 %v5336
    %v6609 = vunpack.c.h.b16 %v5336
    %v6610 = vunpack.c.l.b16 %v5337
    %v6611 = vunpack.c.h.b16 %v5337
    %v6612 = vunpack.c.l.b16 %v5338
    %v6613 = vunpack.c.h.b16 %v5338
    %v6614 = vunpack.c.l.b16 %v5339
    %v6615 = vunpack.c.h.b16 %v5339
    %v6616 = vunpack.c.l.b16 %v5340
    %v6617 = vunpack.c.h.b16 %v5340
    %v6618 = vunpack.c.l.b16 %v5341
    %v6619 = vunpack.c.h.b16 %v5341
    %v6620 = vunpack.c.l.b16 %v5342
    %v6621 = vunpack.c.l.b16 %v5343
    %v6622 = vunpack.c.h.b16 %v5343
    %v6623 = vunpack.c.l.b16 %v5344
    %v6624 = vunpack.c.h.b16 %v5344
    %v6625 = vunpack.c.l.b16 %v5345
    %v6626 = vunpack.c.h.b16 %v5345
    %v6627 = vunpack.c.l.b16 %v5346
    %v6628 = vunpack.c.h.b16 %v5346
    %v6629 = vunpack.c.l.b16 %v5347
    %v6630 = vunpack.c.h.b16 %v5347
    %v6631 = vunpack.c.l.b16 %v5348
    %v6632 = vunpack.c.h.b16 %v5348
    %v6633 = vunpack.c.l.b16 %v5349
    %v6634 = vunpack.c.h.b16 %v5349
    %v6635 = vunpack.c.l.b16 %v5350
    %v6636 = vunpack.c.l.b16 %v5351
    %v6637 = vunpack.c.h.b16 %v5351
    %v6638 = vunpack.c.l.b16 %v5352
    %v6639 = vunpack.c.h.b16 %v5352
    %v6640 = vunpack.c.l.b16 %v5353
    %v6641 = vunpack.c.h.b16 %v5353
    %v6642 = vunpack.c.l.b16 %v5354
    %v6643 = vunpack.c.h.b16 %v5354
    %v6644 = vunpack.c.l.b16 %v5355
    %v6645 = vunpack.c.h.b16 %v5355
    %v6646 = vunpack.c.l.b16 %v5356
    %v6647 = vunpack.c.h.b16 %v5356
    %v6648 = vunpack.c.l.b16 %v5357
    %v6649 = vunpack.c.h.b16 %v5357
    %v6650 = vunpack.c.l.b16 %v5358
    %v6651 = vunpack.c.l.b16 %v5359
    %v6652 = vunpack.c.h.b16 %v5359
    %v6653 = vunpack.c.l.b16 %v5360
    %v6654 = vunpack.c.h.b16 %v5360
    %v6655 = vunpack.c.l.b16 %v5361
    %v6656 = vunpack.c.h.b16 %v5361
    %v6657 = vunpack.c.l.b16 %v5362
    %v6658 = vunpack.c.h.b16 %v5362
    %v6659 = vunpack.c.l.b16 %v5363
    %v6660 = vunpack.c.h.b16 %v5363
    %v6661 = vunpack.c.l.b16 %v5364
    %v6662 = vunpack.c.h.b16 %v5364
    %v6663 = vunpack.c.l.b16 %v5365
    %v6664 = vunpack.c.h.b16 %v5365
    %v6665 = vunpack.c.l.b16 %v5366
    %v6666 = vunpack.c.l.b16 %v5367
    %v6667 = vunpack.c.h.b16 %v5367
    %v6668 = vunpack.c.l.b16 %v5368
    %v6669 = vunpack.c.h.b16 %v5368
    %v6670 = vunpack.c.l.b16 %v5369
    %v6671 = vunpack.c.h.b16 %v5369
    %v6672 = vunpack.c.l.b16 %v5370
    %v6673 = vunpack.c.h.b16 %v5370
    %v6674 = vunpack.c.l.b16 %v5371
    %v6675 = vunpack.c.h.b16 %v5371
    %v6676 = vunpack.c.l.b16 %v5372
    %v6677 = vunpack.c.h.b16 %v5372
    %v6678 = vunpack.c.l.b16 %v5373
    %v6679 = vunpack.c.h.b16 %v5373
    %v6680 = vunpack.c.l.b16 %v5374
    %v6681 = vunpack.c.l.b16 %v5375
    %v6682 = vunpack.c.h.b16 %v5375
    %v6683 = vunpack.c.l.b16 %v5376
    %v6684 = vunpack.c.h.b16 %v5376
    %v6685 = vunpack.c.l.b16 %v5377
    %v6686 = vunpack.c.h.b16 %v5377
    %v6687 = vunpack.c.l.b16 %v5378
    %v6688 = vunpack.c.h.b16 %v5378
    %v6689 = vunpack.c.l.b16 %v5379
    %v6690 = vunpack.c.h.b16 %v5379
    %v6691 = vunpack.c.l.b16 %v5380
    %v6692 = vunpack.c.h.b16 %v5380
    %v6693 = vunpack.c.l.b16 %v5381
    %v6694 = vunpack.c.h.b16 %v5381
    %v6695 = vunpack.c.l.b16 %v5382
    %v6696 = vunpack.c.l.b16 %v5383
    %v6697 = vunpack.c.h.b16 %v5383
    %v6698 = vunpack.c.l.b16 %v5384
    %v6699 = vunpack.c.h.b16 %v5384
    %v6700 = vunpack.c.l.b16 %v5385
    %v6701 = vunpack.c.h.b16 %v5385
    %v6702 = vunpack.c.l.b16 %v5386
    %v6703 = vunpack.c.h.b16 %v5386
    %v6704 = vunpack.c.l.b16 %v5387
    %v6705 = vunpack.c.h.b16 %v5387
    %v6706 = vunpack.c.l.b16 %v5388
    %v6707 = vunpack.c.h.b16 %v5388
    %v6708 = vunpack.c.l.b16 %v5389
    %v6709 = vunpack.c.h.b16 %v5389
    %v6710 = vunpack.c.l.b16 %v5390
    %v6711 = vunpack.c.l.b16 %v5391
    %v6712 = vunpack.c.h.b16 %v5391
    %v6713 = vunpack.c.l.b16 %v5392
    %v6714 = vunpack.c.h.b16 %v5392
    %v6715 = vunpack.c.l.b16 %v5393
    %v6716 = vunpack.c.h.b16 %v5393
    %v6717 = vunpack.c.l.b16 %v5394
    %v6718 = vunpack.c.h.b16 %v5394
    %v6719 = vunpack.c.l.b16 %v5395
    %v6720 = vunpack.c.h.b16 %v5395
    %v6721 = vunpack.c.l.b16 %v5396
    %v6722 = vunpack.c.h.b16 %v5396
    %v6723 = vunpack.c.l.b16 %v5397
    %v6724 = vunpack.c.h.b16 %v5397
    %v6725 = vunpack.c.l.b16 %v5398
    %v6726 = vunpack.c.l.b16 %v5399
    %v6727 = vunpack.c.h.b16 %v5399
    %v6728 = vunpack.c.l.b16 %v5400
    %v6729 = vunpack.c.h.b16 %v5400
    %v6730 = vunpack.c.l.b16 %v5401
    %v6731 = vunpack.c.h.b16 %v5401
    %v6732 = vunpack.c.l.b16 %v5402
    %v6733 = vunpack.c.h.b16 %v5402
    %v6734 = vunpack.c.l.b16 %v5403
    %v6735 = vunpack.c.h.b16 %v5403
    %v6736 = vunpack.c.l.b16 %v5404
    %v6737 = vunpack.c.h.b16 %v5404
    %v6738 = vunpack.c.l.b16 %v5405
    %v6739 = vunpack.c.h.b16 %v5405
    %v6740 = vunpack.c.l.b16 %v5406
    %v6741 = vunpack.c.l.b16 %v5407
    %v6742 = vunpack.c.h.b16 %v5407
    %v6743 = vunpack.c.l.b16 %v5408
    %v6744 = vunpack.c.h.b16 %v5408
    %v6745 = vunpack.c.l.b16 %v5409
    %v6746 = vunpack.c.h.b16 %v5409
    %v6747 = vunpack.c.l.b16 %v5410
    %v6748 = vunpack.c.h.b16 %v5410
    %v6749 = vunpack.c.l.b16 %v5411
    %v6750 = vunpack.c.h.b16 %v5411
    %v6751 = vunpack.c.l.b16 %v5412
    %v6752 = vunpack.c.h.b16 %v5412
    %v6753 = vunpack.c.l.b16 %v5413
    %v6754 = vunpack.c.h.b16 %v5413
    %v6755 = vunpack.c.l.b16 %v5414
    %v6756 = vunpack.c.l.b16 %v5415
    %v6757 = vunpack.c.h.b16 %v5415
    %v6758 = vunpack.c.l.b16 %v5416
    %v6759 = vunpack.c.h.b16 %v5416
    %v6760 = vunpack.c.l.b16 %v5417
    %v6761 = vunpack.c.h.b16 %v5417
    %v6762 = vunpack.c.l.b16 %v5418
    %v6763 = vunpack.c.h.b16 %v5418
    %v6764 = vunpack.c.l.b16 %v5419
    %v6765 = vunpack.c.h.b16 %v5419
    %v6766 = vunpack.c.l.b16 %v5420
    %v6767 = vunpack.c.h.b16 %v5420
    %v6768 = vunpack.c.l.b16 %v5421
    %v6769 = vunpack.c.h.b16 %v5421
    %v6770 = vunpack.c.l.b16 %v5422
    %v6771 = vunpack.c.l.b16 %v5423
    %v6772 = vunpack.c.h.b16 %v5423
    %v6773 = vunpack.c.l.b16 %v5424
    %v6774 = vunpack.c.h.b16 %v5424
    %v6775 = vunpack.c.l.b16 %v5425
    %v6776 = vunpack.c.h.b16 %v5425
    %v6777 = vunpack.c.l.b16 %v5426
    %v6778 = vunpack.c.h.b16 %v5426
    %v6779 = vunpack.c.l.b16 %v5427
    %v6780 = vunpack.c.h.b16 %v5427
    %v6781 = vunpack.c.l.b16 %v5428
    %v6782 = vunpack.c.h.b16 %v5428
    %v6783 = vunpack.c.l.b16 %v5429
    %v6784 = vunpack.c.h.b16 %v5429
    %v6785 = vunpack.c.l.b16 %v5430
    %v6786 = vunpack.c.l.b16 %v5431
    %v6787 = vunpack.c.h.b16 %v5431
    %v6788 = vunpack.c.l.b16 %v5432
    %v6789 = vunpack.c.h.b16 %v5432
    %v6790 = vunpack.c.l.b16 %v5433
    %v6791 = vunpack.c.h.b16 %v5433
    %v6792 = vunpack.c.l.b16 %v5434
    %v6793 = vunpack.c.h.b16 %v5434
    %v6794 = vunpack.c.l.b16 %v5435
    %v6795 = vunpack.c.h.b16 %v5435
    %v6796 = vunpack.c.l.b16 %v5436
    %v6797 = vunpack.c.h.b16 %v5436
    %v6798 = vunpack.c.l.b16 %v5437
    %v6799 = vunpack.c.h.b16 %v5437
    %v6800 = vunpack.c.l.b16 %v5438
    %v6801 = vunpack.c.l.b16 %v5439
    %v6802 = vunpack.c.h.b16 %v5439
    %v6803 = vunpack.c.l.b16 %v5440
    %v6804 = vunpack.c.h.b16 %v5440
    %v6805 = vunpack.c.l.b16 %v5441
    %v6806 = vunpack.c.h.b16 %v5441
    %v6807 = vunpack.c.l.b16 %v5442
    %v6808 = vunpack.c.h.b16 %v5442
    %v6809 = vunpack.c.l.b16 %v5443
    %v6810 = vunpack.c.h.b16 %v5443
    %v6811 = vunpack.c.l.b16 %v5444
    %v6812 = vunpack.c.h.b16 %v5444
    %v6813 = vunpack.c.l.b16 %v5445
    %v6814 = vunpack.c.h.b16 %v5445
    %v6815 = vunpack.c.l.b16 %v5446
    %v6816 = vunpack.c.l.b16 %v5447
    %v6817 = vunpack.c.h.b16 %v5447
    %v6818 = vunpack.c.l.b16 %v5448
    %v6819 = vunpack.c.h.b16 %v5448
    %v6820 = vunpack.c.l.b16 %v5449
    %v6821 = vunpack.c.h.b16 %v5449
    %v6822 = vunpack.c.l.b16 %v5450
    %v6823 = vunpack.c.h.b16 %v5450
    %v6824 = vunpack.c.l.b16 %v5451
    %v6825 = vunpack.c.h.b16 %v5451
    %v6826 = vunpack.c.l.b16 %v5452
    %v6827 = vunpack.c.h.b16 %v5452
    %v6828 = vunpack.c.l.b16 %v5453
    %v6829 = vunpack.c.h.b16 %v5453
    %v6830 = vunpack.c.l.b16 %v5454
    %v6831 = vunpack.c.l.b16 %v5455
    %v6832 = vunpack.c.h.b16 %v5455
    %v6833 = vunpack.c.l.b16 %v5456
    %v6834 = vunpack.c.h.b16 %v5456
    %v6835 = vunpack.c.l.b16 %v5457
    %v6836 = vunpack.c.h.b16 %v5457
    %v6837 = vunpack.c.l.b16 %v5458
    %v6838 = vunpack.c.h.b16 %v5458
    %v6839 = vunpack.c.l.b16 %v5459
    %v6840 = vunpack.c.h.b16 %v5459
    %v6841 = vunpack.c.l.b16 %v5460
    %v6842 = vunpack.c.h.b16 %v5460
    %v6843 = vunpack.c.l.b16 %v5461
    %v6844 = vunpack.c.h.b16 %v5461
    %v6845 = vunpack.c.l.b16 %v5462
    %v6846 = vunpack.c.l.b16 %v5463
    %v6847 = vunpack.c.h.b16 %v5463
    %v6848 = vunpack.c.l.b16 %v5464
    %v6849 = vunpack.c.h.b16 %v5464
    %v6850 = vunpack.c.l.b16 %v5465
    %v6851 = vunpack.c.h.b16 %v5465
    %v6852 = vunpack.c.l.b16 %v5466
    %v6853 = vunpack.c.h.b16 %v5466
    %v6854 = vunpack.c.l.b16 %v5467
    %v6855 = vunpack.c.h.b16 %v5467
    %v6856 = vunpack.c.l.b16 %v5468
    %v6857 = vunpack.c.h.b16 %v5468
    %v6858 = vunpack.c.l.b16 %v5469
    %v6859 = vunpack.c.h.b16 %v5469
    %v6860 = vunpack.c.l.b16 %v5470
    %v6861 = vunpack.c.l.b16 %v5471
    %v6862 = vunpack.c.h.b16 %v5471
    %v6863 = vunpack.c.l.b16 %v5472
    %v6864 = vunpack.c.h.b16 %v5472
    %v6865 = vunpack.c.l.b16 %v5473
    %v6866 = vunpack.c.h.b16 %v5473
    %v6867 = vunpack.c.l.b16 %v5474
    %v6868 = vunpack.c.h.b16 %v5474
    %v6869 = vunpack.c.l.b16 %v5475
    %v6870 = vunpack.c.h.b16 %v5475
    %v6871 = vunpack.c.l.b16 %v5476
    %v6872 = vunpack.c.h.b16 %v5476
    %v6873 = vunpack.c.l.b16 %v5477
    %v6874 = vunpack.c.h.b16 %v5477
    %v6875 = vunpack.c.l.b16 %v5478
    %v6876 = vunpack.c.l.b16 %v5479
    %v6877 = vunpack.c.h.b16 %v5479
    %v6878 = vunpack.c.l.b16 %v5480
    %v6879 = vunpack.c.h.b16 %v5480
    %v6880 = vunpack.c.l.b16 %v5481
    %v6881 = vunpack.c.h.b16 %v5481
    %v6882 = vunpack.c.l.b16 %v5482
    %v6883 = vunpack.c.h.b16 %v5482
    %v6884 = vunpack.c.l.b16 %v5483
    %v6885 = vunpack.c.h.b16 %v5483
    %v6886 = vunpack.c.l.b16 %v5484
    %v6887 = vunpack.c.h.b16 %v5484
    %v6888 = vunpack.c.l.b16 %v5485
    %v6889 = vunpack.c.h.b16 %v5485
    %v6890 = vunpack.c.l.b16 %v5486
    %v6891 = vunpack.c.l.b16 %v5487
    %v6892 = vunpack.c.h.b16 %v5487
    %v6893 = vunpack.c.l.b16 %v5488
    %v6894 = vunpack.c.h.b16 %v5488
    %v6895 = vunpack.c.l.b16 %v5489
    %v6896 = vunpack.c.h.b16 %v5489
    %v6897 = vunpack.c.l.b16 %v5490
    %v6898 = vunpack.c.h.b16 %v5490
    %v6899 = vunpack.c.l.b16 %v5491
    %v6900 = vunpack.c.h.b16 %v5491
    %v6901 = vunpack.c.l.b16 %v5492
    %v6902 = vunpack.c.h.b16 %v5492
    %v6903 = vunpack.c.l.b16 %v5493
    %v6904 = vunpack.c.h.b16 %v5493
    %v6905 = vunpack.c.l.b16 %v5494
    %v6906 = vunpack.c.l.b16 %v5495
    %v6907 = vunpack.c.h.b16 %v5495
    %v6908 = vunpack.c.l.b16 %v5496
    %v6909 = vunpack.c.h.b16 %v5496
    %v6910 = vunpack.c.l.b16 %v5497
    %v6911 = vunpack.c.h.b16 %v5497
    %v6912 = vunpack.c.l.b16 %v5498
    %v6913 = vunpack.c.h.b16 %v5498
    %v6914 = vunpack.c.l.b16 %v5499
    %v6915 = vunpack.c.h.b16 %v5499
    %v6916 = vunpack.c.l.b16 %v5500
    %v6917 = vunpack.c.h.b16 %v5500
    %v6918 = vunpack.c.l.b16 %v5501
    %v6919 = vunpack.c.h.b16 %v5501
    %v6920 = vunpack.c.l.b16 %v5502
    %v6921 = vunpack.c.l.b16 %v5503
    %v6922 = vunpack.c.h.b16 %v5503
    %v6923 = vunpack.c.l.b16 %v5504
    %v6924 = vunpack.c.h.b16 %v5504
    %v6925 = vunpack.c.l.b16 %v5505
    %v6926 = vunpack.c.h.b16 %v5505
    %v6927 = vunpack.c.l.b16 %v5506
    %v6928 = vunpack.c.h.b16 %v5506
    %v6929 = vunpack.c.l.b16 %v5507
    %v6930 = vunpack.c.h.b16 %v5507
    %v6931 = vunpack.c.l.b16 %v5508
    %v6932 = vunpack.c.h.b16 %v5508
    %v6933 = vunpack.c.l.b16 %v5509
    %v6934 = vunpack.c.h.b16 %v5509
    %v6935 = vunpack.c.l.b16 %v5510
    %v6936 = vunpack.c.l.b16 %v5511
    %v6937 = vunpack.c.h.b16 %v5511
    %v6938 = vunpack.c.l.b16 %v5512
    %v6939 = vunpack.c.h.b16 %v5512
    %v6940 = vunpack.c.l.b16 %v5513
    %v6941 = vunpack.c.h.b16 %v5513
    %v6942 = vunpack.c.l.b16 %v5514
    %v6943 = vunpack.c.h.b16 %v5514
    %v6944 = vunpack.c.l.b16 %v5515
    %v6945 = vunpack.c.h.b16 %v5515
    %v6946 = vunpack.c.l.b16 %v5516
    %v6947 = vunpack.c.h.b16 %v5516
    %v6948 = vunpack.c.l.b16 %v5517
    %v6949 = vunpack.c.h.b16 %v5517
    %v6950 = vunpack.c.l.b16 %v5518
    %v6951 = vunpack.c.l.b16 %v5519
    %v6952 = vunpack.c.h.b16 %v5519
    %v6953 = vunpack.c.l.b16 %v5520
    %v6954 = vunpack.c.h.b16 %v5520
    %v6955 = vunpack.c.l.b16 %v5521
    %v6956 = vunpack.c.h.b16 %v5521
    %v6957 = vunpack.c.l.b16 %v5522
    %v6958 = vunpack.c.h.b16 %v5522
    %v6959 = vunpack.c.l.b16 %v5523
    %v6960 = vunpack.c.h.b16 %v5523
    %v6961 = vunpack.c.l.b16 %v5524
    %v6962 = vunpack.c.h.b16 %v5524
    %v6963 = vunpack.c.l.b16 %v5525
    %v6964 = vunpack.c.h.b16 %v5525
    %v6965 = vunpack.c.l.b16 %v5526
    %v6966 = vunpack.c.l.b16 %v5527
    %v6967 = vunpack.c.h.b16 %v5527
    %v6968 = vunpack.c.l.b16 %v5528
    %v6969 = vunpack.c.h.b16 %v5528
    %v6970 = vunpack.c.l.b16 %v5529
    %v6971 = vunpack.c.h.b16 %v5529
    %v6972 = vunpack.c.l.b16 %v5530
    %v6973 = vunpack.c.h.b16 %v5530
    %v6974 = vunpack.c.l.b16 %v5531
    %v6975 = vunpack.c.h.b16 %v5531
    %v6976 = vunpack.c.l.b16 %v5532
    %v6977 = vunpack.c.h.b16 %v5532
    %v6978 = vunpack.c.l.b16 %v5533
    %v6979 = vunpack.c.h.b16 %v5533
    %v6980 = vunpack.c.l.b16 %v5534
    %v6981 = vunpack.c.l.b16 %v5535
    %v6982 = vunpack.c.h.b16 %v5535
    %v6983 = vunpack.c.l.b16 %v5536
    %v6984 = vunpack.c.h.b16 %v5536
    %v6985 = vunpack.c.l.b16 %v5537
    %v6986 = vunpack.c.h.b16 %v5537
    %v6987 = vunpack.c.l.b16 %v5538
    %v6988 = vunpack.c.h.b16 %v5538
    %v6989 = vunpack.c.l.b16 %v5539
    %v6990 = vunpack.c.h.b16 %v5539
    %v6991 = vunpack.c.l.b16 %v5540
    %v6992 = vunpack.c.h.b16 %v5540
    %v6993 = vunpack.c.l.b16 %v5541
    %v6994 = vunpack.c.h.b16 %v5541
    %v6995 = vunpack.c.l.b16 %v5542
    %v6996 = vunpack.c.l.b16 %v5543
    %v6997 = vunpack.c.h.b16 %v5543
    %v6998 = vunpack.c.l.b16 %v5544
    %v6999 = vunpack.c.h.b16 %v5544
    %v7000 = vunpack.c.l.b16 %v5545
    %v7001 = vunpack.c.h.b16 %v5545
    %v7002 = vunpack.c.l.b16 %v5546
    %v7003 = vunpack.c.h.b16 %v5546
    %v7004 = vunpack.c.l.b16 %v5547
    %v7005 = vunpack.c.h.b16 %v5547
    %v7006 = vunpack.c.l.b16 %v5548
    %v7007 = vunpack.c.h.b16 %v5548
    %v7008 = vunpack.c.l.b16 %v5549
    %v7009 = vunpack.c.h.b16 %v5549
    %v7010 = vunpack.c.l.b16 %v5550
    %v7011 = vunpack.c.l.b16 %v5551
    %v7012 = vunpack.c.h.b16 %v5551
    %v7013 = vunpack.c.l.b16 %v5552
    %v7014 = vunpack.c.h.b16 %v5552
    %v7015 = vunpack.c.l.b16 %v5553
    %v7016 = vunpack.c.h.b16 %v5553
    %v7017 = vunpack.c.l.b16 %v5554
    %v7018 = vunpack.c.h.b16 %v5554
    %v7019 = vunpack.c.l.b16 %v5555
    %v7020 = vunpack.c.h.b16 %v5555
    %v7021 = vunpack.c.l.b16 %v5556
    %v7022 = vunpack.c.h.b16 %v5556
    %v7023 = vunpack.c.l.b16 %v5557
    %v7024 = vunpack.c.h.b16 %v5557
    %v7025 = vunpack.c.l.b16 %v5558
    %v7026 = vunpack.c.l.b16 %v5559
    %v7027 = vunpack.c.h.b16 %v5559
    %v7028 = vunpack.c.l.b16 %v5560
    %v7029 = vunpack.c.h.b16 %v5560
    %v7030 = vunpack.c.l.b16 %v5561
    %v7031 = vunpack.c.h.b16 %v5561
    %v7032 = vunpack.c.l.b16 %v5562
    %v7033 = vunpack.c.h.b16 %v5562
    %v7034 = vunpack.c.l.b16 %v5563
    %v7035 = vunpack.c.h.b16 %v5563
    %v7036 = vunpack.c.l.b16 %v5564
    %v7037 = vunpack.c.h.b16 %v5564
    %v7038 = vunpack.c.l.b16 %v5565
    %v7039 = vunpack.c.h.b16 %v5565
    %v7040 = vunpack.c.l.b16 %v5566
    %v7041 = vunpack.c.l.b16 %v5567
    %v7042 = vunpack.c.h.b16 %v5567
    %v7043 = vunpack.c.l.b16 %v5568
    %v7044 = vunpack.c.h.b16 %v5568
    %v7045 = vunpack.c.l.b16 %v5569
    %v7046 = vunpack.c.h.b16 %v5569
    %v7047 = vunpack.c.l.b16 %v5570
    %v7048 = vunpack.c.h.b16 %v5570
    %v7049 = vunpack.c.l.b16 %v5571
    %v7050 = vunpack.c.h.b16 %v5571
    %v7051 = vunpack.c.l.b16 %v5572
    %v7052 = vunpack.c.h.b16 %v5572
    %v7053 = vunpack.c.l.b16 %v5573
    %v7054 = vunpack.c.h.b16 %v5573
    %v7055 = vunpack.c.l.b16 %v5574
    %v7056 = vunpack.c.l.b16 %v5575
    %v7057 = vunpack.c.h.b16 %v5575
    %v7058 = vunpack.c.l.b16 %v5576
    %v7059 = vunpack.c.h.b16 %v5576
    %v7060 = vunpack.c.l.b16 %v5577
    %v7061 = vunpack.c.h.b16 %v5577
    %v7062 = vunpack.c.l.b16 %v5578
    %v7063 = vunpack.c.h.b16 %v5578
    %v7064 = vunpack.c.l.b16 %v5579
    %v7065 = vunpack.c.h.b16 %v5579
    %v7066 = vunpack.c.l.b16 %v5580
    %v7067 = vunpack.c.h.b16 %v5580
    %v7068 = vunpack.c.l.b16 %v5581
    %v7069 = vunpack.c.h.b16 %v5581
    %v7070 = vunpack.c.l.b16 %v5582
    %v7071 = vunpack.c.l.b16 %v5583
    %v7072 = vunpack.c.h.b16 %v5583
    %v7073 = vunpack.c.l.b16 %v5584
    %v7074 = vunpack.c.h.b16 %v5584
    %v7075 = vunpack.c.l.b16 %v5585
    %v7076 = vunpack.c.h.b16 %v5585
    %v7077 = vunpack.c.l.b16 %v5586
    %v7078 = vunpack.c.h.b16 %v5586
    %v7079 = vunpack.c.l.b16 %v5587
    %v7080 = vunpack.c.h.b16 %v5587
    %v7081 = vunpack.c.l.b16 %v5588
    %v7082 = vunpack.c.h.b16 %v5588
    %v7083 = vunpack.c.l.b16 %v5589
    %v7084 = vunpack.c.h.b16 %v5589
    %v7085 = vunpack.c.l.b16 %v5590
    %v7086 = vunpack.c.l.b16 %v5591
    %v7087 = vunpack.c.h.b16 %v5591
    %v7088 = vunpack.c.l.b16 %v5592
    %v7089 = vunpack.c.h.b16 %v5592
    %v7090 = vunpack.c.l.b16 %v5593
    %v7091 = vunpack.c.h.b16 %v5593
    %v7092 = vunpack.c.l.b16 %v5594
    %v7093 = vunpack.c.h.b16 %v5594
    %v7094 = vunpack.c.l.b16 %v5595
    %v7095 = vunpack.c.h.b16 %v5595
    %v7096 = vunpack.c.l.b16 %v5596
    %v7097 = vunpack.c.h.b16 %v5596
    %v7098 = vunpack.c.l.b16 %v5597
    %v7099 = vunpack.c.h.b16 %v5597
    %v7100 = vunpack.c.l.b16 %v5598
    %v7101 = vunpack.c.l.b16 %v5599
    %v7102 = vunpack.c.h.b16 %v5599
    %v7103 = vunpack.c.l.b16 %v5600
    %v7104 = vunpack.c.h.b16 %v5600
    %v7105 = vunpack.c.l.b16 %v5601
    %v7106 = vunpack.c.h.b16 %v5601
    %v7107 = vunpack.c.l.b16 %v5602
    %v7108 = vunpack.c.h.b16 %v5602
    %v7109 = vunpack.c.l.b16 %v5603
    %v7110 = vunpack.c.h.b16 %v5603
    %v7111 = vunpack.c.l.b16 %v5604
    %v7112 = vunpack.c.h.b16 %v5604
    %v7113 = vunpack.c.l.b16 %v5605
    %v7114 = vunpack.c.h.b16 %v5605
    %v7115 = vunpack.c.l.b16 %v5606
    %v7116 = vunpack.c.l.b16 %v5607
    %v7117 = vunpack.c.h.b16 %v5607
    %v7118 = vunpack.c.l.b16 %v5608
    %v7119 = vunpack.c.h.b16 %v5608
    %v7120 = vunpack.c.l.b16 %v5609
    %v7121 = vunpack.c.h.b16 %v5609
    %v7122 = vunpack.c.l.b16 %v5610
    %v7123 = vunpack.c.h.b16 %v5610
    %v7124 = vunpack.c.l.b16 %v5611
    %v7125 = vunpack.c.h.b16 %v5611
    %v7126 = vunpack.c.l.b16 %v5612
    %v7127 = vunpack.c.h.b16 %v5612
    %v7128 = vunpack.c.l.b16 %v5613
    %v7129 = vunpack.c.h.b16 %v5613
    %v7130 = vunpack.c.l.b16 %v5614
    %v7131 = vunpack.c.l.b16 %v5615
    %v7132 = vunpack.c.h.b16 %v5615
    %v7133 = vunpack.c.l.b16 %v5616
    %v7134 = vunpack.c.h.b16 %v5616
    %v7135 = vunpack.c.l.b16 %v5617
    %v7136 = vunpack.c.h.b16 %v5617
    %v7137 = vunpack.c.l.b16 %v5618
    %v7138 = vunpack.c.h.b16 %v5618
    %v7139 = vunpack.c.l.b16 %v5619
    %v7140 = vunpack.c.h.b16 %v5619
    %v7141 = vunpack.c.l.b16 %v5620
    %v7142 = vunpack.c.h.b16 %v5620
    %v7143 = vunpack.c.l.b16 %v5621
    %v7144 = vunpack.c.h.b16 %v5621
    %v7145 = vunpack.c.l.b16 %v5622
    %v7146 = vunpack.c.l.b16 %v5623
    %v7147 = vunpack.c.h.b16 %v5623
    %v7148 = vunpack.c.l.b16 %v5624
    %v7149 = vunpack.c.h.b16 %v5624
    %v7150 = vunpack.c.l.b16 %v5625
    %v7151 = vunpack.c.h.b16 %v5625
    %v7152 = vunpack.c.l.b16 %v5626
    %v7153 = vunpack.c.h.b16 %v5626
    %v7154 = vunpack.c.l.b16 %v5627
    %v7155 = vunpack.c.h.b16 %v5627
    %v7156 = vunpack.c.l.b16 %v5628
    %v7157 = vunpack.c.h.b16 %v5628
    %v7158 = vunpack.c.l.b16 %v5629
    %v7159 = vunpack.c.h.b16 %v5629
    %v7160 = vunpack.c.l.b16 %v5630
    %v7161 = vunpack.c.l.b16 %v5631
    %v7162 = vunpack.c.h.b16 %v5631
    %v7163 = vunpack.c.l.b16 %v5632
    %v7164 = vunpack.c.h.b16 %v5632
    %v7165 = vunpack.c.l.b16 %v5633
    %v7166 = vunpack.c.h.b16 %v5633
    %v7167 = vunpack.c.l.b16 %v5634
    %v7168 = vunpack.c.h.b16 %v5634
    %v7169 = vunpack.c.l.b16 %v5635
    %v7170 = vunpack.c.h.b16 %v5635
    %v7171 = vunpack.c.l.b16 %v5636
    %v7172 = vunpack.c.h.b16 %v5636
    %v7173 = vunpack.c.l.b16 %v5637
    %v7174 = vunpack.c.h.b16 %v5637
    %v7175 = vunpack.c.l.b16 %v5638
    %v7176 = vunpack.c.l.b16 %v5639
    %v7177 = vunpack.c.h.b16 %v5639
    %v7178 = vunpack.c.l.b16 %v5640
    %v7179 = vunpack.c.h.b16 %v5640
    %v7180 = vunpack.c.l.b16 %v5641
    %v7181 = vunpack.c.h.b16 %v5641
    %v7182 = vunpack.c.l.b16 %v5642
    %v7183 = vunpack.c.h.b16 %v5642
    %v7184 = vunpack.c.l.b16 %v5643
    %v7185 = vunpack.c.h.b16 %v5643
    %v7186 = vunpack.c.l.b16 %v5644
    %v7187 = vunpack.c.h.b16 %v5644
    %v7188 = vunpack.c.l.b16 %v5645
    %v7189 = vunpack.c.h.b16 %v5645
    %v7190 = vunpack.c.l.b16 %v5646
    %v7191 = vunpack.c.l.b16 %v5647
    %v7192 = vunpack.c.h.b16 %v5647
    %v7193 = vunpack.c.l.b16 %v5648
    %v7194 = vunpack.c.h.b16 %v5648
    %v7195 = vunpack.c.l.b16 %v5649
    %v7196 = vunpack.c.h.b16 %v5649
    %v7197 = vunpack.c.l.b16 %v5650
    %v7198 = vunpack.c.h.b16 %v5650
    %v7199 = vunpack.c.l.b16 %v5651
    %v7200 = vunpack.c.h.b16 %v5651
    %v7201 = vunpack.c.l.b16 %v5652
    %v7202 = vunpack.c.h.b16 %v5652
    %v7203 = vunpack.c.l.b16 %v5653
    %v7204 = vunpack.c.h.b16 %v5653
    %v7205 = vunpack.c.l.b16 %v5654
    %v7206 = vpack.c.b16 %v6261, %v6246
    %v7207 = vpack.c.b16 %v6262, %v6247
    %v7208 = vpack.c.b16 %v6263, %v6248
    %v7209 = vpack.c.b16 %v6264, %v6249
    %v7210 = vpack.c.b16 %v6265, %v6250
    %v7211 = vpack.c.b16 %v6266, %v6251
    %v7212 = vpack.c.b16 %v6267, %v6252
    %v7213 = vpack.c.b16 %v6268, %v6253
    %v7214 = vpack.c.b16 %v6269, %v6254
    %v7215 = vpack.c.b16 %v6270, %v6255
    %v7216 = vpack.c.b16 %v6271, %v6256
    %v7217 = vpack.c.b16 %v6272, %v6257
    %v7218 = vpack.c.b16 %v6273, %v6258
    %v7219 = vpack.c.b16 %v6274, %v6259
    %v7220 = vpack.c.b16 %v6275, %v6260
    %v7221 = vpack.c.b16 %v6291, %v6276
    %v7222 = vpack.c.b16 %v6292, %v6277
    %v7223 = vpack.c.b16 %v6293, %v6278
    %v7224 = vpack.c.b16 %v6294, %v6279
    %v7225 = vpack.c.b16 %v6295, %v6280
    %v7226 = vpack.c.b16 %v6296, %v6281
    %v7227 = vpack.c.b16 %v6297, %v6282
    %v7228 = vpack.c.b16 %v6298, %v6283
    %v7229 = vpack.c.b16 %v6299, %v6284
    %v7230 = vpack.c.b16 %v6300, %v6285
    %v7231 = vpack.c.b16 %v6301, %v6286
    %v7232 = vpack.c.b16 %v6302, %v6287
    %v7233 = vpack.c.b16 %v6303, %v6288
    %v7234 = vpack.c.b16 %v6304, %v6289
    %v7235 = vpack.c.b16 %v6305, %v6290
    %v7236 = vpack.c.b16 %v6321, %v6306
    %v7237 = vpack.c.b16 %v6322, %v6307
    %v7238 = vpack.c.b16 %v6323, %v6308
    %v7239 = vpack.c.b16 %v6324, %v6309
    %v7240 = vpack.c.b16 %v6325, %v6310
    %v7241 = vpack.c.b16 %v6326, %v6311
    %v7242 = vpack.c.b16 %v6327, %v6312
    %v7243 = vpack.c.b16 %v6328, %v6313
    %v7244 = vpack.c.b16 %v6329, %v6314
    %v7245 = vpack.c.b16 %v6330, %v6315
    %v7246 = vpack.c.b16 %v6331, %v6316
    %v7247 = vpack.c.b16 %v6332, %v6317
    %v7248 = vpack.c.b16 %v6333, %v6318
    %v7249 = vpack.c.b16 %v6334, %v6319
    %v7250 = vpack.c.b16 %v6335, %v6320
    %v7251 = vpack.c.b16 %v6351, %v6336
    %v7252 = vpack.c.b16 %v6352, %v6337
    %v7253 = vpack.c.b16 %v6353, %v6338
    %v7254 = vpack.c.b16 %v6354, %v6339
    %v7255 = vpack.c.b16 %v6355, %v6340
    %v7256 = vpack.c.b16 %v6356, %v6341
    %v7257 = vpack.c.b16 %v6357, %v6342
    %v7258 = vpack.c.b16 %v6358, %v6343
    %v7259 = vpack.c.b16 %v6359, %v6344
    %v7260 = vpack.c.b16 %v6360, %v6345
    %v7261 = vpack.c.b16 %v6361, %v6346
    %v7262 = vpack.c.b16 %v6362, %v6347
    %v7263 = vpack.c.b16 %v6363, %v6348
    %v7264 = vpack.c.b16 %v6364, %v6349
    %v7265 = vpack.c.b16 %v6365, %v6350
    %v7266 = vpack.c.b16 %v6381, %v6366
    %v7267 = vpack.c.b16 %v6382, %v6367
    %v7268 = vpack.c.b16 %v6383, %v6368
    %v7269 = vpack.c.b16 %v6384, %v6369
    %v7270 = vpack.c.b16 %v6385, %v6370
    %v7271 = vpack.c.b16 %v6386, %v6371
    %v7272 = vpack.c.b16 %v6387, %v6372
    %v7273 = vpack.c.b16 %v6388, %v6373
    %v7274 = vpack.c.b16 %v6389, %v6374
    %v7275 = vpack.c.b16 %v6390, %v6375
    %v7276 = vpack.c.b16 %v6391, %v6376
    %v7277 = vpack.c.b16 %v6392, %v6377
    %v7278 = vpack.c.b16 %v6393, %v6378
    %v7279 = vpack.c.b16 %v6394, %v6379
    %v7280 = vpack.c.b16 %v6395, %v6380
    %v7281 = vpack.c.b16 %v6411, %v6396
    %v7282 = vpack.c.b16 %v6412, %v6397
    %v7283 = vpack.c.b16 %v6413, %v6398
    %v7284 = vpack.c.b16 %v6414, %v6399
    %v7285 = vpack.c.b16 %v6415, %v6400
    %v7286 = vpack.c.b16 %v6416, %v6401
    %v7287 = vpack.c.b16 %v6417, %v6402
    %v7288 = vpack.c.b16 %v6418, %v6403
    %v7289 = vpack.c.b16 %v6419, %v6404
    %v7290 = vpack.c.b16 %v6420, %v6405
    %v7291 = vpack.c.b16 %v6421, %v6406
    %v7292 = vpack.c.b16 %v6422, %v6407
    %v7293 = vpack.c.b16 %v6423, %v6408
    %v7294 = vpack.c.b16 %v6424, %v6409
    %v7295 = vpack.c.b16 %v6425, %v6410
    %v7296 = vpack.c.b16 %v6441, %v6426
    %v7297 = vpack.c.b16 %v6442, %v6427
    %v7298 = vpack.c.b16 %v6443, %v6428
    %v7299 = vpack.c.b16 %v6444, %v6429
    %v7300 = vpack.c.b16 %v6445, %v6430
    %v7301 = vpack.c.b16 %v6446, %v6431
    %v7302 = vpack.c.b16 %v6447, %v6432
    %v7303 = vpack.c.b16 %v6448, %v6433
    %v7304 = vpack.c.b16 %v6449, %v6434
    %v7305 = vpack.c.b16 %v6450, %v6435
    %v7306 = vpack.c.b16 %v6451, %v6436
    %v7307 = vpack.c.b16 %v6452, %v6437
    %v7308 = vpack.c.b16 %v6453, %v6438
    %v7309 = vpack.c.b16 %v6454, %v6439
    %v7310 = vpack.c.b16 %v6455, %v6440
    %v7311 = vpack.c.b16 %v6471, %v6456
    %v7312 = vpack.c.b16 %v6472, %v6457
    %v7313 = vpack.c.b16 %v6473, %v6458
    %v7314 = vpack.c.b16 %v6474, %v6459
    %v7315 = vpack.c.b16 %v6475, %v6460
    %v7316 = vpack.c.b16 %v6476, %v6461
    %v7317 = vpack.c.b16 %v6477, %v6462
    %v7318 = vpack.c.b16 %v6478, %v6463
    %v7319 = vpack.c.b16 %v6479, %v6464
    %v7320 = vpack.c.b16 %v6480, %v6465
    %v7321 = vpack.c.b16 %v6481, %v6466
    %v7322 = vpack.c.b16 %v6482, %v6467
    %v7323 = vpack.c.b16 %v6483, %v6468
    %v7324 = vpack.c.b16 %v6484, %v6469
    %v7325 = vpack.c.b16 %v6485, %v6470
    %v7326 = vpack.c.b16 %v6501, %v6486
    %v7327 = vpack.c.b16 %v6502, %v6487
    %v7328 = vpack.c.b16 %v6503, %v6488
    %v7329 = vpack.c.b16 %v6504, %v6489
    %v7330 = vpack.c.b16 %v6505, %v6490
    %v7331 = vpack.c.b16 %v6506, %v6491
    %v7332 = vpack.c.b16 %v6507, %v6492
    %v7333 = vpack.c.b16 %v6508, %v6493
    %v7334 = vpack.c.b16 %v6509, %v6494
    %v7335 = vpack.c.b16 %v6510, %v6495
    %v7336 = vpack.c.b16 %v6511, %v6496
    %v7337 = vpack.c.b16 %v6512, %v6497
    %v7338 = vpack.c.b16 %v6513, %v6498
    %v7339 = vpack.c.b16 %v6514, %v6499
    %v7340 = vpack.c.b16 %v6515, %v6500
    %v7341 = vpack.c.b16 %v6531, %v6516
    %v7342 = vpack.c.b16 %v6532, %v6517
    %v7343 = vpack.c.b16 %v6533, %v6518
    %v7344 = vpack.c.b16 %v6534, %v6519
    %v7345 = vpack.c.b16 %v6535, %v6520
    %v7346 = vpack.c.b16 %v6536, %v6521
    %v7347 = vpack.c.b16 %v6537, %v6522
    %v7348 = vpack.c.b16 %v6538, %v6523
    %v7349 = vpack.c.b16 %v6539, %v6524
    %v7350 = vpack.c.b16 %v6540, %v6525
    %v7351 = vpack.c.b16 %v6541, %v6526
    %v7352 = vpack.c.b16 %v6542, %v6527
    %v7353 = vpack.c.b16 %v6543, %v6528
    %v7354 = vpack.c.b16 %v6544, %v6529
    %v7355 = vpack.c.b16 %v6545, %v6530
    %v7356 = vpack.c.b16 %v6561, %v6546
    %v7357 = vpack.c.b16 %v6562, %v6547
    %v7358 = vpack.c.b16 %v6563, %v6548
    %v7359 = vpack.c.b16 %v6564, %v6549
    %v7360 = vpack.c.b16 %v6565, %v6550
    %v7361 = vpack.c.b16 %v6566, %v6551
    %v7362 = vpack.c.b16 %v6567, %v6552
    %v7363 = vpack.c.b16 %v6568, %v6553
    %v7364 = vpack.c.b16 %v6569, %v6554
    %v7365 = vpack.c.b16 %v6570, %v6555
    %v7366 = vpack.c.b16 %v6571, %v6556
    %v7367 = vpack.c.b16 %v6572, %v6557
    %v7368 = vpack.c.b16 %v6573, %v6558
    %v7369 = vpack.c.b16 %v6574, %v6559
    %v7370 = vpack.c.b16 %v6575, %v6560
    %v7371 = vpack.c.b16 %v6591, %v6576
    %v7372 = vpack.c.b16 %v6592, %v6577
    %v7373 = vpack.c.b16 %v6593, %v6578
    %v7374 = vpack.c.b16 %v6594, %v6579
    %v7375 = vpack.c.b16 %v6595, %v6580
    %v7376 = vpack.c.b16 %v6596, %v6581
    %v7377 = vpack.c.b16 %v6597, %v6582
    %v7378 = vpack.c.b16 %v6598, %v6583
    %v7379 = vpack.c.b16 %v6599, %v6584
    %v7380 = vpack.c.b16 %v6600, %v6585
    %v7381 = vpack.c.b16 %v6601, %v6586
    %v7382 = vpack.c.b16 %v6602, %v6587
    %v7383 = vpack.c.b16 %v6603, %v6588
    %v7384 = vpack.c.b16 %v6604, %v6589
    %v7385 = vpack.c.b16 %v6605, %v6590
    %v7386 = vpack.c.b16 %v6621, %v6606
    %v7387 = vpack.c.b16 %v6622, %v6607
    %v7388 = vpack.c.b16 %v6623, %v6608
    %v7389 = vpack.c.b16 %v6624, %v6609
    %v7390 = vpack.c.b16 %v6625, %v6610
    %v7391 = vpack.c.b16 %v6626, %v6611
    %v7392 = vpack.c.b16 %v6627, %v6612
    %v7393 = vpack.c.b16 %v6628, %v6613
    %v7394 = vpack.c.b16 %v6629, %v6614
    %v7395 = vpack.c.b16 %v6630, %v6615
    %v7396 = vpack.c.b16 %v6631, %v6616
    %v7397 = vpack.c.b16 %v6632, %v6617
    %v7398 = vpack.c.b16 %v6633, %v6618
    %v7399 = vpack.c.b16 %v6634, %v6619
    %v7400 = vpack.c.b16 %v6635, %v6620
    %v7401 = vpack.c.b16 %v6651, %v6636
    %v7402 = vpack.c.b16 %v6652, %v6637
    %v7403 = vpack.c.b16 %v6653, %v6638
    %v7404 = vpack.c.b16 %v6654, %v6639
    %v7405 = vpack.c.b16 %v6655, %v6640
    %v7406 = vpack.c.b16 %v6656, %v6641
    %v7407 = vpack.c.b16 %v6657, %v6642
    %v7408 = vpack.c.b16 %v6658, %v6643
    %v7409 = vpack.c.b16 %v6659, %v6644
    %v7410 = vpack.c.b16 %v6660, %v6645
    %v7411 = vpack.c.b16 %v6661, %v6646
    %v7412 = vpack.c.b16 %v6662, %v6647
    %v7413 = vpack.c.b16 %v6663, %v6648
    %v7414 = vpack.c.b16 %v6664, %v6649
    %v7415 = vpack.c.b16 %v6665, %v6650
    %v7416 = vpack.c.b16 %v6681, %v6666
    %v7417 = vpack.c.b16 %v6682, %v6667
    %v7418 = vpack.c.b16 %v6683, %v6668
    %v7419 = vpack.c.b16 %v6684, %v6669
    %v7420 = vpack.c.b16 %v6685, %v6670
    %v7421 = vpack.c.b16 %v6686, %v6671
    %v7422 = vpack.c.b16 %v6687, %v6672
    %v7423 = vpack.c.b16 %v6688, %v6673
    %v7424 = vpack.c.b16 %v6689, %v6674
    %v7425 = vpack.c.b16 %v6690, %v6675
    %v7426 = vpack.c.b16 %v6691, %v6676
    %v7427 = vpack.c.b16 %v6692, %v6677
    %v7428 = vpack.c.b16 %v6693, %v6678
    %v7429 = vpack.c.b16 %v6694, %v6679
    %v7430 = vpack.c.b16 %v6695, %v6680
    %v7431 = vpack.c.b16 %v6711, %v6696
    %v7432 = vpack.c.b16 %v6712, %v6697
    %v7433 = vpack.c.b16 %v6713, %v6698
    %v7434 = vpack.c.b16 %v6714, %v6699
    %v7435 = vpack.c.b16 %v6715, %v6700
    %v7436 = vpack.c.b16 %v6716, %v6701
    %v7437 = vpack.c.b16 %v6717, %v6702
    %v7438 = vpack.c.b16 %v6718, %v6703
    %v7439 = vpack.c.b16 %v6719, %v6704
    %v7440 = vpack.c.b16 %v6720, %v6705
    %v7441 = vpack.c.b16 %v6721, %v6706
    %v7442 = vpack.c.b16 %v6722, %v6707
    %v7443 = vpack.c.b16 %v6723, %v6708
    %v7444 = vpack.c.b16 %v6724, %v6709
    %v7445 = vpack.c.b16 %v6725, %v6710
    %v7446 = vpack.c.b16 %v6741, %v6726
    %v7447 = vpack.c.b16 %v6742, %v6727
    %v7448 = vpack.c.b16 %v6743, %v6728
    %v7449 = vpack.c.b16 %v6744, %v6729
    %v7450 = vpack.c.b16 %v6745, %v6730
    %v7451 = vpack.c.b16 %v6746, %v6731
    %v7452 = vpack.c.b16 %v6747, %v6732
    %v7453 = vpack.c.b16 %v6748, %v6733
    %v7454 = vpack.c.b16 %v6749, %v6734
    %v7455 = vpack.c.b16 %v6750, %v6735
    %v7456 = vpack.c.b16 %v6751, %v6736
    %v7457 = vpack.c.b16 %v6752, %v6737
    %v7458 = vpack.c.b16 %v6753, %v6738
    %v7459 = vpack.c.b16 %v6754, %v6739
    %v7460 = vpack.c.b16 %v6755, %v6740
    %v7461 = vpack.c.b16 %v6771, %v6756
    %v7462 = vpack.c.b16 %v6772, %v6757
    %v7463 = vpack.c.b16 %v6773, %v6758
    %v7464 = vpack.c.b16 %v6774, %v6759
    %v7465 = vpack.c.b16 %v6775, %v6760
    %v7466 = vpack.c.b16 %v6776, %v6761
    %v7467 = vpack.c.b16 %v6777, %v6762
    %v7468 = vpack.c.b16 %v6778, %v6763
    %v7469 = vpack.c.b16 %v6779, %v6764
    %v7470 = vpack.c.b16 %v6780, %v6765
    %v7471 = vpack.c.b16 %v6781, %v6766
    %v7472 = vpack.c.b16 %v6782, %v6767
    %v7473 = vpack.c.b16 %v6783, %v6768
    %v7474 = vpack.c.b16 %v6784, %v6769
    %v7475 = vpack.c.b16 %v6785, %v6770
    %v7476 = vpack.c.b16 %v6801, %v6786
    %v7477 = vpack.c.b16 %v6802, %v6787
    %v7478 = vpack.c.b16 %v6803, %v6788
    %v7479 = vpack.c.b16 %v6804, %v6789
    %v7480 = vpack.c.b16 %v6805, %v6790
    %v7481 = vpack.c.b16 %v6806, %v6791
    %v7482 = vpack.c.b16 %v6807, %v6792
    %v7483 = vpack.c.b16 %v6808, %v6793
    %v7484 = vpack.c.b16 %v6809, %v6794
    %v7485 = vpack.c.b16 %v6810, %v6795
    %v7486 = vpack.c.b16 %v6811, %v6796
    %v7487 = vpack.c.b16 %v6812, %v6797
    %v7488 = vpack.c.b16 %v6813, %v6798
    %v7489 = vpack.c.b16 %v6814, %v6799
    %v7490 = vpack.c.b16 %v6815, %v6800
    %v7491 = vpack.c.b16 %v6831, %v6816
    %v7492 = vpack.c.b16 %v6832, %v6817
    %v7493 = vpack.c.b16 %v6833, %v6818
    %v7494 = vpack.c.b16 %v6834, %v6819
    %v7495 = vpack.c.b16 %v6835, %v6820
    %v7496 = vpack.c.b16 %v6836, %v6821
    %v7497 = vpack.c.b16 %v6837, %v6822
    %v7498 = vpack.c.b16 %v6838, %v6823
    %v7499 = vpack.c.b16 %v6839, %v6824
    %v7500 = vpack.c.b16 %v6840, %v6825
    %v7501 = vpack.c.b16 %v6841, %v6826
    %v7502 = vpack.c.b16 %v6842, %v6827
    %v7503 = vpack.c.b16 %v6843, %v6828
    %v7504 = vpack.c.b16 %v6844, %v6829
    %v7505 = vpack.c.b16 %v6845, %v6830
    %v7506 = vpack.c.b16 %v6861, %v6846
    %v7507 = vpack.c.b16 %v6862, %v6847
    %v7508 = vpack.c.b16 %v6863, %v6848
    %v7509 = vpack.c.b16 %v6864, %v6849
    %v7510 = vpack.c.b16 %v6865, %v6850
    %v7511 = vpack.c.b16 %v6866, %v6851
    %v7512 = vpack.c.b16 %v6867, %v6852
    %v7513 = vpack.c.b16 %v6868, %v6853
    %v7514 = vpack.c.b16 %v6869, %v6854
    %v7515 = vpack.c.b16 %v6870, %v6855
    %v7516 = vpack.c.b16 %v6871, %v6856
    %v7517 = vpack.c.b16 %v6872, %v6857
    %v7518 = vpack.c.b16 %v6873, %v6858
    %v7519 = vpack.c.b16 %v6874, %v6859
    %v7520 = vpack.c.b16 %v6875, %v6860
    %v7521 = vpack.c.b16 %v6891, %v6876
    %v7522 = vpack.c.b16 %v6892, %v6877
    %v7523 = vpack.c.b16 %v6893, %v6878
    %v7524 = vpack.c.b16 %v6894, %v6879
    %v7525 = vpack.c.b16 %v6895, %v6880
    %v7526 = vpack.c.b16 %v6896, %v6881
    %v7527 = vpack.c.b16 %v6897, %v6882
    %v7528 = vpack.c.b16 %v6898, %v6883
    %v7529 = vpack.c.b16 %v6899, %v6884
    %v7530 = vpack.c.b16 %v6900, %v6885
    %v7531 = vpack.c.b16 %v6901, %v6886
    %v7532 = vpack.c.b16 %v6902, %v6887
    %v7533 = vpack.c.b16 %v6903, %v6888
    %v7534 = vpack.c.b16 %v6904, %v6889
    %v7535 = vpack.c.b16 %v6905, %v6890
    %v7536 = vpack.c.b16 %v6921, %v6906
    %v7537 = vpack.c.b16 %v6922, %v6907
    %v7538 = vpack.c.b16 %v6923, %v6908
    %v7539 = vpack.c.b16 %v6924, %v6909
    %v7540 = vpack.c.b16 %v6925, %v6910
    %v7541 = vpack.c.b16 %v6926, %v6911
    %v7542 = vpack.c.b16 %v6927, %v6912
    %v7543 = vpack.c.b16 %v6928, %v6913
    %v7544 = vpack.c.b16 %v6929, %v6914
    %v7545 = vpack.c.b16 %v6930, %v6915
    %v7546 = vpack.c.b16 %v6931, %v6916
    %v7547 = vpack.c.b16 %v6932, %v6917
    %v7548 = vpack.c.b16 %v6933, %v6918
    %v7549 = vpack.c.b16 %v6934, %v6919
    %v7550 = vpack.c.b16 %v6935, %v6920
    %v7551 = vpack.c.b16 %v6951, %v6936
    %v7552 = vpack.c.b16 %v6952, %v6937
    %v7553 = vpack.c.b16 %v6953, %v6938
    %v7554 = vpack.c.b16 %v6954, %v6939
    %v7555 = vpack.c.b16 %v6955, %v6940
    %v7556 = vpack.c.b16 %v6956, %v6941
    %v7557 = vpack.c.b16 %v6957, %v6942
    %v7558 = vpack.c.b16 %v6958, %v6943
    %v7559 = vpack.c.b16 %v6959, %v6944
    %v7560 = vpack.c.b16 %v6960, %v6945
    %v7561 = vpack.c.b16 %v6961, %v6946
    %v7562 = vpack.c.b16 %v6962, %v6947
    %v7563 = vpack.c.b16 %v6963, %v6948
    %v7564 = vpack.c.b16 %v6964, %v6949
    %v7565 = vpack.c.b16 %v6965, %v6950
    %v7566 = vpack.c.b16 %v6981, %v6966
    %v7567 = vpack.c.b16 %v6982, %v6967
    %v7568 = vpack.c.b16 %v6983, %v6968
    %v7569 = vpack.c.b16 %v6984, %v6969
    %v7570 = vpack.c.b16 %v6985, %v6970
    %v7571 = vpack.c.b16 %v6986, %v6971
    %v7572 = vpack.c.b16 %v6987, %v6972
    %v7573 = vpack.c.b16 %v6988, %v6973
    %v7574 = vpack.c.b16 %v6989, %v6974
    %v7575 = vpack.c.b16 %v6990, %v6975
    %v7576 = vpack.c.b16 %v6991, %v6976
    %v7577 = vpack.c.b16 %v6992, %v6977
    %v7578 = vpack.c.b16 %v6993, %v6978
    %v7579 = vpack.c.b16 %v6994, %v6979
    %v7580 = vpack.c.b16 %v6995, %v6980
    %v7581 = vpack.c.b16 %v7011, %v6996
    %v7582 = vpack.c.b16 %v7012, %v6997
    %v7583 = vpack.c.b16 %v7013, %v6998
    %v7584 = vpack.c.b16 %v7014, %v6999
    %v7585 = vpack.c.b16 %v7015, %v7000
    %v7586 = vpack.c.b16 %v7016, %v7001
    %v7587 = vpack.c.b16 %v7017, %v7002
    %v7588 = vpack.c.b16 %v7018, %v7003
    %v7589 = vpack.c.b16 %v7019, %v7004
    %v7590 = vpack.c.b16 %v7020, %v7005
    %v7591 = vpack.c.b16 %v7021, %v7006
    %v7592 = vpack.c.b16 %v7022, %v7007
    %v7593 = vpack.c.b16 %v7023, %v7008
    %v7594 = vpack.c.b16 %v7024, %v7009
    %v7595 = vpack.c.b16 %v7025, %v7010
    %v7596 = vpack.c.b16 %v7041, %v7026
    %v7597 = vpack.c.b16 %v7042, %v7027
    %v7598 = vpack.c.b16 %v7043, %v7028
    %v7599 = vpack.c.b16 %v7044, %v7029
    %v7600 = vpack.c.b16 %v7045, %v7030
    %v7601 = vpack.c.b16 %v7046, %v7031
    %v7602 = vpack.c.b16 %v7047, %v7032
    %v7603 = vpack.c.b16 %v7048, %v7033
    %v7604 = vpack.c.b16 %v7049, %v7034
    %v7605 = vpack.c.b16 %v7050, %v7035
    %v7606 = vpack.c.b16 %v7051, %v7036
    %v7607 = vpack.c.b16 %v7052, %v7037
    %v7608 = vpack.c.b16 %v7053, %v7038
    %v7609 = vpack.c.b16 %v7054, %v7039
    %v7610 = vpack.c.b16 %v7055, %v7040
    %v7611 = vpack.c.b16 %v7071, %v7056
    %v7612 = vpack.c.b16 %v7072, %v7057
    %v7613 = vpack.c.b16 %v7073, %v7058
    %v7614 = vpack.c.b16 %v7074, %v7059
    %v7615 = vpack.c.b16 %v7075, %v7060
    %v7616 = vpack.c.b16 %v7076, %v7061
    %v7617 = vpack.c.b16 %v7077, %v7062
    %v7618 = vpack.c.b16 %v7078, %v7063
    %v7619 = vpack.c.b16 %v7079, %v7064
    %v7620 = vpack.c.b16 %v7080, %v7065
    %v7621 = vpack.c.b16 %v7081, %v7066
    %v7622 = vpack.c.b16 %v7082, %v7067
    %v7623 = vpack.c.b16 %v7083, %v7068
    %v7624 = vpack.c.b16 %v7084, %v7069
    %v7625 = vpack.c.b16 %v7085, %v7070
    %v7626 = vpack.c.b16 %v7101, %v7086
    %v7627 = vpack.c.b16 %v7102, %v7087
    %v7628 = vpack.c.b16 %v7103, %v7088
    %v7629 = vpack.c.b16 %v7104, %v7089
    %v7630 = vpack.c.b16 %v7105, %v7090
    %v7631 = vpack.c.b16 %v7106, %v7091
    %v7632 = vpack.c.b16 %v7107, %v7092
    %v7633 = vpack.c.b16 %v7108, %v7093
    %v7634 = vpack.c.b16 %v7109, %v7094
    %v7635 = vpack.c.b16 %v7110, %v7095
    %v7636 = vpack.c.b16 %v7111, %v7096
    %v7637 = vpack.c.b16 %v7112, %v7097
    %v7638 = vpack.c.b16 %v7113, %v7098
    %v7639 = vpack.c.b16 %v7114, %v7099
    %v7640 = vpack.c.b16 %v7115, %v7100
    %v7641 = vpack.c.b16 %v7131, %v7116
    %v7642 = vpack.c.b16 %v7132, %v7117
    %v7643 = vpack.c.b16 %v7133, %v7118
    %v7644 = vpack.c.b16 %v7134, %v7119
    %v7645 = vpack.c.b16 %v7135, %v7120
    %v7646 = vpack.c.b16 %v7136, %v7121
    %v7647 = vpack.c.b16 %v7137, %v7122
    %v7648 = vpack.c.b16 %v7138, %v7123
    %v7649 = vpack.c.b16 %v7139, %v7124
    %v7650 = vpack.c.b16 %v7140, %v7125
    %v7651 = vpack.c.b16 %v7141, %v7126
    %v7652 = vpack.c.b16 %v7142, %v7127
    %v7653 = vpack.c.b16 %v7143, %v7128
    %v7654 = vpack.c.b16 %v7144, %v7129
    %v7655 = vpack.c.b16 %v7145, %v7130
    %v7656 = vpack.c.b16 %v7161, %v7146
    %v7657 = vpack.c.b16 %v7162, %v7147
    %v7658 = vpack.c.b16 %v7163, %v7148
    %v7659 = vpack.c.b16 %v7164, %v7149
    %v7660 = vpack.c.b16 %v7165, %v7150
    %v7661 = vpack.c.b16 %v7166, %v7151
    %v7662 = vpack.c.b16 %v7167, %v7152
    %v7663 = vpack.c.b16 %v7168, %v7153
    %v7664 = vpack.c.b16 %v7169, %v7154
    %v7665 = vpack.c.b16 %v7170, %v7155
    %v7666 = vpack.c.b16 %v7171, %v7156
    %v7667 = vpack.c.b16 %v7172, %v7157
    %v7668 = vpack.c.b16 %v7173, %v7158
    %v7669 = vpack.c.b16 %v7174, %v7159
    %v7670 = vpack.c.b16 %v7175, %v7160
    %v7671 = vpack.c.b16 %v7191, %v7176
    %v7672 = vpack.c.b16 %v7192, %v7177
    %v7673 = vpack.c.b16 %v7193, %v7178
    %v7674 = vpack.c.b16 %v7194, %v7179
    %v7675 = vpack.c.b16 %v7195, %v7180
    %v7676 = vpack.c.b16 %v7196, %v7181
    %v7677 = vpack.c.b16 %v7197, %v7182
    %v7678 = vpack.c.b16 %v7198, %v7183
    %v7679 = vpack.c.b16 %v7199, %v7184
    %v7680 = vpack.c.b16 %v7200, %v7185
    %v7681 = vpack.c.b16 %v7201, %v7186
    %v7682 = vpack.c.b16 %v7202, %v7187
    %v7683 = vpack.c.b16 %v7203, %v7188
    %v7684 = vpack.c.b16 %v7204, %v7189
    %v7685 = vpack.c.b16 %v7205, %v7190
    %8166 = vmatprep.subr.bf16.mxu0 %v7207
    %8167 = vmatpush1.bf16.msra.mxu0 %v7206
    %8168 = vmatprep.subr.bf16.mxu0 %v7222
    %8169 = vmatpush1.bf16.msra.mxu0 %v7221
    %8170 = vmatprep.subr.bf16.mxu0 %v7237
    %8171 = vmatpush1.bf16.msra.mxu0 %v7236
    %8172 = vmatprep.subr.bf16.mxu0 %v7252
    %8173 = vmatpush1.bf16.msra.mxu0 %v7251
    %8174 = vmatprep.subr.bf16.mxu0 %v7267
    %8175 = vmatpush1.bf16.msra.mxu0 %v7266
    %8176 = vmatprep.subr.bf16.mxu0 %v7282
    %8177 = vmatpush1.bf16.msra.mxu0 %v7281
    %8178 = vmatprep.subr.bf16.mxu0 %v7297
    %8179 = vmatpush1.bf16.msra.mxu0 %v7296
    %8180 = vmatprep.subr.bf16.mxu0 %v7312
    %8181 = vmatpush1.bf16.msra.mxu0 %v7311
    %8182 = vmatprep.subr.bf16.mxu0 %v7327
    %8183 = vmatpush1.bf16.msra.mxu0 %v7326
    %8184 = vmatprep.subr.bf16.mxu0 %v7342
    %8185 = vmatpush1.bf16.msra.mxu0 %v7341
    %8186 = vmatprep.subr.bf16.mxu0 %v7357
    %8187 = vmatpush1.bf16.msra.mxu0 %v7356
    %8188 = vmatprep.subr.bf16.mxu0 %v7372
    %8189 = vmatpush1.bf16.msra.mxu0 %v7371
    %8190 = vmatprep.subr.bf16.mxu0 %v7387
    %8191 = vmatpush1.bf16.msra.mxu0 %v7386
    %8192 = vmatprep.subr.bf16.mxu0 %v7402
    %8193 = vmatpush1.bf16.msra.mxu0 %v7401
    %8194 = vmatprep.subr.bf16.mxu0 %v7417
    %8195 = vmatpush1.bf16.msra.mxu0 %v7416
    %8196 = vmatprep.subr.bf16.mxu0 %v7432
    %8197 = vmatpush1.bf16.msra.mxu0 %v7431
    %8198 = vmatprep.mubr.bf16.mxu0 %v5140
    %8199 = vmatmul.mubr.bf16.gmra.mrb[0].mxu0 %v5139
    %v8200 = vpop.f32.mrb[0].mxu0
    %v8201 = vadd.f32 %v5662, %v8200
    %v8202 = vpop.f32.mrb[0].mxu0
    %v8203 = vadd.f32 %v5666, %v8202
    %v8204 = vpop.f32.mrb[0].mxu0
    %v8205 = vadd.f32 %v5662, %v8204
    %v8206 = vpop.f32.mrb[0].mxu0
    %v8207 = vadd.f32 %v5666, %v8206
    %8208 = vdwg.mxu0
    %8209 = vmatprep.subr.bf16.mxu0 %v7447
    %8210 = vmatpush1.bf16.msra.mxu0 %v7446
    %8211 = vmatprep.subr.bf16.mxu0 %v7462
    %8212 = vmatpush1.bf16.msra.mxu0 %v7461
    %8213 = vmatprep.subr.bf16.mxu0 %v7477
    %8214 = vmatpush1.bf16.msra.mxu0 %v7476
    %8215 = vmatprep.subr.bf16.mxu0 %v7492
    %8216 = vmatpush1.bf16.msra.mxu0 %v7491
    %8217 = vmatprep.subr.bf16.mxu0 %v7507
    %8218 = vmatpush1.bf16.msra.mxu0 %v7506
    %8219 = vmatprep.subr.bf16.mxu0 %v7522
    %8220 = vmatpush1.bf16.msra.mxu0 %v7521
    %8221 = vmatprep.subr.bf16.mxu0 %v7537
    %8222 = vmatpush1.bf16.msra.mxu0 %v7536
    %8223 = vmatprep.subr.bf16.mxu0 %v7552
    %8224 = vmatpush1.bf16.msra.mxu0 %v7551
    %8225 = vmatprep.subr.bf16.mxu0 %v7567
    %8226 = vmatpush1.bf16.msra.mxu0 %v7566
    %8227 = vmatprep.subr.bf16.mxu0 %v7582
    %8228 = vmatpush1.bf16.msra.mxu0 %v7581
    %8229 = vmatprep.subr.bf16.mxu0 %v7597
    %8230 = vmatpush1.bf16.msra.mxu0 %v7596
    %8231 = vmatprep.subr.bf16.mxu0 %v7612
    %8232 = vmatpush1.bf16.msra.mxu0 %v7611
    %8233 = vmatprep.subr.bf16.mxu0 %v7627
    %8234 = vmatpush1.bf16.msra.mxu0 %v7626
    %8235 = vmatprep.subr.bf16.mxu0 %v7642
    %8236 = vmatpush1.bf16.msra.mxu0 %v7641
    %8237 = vmatprep.subr.bf16.mxu0 %v7657
    %8238 = vmatpush1.bf16.msra.mxu0 %v7656
    %8239 = vmatprep.subr.bf16.mxu0 %v7672
    %8240 = vmatpush1.bf16.msra.mxu0 %v7671
    %8241 = vmatprep.mubr.bf16.mxu0 %v5142
    %8242 = vmatmul.mubr.bf16.gmra.mrb[0].mxu0 %v5141
    %v8243 = vpop.f32.mrb[0].mxu0
    %v8244 = vadd.f32 %v8201, %v8243
    %v8245 = vpop.f32.mrb[0].mxu0
    %v8246 = vadd.f32 %v8203, %v8245
    %v8247 = vpop.f32.mrb[0].mxu0
    %v8248 = vadd.f32 %v8205, %v8247
    %v8249 = vpop.f32.mrb[0].mxu0
    %v8250 = vadd.f32 %v8207, %v8249
    %8251 = vdwg.mxu0
    %8252 = vmatprep.subr.bf16.mxu0 %v7209
    %8253 = vmatpush1.bf16.msra.mxu0 %v7208
    %8254 = vmatprep.subr.bf16.mxu0 %v7224
    %8255 = vmatpush1.bf16.msra.mxu0 %v7223
    %8256 = vmatprep.subr.bf16.mxu0 %v7239
    %8257 = vmatpush1.bf16.msra.mxu0 %v7238
    %8258 = vmatprep.subr.bf16.mxu0 %v7254
    %8259 = vmatpush1.bf16.msra.mxu0 %v7253
    %8260 = vmatprep.subr.bf16.mxu0 %v7269
    %8261 = vmatpush1.bf16.msra.mxu0 %v7268
    %8262 = vmatprep.subr.bf16.mxu0 %v7284
    %8263 = vmatpush1.bf16.msra.mxu0 %v7283
    %8264 = vmatprep.subr.bf16.mxu0 %v7299
    %8265 = vmatpush1.bf16.msra.mxu0 %v7298
    %8266 = vmatprep.subr.bf16.mxu0 %v7314
    %8267 = vmatpush1.bf16.msra.mxu0 %v7313
    %8268 = vmatprep.subr.bf16.mxu0 %v7329
    %8269 = vmatpush1.bf16.msra.mxu0 %v7328
    %8270 = vmatprep.subr.bf16.mxu0 %v7344
    %8271 = vmatpush1.bf16.msra.mxu0 %v7343
    %8272 = vmatprep.subr.bf16.mxu0 %v7359
    %8273 = vmatpush1.bf16.msra.mxu0 %v7358
    %8274 = vmatprep.subr.bf16.mxu0 %v7374
    %8275 = vmatpush1.bf16.msra.mxu0 %v7373
    %8276 = vmatprep.subr.bf16.mxu0 %v7389
    %8277 = vmatpush1.bf16.msra.mxu0 %v7388
    %8278 = vmatprep.subr.bf16.mxu0 %v7404
    %8279 = vmatpush1.bf16.msra.mxu0 %v7403
    %8280 = vmatprep.subr.bf16.mxu0 %v7419
    %8281 = vmatpush1.bf16.msra.mxu0 %v7418
    %8282 = vmatprep.subr.bf16.mxu0 %v7434
    %8283 = vmatpush1.bf16.msra.mxu0 %v7433
    %8284 = vmatprep.mubr.bf16.mxu0 %v5140
    %8285 = vmatmul.mubr.bf16.gmra.mrb[0].mxu0 %v5139
    %v8286 = vpop.f32.mrb[0].mxu0
    %v8287 = vadd.f32 %v5670, %v8286
    %v8288 = vpop.f32.mrb[0].mxu0
    %v8289 = vadd.f32 %v5674, %v8288
    %v8290 = vpop.f32.mrb[0].mxu0
    %v8291 = vadd.f32 %v5670, %v8290
    %v8292 = vpop.f32.mrb[0].mxu0
    %v8293 = vadd.f32 %v5674, %v8292
    %8294 = vdwg.mxu0
    %8295 = vmatprep.subr.bf16.mxu0 %v7449
    %8296 = vmatpush1.bf16.msra.mxu0 %v7448
    %8297 = vmatprep.subr.bf16.mxu0 %v7464
    %8298 = vmatpush1.bf16.msra.mxu0 %v7463
    %8299 = vmatprep.subr.bf16.mxu0 %v7479
    %8300 = vmatpush1.bf16.msra.mxu0 %v7478
    %8301 = vmatprep.subr.bf16.mxu0 %v7494
    %8302 = vmatpush1.bf16.msra.mxu0 %v7493
    %8303 = vmatprep.subr.bf16.mxu0 %v7509
    %8304 = vmatpush1.bf16.msra.mxu0 %v7508
    %8305 = vmatprep.subr.bf16.mxu0 %v7524
    %8306 = vmatpush1.bf16.msra.mxu0 %v7523
    %8307 = vmatprep.subr.bf16.mxu0 %v7539
    %8308 = vmatpush1.bf16.msra.mxu0 %v7538
    %8309 = vmatprep.subr.bf16.mxu0 %v7554
    %8310 = vmatpush1.bf16.msra.mxu0 %v7553
    %8311 = vmatprep.subr.bf16.mxu0 %v7569
    %8312 = vmatpush1.bf16.msra.mxu0 %v7568
    %8313 = vmatprep.subr.bf16.mxu0 %v7584
    %8314 = vmatpush1.bf16.msra.mxu0 %v7583
    %8315 = vmatprep.subr.bf16.mxu0 %v7599
    %8316 = vmatpush1.bf16.msra.mxu0 %v7598
    %8317 = vmatprep.subr.bf16.mxu0 %v7614
    %8318 = vmatpush1.bf16.msra.mxu0 %v7613
    %8319 = vmatprep.subr.bf16.mxu0 %v7629
    %8320 = vmatpush1.bf16.msra.mxu0 %v7628
    %8321 = vmatprep.subr.bf16.mxu0 %v7644
    %8322 = vmatpush1.bf16.msra.mxu0 %v7643
    %8323 = vmatprep.subr.bf16.mxu0 %v7659
    %8324 = vmatpush1.bf16.msra.mxu0 %v7658
    %8325 = vmatprep.subr.bf16.mxu0 %v7674
    %8326 = vmatpush1.bf16.msra.mxu0 %v7673
    %8327 = vmatprep.mubr.bf16.mxu0 %v5142
    %8328 = vmatmul.mubr.bf16.gmra.mrb[0].mxu0 %v5141
    %v8329 = vpop.f32.mrb[0].mxu0
    %v8330 = vadd.f32 %v8287, %v8329
    %v8331 = vpop.f32.mrb[0].mxu0
    %v8332 = vadd.f32 %v8289, %v8331
    %v8333 = vpop.f32.mrb[0].mxu0
    %v8334 = vadd.f32 %v8291, %v8333
    %v8335 = vpop.f32.mrb[0].mxu0
    %v8336 = vadd.f32 %v8293, %v8335
    %8337 = vdwg.mxu0
    %8338 = vmatprep.subr.bf16.mxu0 %v7211
    %8339 = vmatpush1.bf16.msra.mxu0 %v7210
    %8340 = vmatprep.subr.bf16.mxu0 %v7226
    %8341 = vmatpush1.bf16.msra.mxu0 %v7225
    %8342 = vmatprep.subr.bf16.mxu0 %v7241
    %8343 = vmatpush1.bf16.msra.mxu0 %v7240
    %8344 = vmatprep.subr.bf16.mxu0 %v7256
    %8345 = vmatpush1.bf16.msra.mxu0 %v7255
    %8346 = vmatprep.subr.bf16.mxu0 %v7271
    %8347 = vmatpush1.bf16.msra.mxu0 %v7270
    %8348 = vmatprep.subr.bf16.mxu0 %v7286
    %8349 = vmatpush1.bf16.msra.mxu0 %v7285
    %8350 = vmatprep.subr.bf16.mxu0 %v7301
    %8351 = vmatpush1.bf16.msra.mxu0 %v7300
    %8352 = vmatprep.subr.bf16.mxu0 %v7316
    %8353 = vmatpush1.bf16.msra.mxu0 %v7315
    %8354 = vmatprep.subr.bf16.mxu0 %v7331
    %8355 = vmatpush1.bf16.msra.mxu0 %v7330
    %8356 = vmatprep.subr.bf16.mxu0 %v7346
    %8357 = vmatpush1.bf16.msra.mxu0 %v7345
    %8358 = vmatprep.subr.bf16.mxu0 %v7361
    %8359 = vmatpush1.bf16.msra.mxu0 %v7360
    %8360 = vmatprep.subr.bf16.mxu0 %v7376
    %8361 = vmatpush1.bf16.msra.mxu0 %v7375
    %8362 = vmatprep.subr.bf16.mxu0 %v7391
    %8363 = vmatpush1.bf16.msra.mxu0 %v7390
    %8364 = vmatprep.subr.bf16.mxu0 %v7406
    %8365 = vmatpush1.bf16.msra.mxu0 %v7405
    %8366 = vmatprep.subr.bf16.mxu0 %v7421
    %8367 = vmatpush1.bf16.msra.mxu0 %v7420
    %8368 = vmatprep.subr.bf16.mxu0 %v7436
    %8369 = vmatpush1.bf16.msra.mxu0 %v7435
    %8370 = vmatprep.mubr.bf16.mxu0 %v5140
    %8371 = vmatmul.mubr.bf16.gmra.mrb[0].mxu0 %v5139
    %v8372 = vpop.f32.mrb[0].mxu0
    %v8373 = vadd.f32 %v5678, %v8372
    %v8374 = vpop.f32.mrb[0].mxu0
    %v8375 = vadd.f32 %v5682, %v8374
    %v8376 = vpop.f32.mrb[0].mxu0
    %v8377 = vadd.f32 %v5678, %v8376
    %v8378 = vpop.f32.mrb[0].mxu0
    %v8379 = vadd.f32 %v5682, %v8378
    %8380 = vdwg.mxu0
    %8381 = vmatprep.subr.bf16.mxu0 %v7451
    %8382 = vmatpush1.bf16.msra.mxu0 %v7450
    %8383 = vmatprep.subr.bf16.mxu0 %v7466
    %8384 = vmatpush1.bf16.msra.mxu0 %v7465
    %8385 = vmatprep.subr.bf16.mxu0 %v7481
    %8386 = vmatpush1.bf16.msra.mxu0 %v7480
    %8387 = vmatprep.subr.bf16.mxu0 %v7496
    %8388 = vmatpush1.bf16.msra.mxu0 %v7495
    %8389 = vmatprep.subr.bf16.mxu0 %v7511
    %8390 = vmatpush1.bf16.msra.mxu0 %v7510
    %8391 = vmatprep.subr.bf16.mxu0 %v7526
    %8392 = vmatpush1.bf16.msra.mxu0 %v7525
    %8393 = vmatprep.subr.bf16.mxu0 %v7541
    %8394 = vmatpush1.bf16.msra.mxu0 %v7540
    %8395 = vmatprep.subr.bf16.mxu0 %v7556
    %8396 = vmatpush1.bf16.msra.mxu0 %v7555
    %8397 = vmatprep.subr.bf16.mxu0 %v7571
    %8398 = vmatpush1.bf16.msra.mxu0 %v7570
    %8399 = vmatprep.subr.bf16.mxu0 %v7586
    %8400 = vmatpush1.bf16.msra.mxu0 %v7585
    %8401 = vmatprep.subr.bf16.mxu0 %v7601
    %8402 = vmatpush1.bf16.msra.mxu0 %v7600
    %8403 = vmatprep.subr.bf16.mxu0 %v7616
    %8404 = vmatpush1.bf16.msra.mxu0 %v7615
    %8405 = vmatprep.subr.bf16.mxu0 %v7631
    %8406 = vmatpush1.bf16.msra.mxu0 %v7630
    %8407 = vmatprep.subr.bf16.mxu0 %v7646
    %8408 = vmatpush1.bf16.msra.mxu0 %v7645
    %8409 = vmatprep.subr.bf16.mxu0 %v7661
    %8410 = vmatpush1.bf16.msra.mxu0 %v7660
    %8411 = vmatprep.subr.bf16.mxu0 %v7676
    %8412 = vmatpush1.bf16.msra.mxu0 %v7675
    %8413 = vmatprep.mubr.bf16.mxu0 %v5142
    %8414 = vmatmul.mubr.bf16.gmra.mrb[0].mxu0 %v5141
    %v8415 = vpop.f32.mrb[0].mxu0
    %v8416 = vadd.f32 %v8373, %v8415
    %v8417 = vpop.f32.mrb[0].mxu0
    %v8418 = vadd.f32 %v8375, %v8417
    %v8419 = vpop.f32.mrb[0].mxu0
    %v8420 = vadd.f32 %v8377, %v8419
    %v8421 = vpop.f32.mrb[0].mxu0
    %v8422 = vadd.f32 %v8379, %v8421
    %8423 = vdwg.mxu0
    %8424 = vmatprep.subr.bf16.mxu0 %v7213
    %8425 = vmatpush1.bf16.msra.mxu0 %v7212
    %8426 = vmatprep.subr.bf16.mxu0 %v7228
    %8427 = vmatpush1.bf16.msra.mxu0 %v7227
    %8428 = vmatprep.subr.bf16.mxu0 %v7243
    %8429 = vmatpush1.bf16.msra.mxu0 %v7242
    %8430 = vmatprep.subr.bf16.mxu0 %v7258
    %8431 = vmatpush1.bf16.msra.mxu0 %v7257
    %8432 = vmatprep.subr.bf16.mxu0 %v7273
    %8433 = vmatpush1.bf16.msra.mxu0 %v7272
    %8434 = vmatprep.subr.bf16.mxu0 %v7288
    %8435 = vmatpush1.bf16.msra.mxu0 %v7287
    %8436 = vmatprep.subr.bf16.mxu0 %v7303
    %8437 = vmatpush1.bf16.msra.mxu0 %v7302
    %8438 = vmatprep.subr.bf16.mxu0 %v7318
    %8439 = vmatpush1.bf16.msra.mxu0 %v7317
    %8440 = vmatprep.subr.bf16.mxu0 %v7333
    %8441 = vmatpush1.bf16.msra.mxu0 %v7332
    %8442 = vmatprep.subr.bf16.mxu0 %v7348
    %8443 = vmatpush1.bf16.msra.mxu0 %v7347
    %8444 = vmatprep.subr.bf16.mxu0 %v7363
    %8445 = vmatpush1.bf16.msra.mxu0 %v7362
    %8446 = vmatprep.subr.bf16.mxu0 %v7378
    %8447 = vmatpush1.bf16.msra.mxu0 %v7377
    %8448 = vmatprep.subr.bf16.mxu0 %v7393
    %8449 = vmatpush1.bf16.msra.mxu0 %v7392
    %8450 = vmatprep.subr.bf16.mxu0 %v7408
    %8451 = vmatpush1.bf16.msra.mxu0 %v7407
    %8452 = vmatprep.subr.bf16.mxu0 %v7423
    %8453 = vmatpush1.bf16.msra.mxu0 %v7422
    %8454 = vmatprep.subr.bf16.mxu0 %v7438
    %8455 = vmatpush1.bf16.msra.mxu0 %v7437
    %8456 = vmatprep.mubr.bf16.mxu0 %v5140
    %8457 = vmatmul.mubr.bf16.gmra.mrb[0].mxu0 %v5139
    %v8458 = vpop.f32.mrb[0].mxu0
    %v8459 = vadd.f32 %v5686, %v8458
    %v8460 = vpop.f32.mrb[0].mxu0
    %v8461 = vadd.f32 %v5690, %v8460
    %v8462 = vpop.f32.mrb[0].mxu0
    %v8463 = vadd.f32 %v5686, %v8462
    %v8464 = vpop.f32.mrb[0].mxu0
    %v8465 = vadd.f32 %v5690, %v8464
    %8466 = vdwg.mxu0
    %8467 = vmatprep.subr.bf16.mxu0 %v7453
    %8468 = vmatpush1.bf16.msra.mxu0 %v7452
    %8469 = vmatprep.subr.bf16.mxu0 %v7468
    %8470 = vmatpush1.bf16.msra.mxu0 %v7467
    %8471 = vmatprep.subr.bf16.mxu0 %v7483
    %8472 = vmatpush1.bf16.msra.mxu0 %v7482
    %8473 = vmatprep.subr.bf16.mxu0 %v7498
    %8474 = vmatpush1.bf16.msra.mxu0 %v7497
    %8475 = vmatprep.subr.bf16.mxu0 %v7513
    %8476 = vmatpush1.bf16.msra.mxu0 %v7512
    %8477 = vmatprep.subr.bf16.mxu0 %v7528
    %8478 = vmatpush1.bf16.msra.mxu0 %v7527
    %8479 = vmatprep.subr.bf16.mxu0 %v7543
    %8480 = vmatpush1.bf16.msra.mxu0 %v7542
    %8481 = vmatprep.subr.bf16.mxu0 %v7558
    %8482 = vmatpush1.bf16.msra.mxu0 %v7557
    %8483 = vmatprep.subr.bf16.mxu0 %v7573
    %8484 = vmatpush1.bf16.msra.mxu0 %v7572
    %8485 = vmatprep.subr.bf16.mxu0 %v7588
    %8486 = vmatpush1.bf16.msra.mxu0 %v7587
    %8487 = vmatprep.subr.bf16.mxu0 %v7603
    %8488 = vmatpush1.bf16.msra.mxu0 %v7602
    %8489 = vmatprep.subr.bf16.mxu0 %v7618
    %8490 = vmatpush1.bf16.msra.mxu0 %v7617
    %8491 = vmatprep.subr.bf16.mxu0 %v7633
    %8492 = vmatpush1.bf16.msra.mxu0 %v7632
    %8493 = vmatprep.subr.bf16.mxu0 %v7648
    %8494 = vmatpush1.bf16.msra.mxu0 %v7647
    %8495 = vmatprep.subr.bf16.mxu0 %v7663
    %8496 = vmatpush1.bf16.msra.mxu0 %v7662
    %8497 = vmatprep.subr.bf16.mxu0 %v7678
    %8498 = vmatpush1.bf16.msra.mxu0 %v7677
    %8499 = vmatprep.mubr.bf16.mxu0 %v5142
    %8500 = vmatmul.mubr.bf16.gmra.mrb[0].mxu0 %v5141
    %v8501 = vpop.f32.mrb[0].mxu0
    %v8502 = vadd.f32 %v8459, %v8501
    %v8503 = vpop.f32.mrb[0].mxu0
    %v8504 = vadd.f32 %v8461, %v8503
    %v8505 = vpop.f32.mrb[0].mxu0
    %v8506 = vadd.f32 %v8463, %v8505
    %v8507 = vpop.f32.mrb[0].mxu0
    %v8508 = vadd.f32 %v8465, %v8507
    %8509 = vdwg.mxu0
    %8510 = vmatprep.subr.bf16.mxu0 %v7215
    %8511 = vmatpush1.bf16.msra.mxu0 %v7214
    %8512 = vmatprep.subr.bf16.mxu0 %v7230
    %8513 = vmatpush1.bf16.msra.mxu0 %v7229
    %8514 = vmatprep.subr.bf16.mxu0 %v7245
    %8515 = vmatpush1.bf16.msra.mxu0 %v7244
    %8516 = vmatprep.subr.bf16.mxu0 %v7260
    %8517 = vmatpush1.bf16.msra.mxu0 %v7259
    %8518 = vmatprep.subr.bf16.mxu0 %v7275
    %8519 = vmatpush1.bf16.msra.mxu0 %v7274
    %8520 = vmatprep.subr.bf16.mxu0 %v7290
    %8521 = vmatpush1.bf16.msra.mxu0 %v7289
    %8522 = vmatprep.subr.bf16.mxu0 %v7305
    %8523 = vmatpush1.bf16.msra.mxu0 %v7304
    %8524 = vmatprep.subr.bf16.mxu0 %v7320
    %8525 = vmatpush1.bf16.msra.mxu0 %v7319
    %8526 = vmatprep.subr.bf16.mxu0 %v7335
    %8527 = vmatpush1.bf16.msra.mxu0 %v7334
    %8528 = vmatprep.subr.bf16.mxu0 %v7350
    %8529 = vmatpush1.bf16.msra.mxu0 %v7349
    %8530 = vmatprep.subr.bf16.mxu0 %v7365
    %8531 = vmatpush1.bf16.msra.mxu0 %v7364
    %8532 = vmatprep.subr.bf16.mxu0 %v7380
    %8533 = vmatpush1.bf16.msra.mxu0 %v7379
    %8534 = vmatprep.subr.bf16.mxu0 %v7395
    %8535 = vmatpush1.bf16.msra.mxu0 %v7394
    %8536 = vmatprep.subr.bf16.mxu0 %v7410
    %8537 = vmatpush1.bf16.msra.mxu0 %v7409
    %8538 = vmatprep.subr.bf16.mxu0 %v7425
    %8539 = vmatpush1.bf16.msra.mxu0 %v7424
    %8540 = vmatprep.subr.bf16.mxu0 %v7440
    %8541 = vmatpush1.bf16.msra.mxu0 %v7439
    %8542 = vmatprep.mubr.bf16.mxu0 %v5140
    %8543 = vmatmul.mubr.bf16.gmra.mrb[0].mxu0 %v5139
    %v8544 = vpop.f32.mrb[0].mxu0
    %v8545 = vadd.f32 %v5694, %v8544
    %v8546 = vpop.f32.mrb[0].mxu0
    %v8547 = vadd.f32 %v5698, %v8546
    %v8548 = vpop.f32.mrb[0].mxu0
    %v8549 = vadd.f32 %v5694, %v8548
    %v8550 = vpop.f32.mrb[0].mxu0
    %v8551 = vadd.f32 %v5698, %v8550
    %8552 = vdwg.mxu0
    %8553 = vmatprep.subr.bf16.mxu0 %v7455
    %8554 = vmatpush1.bf16.msra.mxu0 %v7454
    %8555 = vmatprep.subr.bf16.mxu0 %v7470
    %8556 = vmatpush1.bf16.msra.mxu0 %v7469
    %8557 = vmatprep.subr.bf16.mxu0 %v7485
    %8558 = vmatpush1.bf16.msra.mxu0 %v7484
    %8559 = vmatprep.subr.bf16.mxu0 %v7500
    %8560 = vmatpush1.bf16.msra.mxu0 %v7499
    %8561 = vmatprep.subr.bf16.mxu0 %v7515
    %8562 = vmatpush1.bf16.msra.mxu0 %v7514
    %8563 = vmatprep.subr.bf16.mxu0 %v7530
    %8564 = vmatpush1.bf16.msra.mxu0 %v7529
    %8565 = vmatprep.subr.bf16.mxu0 %v7545
    %8566 = vmatpush1.bf16.msra.mxu0 %v7544
    %8567 = vmatprep.subr.bf16.mxu0 %v7560
    %8568 = vmatpush1.bf16.msra.mxu0 %v7559
    %8569 = vmatprep.subr.bf16.mxu0 %v7575
    %8570 = vmatpush1.bf16.msra.mxu0 %v7574
    %8571 = vmatprep.subr.bf16.mxu0 %v7590
    %8572 = vmatpush1.bf16.msra.mxu0 %v7589
    %8573 = vmatprep.subr.bf16.mxu0 %v7605
    %8574 = vmatpush1.bf16.msra.mxu0 %v7604
    %8575 = vmatprep.subr.bf16.mxu0 %v7620
    %8576 = vmatpush1.bf16.msra.mxu0 %v7619
    %8577 = vmatprep.subr.bf16.mxu0 %v7635
    %8578 = vmatpush1.bf16.msra.mxu0 %v7634
    %8579 = vmatprep.subr.bf16.mxu0 %v7650
    %8580 = vmatpush1.bf16.msra.mxu0 %v7649
    %8581 = vmatprep.subr.bf16.mxu0 %v7665
    %8582 = vmatpush1.bf16.msra.mxu0 %v7664
    %8583 = vmatprep.subr.bf16.mxu0 %v7680
    %8584 = vmatpush1.bf16.msra.mxu0 %v7679
    %8585 = vmatprep.mubr.bf16.mxu0 %v5142
    %8586 = vmatmul.mubr.bf16.gmra.mrb[0].mxu0 %v5141
    %v8587 = vpop.f32.mrb[0].mxu0
    %v8588 = vadd.f32 %v8545, %v8587
    %v8589 = vpop.f32.mrb[0].mxu0
    %v8590 = vadd.f32 %v8547, %v8589
    %v8591 = vpop.f32.mrb[0].mxu0
    %v8592 = vadd.f32 %v8549, %v8591
    %v8593 = vpop.f32.mrb[0].mxu0
    %v8594 = vadd.f32 %v8551, %v8593
    %8595 = vdwg.mxu0
    %8596 = vmatprep.subr.bf16.mxu0 %v7217
    %8597 = vmatpush1.bf16.msra.mxu0 %v7216
    %8598 = vmatprep.subr.bf16.mxu0 %v7232
    %8599 = vmatpush1.bf16.msra.mxu0 %v7231
    %8600 = vmatprep.subr.bf16.mxu0 %v7247
    %8601 = vmatpush1.bf16.msra.mxu0 %v7246
    %8602 = vmatprep.subr.bf16.mxu0 %v7262
    %8603 = vmatpush1.bf16.msra.mxu0 %v7261
    %8604 = vmatprep.subr.bf16.mxu0 %v7277
    %8605 = vmatpush1.bf16.msra.mxu0 %v7276
    %8606 = vmatprep.subr.bf16.mxu0 %v7292
    %8607 = vmatpush1.bf16.msra.mxu0 %v7291
    %8608 = vmatprep.subr.bf16.mxu0 %v7307
    %8609 = vmatpush1.bf16.msra.mxu0 %v7306
    %8610 = vmatprep.subr.bf16.mxu0 %v7322
    %8611 = vmatpush1.bf16.msra.mxu0 %v7321
    %8612 = vmatprep.subr.bf16.mxu0 %v7337
    %8613 = vmatpush1.bf16.msra.mxu0 %v7336
    %8614 = vmatprep.subr.bf16.mxu0 %v7352
    %8615 = vmatpush1.bf16.msra.mxu0 %v7351
    %8616 = vmatprep.subr.bf16.mxu0 %v7367
    %8617 = vmatpush1.bf16.msra.mxu0 %v7366
    %8618 = vmatprep.subr.bf16.mxu0 %v7382
    %8619 = vmatpush1.bf16.msra.mxu0 %v7381
    %8620 = vmatprep.subr.bf16.mxu0 %v7397
    %8621 = vmatpush1.bf16.msra.mxu0 %v7396
    %8622 = vmatprep.subr.bf16.mxu0 %v7412
    %8623 = vmatpush1.bf16.msra.mxu0 %v7411
    %8624 = vmatprep.subr.bf16.mxu0 %v7427
    %8625 = vmatpush1.bf16.msra.mxu0 %v7426
    %8626 = vmatprep.subr.bf16.mxu0 %v7442
    %8627 = vmatpush1.bf16.msra.mxu0 %v7441
    %8628 = vmatprep.mubr.bf16.mxu0 %v5140
    %8629 = vmatmul.mubr.bf16.gmra.mrb[0].mxu0 %v5139
    %v8630 = vpop.f32.mrb[0].mxu0
    %v8631 = vadd.f32 %v5702, %v8630
    %v8632 = vpop.f32.mrb[0].mxu0
    %v8633 = vadd.f32 %v5706, %v8632
    %v8634 = vpop.f32.mrb[0].mxu0
    %v8635 = vadd.f32 %v5702, %v8634
    %v8636 = vpop.f32.mrb[0].mxu0
    %v8637 = vadd.f32 %v5706, %v8636
    %8638 = vdwg.mxu0
    %8639 = vmatprep.subr.bf16.mxu0 %v7457
    %8640 = vmatpush1.bf16.msra.mxu0 %v7456
    %8641 = vmatprep.subr.bf16.mxu0 %v7472
    %8642 = vmatpush1.bf16.msra.mxu0 %v7471
    %8643 = vmatprep.subr.bf16.mxu0 %v7487
    %8644 = vmatpush1.bf16.msra.mxu0 %v7486
    %8645 = vmatprep.subr.bf16.mxu0 %v7502
    %8646 = vmatpush1.bf16.msra.mxu0 %v7501
    %8647 = vmatprep.subr.bf16.mxu0 %v7517
    %8648 = vmatpush1.bf16.msra.mxu0 %v7516
    %8649 = vmatprep.subr.bf16.mxu0 %v7532
    %8650 = vmatpush1.bf16.msra.mxu0 %v7531
    %8651 = vmatprep.subr.bf16.mxu0 %v7547
    %8652 = vmatpush1.bf16.msra.mxu0 %v7546
    %8653 = vmatprep.subr.bf16.mxu0 %v7562
    %8654 = vmatpush1.bf16.msra.mxu0 %v7561
    %8655 = vmatprep.subr.bf16.mxu0 %v7577
    %8656 = vmatpush1.bf16.msra.mxu0 %v7576
    %8657 = vmatprep.subr.bf16.mxu0 %v7592
    %8658 = vmatpush1.bf16.msra.mxu0 %v7591
    %8659 = vmatprep.subr.bf16.mxu0 %v7607
    %8660 = vmatpush1.bf16.msra.mxu0 %v7606
    %8661 = vmatprep.subr.bf16.mxu0 %v7622
    %8662 = vmatpush1.bf16.msra.mxu0 %v7621
    %8663 = vmatprep.subr.bf16.mxu0 %v7637
    %8664 = vmatpush1.bf16.msra.mxu0 %v7636
    %8665 = vmatprep.subr.bf16.mxu0 %v7652
    %8666 = vmatpush1.bf16.msra.mxu0 %v7651
    %8667 = vmatprep.subr.bf16.mxu0 %v7667
    %8668 = vmatpush1.bf16.msra.mxu0 %v7666
    %8669 = vmatprep.subr.bf16.mxu0 %v7682
    %8670 = vmatpush1.bf16.msra.mxu0 %v7681
    %8671 = vmatprep.mubr.bf16.mxu0 %v5142
    %8672 = vmatmul.mubr.bf16.gmra.mrb[0].mxu0 %v5141
    %v8673 = vpop.f32.mrb[0].mxu0
    %v8674 = vadd.f32 %v8631, %v8673
    %v8675 = vpop.f32.mrb[0].mxu0
    %v8676 = vadd.f32 %v8633, %v8675
    %v8677 = vpop.f32.mrb[0].mxu0
    %v8678 = vadd.f32 %v8635, %v8677
    %v8679 = vpop.f32.mrb[0].mxu0
    %v8680 = vadd.f32 %v8637, %v8679
    %8681 = vdwg.mxu0
    %8682 = vmatprep.subr.bf16.mxu0 %v7219
    %8683 = vmatpush1.bf16.msra.mxu0 %v7218
    %8684 = vmatprep.subr.bf16.mxu0 %v7234
    %8685 = vmatpush1.bf16.msra.mxu0 %v7233
    %8686 = vmatprep.subr.bf16.mxu0 %v7249
    %8687 = vmatpush1.bf16.msra.mxu0 %v7248
    %8688 = vmatprep.subr.bf16.mxu0 %v7264
    %8689 = vmatpush1.bf16.msra.mxu0 %v7263
    %8690 = vmatprep.subr.bf16.mxu0 %v7279
    %8691 = vmatpush1.bf16.msra.mxu0 %v7278
    %8692 = vmatprep.subr.bf16.mxu0 %v7294
    %8693 = vmatpush1.bf16.msra.mxu0 %v7293
    %8694 = vmatprep.subr.bf16.mxu0 %v7309
    %8695 = vmatpush1.bf16.msra.mxu0 %v7308
    %8696 = vmatprep.subr.bf16.mxu0 %v7324
    %8697 = vmatpush1.bf16.msra.mxu0 %v7323
    %8698 = vmatprep.subr.bf16.mxu0 %v7339
    %8699 = vmatpush1.bf16.msra.mxu0 %v7338
    %8700 = vmatprep.subr.bf16.mxu0 %v7354
    %8701 = vmatpush1.bf16.msra.mxu0 %v7353
    %8702 = vmatprep.subr.bf16.mxu0 %v7369
    %8703 = vmatpush1.bf16.msra.mxu0 %v7368
    %8704 = vmatprep.subr.bf16.mxu0 %v7384
    %8705 = vmatpush1.bf16.msra.mxu0 %v7383
    %8706 = vmatprep.subr.bf16.mxu0 %v7399
    %8707 = vmatpush1.bf16.msra.mxu0 %v7398
    %8708 = vmatprep.subr.bf16.mxu0 %v7414
    %8709 = vmatpush1.bf16.msra.mxu0 %v7413
    %8710 = vmatprep.subr.bf16.mxu0 %v7429
    %8711 = vmatpush1.bf16.msra.mxu0 %v7428
    %8712 = vmatprep.subr.bf16.mxu0 %v7444
    %8713 = vmatpush1.bf16.msra.mxu0 %v7443
    %8714 = vmatprep.mubr.bf16.mxu0 %v5140
    %8715 = vmatmul.mubr.bf16.gmra.mrb[0].mxu0 %v5139
    %v8716 = vpop.f32.mrb[0].mxu0
    %v8717 = vadd.f32 %v5710, %v8716
    %v8718 = vpop.f32.mrb[0].mxu0
    %v8719 = vadd.f32 %v5714, %v8718
    %v8720 = vpop.f32.mrb[0].mxu0
    %v8721 = vadd.f32 %v5710, %v8720
    %v8722 = vpop.f32.mrb[0].mxu0
    %v8723 = vadd.f32 %v5714, %v8722
    %8724 = vdwg.mxu0
    %8725 = vmatprep.subr.bf16.mxu0 %v7459
    %8726 = vmatpush1.bf16.msra.mxu0 %v7458
    %8727 = vmatprep.subr.bf16.mxu0 %v7474
    %8728 = vmatpush1.bf16.msra.mxu0 %v7473
    %8729 = vmatprep.subr.bf16.mxu0 %v7489
    %8730 = vmatpush1.bf16.msra.mxu0 %v7488
    %8731 = vmatprep.subr.bf16.mxu0 %v7504
    %8732 = vmatpush1.bf16.msra.mxu0 %v7503
    %8733 = vmatprep.subr.bf16.mxu0 %v7519
    %8734 = vmatpush1.bf16.msra.mxu0 %v7518
    %8735 = vmatprep.subr.bf16.mxu0 %v7534
    %8736 = vmatpush1.bf16.msra.mxu0 %v7533
    %8737 = vmatprep.subr.bf16.mxu0 %v7549
    %8738 = vmatpush1.bf16.msra.mxu0 %v7548
    %8739 = vmatprep.subr.bf16.mxu0 %v7564
    %8740 = vmatpush1.bf16.msra.mxu0 %v7563
    %8741 = vmatprep.subr.bf16.mxu0 %v7579
    %8742 = vmatpush1.bf16.msra.mxu0 %v7578
    %8743 = vmatprep.subr.bf16.mxu0 %v7594
    %8744 = vmatpush1.bf16.msra.mxu0 %v7593
    %8745 = vmatprep.subr.bf16.mxu0 %v7609
    %8746 = vmatpush1.bf16.msra.mxu0 %v7608
    %8747 = vmatprep.subr.bf16.mxu0 %v7624
    %8748 = vmatpush1.bf16.msra.mxu0 %v7623
    %8749 = vmatprep.subr.bf16.mxu0 %v7639
    %8750 = vmatpush1.bf16.msra.mxu0 %v7638
    %8751 = vmatprep.subr.bf16.mxu0 %v7654
    %8752 = vmatpush1.bf16.msra.mxu0 %v7653
    %8753 = vmatprep.subr.bf16.mxu0 %v7669
    %8754 = vmatpush1.bf16.msra.mxu0 %v7668
    %8755 = vmatprep.subr.bf16.mxu0 %v7684
    %8756 = vmatpush1.bf16.msra.mxu0 %v7683
    %8757 = vmatprep.mubr.bf16.mxu0 %v5142
    %8758 = vmatmul.mubr.bf16.gmra.mrb[0].mxu0 %v5141
    %v8759 = vpop.f32.mrb[0].mxu0
    %v8760 = vadd.f32 %v8717, %v8759
    %v8761 = vpop.f32.mrb[0].mxu0
    %v8762 = vadd.f32 %v8719, %v8761
    %v8763 = vpop.f32.mrb[0].mxu0
    %v8764 = vadd.f32 %v8721, %v8763
    %v8765 = vpop.f32.mrb[0].mxu0
    %v8766 = vadd.f32 %v8723, %v8765
    %8767 = vdwg.mxu0
    %8768 = vmatprep.subr.bf16.mxu0 0
    %8769 = vmatpush1.bf16.msra.mxu0 %v7220
    %8770 = vmatprep.subr.bf16.mxu0 0
    %8771 = vmatpush1.bf16.msra.mxu0 %v7235
    %8772 = vmatprep.subr.bf16.mxu0 0
    %8773 = vmatpush1.bf16.msra.mxu0 %v7250
    %8774 = vmatprep.subr.bf16.mxu0 0
    %8775 = vmatpush1.bf16.msra.mxu0 %v7265
    %8776 = vmatprep.subr.bf16.mxu0 0
    %8777 = vmatpush1.bf16.msra.mxu0 %v7280
    %8778 = vmatprep.subr.bf16.mxu0 0
    %8779 = vmatpush1.bf16.msra.mxu0 %v7295
    %8780 = vmatprep.subr.bf16.mxu0 0
    %8781 = vmatpush1.bf16.msra.mxu0 %v7310
    %8782 = vmatprep.subr.bf16.mxu0 0
    %8783 = vmatpush1.bf16.msra.mxu0 %v7325
    %8784 = vmatprep.subr.bf16.mxu0 0
    %8785 = vmatpush1.bf16.msra.mxu0 %v7340
    %8786 = vmatprep.subr.bf16.mxu0 0
    %8787 = vmatpush1.bf16.msra.mxu0 %v7355
    %8788 = vmatprep.subr.bf16.mxu0 0
    %8789 = vmatpush1.bf16.msra.mxu0 %v7370
    %8790 = vmatprep.subr.bf16.mxu0 0
    %8791 = vmatpush1.bf16.msra.mxu0 %v7385
    %8792 = vmatprep.subr.bf16.mxu0 0
    %8793 = vmatpush1.bf16.msra.mxu0 %v7400
    %8794 = vmatprep.subr.bf16.mxu0 0
    %8795 = vmatpush1.bf16.msra.mxu0 %v7415
    %8796 = vmatprep.subr.bf16.mxu0 0
    %8797 = vmatpush1.bf16.msra.mxu0 %v7430
    %8798 = vmatprep.subr.bf16.mxu0 0
    %8799 = vmatpush1.bf16.msra.mxu0 %v7445
    %8800 = vmatprep.mubr.bf16.mxu0 %v5140
    %8801 = vmatmul.mubr.bf16.gmra.mrb[0].mxu0 %v5139
    %v8802 = vpop.f32.mrb[0].mxu0
    %v8803 = vadd.f32 %v5718, %v8802
    %v8804 = vpop.f32.mrb[0].mxu0
    %v8805 = vpop.f32.mrb[0].mxu0
    %v8806 = vadd.f32 %v5718, %v8805
    %v8807 = vpop.f32.mrb[0].mxu0
    %8808 = vdwg.mxu0
    %8809 = vmatprep.subr.bf16.mxu0 0
    %8810 = vmatpush1.bf16.msra.mxu0 %v7460
    %8811 = vmatprep.subr.bf16.mxu0 0
    %8812 = vmatpush1.bf16.msra.mxu0 %v7475
    %8813 = vmatprep.subr.bf16.mxu0 0
    %8814 = vmatpush1.bf16.msra.mxu0 %v7490
    %8815 = vmatprep.subr.bf16.mxu0 0
    %8816 = vmatpush1.bf16.msra.mxu0 %v7505
    %8817 = vmatprep.subr.bf16.mxu0 0
    %8818 = vmatpush1.bf16.msra.mxu0 %v7520
    %8819 = vmatprep.subr.bf16.mxu0 0
    %8820 = vmatpush1.bf16.msra.mxu0 %v7535
    %8821 = vmatprep.subr.bf16.mxu0 0
    %8822 = vmatpush1.bf16.msra.mxu0 %v7550
    %8823 = vmatprep.subr.bf16.mxu0 0
    %8824 = vmatpush1.bf16.msra.mxu0 %v7565
    %8825 = vmatprep.subr.bf16.mxu0 0
    %8826 = vmatpush1.bf16.msra.mxu0 %v7580
    %8827 = vmatprep.subr.bf16.mxu0 0
    %8828 = vmatpush1.bf16.msra.mxu0 %v7595
    %8829 = vmatprep.subr.bf16.mxu0 0
    %8830 = vmatpush1.bf16.msra.mxu0 %v7610
    %8831 = vmatprep.subr.bf16.mxu0 0
    %8832 = vmatpush1.bf16.msra.mxu0 %v7625
    %8833 = vmatprep.subr.bf16.mxu0 0
    %8834 = vmatpush1.bf16.msra.mxu0 %v7640
    %8835 = vmatprep.subr.bf16.mxu0 0
    %8836 = vmatpush1.bf16.msra.mxu0 %v7655
    %8837 = vmatprep.subr.bf16.mxu0 0
    %8838 = vmatpush1.bf16.msra.mxu0 %v7670
    %8839 = vmatprep.subr.bf16.mxu0 0
    %8840 = vmatpush1.bf16.msra.mxu0 %v7685
    %8841 = vmatprep.mubr.bf16.mxu0 %v5142
    %8842 = vmatmul.mubr.bf16.gmra.mrb[0].mxu0 %v5141
    %v8843 = vpop.f32.mrb[0].mxu0
    %v8844 = vadd.f32 %v8803, %v8843
    %v8845 = vpop.f32.mrb[0].mxu0
    %v8846 = vpop.f32.mrb[0].mxu0
    %v8847 = vadd.f32 %v8806, %v8846
    %v8848 = vpop.f32.mrb[0].mxu0
    %8849 = vdwg.mxu0
    %v8850 = vtanh.pop %v8244
    %v8851 = vtanh.pop %v8246
    %v8852 = vtanh.pop %v8330
    %v8853 = vtanh.pop %v8332
    %v8854 = vtanh.pop %v8416
    %v8855 = vtanh.pop %v8418
    %v8856 = vtanh.pop %v8502
    %v8857 = vtanh.pop %v8504
    %v8858 = vtanh.pop %v8588
    %v8859 = vtanh.pop %v8590
    %v8860 = vtanh.pop %v8674
    %v8861 = vtanh.pop %v8676
    %v8862 = vtanh.pop %v8760
    %v8863 = vtanh.pop %v8762
    %v8864 = vtanh.pop %v8844
    %v8865 = vtanh.pop %v8248
    %v8866 = vtanh.pop %v8250
    %v8867 = vtanh.pop %v8334
    %v8868 = vtanh.pop %v8336
    %v8869 = vtanh.pop %v8420
    %v8870 = vtanh.pop %v8422
    %v8871 = vtanh.pop %v8506
    %v8872 = vtanh.pop %v8508
    %v8873 = vtanh.pop %v8592
    %v8874 = vtanh.pop %v8594
    %v8875 = vtanh.pop %v8678
    %v8876 = vtanh.pop %v8680
    %v8877 = vtanh.pop %v8764
    %v8878 = vtanh.pop %v8766
    %v8879 = vtanh.pop %v8847
    %v8880 = vpack.c.bf16 %v8865, %v8850
    %v8881 = vpack.c.bf16 %v8866, %v8851
    %v8882 = vpack.c.bf16 %v8867, %v8852
    %v8883 = vpack.c.bf16 %v8868, %v8853
    %v8884 = vpack.c.bf16 %v8869, %v8854
    %v8885 = vpack.c.bf16 %v8870, %v8855
    %v8886 = vpack.c.bf16 %v8871, %v8856
    %v8887 = vpack.c.bf16 %v8872, %v8857
    %v8888 = vpack.c.bf16 %v8873, %v8858
    %v8889 = vpack.c.bf16 %v8874, %v8859
    %v8890 = vpack.c.bf16 %v8875, %v8860
    %v8891 = vpack.c.bf16 %v8876, %v8861
    %v8892 = vpack.c.bf16 %v8877, %v8862
    %v8893 = vpack.c.bf16 %v8878, %v8863
    %v8894 = vpack.c.bf16 %v8879, %v8864
    %v8910 = vunpack.c.l.b16 %v8880
    %v8911 = vunpack.c.l.b16 %v8881
    %v8912 = vunpack.c.l.b16 %v8882
    %v8913 = vunpack.c.l.b16 %v8883
    %v8914 = vunpack.c.l.b16 %v8884
    %v8915 = vunpack.c.l.b16 %v8885
    %v8916 = vunpack.c.l.b16 %v8886
    %v8917 = vunpack.c.l.b16 %v8887
    %v8918 = vunpack.c.l.b16 %v8888
    %v8919 = vunpack.c.l.b16 %v8889
    %v8920 = vunpack.c.l.b16 %v8890
    %v8921 = vunpack.c.l.b16 %v8891
    %v8922 = vunpack.c.l.b16 %v8892
    %v8923 = vunpack.c.l.b16 %v8893
    %v8924 = vunpack.c.l.b16 %v8894
    %v8925 = vunpack.c.h.b16 %v8880
    %v8926 = vunpack.c.h.b16 %v8881
    %v8927 = vunpack.c.h.b16 %v8882
    %v8928 = vunpack.c.h.b16 %v8883
    %v8929 = vunpack.c.h.b16 %v8884
    %v8930 = vunpack.c.h.b16 %v8885
    %v8931 = vunpack.c.h.b16 %v8886
    %v8932 = vunpack.c.h.b16 %v8887
    %v8933 = vunpack.c.h.b16 %v8888
    %v8934 = vunpack.c.h.b16 %v8889
    %v8935 = vunpack.c.h.b16 %v8890
    %v8936 = vunpack.c.h.b16 %v8891
    %v8937 = vunpack.c.h.b16 %v8892
    %v8938 = vunpack.c.h.b16 %v8893
    %v8939 = vunpack.c.h.b16 %v8894
    %v8940 = vpack.c.b16 %v8911, %v8910
    %v8941 = vpack.c.b16 %v8913, %v8912
    %v8942 = vpack.c.b16 %v8915, %v8914
    %v8943 = vpack.c.b16 %v8917, %v8916
    %v8944 = vpack.c.b16 %v8919, %v8918
    %v8945 = vpack.c.b16 %v8921, %v8920
    %v8946 = vpack.c.b16 %v8923, %v8922
    %v8947 = vpack.c.b16 %v8924, %v8924
    %v8948 = vpack.c.b16 %v8926, %v8925
    %v8949 = vpack.c.b16 %v8928, %v8927
    %v8950 = vpack.c.b16 %v8930, %v8929
    %v8951 = vpack.c.b16 %v8932, %v8931
    %v8952 = vpack.c.b16 %v8934, %v8933
    %v8953 = vpack.c.b16 %v8936, %v8935
    %v8954 = vpack.c.b16 %v8938, %v8937
    %v8955 = vpack.c.b16 %v8939, %v8939
    %8972 = vst [vmem:[%s14] sm:$0xff] %v8940
    %8973 = vst [vmem:[%s14 + $0x8] sm:$0xff] %v8941
    %8974 = vst [vmem:[%s14 + $0x10] sm:$0xff] %v8942
    %8975 = vst [vmem:[%s14 + $0x18] sm:$0xff] %v8943
    %8976 = vst [vmem:[%s14 + $0x20] sm:$0xff] %v8944
    %8977 = vst [vmem:[%s14 + $0x28] sm:$0xff] %v8945
    %8978 = vst [vmem:[%s14 + $0x30] sm:$0xff] %v8946
    %vm8979 = vcmask 60416
    %8980 = vst.msk [vmem:[%s14 + $0x38] sm:$0xf] %vm8979, %v8947
    %8981 = vst [vmem:[%s14 + $0x3c] sm:$0xff] %v8948
    %8982 = vst [vmem:[%s14 + $0x44] sm:$0xff] %v8949
    %8983 = vst [vmem:[%s14 + $0x4c] sm:$0xff] %v8950
    %8984 = vst [vmem:[%s14 + $0x54] sm:$0xff] %v8951
    %8985 = vst [vmem:[%s14 + $0x5c] sm:$0xff] %v8952
    %8986 = vst [vmem:[%s14 + $0x64] sm:$0xff] %v8953
    %8987 = vst [vmem:[%s14 + $0x6c] sm:$0xff] %v8954
    %8988 = vst.msk [vmem:[%s14 + $0x74] sm:$0xf] %vm8979, %v8955
    %s8989 = smul.u32 0, 16
    %v8990 = vlaneseq
    %v8991 = vshrl.u32 %v8990, 7
    %v8992 = vadd.s32 %v8991, 8
    %v8993 = vstv %s8989
    %v8994 = vadd.s32 %v8993, %v8991
    %v8995 = vadd.s32 %v8993, %v8992
    %vm8996 = vcmp.lt.s32.totalorder %v8994, 2
    %vm8997 = vcmp.lt.s32.totalorder %v8995, 2
    %v8998 = vsel %vm8996, 1, 0
    %v8999 = vsel %vm8997, 1, 0
    %v9000 = vcvt.s32.f32 %v8998
    %v9001 = vcvt.s32.f32 %v8999
    %v9002 = vunpack.c.l.bf16 %v204
    %v9003 = vunpack.c.h.bf16 %v204
    %v9004 = vunpack.c.l.bf16 %v205
    %v9005 = vunpack.c.h.bf16 %v205
    %v9006 = vunpack.c.l.bf16 %v206
    %v9007 = vunpack.c.h.bf16 %v206
    %v9008 = vunpack.c.l.bf16 %v207
    %v9009 = vunpack.c.h.bf16 %v207
    %v9010 = vunpack.c.l.bf16 %v208
    %v9011 = vunpack.c.h.bf16 %v208
    %v9012 = vunpack.c.l.bf16 %v209
    %v9013 = vunpack.c.h.bf16 %v209
    %v9014 = vunpack.c.l.bf16 %v210
    %v9015 = vunpack.c.h.bf16 %v210
    %v9016 = vunpack.c.l.bf16 %v211
    %v9017 = vunpack.c.l.bf16 %v212
    %v9018 = vunpack.c.h.bf16 %v212
    %v9019 = vunpack.c.l.bf16 %v213
    %v9020 = vunpack.c.h.bf16 %v213
    %v9021 = vunpack.c.l.bf16 %v214
    %v9022 = vunpack.c.h.bf16 %v214
    %v9023 = vunpack.c.l.bf16 %v215
    %v9024 = vunpack.c.h.bf16 %v215
    %v9025 = vunpack.c.l.bf16 %v216
    %v9026 = vunpack.c.h.bf16 %v216
    %v9027 = vunpack.c.l.bf16 %v217
    %v9028 = vunpack.c.h.bf16 %v217
    %v9029 = vunpack.c.l.bf16 %v218
    %v9030 = vunpack.c.h.bf16 %v218
    %v9031 = vunpack.c.l.bf16 %v219
    %v9032 = vsub.f32 %v8850, %v9002
    %v9033 = vsub.f32 %v8851, %v9003
    %v9034 = vsub.f32 %v8852, %v9004
    %v9035 = vsub.f32 %v8853, %v9005
    %v9036 = vsub.f32 %v8854, %v9006
    %v9037 = vsub.f32 %v8855, %v9007
    %v9038 = vsub.f32 %v8856, %v9008
    %v9039 = vsub.f32 %v8857, %v9009
    %v9040 = vsub.f32 %v8858, %v9010
    %v9041 = vsub.f32 %v8859, %v9011
    %v9042 = vsub.f32 %v8860, %v9012
    %v9043 = vsub.f32 %v8861, %v9013
    %v9044 = vsub.f32 %v8862, %v9014
    %v9045 = vsub.f32 %v8863, %v9015
    %v9046 = vsub.f32 %v8864, %v9016
    %v9047 = vsub.f32 %v8865, %v9017
    %v9048 = vsub.f32 %v8866, %v9018
    %v9049 = vsub.f32 %v8867, %v9019
    %v9050 = vsub.f32 %v8868, %v9020
    %v9051 = vsub.f32 %v8869, %v9021
    %v9052 = vsub.f32 %v8870, %v9022
    %v9053 = vsub.f32 %v8871, %v9023
    %v9054 = vsub.f32 %v8872, %v9024
    %v9055 = vsub.f32 %v8873, %v9025
    %v9056 = vsub.f32 %v8874, %v9026
    %v9057 = vsub.f32 %v8875, %v9027
    %v9058 = vsub.f32 %v8876, %v9028
    %v9059 = vsub.f32 %v8877, %v9029
    %v9060 = vsub.f32 %v8878, %v9030
    %v9061 = vsub.f32 %v8879, %v9031
    %v9062 = vmul.f32 %v9032, %v9000
    %v9063 = vmul.f32 %v9033, %v9000
    %v9064 = vmul.f32 %v9034, %v9000
    %v9065 = vmul.f32 %v9035, %v9000
    %v9066 = vmul.f32 %v9036, %v9000
    %v9067 = vmul.f32 %v9037, %v9000
    %v9068 = vmul.f32 %v9038, %v9000
    %v9069 = vmul.f32 %v9039, %v9000
    %v9070 = vmul.f32 %v9040, %v9000
    %v9071 = vmul.f32 %v9041, %v9000
    %v9072 = vmul.f32 %v9042, %v9000
    %v9073 = vmul.f32 %v9043, %v9000
    %v9074 = vmul.f32 %v9044, %v9000
    %v9075 = vmul.f32 %v9045, %v9000
    %v9076 = vmul.f32 %v9046, %v9000
    %v9077 = vmul.f32 %v9047, %v9001
    %v9078 = vmul.f32 %v9048, %v9001
    %v9079 = vmul.f32 %v9049, %v9001
    %v9080 = vmul.f32 %v9050, %v9001
    %v9081 = vmul.f32 %v9051, %v9001
    %v9082 = vmul.f32 %v9052, %v9001
    %v9083 = vmul.f32 %v9053, %v9001
    %v9084 = vmul.f32 %v9054, %v9001
    %v9085 = vmul.f32 %v9055, %v9001
    %v9086 = vmul.f32 %v9056, %v9001
    %v9087 = vmul.f32 %v9057, %v9001
    %v9088 = vmul.f32 %v9058, %v9001
    %v9089 = vmul.f32 %v9059, %v9001
    %v9090 = vmul.f32 %v9060, %v9001
    %v9091 = vmul.f32 %v9061, %v9001
    %v9092 = vmul.f32 %v9062, %v9062
    %v9093 = vmul.f32 %v9063, %v9063
    %v9094 = vmul.f32 %v9064, %v9064
    %v9095 = vmul.f32 %v9065, %v9065
    %v9096 = vmul.f32 %v9066, %v9066
    %v9097 = vmul.f32 %v9067, %v9067
    %v9098 = vmul.f32 %v9068, %v9068
    %v9099 = vmul.f32 %v9069, %v9069
    %v9100 = vmul.f32 %v9070, %v9070
    %v9101 = vmul.f32 %v9071, %v9071
    %v9102 = vmul.f32 %v9072, %v9072
    %v9103 = vmul.f32 %v9073, %v9073
    %v9104 = vmul.f32 %v9074, %v9074
    %v9105 = vmul.f32 %v9075, %v9075
    %v9106 = vmul.f32 %v9076, %v9076
    %v9107 = vmul.f32 %v9077, %v9077
    %v9108 = vmul.f32 %v9078, %v9078
    %v9109 = vmul.f32 %v9079, %v9079
    %v9110 = vmul.f32 %v9080, %v9080
    %v9111 = vmul.f32 %v9081, %v9081
    %v9112 = vmul.f32 %v9082, %v9082
    %v9113 = vmul.f32 %v9083, %v9083
    %v9114 = vmul.f32 %v9084, %v9084
    %v9115 = vmul.f32 %v9085, %v9085
    %v9116 = vmul.f32 %v9086, %v9086
    %v9117 = vmul.f32 %v9087, %v9087
    %v9118 = vmul.f32 %v9088, %v9088
    %v9119 = vmul.f32 %v9089, %v9089
    %v9120 = vmul.f32 %v9090, %v9090
    %v9121 = vmul.f32 %v9091, %v9091
    %v9122 = vadd.f32 %v9092, %v9093
    %v9123 = vadd.f32 %v9122, %v9094
    %v9124 = vadd.f32 %v9123, %v9095
    %v9125 = vadd.f32 %v9124, %v9096
    %v9126 = vadd.f32 %v9125, %v9097
    %v9127 = vadd.f32 %v9126, %v9098
    %v9128 = vadd.f32 %v9127, %v9099
    %v9129 = vadd.f32 %v9128, %v9100
    %v9130 = vadd.f32 %v9129, %v9101
    %v9131 = vadd.f32 %v9130, %v9102
    %v9132 = vadd.f32 %v9131, %v9103
    %v9133 = vadd.f32 %v9132, %v9104
    %v9134 = vadd.f32 %v9133, %v9105
    %v9135 = vsel %vm3017, %v9106, 0.0
    %v9136 = vadd.f32 %v9134, %v9135
    %v9137 = vadd.f32 %v9136, %v9107
    %v9138 = vadd.f32 %v9137, %v9108
    %v9139 = vadd.f32 %v9138, %v9109
    %v9140 = vadd.f32 %v9139, %v9110
    %v9141 = vadd.f32 %v9140, %v9111
    %v9142 = vadd.f32 %v9141, %v9112
    %v9143 = vadd.f32 %v9142, %v9113
    %v9144 = vadd.f32 %v9143, %v9114
    %v9145 = vadd.f32 %v9144, %v9115
    %v9146 = vadd.f32 %v9145, %v9116
    %v9147 = vadd.f32 %v9146, %v9117
    %v9148 = vadd.f32 %v9147, %v9118
    %v9149 = vadd.f32 %v9148, %v9119
    %v9150 = vadd.f32 %v9149, %v9120
    %v9151 = vsel %vm3017, %v9121, 0.0
    %v9152 = vadd.f32 %v9150, %v9151
    %9153 = vadd.xlane.f32.xlu0 %v9152
    %v9154 = vpop.xlane.xlu0 %9153
    %v9155 = vrot.slane %v9154, 4
    %v9156 = vadd.f32 %v9154, %v9155
    %v9157 = vrot.slane %v9156, 2
    %v9158 = vadd.f32 %v9156, %v9157
    %v9159 = vrot.slane %v9158, 1
    %v9160 = vadd.f32 %v9158, %v9159
    %s9161 = vtos %v9160
    %v9162 = vmul.f32 %v8864, %v9000
    %v9163 = vmul.f32 %v8879, %v9001
    %v9164 = vmul.f32 %v9162, %v9162
    %v9165 = vmul.f32 %v9163, %v9163
    %9168 = vrot.lane.b32.xlu0 %v9164, 120
    %v9169 = vpop.permute.xlu0 %9168
    %9170 = vrot.lane.b32.xlu0 %v9165, 120
    %v9171 = vpop.permute.xlu0 %9170
    %vm9174 = vcmask 982016
    %v9175 = vsel %vm9174, %v9169, 0.0
    %v9176 = vsel %vm9174, %v9171, 0.0
    %v9177 = vadd.f32 %v9175, %v9176
    %9178 = vadd.xlane.f32.xlu0 %v9177
    %v9179 = vpop.xlane.xlu0 %9178
    %v9180 = vrot.slane %v9179, 4
    %v9181 = vadd.f32 %v9179, %v9180
    %v9182 = vrot.slane %v9181, 2
    %v9183 = vadd.f32 %v9181, %v9182
    %v9184 = vrot.slane %v9183, 1
    %v9185 = vadd.f32 %v9183, %v9184
    %s9186 = vtos %v9185
    %s9187 = sadd.f32 %s9161, %s9186
    %v9188 = vadd.f32 %v4463, 1.0
    %v9189 = vadd.f32 %v4467, 1.0
    %v9190 = vmul.f32 %v4461, %v4461
    %v9191 = vmul.f32 %v4465, %v4465
    %v9192 = vsub.f32 %v9188, %v9190
    %v9193 = vsub.f32 %v9189, %v9191
    %v9194 = vmul.f32 %v4463, 1.442695
    %v9195 = vpow.pop %v9194
    %v9196 = vmul.f32 %v4467, 1.442695
    %v9197 = vpow.pop %v9196
    %v9198 = vsub.f32 %v9192, %v9195
    %v9199 = vsub.f32 %v9193, %v9197
    %9200 = vadd.xlane.f32.xlu0 %v9198
    %v9201 = vpop.xlane.xlu0 %9200
    %9202 = vadd.xlane.f32.xlu0 %v9199
    %v9203 = vpop.xlane.xlu0 %9202
    %v9204 = vmul.f32 %v9201, -0.5
    %v9205 = vmul.f32 %v9203, -0.5
    %v9206 = vmul.f32 %v9204, %v9000
    %v9207 = vmul.f32 %v9205, %v9001
    %vm9208 = vcmask 7168
    %v9209 = vsel %vm9208, %v9206, 0.0
    %v9210 = vsel %vm9208, %v9207, 0.0
    %v9211 = vadd.f32 %v9209, %v9210
    %9212 = vadd.xlane.f32.xlu0 %v9211
    %v9213 = vpop.xlane.xlu0 %9212
    %v9214 = vrot.slane %v9213, 4
    %v9215 = vadd.f32 %v9213, %v9214
    %v9216 = vrot.slane %v9215, 2
    %v9217 = vadd.f32 %v9215, %v9216
    %v9218 = vrot.slane %v9217, 1
    %v9219 = vadd.f32 %v9217, %v9218
    %s9220 = vtos %v9219
    %s9221 = scalar_lea.smem [#allocation22], 0
    %9222 = sst [smem:[%s9221]] %s9187
    %s9223 = scalar_lea.smem [#allocation23], 0
    %9224 = sst [smem:[%s9223]] %s9220
    // Predicated region
    $region106: #{vae_forward.1} parent=1 // pred_check
      _
    $region107: #{vae_forward.1} parent=1 // pred_check_branch
      %9226 = sbr.rel (0) target = $region109
    $region108: #{vae_forward.1} parent=1 // pred_region
      _
    $region109: #{vae_forward.1} parent=1 // pred_fallthru
      _
    // Predicated region
    $region110: #{vae_forward.1} parent=1 // pred_check
      _
    $region111: #{vae_forward.1} parent=1 // pred_check_branch
      %9228 = sbr.rel (0) target = $region113
    $region112: #{vae_forward.1} parent=1 // pred_region
      %s9230 = ssub.s32 16, 16
      %9231 = vsyncadd [#allocation4], %s9230
      %9234 = dma.smem_to_hbm [#allocation22], 16, %s15, [#allocation4]
    $region113: #{vae_forward.1} parent=1 // pred_fallthru
      _
    // Predicated region
    $region114: #{vae_forward.1} parent=1 // pred_check
      _
    $region115: #{vae_forward.1} parent=1 // pred_check_branch
      %9236 = sbr.rel (0) target = $region117
    $region116: #{vae_forward.1} parent=1 // pred_region
      %s9238 = ssub.s32 16, 16
      %9239 = vsyncadd [#allocation24], %s9238
      %9242 = dma.smem_to_hbm [#allocation23], 16, %s16, [#allocation24]
    $region117: #{vae_forward.1} parent=1 // pred_fallthru
      _
    // Predicated region
    $region118: #{vae_forward.1} parent=1 // pred_check
      _
    $region119: #{vae_forward.1} parent=1 // pred_check_branch
      %9244 = sbr.rel (0) target = $region121
    $region120: #{vae_forward.1} parent=1 // pred_region
      _
    $region121: #{vae_forward.1} parent=1 // pred_fallthru
      _
    // Predicated region
    $region122: #{vae_forward.1} parent=1 // pred_check
      _
    $region123: #{vae_forward.1} parent=1 // pred_check_branch
      %9246 = sbr.rel (0) target = $region125
    $region124: #{vae_forward.1} parent=1 // pred_region
      %9247 = dma.done [#allocation4], 16
    $region125: #{vae_forward.1} parent=1 // pred_fallthru
      _
    // Predicated region
    $region126: #{vae_forward.1} parent=1 // pred_check
      _
    $region127: #{vae_forward.1} parent=1 // pred_check_branch
      %9249 = sbr.rel (0) target = $region129
    $region128: #{vae_forward.1} parent=1 // pred_region
      %9250 = dma.done [#allocation24], 16
    $region129: #{vae_forward.1} parent=1 // pred_fallthru
      _
    %9251 = sfence
    %9252 = vsyncpa [#allocation3], 1
    %9253 = vsyncpa [#allocation6], 1
    %9254 = vsyncpa [#allocation9], 1
    %9255 = vsyncpa [#allocation12], 1
    %9256 = vsyncpa [#allocation15], 1
    %9257 = vsyncpa [#allocation18], 1
    %9258 = vsyncpa [#allocation21], 1
    %9259 = vsyncpa [#allocation4], 1
    %9260 = vsyncpa [#allocation24], 1

</llo_original>
